<compile_context>
chip_gen: v7x
topology: tpu7x:2x2x1
jax: 0.10.0
libtpu: 0.0.40
codegen_flags: <defaults>
</compile_context>

<pallas_src>
import functools

import jax
import jax.numpy as jnp
from jax.experimental import pallas as pl
from jax.experimental.pallas import tpu as pltpu


# ----------------------------------------------------------------------------
# helpers
# ----------------------------------------------------------------------------
def _round_up(x: int, m: int) -> int:
    return ((x + m - 1) // m) * m


def _pad_to(x, target_shape):
    pads = [(0, t - s) for s, t in zip(x.shape, target_shape)]
    return jnp.pad(x, pads)


# ----------------------------------------------------------------------------
# Fused training kernel:
#   Linear1 -> ReLU -> [UD partial] -> Linear2 -> log-softmax -> masked-CE
# One grid step = TN points.  Emits per-tile (or accumulated) lane-dense
# (8,128) slab:  [0,0]=sum CE (valid pts), [0,1]=#valid pts, [0,2]=sum hidden^2
# ----------------------------------------------------------------------------
def _fused_loss_kernel(n_valid_ref, feat_ref, lab_ref, w1_ref, b1_ref,
                       w2_ref, b2_ref, out_ref, *, tn, num_classes,
                       accumulate):
    i = pl.program_id(0)
    nv = n_valid_ref[0]                                              # SMEM scalar

    # ---- Linear1 + ReLU (bf16 MXU, f32 accumulate) --------------------------
    x = feat_ref[...]                                                # (TN, CinPad)
    h = jnp.dot(x, w1_ref[...], preferred_element_type=jnp.float32)  # (TN, Hpad) f32
    h = jnp.maximum(h + b1_ref[...], 0.0)

    # rows beyond the real N (padding of the last tile) are masked out
    row_ids = i * tn + jax.lax.broadcasted_iota(jnp.int32, (tn, 1), 0)
    row_valid = row_ids < nv                                         # (TN, 1)

    # ---- UD partial (hidden never leaves VMEM; padded H columns are 0) ------
    ud_row = jnp.sum(h * h, axis=-1, keepdims=True)                  # (TN, 1)
    ud_sum = jnp.sum(jnp.where(row_valid, ud_row, 0.0))

    # ---- Linear2 -> logits (lane-dense Kpad) ---------------------------------
    logits = jnp.dot(h.astype(w2_ref.dtype), w2_ref[...],
                     preferred_element_type=jnp.float32)
    logits = logits + b2_ref[...]                                    # (TN, Kpad) f32
    kpad = logits.shape[-1]
    cls_row = jax.lax.broadcasted_iota(jnp.int32, (1, kpad), 1)      # (1, Kpad)
    if num_classes < kpad:
        logits = jnp.where(cls_row < num_classes, logits, jnp.float32(-1e30))

    # ---- numerically-stable softmax pieces (log_probs never materialized) ---
    row_max = jnp.max(logits, axis=-1, keepdims=True)
    shifted = logits - row_max
    denom = jnp.sum(jnp.exp(shifted), axis=-1, keepdims=True)        # (TN, 1)

    # ---- CE via broadcasted one-hot (no gather; ignore_index=-1 safe) -------
    labels = lab_ref[...]                                            # (TN, 1) int32
    lab_valid = jnp.logical_and(labels >= 0, row_valid)              # (TN, 1)
    safe_lab = jnp.where(lab_valid, labels, 0)
    one_hot = cls_row == safe_lab                                    # (TN, Kpad)
    picked_shift = jnp.sum(jnp.where(one_hot, shifted, 0.0),
                           axis=-1, keepdims=True)                   # (TN, 1)
    ce_row = jnp.log(denom) - picked_shift                           # -log_prob[label]
    ce_sum = jnp.sum(jnp.where(lab_valid, ce_row, 0.0))
    cnt = jnp.sum(lab_valid.astype(jnp.float32))

    # ---- pack the three scalars into a lane-dense (8,128) slab --------------
    lane = jax.lax.broadcasted_iota(jnp.int32, (1, 128), 1)
    contrib = jnp.where(lane == 0, ce_sum,
              jnp.where(lane == 1, cnt,
              jnp.where(lane == 2, ud_sum, 0.0)))                    # (1, 128)
    row8 = jax.lax.broadcasted_iota(jnp.int32, (8, 128), 0)
    slab = jnp.where(row8 == 0, contrib, 0.0)                        # (8, 128)

    if accumulate:
        @pl.when(i == 0)
        def _():
            out_ref[...] = jnp.zeros_like(out_ref)
        out_ref[...] += slab
    else:
        out_ref[...] = slab


# ----------------------------------------------------------------------------
# Inference kernel: emits lane-dense logits[Npad, Kpad] (eval path only).
# ----------------------------------------------------------------------------
def _mlp_logits_kernel(feat_ref, w1_ref, b1_ref, w2_ref, b2_ref, out_ref):
    x = feat_ref[...]
    h = jnp.dot(x, w1_ref[...], preferred_element_type=jnp.float32)
    h = jnp.maximum(h + b1_ref[...], 0.0)
    logits = jnp.dot(h.astype(w2_ref.dtype), w2_ref[...],
                     preferred_element_type=jnp.float32)
    out_ref[...] = (logits + b2_ref[...]).astype(out_ref.dtype)


# ----------------------------------------------------------------------------
# Module wrapper
# ----------------------------------------------------------------------------
class DefaultSegmentorPlusUDLoss:
    """JAX/Pallas equivalent of DefaultSegmentor_plus_UDloss with a concrete
    two-layer per-point MLP backbone and CrossEntropy(ignore_index=-1)."""

    def __init__(self, W1, b1, W2, b2, tile_n=1024, parallel_partials=None,
                 compute_dtype=jnp.bfloat16):
        self.c_in, self.hidden = W1.shape
        self.num_classes = W2.shape[1]
        self.tn = int(tile_n)
        self.compute_dtype = compute_dtype
        self._wt_itemsize = jnp.dtype(compute_dtype).itemsize

        # sublane packing of the compute dtype (f32 -> 8, bf16 -> 16)
        sub = 8 * (4 // self._wt_itemsize)
        self.cin_pad = _round_up(self.c_in, sub)
        self.hpad = _round_up(self.hidden, 128)
        self.kpad = _round_up(self.num_classes, 128)

        # Output mode for the training kernel:
        #   * single-TC chips (v5e/v6e): VMEM accumulator ("arbitrary") -> no
        #     per-tile HBM writeback, no XLA epilogue reduction.
        #   * v7x (2 TCs): per-tile partials + "parallel" keeps megacore.
        if parallel_partials is None:
            try:
                kind = jax.devices()[0].device_kind.lower()
                parallel_partials = "v7" in kind
            except Exception:  # pragma: no cover - best-effort detection
                parallel_partials = False
        self.parallel_partials = bool(parallel_partials)

        # zero-pad weights so Cin / H / K sit on packing/lane-dense multiples;
        # padded hidden columns stay exactly 0 after ReLU (W1/b1 padded with 0)
        self.w1 = _pad_to(jnp.asarray(W1, compute_dtype),
                          (self.cin_pad, self.hpad))
        self.b1 = _pad_to(jnp.asarray(b1, jnp.float32).reshape(1, -1),
                          (1, self.hpad))
        self.w2 = _pad_to(jnp.asarray(W2, compute_dtype),
                          (self.hpad, self.kpad))
        self.b2 = _pad_to(jnp.asarray(b2, jnp.float32).reshape(1, -1),
                          (1, self.kpad))

        self._vmem_limit = 32 * 1024 * 1024   # safe on v5e/v6e/v7x

    # ---- fused training-loss partial sums ------------------------------------
    def _fused_sums(self, feat_p, seg_p, n_valid):
        npad, cin_pad = feat_p.shape
        tn, hpad, kpad = self.tn, self.hpad, self.kpad
        num_tiles = npad // tn
        accumulate = not self.parallel_partials

        kernel = functools.partial(
            _fused_loss_kernel, tn=tn, num_classes=self.num_classes,
            accumulate=accumulate)

        if accumulate:
            out_shape = jax.ShapeDtypeStruct((8, 128), jnp.float32)
            out_spec = pl.BlockSpec((8, 128), lambda i, nv: (0, 0))
            semantics = ("arbitrary",)
        else:
            out_shape = jax.ShapeDtypeStruct((num_tiles * 8, 128), jnp.float32)
            out_spec = pl.BlockSpec((8, 128), lambda i, nv: (i, 0))
            semantics = ("parallel",)

        flops = 2 * npad * (cin_pad * hpad + hpad * kpad)
        transcendentals = npad * (kpad + 1)
        bytes_accessed = (npad * cin_pad * self._wt_itemsize       # feat
                          + npad * 4                               # labels
                          + (cin_pad * hpad + hpad * kpad) * self._wt_itemsize
                          + (hpad + kpad) * 4                      # biases
                          + 8 * 128 * 4 * (1 if accumulate else num_tiles))

        nv = jnp.full((1,), n_valid, jnp.int32)

        out = pl.pallas_call(
            kernel,
            out_shape=out_shape,
            grid_spec=pltpu.PrefetchScalarGridSpec(
                num_scalar_prefetch=1,               # n_valid -> SMEM
                grid=(num_tiles,),
                in_specs=[
                    pl.BlockSpec((tn, cin_pad), lambda i, nv: (i, 0)),   # feat
                    pl.BlockSpec((tn, 1), lambda i, nv: (i, 0)),         # labels
                    pl.BlockSpec((cin_pad, hpad), lambda i, nv: (0, 0)), # W1
                    pl.BlockSpec((1, hpad), lambda i, nv: (0, 0)),       # b1
                    pl.BlockSpec((hpad, kpad), lambda i, nv: (0, 0)),    # W2
                    pl.BlockSpec((1, kpad), lambda i, nv: (0, 0)),       # b2
                ],
                out_specs=out_spec,
            ),
            compiler_params=pltpu.CompilerParams(
                dimension_semantics=semantics,
                vmem_limit_bytes=self._vmem_limit),
            cost_estimate=pl.CostEstimate(
                flops=int(flops), transcendentals=int(transcendentals),
                bytes_accessed=int(bytes_accessed)),
        )(nv, feat_p, seg_p, self.w1, self.b1, self.w2, self.b2)

        if accumulate:
            ce_sum, cnt, ud_sum = out[0, 0], out[0, 1], out[0, 2]
        else:
            parts = out.reshape(num_tiles, 8, 128)
            ce_sum = jnp.sum(parts[:, 0, 0])
            cnt = jnp.sum(parts[:, 0, 1])
            ud_sum = jnp.sum(parts[:, 0, 2])
        return ce_sum, cnt, ud_sum

    # ---- logits for the eval path ---------------------------------------------
    def _logits(self, feat_p):
        npad, cin_pad = feat_p.shape
        tn, hpad, kpad = self.tn, self.hpad, self.kpad
        num_tiles = npad // tn

        flops = 2 * npad * (cin_pad * hpad + hpad * kpad)
        bytes_accessed = (npad * cin_pad * self._wt_itemsize
                          + (cin_pad * hpad + hpad * kpad) * self._wt_itemsize
                          + (hpad + kpad) * 4
                          + npad * kpad * 4)

        return pl.pallas_call(
            _mlp_logits_kernel,
            out_shape=jax.ShapeDtypeStruct((npad, kpad), jnp.float32),
            grid_spec=pltpu.PrefetchScalarGridSpec(
                num_scalar_prefetch=0,
                grid=(num_tiles,),
                in_specs=[
                    pl.BlockSpec((tn, cin_pad), lambda i: (i, 0)),
                    pl.BlockSpec((cin_pad, hpad), lambda i: (0, 0)),
                    pl.BlockSpec((1, hpad), lambda i: (0, 0)),
                    pl.BlockSpec((hpad, kpad), lambda i: (0, 0)),
                    pl.BlockSpec((1, kpad), lambda i: (0, 0)),
                ],
                out_specs=pl.BlockSpec((tn, kpad), lambda i: (i, 0)),
            ),
            compiler_params=pltpu.CompilerParams(
                dimension_semantics=("parallel",),
                vmem_limit_bytes=self._vmem_limit),
            cost_estimate=pl.CostEstimate(
                flops=int(flops), transcendentals=0,
                bytes_accessed=int(bytes_accessed)),
        )(feat_p, self.w1, self.b1, self.w2, self.b2)

    # ---- forward ----------------------------------------------------------------
    def __call__(self, input_dict, training=True):
        feat = jnp.asarray(input_dict["feat"])
        n = feat.shape[0]
        npad = _round_up(max(n, 1), self.tn)   # Npad bucketed to tile_n granularity
        feat_p = _pad_to(feat.astype(self.compute_dtype), (npad, self.cin_pad))

        seg = input_dict.get("segment", None)
        if training and seg is None:
            raise ValueError(
                "training=True requires input_dict['segment'] labels")

        seg_p = None
        if seg is not None:
            seg2d = jnp.asarray(seg, jnp.int32).reshape(n, 1)
            seg_p = jnp.pad(seg2d, ((0, npad - n), (0, 0)), constant_values=-1)

        if training:
            # TODO(synk): wandb.log / comm.get_local_rank() omitted (no JAX equiv).
            ce_sum, cnt, ud_sum = self._fused_sums(feat_p, seg_p, n)
            # NOTE: torch CE(ignore_index=-1,'mean') returns NaN when no valid
            # labels exist; we intentionally return 0 instead.
            ce = jnp.where(cnt > 0, ce_sum / jnp.maximum(cnt, 1.0), 0.0)
            loss_ud = ud_sum / float(n * self.hidden)
            return {"loss": ce + loss_ud}

        logits = self._logits(feat_p)[:n, :self.num_classes]
        if seg_p is not None:
            # CE directly from the materialized logits (MLP runs only once).
            labels = jnp.asarray(seg, jnp.int32)
            valid = labels >= 0
            logp = jax.nn.log_softmax(logits, axis=-1)
            picked = jnp.take_along_axis(
                logp, jnp.where(valid, labels, 0)[:, None], axis=1)[:, 0]
            cnt = jnp.sum(valid.astype(jnp.float32))
            ce = jnp.where(cnt > 0,
                           -jnp.sum(jnp.where(valid, picked, 0.0))
                           / jnp.maximum(cnt, 1.0), 0.0)
            return {"loss": ce, "seg_logits": logits}
        return {"seg_logits": logits}


# ----------------------------------------------------------------------------
# demo / self-check
# ----------------------------------------------------------------------------
if __name__ == "__main__":
    key = jax.random.PRNGKey(0)
    N, C_IN, H, K = 2500, 6, 32, 13            # small point-cloud-like shapes
    k1, k2, k3, k4, k5, k6 = jax.random.split(key, 6)

    feat = jax.random.normal(k1, (N, C_IN), jnp.float32)
    labels = jax.random.randint(k2, (N,), 0, K, jnp.int32)
    ignore = jax.random.uniform(k3, (N,)) < 0.1          # ~10% ignore_index=-1
    labels = jnp.where(ignore, jnp.int32(-1), labels)

    W1 = 0.1 * jax.random.normal(k4, (C_IN, H), jnp.float32)
    b1 = 0.01 * jax.random.normal(k5, (H,), jnp.float32)
    W2 = 0.1 * jax.random.normal(k6, (H, K), jnp.float32)
    b2 = jnp.zeros((K,), jnp.float32)

    # ---- pure-JAX f32 reference ------------------------------------------------
    h_ref = jnp.maximum(feat @ W1 + b1, 0.0)
    ud_ref = jnp.mean(h_ref ** 2)
    logits_ref = h_ref @ W2 + b2
    logp_ref = jax.nn.log_softmax(logits_ref, axis=-1)
    valid = labels >= 0
    picked = jnp.take_along_axis(
        logp_ref, jnp.where(valid, labels, 0)[:, None], axis=1)[:, 0]
    ce_ref = -jnp.sum(jnp.where(valid, picked, 0.0)) / jnp.maximum(
        jnp.sum(valid.astype(jnp.float32)), 1.0)
    loss_ref = ce_ref + ud_ref

    # bf16 matmuls (f32 accumulation) vs f32 reference -> looser tolerance
    RTOL, ATOL = 2e-2, 2e-2

    # ---- training branch: check both output modes (accumulator & parallel) ----
    models = {}
    for pp in (False, True):
        model = DefaultSegmentorPlusUDLoss(W1, b1, W2, b2,
                                           tile_n=1024, parallel_partials=pp)
        models[pp] = model
        out_train = model({"feat": feat, "segment": labels}, training=True)
        loss = jax.block_until_ready(out_train["loss"])
        assert jnp.allclose(loss, loss_ref, rtol=RTOL, atol=ATOL), \
            (pp, loss, loss_ref)

    # ---- guard: training without labels must raise -----------------------------
    try:
        models[False]({"feat": feat}, training=True)
        raise AssertionError("expected ValueError for missing 'segment'")
    except ValueError:
        pass

    # ---- eval branch (logits + CE-only loss; MLP runs once) --------------------
    out_eval = models[False]({"feat": feat, "segment": labels}, training=False)
    seg_logits = jax.block_until_ready(out_eval["seg_logits"])
    assert jnp.allclose(seg_logits, logits_ref, rtol=RTOL, atol=ATOL)
    assert jnp.allclose(out_eval["loss"], ce_ref, rtol=RTOL, atol=ATOL)

    out_eval_nolab = models[False]({"feat": feat}, training=False)
    jax.block_until_ready(out_eval_nolab["seg_logits"])

    print("KERNEL_OK")
</pallas_src>

<mosaic_0001>
module attributes {stable_mosaic.version = 11 : i64} {
  func.func @_fused_loss_kernel(%arg0: i32, %arg1: memref<1xi32, #tpu.memory_space<smem>>, %arg2: memref<1024x16xbf16, #tpu.memory_space<vmem>>, %arg3: memref<1024x1xi32, #tpu.memory_space<vmem>>, %arg4: memref<16x128xbf16, #tpu.memory_space<vmem>>, %arg5: memref<1x128xf32, #tpu.memory_space<vmem>>, %arg6: memref<128x128xbf16, #tpu.memory_space<vmem>>, %arg7: memref<1x128xf32, #tpu.memory_space<vmem>>, %arg8: memref<8x128xf32, #tpu.memory_space<vmem>>) attributes {dimension_semantics = [#tpu.dimension_semantics<arbitrary>], iteration_bounds = array<i64: 3>, scalar_prefetch = 1 : i64, scratch_operands = 0 : i64, tpu.core_type = #tpu.core_type<tc>, window_params = [{transform_indices = @transform_0, window_bounds = array<i64: 1024, 16>}, {transform_indices = @transform_1, window_bounds = array<i64: 1024, 1>}, {pipeline_mode = #tpu.pipeline_mode<synchronous>, transform_indices = @transform_2, window_bounds = array<i64: 16, 128>}, {pipeline_mode = #tpu.pipeline_mode<synchronous>, transform_indices = @transform_3, window_bounds = array<i64: 1, 128>}, {pipeline_mode = #tpu.pipeline_mode<synchronous>, transform_indices = @transform_4, window_bounds = array<i64: 128, 128>}, {pipeline_mode = #tpu.pipeline_mode<synchronous>, transform_indices = @transform_5, window_bounds = array<i64: 1, 128>}, {pipeline_mode = #tpu.pipeline_mode<synchronous>, transform_indices = @transform_6, window_bounds = array<i64: 8, 128>}]} {
    %c0 = arith.constant 0 : index
    %0 = memref.load %arg1[%c0] : memref<1xi32, #tpu.memory_space<smem>>
    %c0_0 = arith.constant 0 : index
    %c0_1 = arith.constant 0 : index
    %1 = vector.load %arg2[%c0_0, %c0_1] : memref<1024x16xbf16, #tpu.memory_space<vmem>>, vector<1024x16xbf16>
    %c0_2 = arith.constant 0 : index
    %c0_3 = arith.constant 0 : index
    %2 = vector.load %arg4[%c0_2, %c0_3] : memref<16x128xbf16, #tpu.memory_space<vmem>>, vector<16x128xbf16>
    %cst = arith.constant dense<0.000000e+00> : vector<1024x128xf32>
    %3 = tpu.matmul %1, %2, %cst {dimension_numbers = #tpu.dot_dimension_numbers<[1], [0], [0], [1], [0, 0, 1, 1], [], []>} : vector<1024x16xbf16>, vector<16x128xbf16>, vector<1024x128xf32> -> vector<1024x128xf32>
    %c0_4 = arith.constant 0 : index
    %c0_5 = arith.constant 0 : index
    %4 = vector.load %arg5[%c0_4, %c0_5] : memref<1x128xf32, #tpu.memory_space<vmem>>, vector<1x128xf32>
    %5 = vector.broadcast %4 : vector<1x128xf32> to vector<1024x128xf32>
    %6 = arith.addf %3, %5 : vector<1024x128xf32>
    %cst_6 = arith.constant 0.000000e+00 : f32
    %7 = vector.broadcast %cst_6 : f32 to vector<1024x128xf32>
    %8 = arith.maximumf %6, %7 : vector<1024x128xf32>
    %c1024_i32 = arith.constant 1024 : i32
    %9 = arith.muli %arg0, %c1024_i32 : i32
    %10 = tpu.iota {dimensions = array<i32: 0>} : vector<1024x1xi32>
    %11 = vector.broadcast %9 : i32 to vector<1024x1xi32>
    %12 = arith.addi %11, %10 : vector<1024x1xi32>
    %13 = vector.broadcast %0 : i32 to vector<1024x1xi32>
    %14 = arith.cmpi slt, %12, %13 : vector<1024x1xi32>
    %15 = arith.mulf %8, %8 : vector<1024x128xf32>
    %cst_7 = arith.constant dense<0.000000e+00> : vector<1024xf32>
    %16 = vector.multi_reduction <add>, %15, %cst_7 [1] : vector<1024x128xf32> to vector<1024xf32>
    %17 = vector.shape_cast %16 : vector<1024xf32> to vector<1024x1xf32>
    %cst_8 = arith.constant 0.000000e+00 : f32
    %18 = vector.broadcast %cst_8 : f32 to vector<1024x1xf32>
    %19 = arith.select %14, %17, %18 : vector<1024x1xi1>, vector<1024x1xf32>
    %20 = vector.shape_cast %19 : vector<1024x1xf32> to vector<1x1024x1xf32>
    %cst_9 = arith.constant dense<0.000000e+00> : vector<1xf32>
    %21 = vector.multi_reduction <add>, %20, %cst_9 [1, 2] : vector<1x1024x1xf32> to vector<1xf32>
    %22 = vector.shape_cast %21 : vector<1xf32> to vector<1x1x1xf32>
    %23 = vector.extract %22[0, 0, 0] : f32 from vector<1x1x1xf32>
    %24 = arith.truncf %8 : vector<1024x128xf32> to vector<1024x128xbf16>
    %c0_10 = arith.constant 0 : index
    %c0_11 = arith.constant 0 : index
    %25 = vector.load %arg6[%c0_10, %c0_11] : memref<128x128xbf16, #tpu.memory_space<vmem>>, vector<128x128xbf16>
    %cst_12 = arith.constant dense<0.000000e+00> : vector<1024x128xf32>
    %26 = tpu.matmul %24, %25, %cst_12 {dimension_numbers = #tpu.dot_dimension_numbers<[1], [0], [0], [1], [0, 0, 1, 1], [], []>} : vector<1024x128xbf16>, vector<128x128xbf16>, vector<1024x128xf32> -> vector<1024x128xf32>
    %c0_13 = arith.constant 0 : index
    %c0_14 = arith.constant 0 : index
    %27 = vector.load %arg7[%c0_13, %c0_14] : memref<1x128xf32, #tpu.memory_space<vmem>>, vector<1x128xf32>
    %28 = vector.broadcast %27 : vector<1x128xf32> to vector<1024x128xf32>
    %29 = arith.addf %26, %28 : vector<1024x128xf32>
    %30 = tpu.iota {dimensions = array<i32: 1>} : vector<1x128xi32>
    %c13_i32 = arith.constant 13 : i32
    %31 = vector.broadcast %c13_i32 : i32 to vector<1x128xi32>
    %32 = arith.cmpi slt, %30, %31 : vector<1x128xi32>
    %cst_15 = arith.constant -1.000000e+30 : f32
    %33 = vector.shape_cast %32 : vector<1x128xi1> to vector<1x128xi1>
    %34 = vector.broadcast %33 : vector<1x128xi1> to vector<1024x128xi1>
    %35 = vector.broadcast %cst_15 : f32 to vector<1024x128xf32>
    %36 = arith.select %34, %29, %35 : vector<1024x128xi1>, vector<1024x128xf32>
    %cst_16 = arith.constant dense<0xFF800000> : vector<1024xf32>
    %37 = vector.multi_reduction <maximumf>, %36, %cst_16 [1] : vector<1024x128xf32> to vector<1024xf32>
    %38 = vector.shape_cast %37 : vector<1024xf32> to vector<1024x1xf32>
    %39 = vector.broadcast %38 : vector<1024x1xf32> to vector<1024x128xf32>
    %40 = arith.subf %36, %39 : vector<1024x128xf32>
    %41 = math.exp %40 : vector<1024x128xf32>
    %cst_17 = arith.constant dense<0.000000e+00> : vector<1024xf32>
    %42 = vector.multi_reduction <add>, %41, %cst_17 [1] : vector<1024x128xf32> to vector<1024xf32>
    %43 = vector.shape_cast %42 : vector<1024xf32> to vector<1024x1xf32>
    %c0_18 = arith.constant 0 : index
    %c0_19 = arith.constant 0 : index
    %44 = vector.load %arg3[%c0_18, %c0_19] : memref<1024x1xi32, #tpu.memory_space<vmem>>, vector<1024x1xi32>
    %c0_i32 = arith.constant 0 : i32
    %45 = vector.broadcast %c0_i32 : i32 to vector<1024x1xi32>
    %46 = arith.cmpi sge, %44, %45 : vector<1024x1xi32>
    %47 = arith.andi %46, %14 : vector<1024x1xi1>
    %c0_i32_20 = arith.constant 0 : i32
    %48 = vector.broadcast %c0_i32_20 : i32 to vector<1024x1xi32>
    %49 = arith.select %47, %44, %48 : vector<1024x1xi1>, vector<1024x1xi32>
    %50 = vector.broadcast %30 : vector<1x128xi32> to vector<1024x128xi32>
    %51 = vector.broadcast %49 : vector<1024x1xi32> to vector<1024x128xi32>
    %52 = arith.cmpi eq, %50, %51 : vector<1024x128xi32>
    %cst_21 = arith.constant 0.000000e+00 : f32
    %53 = vector.broadcast %cst_21 : f32 to vector<1024x128xf32>
    %54 = arith.select %52, %40, %53 : vector<1024x128xi1>, vector<1024x128xf32>
    %cst_22 = arith.constant dense<0.000000e+00> : vector<1024xf32>
    %55 = vector.multi_reduction <add>, %54, %cst_22 [1] : vector<1024x128xf32> to vector<1024xf32>
    %56 = vector.shape_cast %55 : vector<1024xf32> to vector<1024x1xf32>
    %57 = math.log %43 : vector<1024x1xf32>
    %58 = arith.subf %57, %56 : vector<1024x1xf32>
    %cst_23 = arith.constant 0.000000e+00 : f32
    %59 = vector.broadcast %cst_23 : f32 to vector<1024x1xf32>
    %60 = arith.select %47, %58, %59 : vector<1024x1xi1>, vector<1024x1xf32>
    %61 = vector.shape_cast %60 : vector<1024x1xf32> to vector<1x1024x1xf32>
    %cst_24 = arith.constant dense<0.000000e+00> : vector<1xf32>
    %62 = vector.multi_reduction <add>, %61, %cst_24 [1, 2] : vector<1x1024x1xf32> to vector<1xf32>
    %63 = vector.shape_cast %62 : vector<1xf32> to vector<1x1x1xf32>
    %64 = vector.extract %63[0, 0, 0] : f32 from vector<1x1x1xf32>
    %65 = arith.extui %47 : vector<1024x1xi1> to vector<1024x1xi32>
    %66 = arith.sitofp %65 : vector<1024x1xi32> to vector<1024x1xf32>
    %67 = vector.shape_cast %66 : vector<1024x1xf32> to vector<1x1024x1xf32>
    %cst_25 = arith.constant dense<0.000000e+00> : vector<1xf32>
    %68 = vector.multi_reduction <add>, %67, %cst_25 [1, 2] : vector<1x1024x1xf32> to vector<1xf32>
    %69 = vector.shape_cast %68 : vector<1xf32> to vector<1x1x1xf32>
    %70 = vector.extract %69[0, 0, 0] : f32 from vector<1x1x1xf32>
    %71 = tpu.iota {dimensions = array<i32: 1>} : vector<1x128xi32>
    %c0_i32_26 = arith.constant 0 : i32
    %72 = vector.broadcast %c0_i32_26 : i32 to vector<1x128xi32>
    %73 = arith.cmpi eq, %71, %72 : vector<1x128xi32>
    %c1_i32 = arith.constant 1 : i32
    %74 = vector.broadcast %c1_i32 : i32 to vector<1x128xi32>
    %75 = arith.cmpi eq, %71, %74 : vector<1x128xi32>
    %c2_i32 = arith.constant 2 : i32
    %76 = vector.broadcast %c2_i32 : i32 to vector<1x128xi32>
    %77 = arith.cmpi eq, %71, %76 : vector<1x128xi32>
    %cst_27 = arith.constant 0.000000e+00 : f32
    %78 = vector.broadcast %23 : f32 to vector<1x128xf32>
    %79 = vector.broadcast %cst_27 : f32 to vector<1x128xf32>
    %80 = arith.select %77, %78, %79 : vector<1x128xi1>, vector<1x128xf32>
    %81 = vector.broadcast %70 : f32 to vector<1x128xf32>
    %82 = arith.select %75, %81, %80 : vector<1x128xi1>, vector<1x128xf32>
    %83 = vector.broadcast %64 : f32 to vector<1x128xf32>
    %84 = arith.select %73, %83, %82 : vector<1x128xi1>, vector<1x128xf32>
    %85 = tpu.iota {dimensions = array<i32: 0>} : vector<8x128xi32>
    %c0_i32_28 = arith.constant 0 : i32
    %86 = vector.broadcast %c0_i32_28 : i32 to vector<8x128xi32>
    %87 = arith.cmpi eq, %85, %86 : vector<8x128xi32>
    %cst_29 = arith.constant 0.000000e+00 : f32
    %88 = vector.shape_cast %84 : vector<1x128xf32> to vector<1x128xf32>
    %89 = vector.broadcast %88 : vector<1x128xf32> to vector<8x128xf32>
    %90 = vector.broadcast %cst_29 : f32 to vector<8x128xf32>
    %91 = arith.select %87, %89, %90 : vector<8x128xi1>, vector<8x128xf32>
    %c0_i32_30 = arith.constant 0 : i32
    %92 = arith.cmpi eq, %arg0, %c0_i32_30 : i32
    %93 = arith.extui %92 : i1 to i32
    %c0_i32_31 = arith.constant 0 : i32
    %94 = arith.cmpi ne, %93, %c0_i32_31 : i32
    scf.if %94 {
      %cst_36 = arith.constant 0.000000e+00 : f32
      %98 = vector.broadcast %cst_36 : f32 to vector<8x128xf32>
      %c0_37 = arith.constant 0 : index
      %c0_38 = arith.constant 0 : index
      %99 = vector.load %arg8[%c0_37, %c0_38] : memref<8x128xf32, #tpu.memory_space<vmem>>, vector<8x128xf32>
      tpu.vector_store %arg8[%c0_37, %c0_38], %98 {strides = array<i32>} : memref<8x128xf32, #tpu.memory_space<vmem>>, vector<8x128xf32>,
    } else {
    }
    %c0_32 = arith.constant 0 : index
    %c0_33 = arith.constant 0 : index
    %95 = vector.load %arg8[%c0_32, %c0_33] : memref<8x128xf32, #tpu.memory_space<vmem>>, vector<8x128xf32>
    %96 = arith.addf %95, %91 : vector<8x128xf32>
    %c0_34 = arith.constant 0 : index
    %c0_35 = arith.constant 0 : index
    %97 = vector.load %arg8[%c0_34, %c0_35] : memref<8x128xf32, #tpu.memory_space<vmem>>, vector<8x128xf32>
    tpu.vector_store %arg8[%c0_34, %c0_35], %96 {strides = array<i32>} : memref<8x128xf32, #tpu.memory_space<vmem>>, vector<8x128xf32>,
    return
  }
  func.func @transform_0(%arg0: i32, %arg1: memref<1xi32, #tpu.memory_space<smem>>) -> (i32, i32) {
    %c0_i32 = arith.constant 0 : i32
    %c0_i32_0 = arith.constant 0 : i32
    return %arg0, %c0_i32 : i32, i32
  }
  func.func @transform_1(%arg0: i32, %arg1: memref<1xi32, #tpu.memory_space<smem>>) -> (i32, i32) {
    %c0_i32 = arith.constant 0 : i32
    %c0_i32_0 = arith.constant 0 : i32
    return %arg0, %c0_i32 : i32, i32
  }
  func.func @transform_2(%arg0: i32, %arg1: memref<1xi32, #tpu.memory_space<smem>>) -> (i32, i32) {
    %c0_i32 = arith.constant 0 : i32
    %c0_i32_0 = arith.constant 0 : i32
    %c0_i32_1 = arith.constant 0 : i32
    return %c0_i32, %c0_i32_0 : i32, i32
  }
  func.func @transform_3(%arg0: i32, %arg1: memref<1xi32, #tpu.memory_space<smem>>) -> (i32, i32) {
    %c0_i32 = arith.constant 0 : i32
    %c0_i32_0 = arith.constant 0 : i32
    %c0_i32_1 = arith.constant 0 : i32
    return %c0_i32, %c0_i32_0 : i32, i32
  }
  func.func @transform_4(%arg0: i32, %arg1: memref<1xi32, #tpu.memory_space<smem>>) -> (i32, i32) {
    %c0_i32 = arith.constant 0 : i32
    %c0_i32_0 = arith.constant 0 : i32
    %c0_i32_1 = arith.constant 0 : i32
    return %c0_i32, %c0_i32_0 : i32, i32
  }
  func.func @transform_5(%arg0: i32, %arg1: memref<1xi32, #tpu.memory_space<smem>>) -> (i32, i32) {
    %c0_i32 = arith.constant 0 : i32
    %c0_i32_0 = arith.constant 0 : i32
    %c0_i32_1 = arith.constant 0 : i32
    return %c0_i32, %c0_i32_0 : i32, i32
  }
  func.func @transform_6(%arg0: i32, %arg1: memref<1xi32, #tpu.memory_space<smem>>) -> (i32, i32) {
    %c0_i32 = arith.constant 0 : i32
    %c0_i32_0 = arith.constant 0 : i32
    %c0_i32_1 = arith.constant 0 : i32
    return %c0_i32, %c0_i32_0 : i32, i32
  }
}

</mosaic_0001>

<llo_original>
// kernel: tpu_custom_call.1
$region0: #{tpu_custom_call.1}
  #allocation0 [shape = 'u32[]', space=smem, size = 0x4, offset = 0x4, fixed_abs, tag = 'smem constant byte address 0x4 - core index']
  #allocation1 [shape = 'u32[144,128]{1,0:T(1,128)}', space=vmem, size = 0x12000, scoped, tag = 'internal scratch']
  #allocation2 [shape = 's32[1]{0}', space=sflag, size = 0x4, scoped, tag = 'scoped memory for tpu_custom_call.1']
  #allocation3 [shape = 's32[1]{0:T(128)S(6)}', space=smem, size = 0x200, scoped, tag = 'prefetched SMEM operand 0']
  %s0 = inlined_call_operand.<no memory space> [shape: s32[1], index: 0, kind: input, shape index: {}]
  %s1 = inlined_call_operand.vmem [shape: bf16[3072,16], index: 1, kind: input, shape index: {}]
  %s2 = inlined_call_operand.vmem [shape: s32[3072,1], index: 2, kind: input, shape index: {}]
  %s3 = inlined_call_operand.vmem [shape: bf16[16,128], index: 3, kind: input, shape index: {}]
  %s4 = inlined_call_operand.vmem [shape: f32[1,128], index: 4, kind: input, shape index: {}]
  %s5 = inlined_call_operand.vmem [shape: bf16[128,128], index: 5, kind: input, shape index: {}]
  %s6 = inlined_call_operand.vmem [shape: f32[1,128], index: 6, kind: input, shape index: {}]
  %s7 = inlined_call_operand.hbm [shape: f32[8,128], index: 7, kind: output, shape index: {}]
  %s8 = sld [smem:[#allocation0]]
  $region61: #{tpu_custom_call.1} parent=0
    _
  %s10 = ssub.s32 1, %s8
  %s11 = scalar_select 0, %s10, %s8
  %12 = sst [smem:[#allocation3]] %s0
  $region1: #{tpu_custom_call.1} parent=0
    #allocation4 [shape = 'u8[4096]{0}', space=vmem, size = 0x1000, scoped, tag = 'output window, operand 0, single buffered']
    #allocation5 [shape = 's32[2]{0}', space=sflag, size = 0x8, scoped, tag = 'scoped memory for tpu_custom_call.1']
    %13 = vsyncpa [#allocation5], 0
    loop: start=0, step=1, limit=5
    $region2: #{tpu_custom_call.1} parent=1 // loop_pre_header
      _
    $region3: #{tpu_custom_call.1} parent=1 // loop_header
      %s15 = sphi 0, %s19
      %p16 = scmp.ge.s32.totalorder %s15, 5
      %s25 = sphi 0, %s27
      %s28 = sphi 0, %s25
      %s29 = sphi 0, %s28
      %s45 = sphi 0, %s29
      %s51 = sphi 0, %s53
      %s54 = sphi 0, %s51
      %s55 = sphi 0, %s54
      %s71 = sphi 0, %s55
      %s75 = sphi 0, %s75
      %s77 = sphi 0, %s75
      %s78 = sphi 0, %s77
      %s92 = sphi 0, %s78
      %s96 = sphi 0, %s96
      %s98 = sphi 0, %s96
      %s99 = sphi 0, %s98
      %s113 = sphi 0, %s99
      %s117 = sphi 0, %s117
      %s119 = sphi 0, %s117
      %s120 = sphi 0, %s119
      %s134 = sphi 0, %s120
      %s138 = sphi 0, %s138
      %s140 = sphi 0, %s138
      %s141 = sphi 0, %s140
      %s155 = sphi 0, %s141
      %s159 = sphi 0, %s159
      %s161 = sphi 0, %s159
      %s162 = sphi 0, %s161
      %s176 = sphi 0, %s162
    $region4: #{tpu_custom_call.1} parent=1 // loop_header_branch
      %18 = sbr.rel (%p16) target = $region8
    $region5: #{tpu_custom_call.1} parent=1 // loop_body
      %s20 = ssub.s32 %s15, 1
      %s21 = ssub.s32 %s15, 2
      %s22 = sadd.s32 %s15, 1
      %s23 = ssub.s32 %s15, %s22
      %p24 = scmp.eq.s32.totalorder %s23, 0
      %s26 = sadd.s32 %s25, 1
      %s27 = scalar_select %p24, %s25, %s26
      %p30 = pneg %p24
      %p31 = scmp.eq.s32.totalorder %s15, 2
      %p32 = por %p30, %p31
      %p33 = scmp.ne.s32.totalorder %s25, %s28
      %p34 = scmp.eq.s32.totalorder %s15, 0
      %p35 = por %p33, %p34
      %p36 = scmp.ne.s32.totalorder %s25, %s28
      %p37 = scmp.eq.s32.totalorder %s20, 2
      %p38 = por %p36, %p37
      %p39 = scmp.ne.s32.totalorder %s28, %s29
      %p40 = scmp.eq.s32.totalorder %s20, 0
      %p41 = por %p39, %p40
      %p42 = scmp.ne.s32.totalorder %s28, %s29
      %p43 = scmp.eq.s32.totalorder %s21, 2
      %p44 = por %p42, %p43
      %p46 = scmp.ne.s32.totalorder %s29, %s45
      %p47 = scmp.eq.s32.totalorder %s21, 0
      %p48 = por %p46, %p47
      %s49 = ssub.s32 %s15, %s22
      %p50 = scmp.eq.s32.totalorder %s49, 0
      %s52 = sadd.s32 %s51, 1
      %s53 = scalar_select %p50, %s51, %s52
      %p56 = pneg %p50
      %p57 = scmp.eq.s32.totalorder %s15, 2
      %p58 = por %p56, %p57
      %p59 = scmp.ne.s32.totalorder %s51, %s54
      %p60 = scmp.eq.s32.totalorder %s15, 0
      %p61 = por %p59, %p60
      %p62 = scmp.ne.s32.totalorder %s51, %s54
      %p63 = scmp.eq.s32.totalorder %s20, 2
      %p64 = por %p62, %p63
      %p65 = scmp.ne.s32.totalorder %s54, %s55
      %p66 = scmp.eq.s32.totalorder %s20, 0
      %p67 = por %p65, %p66
      %p68 = scmp.ne.s32.totalorder %s54, %s55
      %p69 = scmp.eq.s32.totalorder %s21, 2
      %p70 = por %p68, %p69
      %p72 = scmp.ne.s32.totalorder %s55, %s71
      %p73 = scmp.eq.s32.totalorder %s21, 0
      %p74 = por %p72, %p73
      %s76 = sadd.s32 %s75, 1
      %p79 = scmp.eq.s32.totalorder %s15, 2
      %p80 = scmp.ne.s32.totalorder %s75, %s77
      %p81 = scmp.eq.s32.totalorder %s15, 0
      %p82 = por %p80, %p81
      %p83 = scmp.ne.s32.totalorder %s75, %s77
      %p84 = scmp.eq.s32.totalorder %s20, 2
      %p85 = por %p83, %p84
      %p86 = scmp.ne.s32.totalorder %s77, %s78
      %p87 = scmp.eq.s32.totalorder %s20, 0
      %p88 = por %p86, %p87
      %p89 = scmp.ne.s32.totalorder %s77, %s78
      %p90 = scmp.eq.s32.totalorder %s21, 2
      %p91 = por %p89, %p90
      %p93 = scmp.ne.s32.totalorder %s78, %s92
      %p94 = scmp.eq.s32.totalorder %s21, 0
      %p95 = por %p93, %p94
      %s97 = sadd.s32 %s96, 1
      %p100 = scmp.eq.s32.totalorder %s15, 2
      %p101 = scmp.ne.s32.totalorder %s96, %s98
      %p102 = scmp.eq.s32.totalorder %s15, 0
      %p103 = por %p101, %p102
      %p104 = scmp.ne.s32.totalorder %s96, %s98
      %p105 = scmp.eq.s32.totalorder %s20, 2
      %p106 = por %p104, %p105
      %p107 = scmp.ne.s32.totalorder %s98, %s99
      %p108 = scmp.eq.s32.totalorder %s20, 0
      %p109 = por %p107, %p108
      %p110 = scmp.ne.s32.totalorder %s98, %s99
      %p111 = scmp.eq.s32.totalorder %s21, 2
      %p112 = por %p110, %p111
      %p114 = scmp.ne.s32.totalorder %s99, %s113
      %p115 = scmp.eq.s32.totalorder %s21, 0
      %p116 = por %p114, %p115
      %s118 = sadd.s32 %s117, 1
      %p121 = scmp.eq.s32.totalorder %s15, 2
      %p122 = scmp.ne.s32.totalorder %s117, %s119
      %p123 = scmp.eq.s32.totalorder %s15, 0
      %p124 = por %p122, %p123
      %p125 = scmp.ne.s32.totalorder %s117, %s119
      %p126 = scmp.eq.s32.totalorder %s20, 2
      %p127 = por %p125, %p126
      %p128 = scmp.ne.s32.totalorder %s119, %s120
      %p129 = scmp.eq.s32.totalorder %s20, 0
      %p130 = por %p128, %p129
      %p131 = scmp.ne.s32.totalorder %s119, %s120
      %p132 = scmp.eq.s32.totalorder %s21, 2
      %p133 = por %p131, %p132
      %p135 = scmp.ne.s32.totalorder %s120, %s134
      %p136 = scmp.eq.s32.totalorder %s21, 0
      %p137 = por %p135, %p136
      %s139 = sadd.s32 %s138, 1
      %p142 = scmp.eq.s32.totalorder %s15, 2
      %p143 = scmp.ne.s32.totalorder %s138, %s140
      %p144 = scmp.eq.s32.totalorder %s15, 0
      %p145 = por %p143, %p144
      %p146 = scmp.ne.s32.totalorder %s138, %s140
      %p147 = scmp.eq.s32.totalorder %s20, 2
      %p148 = por %p146, %p147
      %p149 = scmp.ne.s32.totalorder %s140, %s141
      %p150 = scmp.eq.s32.totalorder %s20, 0
      %p151 = por %p149, %p150
      %p152 = scmp.ne.s32.totalorder %s140, %s141
      %p153 = scmp.eq.s32.totalorder %s21, 2
      %p154 = por %p152, %p153
      %p156 = scmp.ne.s32.totalorder %s141, %s155
      %p157 = scmp.eq.s32.totalorder %s21, 0
      %p158 = por %p156, %p157
      %s160 = sadd.s32 %s159, 1
      %p163 = scmp.eq.s32.totalorder %s15, 2
      %p164 = scmp.ne.s32.totalorder %s159, %s161
      %p165 = scmp.eq.s32.totalorder %s15, 0
      %p166 = por %p164, %p165
      %p167 = scmp.ne.s32.totalorder %s159, %s161
      %p168 = scmp.eq.s32.totalorder %s20, 2
      %p169 = por %p167, %p168
      %p170 = scmp.ne.s32.totalorder %s161, %s162
      %p171 = scmp.eq.s32.totalorder %s20, 0
      %p172 = por %p170, %p171
      %p173 = scmp.ne.s32.totalorder %s161, %s162
      %p174 = scmp.eq.s32.totalorder %s21, 2
      %p175 = por %p173, %p174
      %p177 = scmp.ne.s32.totalorder %s162, %s176
      %p178 = scmp.eq.s32.totalorder %s21, 0
      %p179 = por %p177, %p178
      %p180 = scmp.le.s32.totalorder 1, %s15
      %p181 = scmp.lt.s32.totalorder %s15, 4
      %p182 = pnand %p180, %p181
      %p183 = pneg %p182
      // Predicated region
      $region9: #{tpu_custom_call.1} parent=5 // pred_check
        _
      $region10: #{tpu_custom_call.1} parent=5 // pred_check_branch
        %185 = sbr.rel (%p182) target = $region12
      $region11: #{tpu_custom_call.1} parent=5 // pred_region
        %s186 = ssub.s32 %s15, 1
        // Predicated region
        $region13: #{tpu_custom_call.1} parent=11 // pred_check
          %p187 = pneg %p88
        $region14: #{tpu_custom_call.1} parent=11 // pred_check_branch
          %189 = sbr.rel (%p187) target = $region16
        $region15: #{tpu_custom_call.1} parent=11 // pred_region
          _
        $region16: #{tpu_custom_call.1} parent=11 // pred_fallthru
          _
        // Predicated region
        $region17: #{tpu_custom_call.1} parent=11 // pred_check
          %p190 = pneg %p109
        $region18: #{tpu_custom_call.1} parent=11 // pred_check_branch
          %192 = sbr.rel (%p190) target = $region20
        $region19: #{tpu_custom_call.1} parent=11 // pred_region
          _
        $region20: #{tpu_custom_call.1} parent=11 // pred_fallthru
          _
        // Predicated region
        $region21: #{tpu_custom_call.1} parent=11 // pred_check
          %p193 = pneg %p130
        $region22: #{tpu_custom_call.1} parent=11 // pred_check_branch
          %195 = sbr.rel (%p193) target = $region24
        $region23: #{tpu_custom_call.1} parent=11 // pred_region
          _
        $region24: #{tpu_custom_call.1} parent=11 // pred_fallthru
          _
        // Predicated region
        $region25: #{tpu_custom_call.1} parent=11 // pred_check
          %p196 = pneg %p151
        $region26: #{tpu_custom_call.1} parent=11 // pred_check_branch
          %198 = sbr.rel (%p196) target = $region28
        $region27: #{tpu_custom_call.1} parent=11 // pred_region
          _
        $region28: #{tpu_custom_call.1} parent=11 // pred_fallthru
          _
      $region12: #{tpu_custom_call.1} parent=5 // pred_fallthru
        _
      %p199 = scmp.lt.s32.totalorder %s15, 3
      // Predicated region
      $region29: #{tpu_custom_call.1} parent=5 // pred_check
        %p200 = pneg %p199
      $region30: #{tpu_custom_call.1} parent=5 // pred_check_branch
        %202 = sbr.rel (%p200) target = $region32
      $region31: #{tpu_custom_call.1} parent=5 // pred_region
        // Predicated region
        $region33: #{tpu_custom_call.1} parent=31 // pred_check
          %p203 = pneg %p35
        $region34: #{tpu_custom_call.1} parent=31 // pred_check_branch
          %205 = sbr.rel (%p203) target = $region36
        $region35: #{tpu_custom_call.1} parent=31 // pred_region
          %s206 = smul.u32 128, %s15
          %p207 = scmp.lt.s32.totalorder %s206, 383
          %s208 = scalar_select %p207, %s206, 383
          %s209 = smul.addr %s208, 4
          %s210 = scalar_lea.vmem %s1, %s209
          %s211 = smul.u32 128, %s15
        $region36: #{tpu_custom_call.1} parent=31 // pred_fallthru
          _
        // Predicated region
        $region37: #{tpu_custom_call.1} parent=31 // pred_check
          %p212 = pneg %p61
        $region38: #{tpu_custom_call.1} parent=31 // pred_check_branch
          %214 = sbr.rel (%p212) target = $region40
        $region39: #{tpu_custom_call.1} parent=31 // pred_region
          %s215 = smul.u32 128, %s15
          %p216 = scmp.lt.s32.totalorder %s215, 383
          %s217 = scalar_select %p216, %s215, 383
          %s218 = smul.addr %s217, 8
          %s219 = scalar_lea.vmem %s2, %s218
          %s220 = smul.u32 128, %s15
        $region40: #{tpu_custom_call.1} parent=31 // pred_fallthru
          _
      $region32: #{tpu_custom_call.1} parent=5 // pred_fallthru
        _
      %p221 = scmp.le.s32.totalorder 1, %s15
      %p222 = scmp.lt.s32.totalorder %s15, 4
      %p223 = pnand %p221, %p222
      %p224 = pneg %p223
      // Predicated region
      $region41: #{tpu_custom_call.1} parent=5 // pred_check
        _
      $region42: #{tpu_custom_call.1} parent=5 // pred_check_branch
        %226 = sbr.rel (%p223) target = $region44
      $region43: #{tpu_custom_call.1} parent=5 // pred_region
        %s227 = ssub.s32 %s15, 1
        %s228 = smul.u32 128, %s20
        %p229 = scmp.lt.s32.totalorder %s228, 383
        %s230 = scalar_select %p229, %s228, 383
        %s231 = smul.addr %s230, 4
        %s232 = scalar_lea.vmem %s1, %s231
        %p233 = pneg %p41
        %p234 = pneg %p38
        %s235 = smul.u32 128, %s20
        %p236 = scmp.lt.s32.totalorder %s235, 383
        %s237 = scalar_select %p236, %s235, 383
        %s238 = smul.addr %s237, 8
        %s239 = scalar_lea.vmem %s2, %s238
        %p240 = pneg %p67
        %p241 = pneg %p64
        %p242 = pneg %p88
        %p243 = pneg %p85
        %p244 = pneg %p109
        %p245 = pneg %p106
        %p246 = pneg %p130
        %p247 = pneg %p127
        %p248 = pneg %p151
        %p249 = pneg %p148
        %p250 = pneg %p172
        %p251 = pneg %p169
        %s252 = smul.u32 128, %s20
        %p253 = scmp.lt.s32.totalorder %s252, 383
        %s254 = scalar_select %p253, %s252, 383
        %s255 = smul.addr %s254, 4
        %s256 = scalar_lea.vmem %s1, %s255
        %s257 = smul.u32 128, %s20
        %s258 = smul.u32 128, %s20
        %p259 = scmp.lt.s32.totalorder %s258, 383
        %s260 = scalar_select %p259, %s258, 383
        %s261 = smul.addr %s260, 8
        %s262 = scalar_lea.vmem %s2, %s261
        %s263 = smul.u32 128, %s20
        %s265 = sld [smem:[#allocation3]]
        %v266 = vld [vmem:[%s256] sm:$0xf]
        %v267 = vld [vmem:[%s256 + $0x4] sm:$0xf]
        %v268 = vld [vmem:[%s256 + $0x8] sm:$0xf]
        %v269 = vld [vmem:[%s256 + $0xc] sm:$0xf]
        %v270 = vld [vmem:[%s256 + $0x10] sm:$0xf]
        %v271 = vld [vmem:[%s256 + $0x14] sm:$0xf]
        %v272 = vld [vmem:[%s256 + $0x18] sm:$0xf]
        %v273 = vld [vmem:[%s256 + $0x1c] sm:$0xf]
        %v274 = vld [vmem:[%s256 + $0x20] sm:$0xf]
        %v275 = vld [vmem:[%s256 + $0x24] sm:$0xf]
        %v276 = vld [vmem:[%s256 + $0x28] sm:$0xf]
        %v277 = vld [vmem:[%s256 + $0x2c] sm:$0xf]
        %v278 = vld [vmem:[%s256 + $0x30] sm:$0xf]
        %v279 = vld [vmem:[%s256 + $0x34] sm:$0xf]
        %v280 = vld [vmem:[%s256 + $0x38] sm:$0xf]
        %v281 = vld [vmem:[%s256 + $0x3c] sm:$0xf]
        %v282 = vld [vmem:[%s256 + $0x40] sm:$0xf]
        %v283 = vld [vmem:[%s256 + $0x44] sm:$0xf]
        %v284 = vld [vmem:[%s256 + $0x48] sm:$0xf]
        %v285 = vld [vmem:[%s256 + $0x4c] sm:$0xf]
        %v286 = vld [vmem:[%s256 + $0x50] sm:$0xf]
        %v287 = vld [vmem:[%s256 + $0x54] sm:$0xf]
        %v288 = vld [vmem:[%s256 + $0x58] sm:$0xf]
        %v289 = vld [vmem:[%s256 + $0x5c] sm:$0xf]
        %v290 = vld [vmem:[%s256 + $0x60] sm:$0xf]
        %v291 = vld [vmem:[%s256 + $0x64] sm:$0xf]
        %v292 = vld [vmem:[%s256 + $0x68] sm:$0xf]
        %v293 = vld [vmem:[%s256 + $0x6c] sm:$0xf]
        %v294 = vld [vmem:[%s256 + $0x70] sm:$0xf]
        %v295 = vld [vmem:[%s256 + $0x74] sm:$0xf]
        %v296 = vld [vmem:[%s256 + $0x78] sm:$0xf]
        %v297 = vld [vmem:[%s256 + $0x7c] sm:$0xf]
        %v298 = vld [vmem:[%s256 + $0x80] sm:$0xf]
        %v299 = vld [vmem:[%s256 + $0x84] sm:$0xf]
        %v300 = vld [vmem:[%s256 + $0x88] sm:$0xf]
        %v301 = vld [vmem:[%s256 + $0x8c] sm:$0xf]
        %v302 = vld [vmem:[%s256 + $0x90] sm:$0xf]
        %v303 = vld [vmem:[%s256 + $0x94] sm:$0xf]
        %v304 = vld [vmem:[%s256 + $0x98] sm:$0xf]
        %v305 = vld [vmem:[%s256 + $0x9c] sm:$0xf]
        %v306 = vld [vmem:[%s256 + $0xa0] sm:$0xf]
        %v307 = vld [vmem:[%s256 + $0xa4] sm:$0xf]
        %v308 = vld [vmem:[%s256 + $0xa8] sm:$0xf]
        %v309 = vld [vmem:[%s256 + $0xac] sm:$0xf]
        %v310 = vld [vmem:[%s256 + $0xb0] sm:$0xf]
        %v311 = vld [vmem:[%s256 + $0xb4] sm:$0xf]
        %v312 = vld [vmem:[%s256 + $0xb8] sm:$0xf]
        %v313 = vld [vmem:[%s256 + $0xbc] sm:$0xf]
        %v314 = vld [vmem:[%s256 + $0xc0] sm:$0xf]
        %v315 = vld [vmem:[%s256 + $0xc4] sm:$0xf]
        %v316 = vld [vmem:[%s256 + $0xc8] sm:$0xf]
        %v317 = vld [vmem:[%s256 + $0xcc] sm:$0xf]
        %v318 = vld [vmem:[%s256 + $0xd0] sm:$0xf]
        %v319 = vld [vmem:[%s256 + $0xd4] sm:$0xf]
        %v320 = vld [vmem:[%s256 + $0xd8] sm:$0xf]
        %v321 = vld [vmem:[%s256 + $0xdc] sm:$0xf]
        %v322 = vld [vmem:[%s256 + $0xe0] sm:$0xf]
        %v323 = vld [vmem:[%s256 + $0xe4] sm:$0xf]
        %v324 = vld [vmem:[%s256 + $0xe8] sm:$0xf]
        %v325 = vld [vmem:[%s256 + $0xec] sm:$0xf]
        %v326 = vld [vmem:[%s256 + $0xf0] sm:$0xf]
        %v327 = vld [vmem:[%s256 + $0xf4] sm:$0xf]
        %v328 = vld [vmem:[%s256 + $0xf8] sm:$0xf]
        %v329 = vld [vmem:[%s256 + $0xfc] sm:$0xf]
        %v330 = vld [vmem:[%s256 + $0x100] sm:$0xf]
        %v331 = vld [vmem:[%s256 + $0x104] sm:$0xf]
        %v332 = vld [vmem:[%s256 + $0x108] sm:$0xf]
        %v333 = vld [vmem:[%s256 + $0x10c] sm:$0xf]
        %v334 = vld [vmem:[%s256 + $0x110] sm:$0xf]
        %v335 = vld [vmem:[%s256 + $0x114] sm:$0xf]
        %v336 = vld [vmem:[%s256 + $0x118] sm:$0xf]
        %v337 = vld [vmem:[%s256 + $0x11c] sm:$0xf]
        %v338 = vld [vmem:[%s256 + $0x120] sm:$0xf]
        %v339 = vld [vmem:[%s256 + $0x124] sm:$0xf]
        %v340 = vld [vmem:[%s256 + $0x128] sm:$0xf]
        %v341 = vld [vmem:[%s256 + $0x12c] sm:$0xf]
        %v342 = vld [vmem:[%s256 + $0x130] sm:$0xf]
        %v343 = vld [vmem:[%s256 + $0x134] sm:$0xf]
        %v344 = vld [vmem:[%s256 + $0x138] sm:$0xf]
        %v345 = vld [vmem:[%s256 + $0x13c] sm:$0xf]
        %v346 = vld [vmem:[%s256 + $0x140] sm:$0xf]
        %v347 = vld [vmem:[%s256 + $0x144] sm:$0xf]
        %v348 = vld [vmem:[%s256 + $0x148] sm:$0xf]
        %v349 = vld [vmem:[%s256 + $0x14c] sm:$0xf]
        %v350 = vld [vmem:[%s256 + $0x150] sm:$0xf]
        %v351 = vld [vmem:[%s256 + $0x154] sm:$0xf]
        %v352 = vld [vmem:[%s256 + $0x158] sm:$0xf]
        %v353 = vld [vmem:[%s256 + $0x15c] sm:$0xf]
        %v354 = vld [vmem:[%s256 + $0x160] sm:$0xf]
        %v355 = vld [vmem:[%s256 + $0x164] sm:$0xf]
        %v356 = vld [vmem:[%s256 + $0x168] sm:$0xf]
        %v357 = vld [vmem:[%s256 + $0x16c] sm:$0xf]
        %v358 = vld [vmem:[%s256 + $0x170] sm:$0xf]
        %v359 = vld [vmem:[%s256 + $0x174] sm:$0xf]
        %v360 = vld [vmem:[%s256 + $0x178] sm:$0xf]
        %v361 = vld [vmem:[%s256 + $0x17c] sm:$0xf]
        %v362 = vld [vmem:[%s256 + $0x180] sm:$0xf]
        %v363 = vld [vmem:[%s256 + $0x184] sm:$0xf]
        %v364 = vld [vmem:[%s256 + $0x188] sm:$0xf]
        %v365 = vld [vmem:[%s256 + $0x18c] sm:$0xf]
        %v366 = vld [vmem:[%s256 + $0x190] sm:$0xf]
        %v367 = vld [vmem:[%s256 + $0x194] sm:$0xf]
        %v368 = vld [vmem:[%s256 + $0x198] sm:$0xf]
        %v369 = vld [vmem:[%s256 + $0x19c] sm:$0xf]
        %v370 = vld [vmem:[%s256 + $0x1a0] sm:$0xf]
        %v371 = vld [vmem:[%s256 + $0x1a4] sm:$0xf]
        %v372 = vld [vmem:[%s256 + $0x1a8] sm:$0xf]
        %v373 = vld [vmem:[%s256 + $0x1ac] sm:$0xf]
        %v374 = vld [vmem:[%s256 + $0x1b0] sm:$0xf]
        %v375 = vld [vmem:[%s256 + $0x1b4] sm:$0xf]
        %v376 = vld [vmem:[%s256 + $0x1b8] sm:$0xf]
        %v377 = vld [vmem:[%s256 + $0x1bc] sm:$0xf]
        %v378 = vld [vmem:[%s256 + $0x1c0] sm:$0xf]
        %v379 = vld [vmem:[%s256 + $0x1c4] sm:$0xf]
        %v380 = vld [vmem:[%s256 + $0x1c8] sm:$0xf]
        %v381 = vld [vmem:[%s256 + $0x1cc] sm:$0xf]
        %v382 = vld [vmem:[%s256 + $0x1d0] sm:$0xf]
        %v383 = vld [vmem:[%s256 + $0x1d4] sm:$0xf]
        %v384 = vld [vmem:[%s256 + $0x1d8] sm:$0xf]
        %v385 = vld [vmem:[%s256 + $0x1dc] sm:$0xf]
        %v386 = vld [vmem:[%s256 + $0x1e0] sm:$0xf]
        %v387 = vld [vmem:[%s256 + $0x1e4] sm:$0xf]
        %v388 = vld [vmem:[%s256 + $0x1e8] sm:$0xf]
        %v389 = vld [vmem:[%s256 + $0x1ec] sm:$0xf]
        %v390 = vld [vmem:[%s256 + $0x1f0] sm:$0xf]
        %v391 = vld [vmem:[%s256 + $0x1f4] sm:$0xf]
        %v392 = vld [vmem:[%s256 + $0x1f8] sm:$0xf]
        %v393 = vld [vmem:[%s256 + $0x1fc] sm:$0xf]
        %v394 = vld [vmem:[%s3] sm:$0xf]
        %v395 = vld [vmem:[%s3 + $0x4] sm:$0xf]
        %v396 = vld [vmem:[%s4] sm:$0x1]
        %v398 = vlaneseq
        %v399 = vshrl.u32 %v398, 7
        %v400 = vsub.s32 0, %v399
        %v401 = vrot.slane %v396, %v400
        %v531 = vunpack.c.l.b16 %v266
        %v532 = vunpack.c.l.b16 %v267
        %v533 = vunpack.c.l.b16 %v268
        %v534 = vunpack.c.l.b16 %v269
        %v535 = vunpack.c.l.b16 %v270
        %v536 = vunpack.c.l.b16 %v271
        %v537 = vunpack.c.l.b16 %v272
        %v538 = vunpack.c.l.b16 %v273
        %v539 = vunpack.c.l.b16 %v274
        %v540 = vunpack.c.l.b16 %v275
        %v541 = vunpack.c.l.b16 %v276
        %v542 = vunpack.c.l.b16 %v277
        %v543 = vunpack.c.l.b16 %v278
        %v544 = vunpack.c.l.b16 %v279
        %v545 = vunpack.c.l.b16 %v280
        %v546 = vunpack.c.l.b16 %v281
        %v547 = vunpack.c.l.b16 %v282
        %v548 = vunpack.c.l.b16 %v283
        %v549 = vunpack.c.l.b16 %v284
        %v550 = vunpack.c.l.b16 %v285
        %v551 = vunpack.c.l.b16 %v286
        %v552 = vunpack.c.l.b16 %v287
        %v553 = vunpack.c.l.b16 %v288
        %v554 = vunpack.c.l.b16 %v289
        %v555 = vunpack.c.l.b16 %v290
        %v556 = vunpack.c.l.b16 %v291
        %v557 = vunpack.c.l.b16 %v292
        %v558 = vunpack.c.l.b16 %v293
        %v559 = vunpack.c.l.b16 %v294
        %v560 = vunpack.c.l.b16 %v295
        %v561 = vunpack.c.l.b16 %v296
        %v562 = vunpack.c.l.b16 %v297
        %v563 = vunpack.c.l.b16 %v298
        %v564 = vunpack.c.l.b16 %v299
        %v565 = vunpack.c.l.b16 %v300
        %v566 = vunpack.c.l.b16 %v301
        %v567 = vunpack.c.l.b16 %v302
        %v568 = vunpack.c.l.b16 %v303
        %v569 = vunpack.c.l.b16 %v304
        %v570 = vunpack.c.l.b16 %v305
        %v571 = vunpack.c.l.b16 %v306
        %v572 = vunpack.c.l.b16 %v307
        %v573 = vunpack.c.l.b16 %v308
        %v574 = vunpack.c.l.b16 %v309
        %v575 = vunpack.c.l.b16 %v310
        %v576 = vunpack.c.l.b16 %v311
        %v577 = vunpack.c.l.b16 %v312
        %v578 = vunpack.c.l.b16 %v313
        %v579 = vunpack.c.l.b16 %v314
        %v580 = vunpack.c.l.b16 %v315
        %v581 = vunpack.c.l.b16 %v316
        %v582 = vunpack.c.l.b16 %v317
        %v583 = vunpack.c.l.b16 %v318
        %v584 = vunpack.c.l.b16 %v319
        %v585 = vunpack.c.l.b16 %v320
        %v586 = vunpack.c.l.b16 %v321
        %v587 = vunpack.c.l.b16 %v322
        %v588 = vunpack.c.l.b16 %v323
        %v589 = vunpack.c.l.b16 %v324
        %v590 = vunpack.c.l.b16 %v325
        %v591 = vunpack.c.l.b16 %v326
        %v592 = vunpack.c.l.b16 %v327
        %v593 = vunpack.c.l.b16 %v328
        %v594 = vunpack.c.l.b16 %v329
        %v595 = vunpack.c.l.b16 %v330
        %v596 = vunpack.c.l.b16 %v331
        %v597 = vunpack.c.l.b16 %v332
        %v598 = vunpack.c.l.b16 %v333
        %v599 = vunpack.c.l.b16 %v334
        %v600 = vunpack.c.l.b16 %v335
        %v601 = vunpack.c.l.b16 %v336
        %v602 = vunpack.c.l.b16 %v337
        %v603 = vunpack.c.l.b16 %v338
        %v604 = vunpack.c.l.b16 %v339
        %v605 = vunpack.c.l.b16 %v340
        %v606 = vunpack.c.l.b16 %v341
        %v607 = vunpack.c.l.b16 %v342
        %v608 = vunpack.c.l.b16 %v343
        %v609 = vunpack.c.l.b16 %v344
        %v610 = vunpack.c.l.b16 %v345
        %v611 = vunpack.c.l.b16 %v346
        %v612 = vunpack.c.l.b16 %v347
        %v613 = vunpack.c.l.b16 %v348
        %v614 = vunpack.c.l.b16 %v349
        %v615 = vunpack.c.l.b16 %v350
        %v616 = vunpack.c.l.b16 %v351
        %v617 = vunpack.c.l.b16 %v352
        %v618 = vunpack.c.l.b16 %v353
        %v619 = vunpack.c.l.b16 %v354
        %v620 = vunpack.c.l.b16 %v355
        %v621 = vunpack.c.l.b16 %v356
        %v622 = vunpack.c.l.b16 %v357
        %v623 = vunpack.c.l.b16 %v358
        %v624 = vunpack.c.l.b16 %v359
        %v625 = vunpack.c.l.b16 %v360
        %v626 = vunpack.c.l.b16 %v361
        %v627 = vunpack.c.l.b16 %v362
        %v628 = vunpack.c.l.b16 %v363
        %v629 = vunpack.c.l.b16 %v364
        %v630 = vunpack.c.l.b16 %v365
        %v631 = vunpack.c.l.b16 %v366
        %v632 = vunpack.c.l.b16 %v367
        %v633 = vunpack.c.l.b16 %v368
        %v634 = vunpack.c.l.b16 %v369
        %v635 = vunpack.c.l.b16 %v370
        %v636 = vunpack.c.l.b16 %v371
        %v637 = vunpack.c.l.b16 %v372
        %v638 = vunpack.c.l.b16 %v373
        %v639 = vunpack.c.l.b16 %v374
        %v640 = vunpack.c.l.b16 %v375
        %v641 = vunpack.c.l.b16 %v376
        %v642 = vunpack.c.l.b16 %v377
        %v643 = vunpack.c.l.b16 %v378
        %v644 = vunpack.c.l.b16 %v379
        %v645 = vunpack.c.l.b16 %v380
        %v646 = vunpack.c.l.b16 %v381
        %v647 = vunpack.c.l.b16 %v382
        %v648 = vunpack.c.l.b16 %v383
        %v649 = vunpack.c.l.b16 %v384
        %v650 = vunpack.c.l.b16 %v385
        %v651 = vunpack.c.l.b16 %v386
        %v652 = vunpack.c.l.b16 %v387
        %v653 = vunpack.c.l.b16 %v388
        %v654 = vunpack.c.l.b16 %v389
        %v655 = vunpack.c.l.b16 %v390
        %v656 = vunpack.c.l.b16 %v391
        %v657 = vunpack.c.l.b16 %v392
        %v658 = vunpack.c.l.b16 %v393
        %v659 = vpack.c.b16 %v532, %v531
        %v660 = vpack.c.b16 %v534, %v533
        %v661 = vpack.c.b16 %v536, %v535
        %v662 = vpack.c.b16 %v538, %v537
        %v663 = vpack.c.b16 %v540, %v539
        %v664 = vpack.c.b16 %v542, %v541
        %v665 = vpack.c.b16 %v544, %v543
        %v666 = vpack.c.b16 %v546, %v545
        %v667 = vpack.c.b16 %v548, %v547
        %v668 = vpack.c.b16 %v550, %v549
        %v669 = vpack.c.b16 %v552, %v551
        %v670 = vpack.c.b16 %v554, %v553
        %v671 = vpack.c.b16 %v556, %v555
        %v672 = vpack.c.b16 %v558, %v557
        %v673 = vpack.c.b16 %v560, %v559
        %v674 = vpack.c.b16 %v562, %v561
        %v675 = vpack.c.b16 %v564, %v563
        %v676 = vpack.c.b16 %v566, %v565
        %v677 = vpack.c.b16 %v568, %v567
        %v678 = vpack.c.b16 %v570, %v569
        %v679 = vpack.c.b16 %v572, %v571
        %v680 = vpack.c.b16 %v574, %v573
        %v681 = vpack.c.b16 %v576, %v575
        %v682 = vpack.c.b16 %v578, %v577
        %v683 = vpack.c.b16 %v580, %v579
        %v684 = vpack.c.b16 %v582, %v581
        %v685 = vpack.c.b16 %v584, %v583
        %v686 = vpack.c.b16 %v586, %v585
        %v687 = vpack.c.b16 %v588, %v587
        %v688 = vpack.c.b16 %v590, %v589
        %v689 = vpack.c.b16 %v592, %v591
        %v690 = vpack.c.b16 %v594, %v593
        %v691 = vpack.c.b16 %v596, %v595
        %v692 = vpack.c.b16 %v598, %v597
        %v693 = vpack.c.b16 %v600, %v599
        %v694 = vpack.c.b16 %v602, %v601
        %v695 = vpack.c.b16 %v604, %v603
        %v696 = vpack.c.b16 %v606, %v605
        %v697 = vpack.c.b16 %v608, %v607
        %v698 = vpack.c.b16 %v610, %v609
        %v699 = vpack.c.b16 %v612, %v611
        %v700 = vpack.c.b16 %v614, %v613
        %v701 = vpack.c.b16 %v616, %v615
        %v702 = vpack.c.b16 %v618, %v617
        %v703 = vpack.c.b16 %v620, %v619
        %v704 = vpack.c.b16 %v622, %v621
        %v705 = vpack.c.b16 %v624, %v623
        %v706 = vpack.c.b16 %v626, %v625
        %v707 = vpack.c.b16 %v628, %v627
        %v708 = vpack.c.b16 %v630, %v629
        %v709 = vpack.c.b16 %v632, %v631
        %v710 = vpack.c.b16 %v634, %v633
        %v711 = vpack.c.b16 %v636, %v635
        %v712 = vpack.c.b16 %v638, %v637
        %v713 = vpack.c.b16 %v640, %v639
        %v714 = vpack.c.b16 %v642, %v641
        %v715 = vpack.c.b16 %v644, %v643
        %v716 = vpack.c.b16 %v646, %v645
        %v717 = vpack.c.b16 %v648, %v647
        %v718 = vpack.c.b16 %v650, %v649
        %v719 = vpack.c.b16 %v652, %v651
        %v720 = vpack.c.b16 %v654, %v653
        %v721 = vpack.c.b16 %v656, %v655
        %v722 = vpack.c.b16 %v658, %v657
        %v725 = vunpack.c.l.b16 %v394
        %v726 = vunpack.c.l.b16 %v395
        %v727 = vpack.c.b16 %v726, %v725
        %vm729 = vcmask 130048
        %v731 = vsel %vm729, %v659, 0
        %v734 = vsel %vm729, %v660, 0
        %v737 = vsel %vm729, %v661, 0
        %v740 = vsel %vm729, %v662, 0
        %v743 = vsel %vm729, %v663, 0
        %v746 = vsel %vm729, %v664, 0
        %v749 = vsel %vm729, %v665, 0
        %v752 = vsel %vm729, %v666, 0
        %v755 = vsel %vm729, %v667, 0
        %v758 = vsel %vm729, %v668, 0
        %v761 = vsel %vm729, %v669, 0
        %v764 = vsel %vm729, %v670, 0
        %v767 = vsel %vm729, %v671, 0
        %v770 = vsel %vm729, %v672, 0
        %v773 = vsel %vm729, %v673, 0
        %v776 = vsel %vm729, %v674, 0
        %v779 = vsel %vm729, %v675, 0
        %v782 = vsel %vm729, %v676, 0
        %v785 = vsel %vm729, %v677, 0
        %v788 = vsel %vm729, %v678, 0
        %v791 = vsel %vm729, %v679, 0
        %v794 = vsel %vm729, %v680, 0
        %v797 = vsel %vm729, %v681, 0
        %v800 = vsel %vm729, %v682, 0
        %v803 = vsel %vm729, %v683, 0
        %v806 = vsel %vm729, %v684, 0
        %v809 = vsel %vm729, %v685, 0
        %v812 = vsel %vm729, %v686, 0
        %v815 = vsel %vm729, %v687, 0
        %v818 = vsel %vm729, %v688, 0
        %v821 = vsel %vm729, %v689, 0
        %v824 = vsel %vm729, %v690, 0
        %v827 = vsel %vm729, %v691, 0
        %v830 = vsel %vm729, %v692, 0
        %v833 = vsel %vm729, %v693, 0
        %v836 = vsel %vm729, %v694, 0
        %v839 = vsel %vm729, %v695, 0
        %v842 = vsel %vm729, %v696, 0
        %v845 = vsel %vm729, %v697, 0
        %v848 = vsel %vm729, %v698, 0
        %v851 = vsel %vm729, %v699, 0
        %v854 = vsel %vm729, %v700, 0
        %v857 = vsel %vm729, %v701, 0
        %v860 = vsel %vm729, %v702, 0
        %v863 = vsel %vm729, %v703, 0
        %v866 = vsel %vm729, %v704, 0
        %v869 = vsel %vm729, %v705, 0
        %v872 = vsel %vm729, %v706, 0
        %v875 = vsel %vm729, %v707, 0
        %v878 = vsel %vm729, %v708, 0
        %v881 = vsel %vm729, %v709, 0
        %v884 = vsel %vm729, %v710, 0
        %v887 = vsel %vm729, %v711, 0
        %v890 = vsel %vm729, %v712, 0
        %v893 = vsel %vm729, %v713, 0
        %v896 = vsel %vm729, %v714, 0
        %v899 = vsel %vm729, %v715, 0
        %v902 = vsel %vm729, %v716, 0
        %v905 = vsel %vm729, %v717, 0
        %v908 = vsel %vm729, %v718, 0
        %v911 = vsel %vm729, %v719, 0
        %v914 = vsel %vm729, %v720, 0
        %v917 = vsel %vm729, %v721, 0
        %v920 = vsel %vm729, %v722, 0
        %922 = vmatprep.subr.bf16.mxu0 0
        %923 = vmatpush1.bf16.msra.mxu0 %v727
        %924 = vmatprep.subr.bf16.mxu0 0
        %925 = vmatpush1.bf16.msra.mxu0 0
        %926 = vmatprep.subr.bf16.mxu0 0
        %927 = vmatpush1.bf16.msra.mxu0 0
        %928 = vmatprep.subr.bf16.mxu0 0
        %929 = vmatpush1.bf16.msra.mxu0 0
        %930 = vmatprep.subr.bf16.mxu0 0
        %931 = vmatpush1.bf16.msra.mxu0 0
        %932 = vmatprep.subr.bf16.mxu0 0
        %933 = vmatpush1.bf16.msra.mxu0 0
        %934 = vmatprep.subr.bf16.mxu0 0
        %935 = vmatpush1.bf16.msra.mxu0 0
        %936 = vmatprep.subr.bf16.mxu0 0
        %937 = vmatpush1.bf16.msra.mxu0 0
        %938 = vmatprep.subr.bf16.mxu0 0
        %939 = vmatpush1.bf16.msra.mxu0 0
        %940 = vmatprep.subr.bf16.mxu0 0
        %941 = vmatpush1.bf16.msra.mxu0 0
        %942 = vmatprep.subr.bf16.mxu0 0
        %943 = vmatpush1.bf16.msra.mxu0 0
        %944 = vmatprep.subr.bf16.mxu0 0
        %945 = vmatpush1.bf16.msra.mxu0 0
        %946 = vmatprep.subr.bf16.mxu0 0
        %947 = vmatpush1.bf16.msra.mxu0 0
        %948 = vmatprep.subr.bf16.mxu0 0
        %949 = vmatpush1.bf16.msra.mxu0 0
        %950 = vmatprep.subr.bf16.mxu0 0
        %951 = vmatpush1.bf16.msra.mxu0 0
        %952 = vmatprep.subr.bf16.mxu0 0
        %953 = vmatpush1.bf16.msra.mxu0 0
        %954 = vmatprep.mubr.bf16.mxu0 0
        %955 = vmatmul.mubr.bf16.gmra.mrb[0].mxu0 %v731
        %v956 = vpop.f32.mrb[0].mxu0
        %v957 = vadd.f32 %v401, %v956
        %v958 = vpop.f32.mrb[0].mxu0
        %v959 = vpop.f32.mrb[0].mxu0
        %v960 = vadd.f32 %v401, %v959
        %v961 = vpop.f32.mrb[0].mxu0
        %962 = vmatprep.mubr.bf16.mxu0 0
        %963 = vmatmul.mubr.bf16.gmra.mrb[0].mxu0 %v734
        %v964 = vpop.f32.mrb[0].mxu0
        %v965 = vadd.f32 %v401, %v964
        %v966 = vpop.f32.mrb[0].mxu0
        %v967 = vpop.f32.mrb[0].mxu0
        %v968 = vadd.f32 %v401, %v967
        %v969 = vpop.f32.mrb[0].mxu0
        %970 = vmatprep.mubr.bf16.mxu0 0
        %971 = vmatmul.mubr.bf16.gmra.mrb[0].mxu0 %v737
        %v972 = vpop.f32.mrb[0].mxu0
        %v973 = vadd.f32 %v401, %v972
        %v974 = vpop.f32.mrb[0].mxu0
        %v975 = vpop.f32.mrb[0].mxu0
        %v976 = vadd.f32 %v401, %v975
        %v977 = vpop.f32.mrb[0].mxu0
        %978 = vmatprep.mubr.bf16.mxu0 0
        %979 = vmatmul.mubr.bf16.gmra.mrb[0].mxu0 %v740
        %v980 = vpop.f32.mrb[0].mxu0
        %v981 = vadd.f32 %v401, %v980
        %v982 = vpop.f32.mrb[0].mxu0
        %v983 = vpop.f32.mrb[0].mxu0
        %v984 = vadd.f32 %v401, %v983
        %v985 = vpop.f32.mrb[0].mxu0
        %986 = vmatprep.mubr.bf16.mxu0 0
        %987 = vmatmul.mubr.bf16.gmra.mrb[0].mxu0 %v743
        %v988 = vpop.f32.mrb[0].mxu0
        %v989 = vadd.f32 %v401, %v988
        %v990 = vpop.f32.mrb[0].mxu0
        %v991 = vpop.f32.mrb[0].mxu0
        %v992 = vadd.f32 %v401, %v991
        %v993 = vpop.f32.mrb[0].mxu0
        %994 = vmatprep.mubr.bf16.mxu0 0
        %995 = vmatmul.mubr.bf16.gmra.mrb[0].mxu0 %v746
        %v996 = vpop.f32.mrb[0].mxu0
        %v997 = vadd.f32 %v401, %v996
        %v998 = vpop.f32.mrb[0].mxu0
        %v999 = vpop.f32.mrb[0].mxu0
        %v1000 = vadd.f32 %v401, %v999
        %v1001 = vpop.f32.mrb[0].mxu0
        %1002 = vmatprep.mubr.bf16.mxu0 0
        %1003 = vmatmul.mubr.bf16.gmra.mrb[0].mxu0 %v749
        %v1004 = vpop.f32.mrb[0].mxu0
        %v1005 = vadd.f32 %v401, %v1004
        %v1006 = vpop.f32.mrb[0].mxu0
        %v1007 = vpop.f32.mrb[0].mxu0
        %v1008 = vadd.f32 %v401, %v1007
        %v1009 = vpop.f32.mrb[0].mxu0
        %1010 = vmatprep.mubr.bf16.mxu0 0
        %1011 = vmatmul.mubr.bf16.gmra.mrb[0].mxu0 %v752
        %v1012 = vpop.f32.mrb[0].mxu0
        %v1013 = vadd.f32 %v401, %v1012
        %v1014 = vpop.f32.mrb[0].mxu0
        %v1015 = vpop.f32.mrb[0].mxu0
        %v1016 = vadd.f32 %v401, %v1015
        %v1017 = vpop.f32.mrb[0].mxu0
        %1018 = vmatprep.mubr.bf16.mxu0 0
        %1019 = vmatmul.mubr.bf16.gmra.mrb[0].mxu0 %v755
        %v1020 = vpop.f32.mrb[0].mxu0
        %v1021 = vadd.f32 %v401, %v1020
        %v1022 = vpop.f32.mrb[0].mxu0
        %v1023 = vpop.f32.mrb[0].mxu0
        %v1024 = vadd.f32 %v401, %v1023
        %v1025 = vpop.f32.mrb[0].mxu0
        %1026 = vmatprep.mubr.bf16.mxu0 0
        %1027 = vmatmul.mubr.bf16.gmra.mrb[0].mxu0 %v758
        %v1028 = vpop.f32.mrb[0].mxu0
        %v1029 = vadd.f32 %v401, %v1028
        %v1030 = vpop.f32.mrb[0].mxu0
        %v1031 = vpop.f32.mrb[0].mxu0
        %v1032 = vadd.f32 %v401, %v1031
        %v1033 = vpop.f32.mrb[0].mxu0
        %1034 = vmatprep.mubr.bf16.mxu0 0
        %1035 = vmatmul.mubr.bf16.gmra.mrb[0].mxu0 %v761
        %v1036 = vpop.f32.mrb[0].mxu0
        %v1037 = vadd.f32 %v401, %v1036
        %v1038 = vpop.f32.mrb[0].mxu0
        %v1039 = vpop.f32.mrb[0].mxu0
        %v1040 = vadd.f32 %v401, %v1039
        %v1041 = vpop.f32.mrb[0].mxu0
        %1042 = vmatprep.mubr.bf16.mxu0 0
        %1043 = vmatmul.mubr.bf16.gmra.mrb[0].mxu0 %v764
        %v1044 = vpop.f32.mrb[0].mxu0
        %v1045 = vadd.f32 %v401, %v1044
        %v1046 = vpop.f32.mrb[0].mxu0
        %v1047 = vpop.f32.mrb[0].mxu0
        %v1048 = vadd.f32 %v401, %v1047
        %v1049 = vpop.f32.mrb[0].mxu0
        %1050 = vmatprep.mubr.bf16.mxu0 0
        %1051 = vmatmul.mubr.bf16.gmra.mrb[0].mxu0 %v767
        %v1052 = vpop.f32.mrb[0].mxu0
        %v1053 = vadd.f32 %v401, %v1052
        %v1054 = vpop.f32.mrb[0].mxu0
        %v1055 = vpop.f32.mrb[0].mxu0
        %v1056 = vadd.f32 %v401, %v1055
        %v1057 = vpop.f32.mrb[0].mxu0
        %1058 = vmatprep.mubr.bf16.mxu0 0
        %1059 = vmatmul.mubr.bf16.gmra.mrb[0].mxu0 %v770
        %v1060 = vpop.f32.mrb[0].mxu0
        %v1061 = vadd.f32 %v401, %v1060
        %v1062 = vpop.f32.mrb[0].mxu0
        %v1063 = vpop.f32.mrb[0].mxu0
        %v1064 = vadd.f32 %v401, %v1063
        %v1065 = vpop.f32.mrb[0].mxu0
        %1066 = vmatprep.mubr.bf16.mxu0 0
        %1067 = vmatmul.mubr.bf16.gmra.mrb[0].mxu0 %v773
        %v1068 = vpop.f32.mrb[0].mxu0
        %v1069 = vadd.f32 %v401, %v1068
        %v1070 = vpop.f32.mrb[0].mxu0
        %v1071 = vpop.f32.mrb[0].mxu0
        %v1072 = vadd.f32 %v401, %v1071
        %v1073 = vpop.f32.mrb[0].mxu0
        %1074 = vmatprep.mubr.bf16.mxu0 0
        %1075 = vmatmul.mubr.bf16.gmra.mrb[0].mxu0 %v776
        %v1076 = vpop.f32.mrb[0].mxu0
        %v1077 = vadd.f32 %v401, %v1076
        %v1078 = vpop.f32.mrb[0].mxu0
        %v1079 = vpop.f32.mrb[0].mxu0
        %v1080 = vadd.f32 %v401, %v1079
        %v1081 = vpop.f32.mrb[0].mxu0
        %1082 = vmatprep.mubr.bf16.mxu0 0
        %1083 = vmatmul.mubr.bf16.gmra.mrb[0].mxu0 %v779
        %v1084 = vpop.f32.mrb[0].mxu0
        %v1085 = vadd.f32 %v401, %v1084
        %v1086 = vpop.f32.mrb[0].mxu0
        %v1087 = vpop.f32.mrb[0].mxu0
        %v1088 = vadd.f32 %v401, %v1087
        %v1089 = vpop.f32.mrb[0].mxu0
        %1090 = vmatprep.mubr.bf16.mxu0 0
        %1091 = vmatmul.mubr.bf16.gmra.mrb[0].mxu0 %v782
        %v1092 = vpop.f32.mrb[0].mxu0
        %v1093 = vadd.f32 %v401, %v1092
        %v1094 = vpop.f32.mrb[0].mxu0
        %v1095 = vpop.f32.mrb[0].mxu0
        %v1096 = vadd.f32 %v401, %v1095
        %v1097 = vpop.f32.mrb[0].mxu0
        %1098 = vmatprep.mubr.bf16.mxu0 0
        %1099 = vmatmul.mubr.bf16.gmra.mrb[0].mxu0 %v785
        %v1100 = vpop.f32.mrb[0].mxu0
        %v1101 = vadd.f32 %v401, %v1100
        %v1102 = vpop.f32.mrb[0].mxu0
        %v1103 = vpop.f32.mrb[0].mxu0
        %v1104 = vadd.f32 %v401, %v1103
        %v1105 = vpop.f32.mrb[0].mxu0
        %1106 = vmatprep.mubr.bf16.mxu0 0
        %1107 = vmatmul.mubr.bf16.gmra.mrb[0].mxu0 %v788
        %v1108 = vpop.f32.mrb[0].mxu0
        %v1109 = vadd.f32 %v401, %v1108
        %v1110 = vpop.f32.mrb[0].mxu0
        %v1111 = vpop.f32.mrb[0].mxu0
        %v1112 = vadd.f32 %v401, %v1111
        %v1113 = vpop.f32.mrb[0].mxu0
        %1114 = vmatprep.mubr.bf16.mxu0 0
        %1115 = vmatmul.mubr.bf16.gmra.mrb[0].mxu0 %v791
        %v1116 = vpop.f32.mrb[0].mxu0
        %v1117 = vadd.f32 %v401, %v1116
        %v1118 = vpop.f32.mrb[0].mxu0
        %v1119 = vpop.f32.mrb[0].mxu0
        %v1120 = vadd.f32 %v401, %v1119
        %v1121 = vpop.f32.mrb[0].mxu0
        %1122 = vmatprep.mubr.bf16.mxu0 0
        %1123 = vmatmul.mubr.bf16.gmra.mrb[0].mxu0 %v794
        %v1124 = vpop.f32.mrb[0].mxu0
        %v1125 = vadd.f32 %v401, %v1124
        %v1126 = vpop.f32.mrb[0].mxu0
        %v1127 = vpop.f32.mrb[0].mxu0
        %v1128 = vadd.f32 %v401, %v1127
        %v1129 = vpop.f32.mrb[0].mxu0
        %1130 = vmatprep.mubr.bf16.mxu0 0
        %1131 = vmatmul.mubr.bf16.gmra.mrb[0].mxu0 %v797
        %v1132 = vpop.f32.mrb[0].mxu0
        %v1133 = vadd.f32 %v401, %v1132
        %v1134 = vpop.f32.mrb[0].mxu0
        %v1135 = vpop.f32.mrb[0].mxu0
        %v1136 = vadd.f32 %v401, %v1135
        %v1137 = vpop.f32.mrb[0].mxu0
        %1138 = vmatprep.mubr.bf16.mxu0 0
        %1139 = vmatmul.mubr.bf16.gmra.mrb[0].mxu0 %v800
        %v1140 = vpop.f32.mrb[0].mxu0
        %v1141 = vadd.f32 %v401, %v1140
        %v1142 = vpop.f32.mrb[0].mxu0
        %v1143 = vpop.f32.mrb[0].mxu0
        %v1144 = vadd.f32 %v401, %v1143
        %v1145 = vpop.f32.mrb[0].mxu0
        %1146 = vmatprep.mubr.bf16.mxu0 0
        %1147 = vmatmul.mubr.bf16.gmra.mrb[0].mxu0 %v803
        %v1148 = vpop.f32.mrb[0].mxu0
        %v1149 = vadd.f32 %v401, %v1148
        %v1150 = vpop.f32.mrb[0].mxu0
        %v1151 = vpop.f32.mrb[0].mxu0
        %v1152 = vadd.f32 %v401, %v1151
        %v1153 = vpop.f32.mrb[0].mxu0
        %1154 = vmatprep.mubr.bf16.mxu0 0
        %1155 = vmatmul.mubr.bf16.gmra.mrb[0].mxu0 %v806
        %v1156 = vpop.f32.mrb[0].mxu0
        %v1157 = vadd.f32 %v401, %v1156
        %v1158 = vpop.f32.mrb[0].mxu0
        %v1159 = vpop.f32.mrb[0].mxu0
        %v1160 = vadd.f32 %v401, %v1159
        %v1161 = vpop.f32.mrb[0].mxu0
        %1162 = vmatprep.mubr.bf16.mxu0 0
        %1163 = vmatmul.mubr.bf16.gmra.mrb[0].mxu0 %v809
        %v1164 = vpop.f32.mrb[0].mxu0
        %v1165 = vadd.f32 %v401, %v1164
        %v1166 = vpop.f32.mrb[0].mxu0
        %v1167 = vpop.f32.mrb[0].mxu0
        %v1168 = vadd.f32 %v401, %v1167
        %v1169 = vpop.f32.mrb[0].mxu0
        %1170 = vmatprep.mubr.bf16.mxu0 0
        %1171 = vmatmul.mubr.bf16.gmra.mrb[0].mxu0 %v812
        %v1172 = vpop.f32.mrb[0].mxu0
        %v1173 = vadd.f32 %v401, %v1172
        %v1174 = vpop.f32.mrb[0].mxu0
        %v1175 = vpop.f32.mrb[0].mxu0
        %v1176 = vadd.f32 %v401, %v1175
        %v1177 = vpop.f32.mrb[0].mxu0
        %1178 = vmatprep.mubr.bf16.mxu0 0
        %1179 = vmatmul.mubr.bf16.gmra.mrb[0].mxu0 %v815
        %v1180 = vpop.f32.mrb[0].mxu0
        %v1181 = vadd.f32 %v401, %v1180
        %v1182 = vpop.f32.mrb[0].mxu0
        %v1183 = vpop.f32.mrb[0].mxu0
        %v1184 = vadd.f32 %v401, %v1183
        %v1185 = vpop.f32.mrb[0].mxu0
        %1186 = vmatprep.mubr.bf16.mxu0 0
        %1187 = vmatmul.mubr.bf16.gmra.mrb[0].mxu0 %v818
        %v1188 = vpop.f32.mrb[0].mxu0
        %v1189 = vadd.f32 %v401, %v1188
        %v1190 = vpop.f32.mrb[0].mxu0
        %v1191 = vpop.f32.mrb[0].mxu0
        %v1192 = vadd.f32 %v401, %v1191
        %v1193 = vpop.f32.mrb[0].mxu0
        %1194 = vmatprep.mubr.bf16.mxu0 0
        %1195 = vmatmul.mubr.bf16.gmra.mrb[0].mxu0 %v821
        %v1196 = vpop.f32.mrb[0].mxu0
        %v1197 = vadd.f32 %v401, %v1196
        %v1198 = vpop.f32.mrb[0].mxu0
        %v1199 = vpop.f32.mrb[0].mxu0
        %v1200 = vadd.f32 %v401, %v1199
        %v1201 = vpop.f32.mrb[0].mxu0
        %1202 = vmatprep.mubr.bf16.mxu0 0
        %1203 = vmatmul.mubr.bf16.gmra.mrb[0].mxu0 %v824
        %v1204 = vpop.f32.mrb[0].mxu0
        %v1205 = vadd.f32 %v401, %v1204
        %v1206 = vpop.f32.mrb[0].mxu0
        %v1207 = vpop.f32.mrb[0].mxu0
        %v1208 = vadd.f32 %v401, %v1207
        %v1209 = vpop.f32.mrb[0].mxu0
        %1210 = vmatprep.mubr.bf16.mxu0 0
        %1211 = vmatmul.mubr.bf16.gmra.mrb[0].mxu0 %v827
        %v1212 = vpop.f32.mrb[0].mxu0
        %v1213 = vadd.f32 %v401, %v1212
        %v1214 = vpop.f32.mrb[0].mxu0
        %v1215 = vpop.f32.mrb[0].mxu0
        %v1216 = vadd.f32 %v401, %v1215
        %v1217 = vpop.f32.mrb[0].mxu0
        %1218 = vmatprep.mubr.bf16.mxu0 0
        %1219 = vmatmul.mubr.bf16.gmra.mrb[0].mxu0 %v830
        %v1220 = vpop.f32.mrb[0].mxu0
        %v1221 = vadd.f32 %v401, %v1220
        %v1222 = vpop.f32.mrb[0].mxu0
        %v1223 = vpop.f32.mrb[0].mxu0
        %v1224 = vadd.f32 %v401, %v1223
        %v1225 = vpop.f32.mrb[0].mxu0
        %1226 = vmatprep.mubr.bf16.mxu0 0
        %1227 = vmatmul.mubr.bf16.gmra.mrb[0].mxu0 %v833
        %v1228 = vpop.f32.mrb[0].mxu0
        %v1229 = vadd.f32 %v401, %v1228
        %v1230 = vpop.f32.mrb[0].mxu0
        %v1231 = vpop.f32.mrb[0].mxu0
        %v1232 = vadd.f32 %v401, %v1231
        %v1233 = vpop.f32.mrb[0].mxu0
        %1234 = vmatprep.mubr.bf16.mxu0 0
        %1235 = vmatmul.mubr.bf16.gmra.mrb[0].mxu0 %v836
        %v1236 = vpop.f32.mrb[0].mxu0
        %v1237 = vadd.f32 %v401, %v1236
        %v1238 = vpop.f32.mrb[0].mxu0
        %v1239 = vpop.f32.mrb[0].mxu0
        %v1240 = vadd.f32 %v401, %v1239
        %v1241 = vpop.f32.mrb[0].mxu0
        %1242 = vmatprep.mubr.bf16.mxu0 0
        %1243 = vmatmul.mubr.bf16.gmra.mrb[0].mxu0 %v839
        %v1244 = vpop.f32.mrb[0].mxu0
        %v1245 = vadd.f32 %v401, %v1244
        %v1246 = vpop.f32.mrb[0].mxu0
        %v1247 = vpop.f32.mrb[0].mxu0
        %v1248 = vadd.f32 %v401, %v1247
        %v1249 = vpop.f32.mrb[0].mxu0
        %1250 = vmatprep.mubr.bf16.mxu0 0
        %1251 = vmatmul.mubr.bf16.gmra.mrb[0].mxu0 %v842
        %v1252 = vpop.f32.mrb[0].mxu0
        %v1253 = vadd.f32 %v401, %v1252
        %v1254 = vpop.f32.mrb[0].mxu0
        %v1255 = vpop.f32.mrb[0].mxu0
        %v1256 = vadd.f32 %v401, %v1255
        %v1257 = vpop.f32.mrb[0].mxu0
        %1258 = vmatprep.mubr.bf16.mxu0 0
        %1259 = vmatmul.mubr.bf16.gmra.mrb[0].mxu0 %v845
        %v1260 = vpop.f32.mrb[0].mxu0
        %v1261 = vadd.f32 %v401, %v1260
        %v1262 = vpop.f32.mrb[0].mxu0
        %v1263 = vpop.f32.mrb[0].mxu0
        %v1264 = vadd.f32 %v401, %v1263
        %v1265 = vpop.f32.mrb[0].mxu0
        %1266 = vmatprep.mubr.bf16.mxu0 0
        %1267 = vmatmul.mubr.bf16.gmra.mrb[0].mxu0 %v848
        %v1268 = vpop.f32.mrb[0].mxu0
        %v1269 = vadd.f32 %v401, %v1268
        %v1270 = vpop.f32.mrb[0].mxu0
        %v1271 = vpop.f32.mrb[0].mxu0
        %v1272 = vadd.f32 %v401, %v1271
        %v1273 = vpop.f32.mrb[0].mxu0
        %1274 = vmatprep.mubr.bf16.mxu0 0
        %1275 = vmatmul.mubr.bf16.gmra.mrb[0].mxu0 %v851
        %v1276 = vpop.f32.mrb[0].mxu0
        %v1277 = vadd.f32 %v401, %v1276
        %v1278 = vpop.f32.mrb[0].mxu0
        %v1279 = vpop.f32.mrb[0].mxu0
        %v1280 = vadd.f32 %v401, %v1279
        %v1281 = vpop.f32.mrb[0].mxu0
        %1282 = vmatprep.mubr.bf16.mxu0 0
        %1283 = vmatmul.mubr.bf16.gmra.mrb[0].mxu0 %v854
        %v1284 = vpop.f32.mrb[0].mxu0
        %v1285 = vadd.f32 %v401, %v1284
        %v1286 = vpop.f32.mrb[0].mxu0
        %v1287 = vpop.f32.mrb[0].mxu0
        %v1288 = vadd.f32 %v401, %v1287
        %v1289 = vpop.f32.mrb[0].mxu0
        %1290 = vmatprep.mubr.bf16.mxu0 0
        %1291 = vmatmul.mubr.bf16.gmra.mrb[0].mxu0 %v857
        %v1292 = vpop.f32.mrb[0].mxu0
        %v1293 = vadd.f32 %v401, %v1292
        %v1294 = vpop.f32.mrb[0].mxu0
        %v1295 = vpop.f32.mrb[0].mxu0
        %v1296 = vadd.f32 %v401, %v1295
        %v1297 = vpop.f32.mrb[0].mxu0
        %1298 = vmatprep.mubr.bf16.mxu0 0
        %1299 = vmatmul.mubr.bf16.gmra.mrb[0].mxu0 %v860
        %v1300 = vpop.f32.mrb[0].mxu0
        %v1301 = vadd.f32 %v401, %v1300
        %v1302 = vpop.f32.mrb[0].mxu0
        %v1303 = vpop.f32.mrb[0].mxu0
        %v1304 = vadd.f32 %v401, %v1303
        %v1305 = vpop.f32.mrb[0].mxu0
        %1306 = vmatprep.mubr.bf16.mxu0 0
        %1307 = vmatmul.mubr.bf16.gmra.mrb[0].mxu0 %v863
        %v1308 = vpop.f32.mrb[0].mxu0
        %v1309 = vadd.f32 %v401, %v1308
        %v1310 = vpop.f32.mrb[0].mxu0
        %v1311 = vpop.f32.mrb[0].mxu0
        %v1312 = vadd.f32 %v401, %v1311
        %v1313 = vpop.f32.mrb[0].mxu0
        %1314 = vmatprep.mubr.bf16.mxu0 0
        %1315 = vmatmul.mubr.bf16.gmra.mrb[0].mxu0 %v866
        %v1316 = vpop.f32.mrb[0].mxu0
        %v1317 = vadd.f32 %v401, %v1316
        %v1318 = vpop.f32.mrb[0].mxu0
        %v1319 = vpop.f32.mrb[0].mxu0
        %v1320 = vadd.f32 %v401, %v1319
        %v1321 = vpop.f32.mrb[0].mxu0
        %1322 = vmatprep.mubr.bf16.mxu0 0
        %1323 = vmatmul.mubr.bf16.gmra.mrb[0].mxu0 %v869
        %v1324 = vpop.f32.mrb[0].mxu0
        %v1325 = vadd.f32 %v401, %v1324
        %v1326 = vpop.f32.mrb[0].mxu0
        %v1327 = vpop.f32.mrb[0].mxu0
        %v1328 = vadd.f32 %v401, %v1327
        %v1329 = vpop.f32.mrb[0].mxu0
        %1330 = vmatprep.mubr.bf16.mxu0 0
        %1331 = vmatmul.mubr.bf16.gmra.mrb[0].mxu0 %v872
        %v1332 = vpop.f32.mrb[0].mxu0
        %v1333 = vadd.f32 %v401, %v1332
        %v1334 = vpop.f32.mrb[0].mxu0
        %v1335 = vpop.f32.mrb[0].mxu0
        %v1336 = vadd.f32 %v401, %v1335
        %v1337 = vpop.f32.mrb[0].mxu0
        %1338 = vmatprep.mubr.bf16.mxu0 0
        %1339 = vmatmul.mubr.bf16.gmra.mrb[0].mxu0 %v875
        %v1340 = vpop.f32.mrb[0].mxu0
        %v1341 = vadd.f32 %v401, %v1340
        %v1342 = vpop.f32.mrb[0].mxu0
        %v1343 = vpop.f32.mrb[0].mxu0
        %v1344 = vadd.f32 %v401, %v1343
        %v1345 = vpop.f32.mrb[0].mxu0
        %1346 = vmatprep.mubr.bf16.mxu0 0
        %1347 = vmatmul.mubr.bf16.gmra.mrb[0].mxu0 %v878
        %v1348 = vpop.f32.mrb[0].mxu0
        %v1349 = vadd.f32 %v401, %v1348
        %v1350 = vpop.f32.mrb[0].mxu0
        %v1351 = vpop.f32.mrb[0].mxu0
        %v1352 = vadd.f32 %v401, %v1351
        %v1353 = vpop.f32.mrb[0].mxu0
        %1354 = vmatprep.mubr.bf16.mxu0 0
        %1355 = vmatmul.mubr.bf16.gmra.mrb[0].mxu0 %v881
        %v1356 = vpop.f32.mrb[0].mxu0
        %v1357 = vadd.f32 %v401, %v1356
        %v1358 = vpop.f32.mrb[0].mxu0
        %v1359 = vpop.f32.mrb[0].mxu0
        %v1360 = vadd.f32 %v401, %v1359
        %v1361 = vpop.f32.mrb[0].mxu0
        %1362 = vmatprep.mubr.bf16.mxu0 0
        %1363 = vmatmul.mubr.bf16.gmra.mrb[0].mxu0 %v884
        %v1364 = vpop.f32.mrb[0].mxu0
        %v1365 = vadd.f32 %v401, %v1364
        %v1366 = vpop.f32.mrb[0].mxu0
        %v1367 = vpop.f32.mrb[0].mxu0
        %v1368 = vadd.f32 %v401, %v1367
        %v1369 = vpop.f32.mrb[0].mxu0
        %1370 = vmatprep.mubr.bf16.mxu0 0
        %1371 = vmatmul.mubr.bf16.gmra.mrb[0].mxu0 %v887
        %v1372 = vpop.f32.mrb[0].mxu0
        %v1373 = vadd.f32 %v401, %v1372
        %v1374 = vpop.f32.mrb[0].mxu0
        %v1375 = vpop.f32.mrb[0].mxu0
        %v1376 = vadd.f32 %v401, %v1375
        %v1377 = vpop.f32.mrb[0].mxu0
        %1378 = vmatprep.mubr.bf16.mxu0 0
        %1379 = vmatmul.mubr.bf16.gmra.mrb[0].mxu0 %v890
        %v1380 = vpop.f32.mrb[0].mxu0
        %v1381 = vadd.f32 %v401, %v1380
        %v1382 = vpop.f32.mrb[0].mxu0
        %v1383 = vpop.f32.mrb[0].mxu0
        %v1384 = vadd.f32 %v401, %v1383
        %v1385 = vpop.f32.mrb[0].mxu0
        %1386 = vmatprep.mubr.bf16.mxu0 0
        %1387 = vmatmul.mubr.bf16.gmra.mrb[0].mxu0 %v893
        %v1388 = vpop.f32.mrb[0].mxu0
        %v1389 = vadd.f32 %v401, %v1388
        %v1390 = vpop.f32.mrb[0].mxu0
        %v1391 = vpop.f32.mrb[0].mxu0
        %v1392 = vadd.f32 %v401, %v1391
        %v1393 = vpop.f32.mrb[0].mxu0
        %1394 = vmatprep.mubr.bf16.mxu0 0
        %1395 = vmatmul.mubr.bf16.gmra.mrb[0].mxu0 %v896
        %v1396 = vpop.f32.mrb[0].mxu0
        %v1397 = vadd.f32 %v401, %v1396
        %v1398 = vpop.f32.mrb[0].mxu0
        %v1399 = vpop.f32.mrb[0].mxu0
        %v1400 = vadd.f32 %v401, %v1399
        %v1401 = vpop.f32.mrb[0].mxu0
        %1402 = vmatprep.mubr.bf16.mxu0 0
        %1403 = vmatmul.mubr.bf16.gmra.mrb[0].mxu0 %v899
        %v1404 = vpop.f32.mrb[0].mxu0
        %v1405 = vadd.f32 %v401, %v1404
        %v1406 = vpop.f32.mrb[0].mxu0
        %v1407 = vpop.f32.mrb[0].mxu0
        %v1408 = vadd.f32 %v401, %v1407
        %v1409 = vpop.f32.mrb[0].mxu0
        %1410 = vmatprep.mubr.bf16.mxu0 0
        %1411 = vmatmul.mubr.bf16.gmra.mrb[0].mxu0 %v902
        %v1412 = vpop.f32.mrb[0].mxu0
        %v1413 = vadd.f32 %v401, %v1412
        %v1414 = vpop.f32.mrb[0].mxu0
        %v1415 = vpop.f32.mrb[0].mxu0
        %v1416 = vadd.f32 %v401, %v1415
        %v1417 = vpop.f32.mrb[0].mxu0
        %1418 = vmatprep.mubr.bf16.mxu0 0
        %1419 = vmatmul.mubr.bf16.gmra.mrb[0].mxu0 %v905
        %v1420 = vpop.f32.mrb[0].mxu0
        %v1421 = vadd.f32 %v401, %v1420
        %v1422 = vpop.f32.mrb[0].mxu0
        %v1423 = vpop.f32.mrb[0].mxu0
        %v1424 = vadd.f32 %v401, %v1423
        %v1425 = vpop.f32.mrb[0].mxu0
        %1426 = vmatprep.mubr.bf16.mxu0 0
        %1427 = vmatmul.mubr.bf16.gmra.mrb[0].mxu0 %v908
        %v1428 = vpop.f32.mrb[0].mxu0
        %v1429 = vadd.f32 %v401, %v1428
        %v1430 = vpop.f32.mrb[0].mxu0
        %v1431 = vpop.f32.mrb[0].mxu0
        %v1432 = vadd.f32 %v401, %v1431
        %v1433 = vpop.f32.mrb[0].mxu0
        %1434 = vmatprep.mubr.bf16.mxu0 0
        %1435 = vmatmul.mubr.bf16.gmra.mrb[0].mxu0 %v911
        %v1436 = vpop.f32.mrb[0].mxu0
        %v1437 = vadd.f32 %v401, %v1436
        %v1438 = vpop.f32.mrb[0].mxu0
        %v1439 = vpop.f32.mrb[0].mxu0
        %v1440 = vadd.f32 %v401, %v1439
        %v1441 = vpop.f32.mrb[0].mxu0
        %1442 = vmatprep.mubr.bf16.mxu0 0
        %1443 = vmatmul.mubr.bf16.gmra.mrb[0].mxu0 %v914
        %v1444 = vpop.f32.mrb[0].mxu0
        %v1445 = vadd.f32 %v401, %v1444
        %v1446 = vpop.f32.mrb[0].mxu0
        %v1447 = vpop.f32.mrb[0].mxu0
        %v1448 = vadd.f32 %v401, %v1447
        %v1449 = vpop.f32.mrb[0].mxu0
        %1450 = vmatprep.mubr.bf16.mxu0 0
        %1451 = vmatmul.mubr.bf16.gmra.mrb[0].mxu0 %v917
        %v1452 = vpop.f32.mrb[0].mxu0
        %v1453 = vadd.f32 %v401, %v1452
        %v1454 = vpop.f32.mrb[0].mxu0
        %v1455 = vpop.f32.mrb[0].mxu0
        %v1456 = vadd.f32 %v401, %v1455
        %v1457 = vpop.f32.mrb[0].mxu0
        %1458 = vmatprep.mubr.bf16.mxu0 0
        %1459 = vmatmul.mubr.bf16.gmra.mrb[0].mxu0 %v920
        %v1460 = vpop.f32.mrb[0].mxu0
        %v1461 = vadd.f32 %v401, %v1460
        %v1462 = vpop.f32.mrb[0].mxu0
        %v1463 = vpop.f32.mrb[0].mxu0
        %v1464 = vadd.f32 %v401, %v1463
        %v1465 = vpop.f32.mrb[0].mxu0
        %1466 = vdwg.mxu0
        %v1467 = vmax.f32 %v957, 0.0
        %v1468 = vmax.f32 %v960, 0.0
        %v1469 = vmax.f32 %v965, 0.0
        %v1470 = vmax.f32 %v968, 0.0
        %v1471 = vmax.f32 %v973, 0.0
        %v1472 = vmax.f32 %v976, 0.0
        %v1473 = vmax.f32 %v981, 0.0
        %v1474 = vmax.f32 %v984, 0.0
        %v1475 = vmax.f32 %v989, 0.0
        %v1476 = vmax.f32 %v992, 0.0
        %v1477 = vmax.f32 %v997, 0.0
        %v1478 = vmax.f32 %v1000, 0.0
        %v1479 = vmax.f32 %v1005, 0.0
        %v1480 = vmax.f32 %v1008, 0.0
        %v1481 = vmax.f32 %v1013, 0.0
        %v1482 = vmax.f32 %v1016, 0.0
        %v1483 = vmax.f32 %v1021, 0.0
        %v1484 = vmax.f32 %v1024, 0.0
        %v1485 = vmax.f32 %v1029, 0.0
        %v1486 = vmax.f32 %v1032, 0.0
        %v1487 = vmax.f32 %v1037, 0.0
        %v1488 = vmax.f32 %v1040, 0.0
        %v1489 = vmax.f32 %v1045, 0.0
        %v1490 = vmax.f32 %v1048, 0.0
        %v1491 = vmax.f32 %v1053, 0.0
        %v1492 = vmax.f32 %v1056, 0.0
        %v1493 = vmax.f32 %v1061, 0.0
        %v1494 = vmax.f32 %v1064, 0.0
        %v1495 = vmax.f32 %v1069, 0.0
        %v1496 = vmax.f32 %v1072, 0.0
        %v1497 = vmax.f32 %v1077, 0.0
        %v1498 = vmax.f32 %v1080, 0.0
        %v1499 = vmax.f32 %v1085, 0.0
        %v1500 = vmax.f32 %v1088, 0.0
        %v1501 = vmax.f32 %v1093, 0.0
        %v1502 = vmax.f32 %v1096, 0.0
        %v1503 = vmax.f32 %v1101, 0.0
        %v1504 = vmax.f32 %v1104, 0.0
        %v1505 = vmax.f32 %v1109, 0.0
        %v1506 = vmax.f32 %v1112, 0.0
        %v1507 = vmax.f32 %v1117, 0.0
        %v1508 = vmax.f32 %v1120, 0.0
        %v1509 = vmax.f32 %v1125, 0.0
        %v1510 = vmax.f32 %v1128, 0.0
        %v1511 = vmax.f32 %v1133, 0.0
        %v1512 = vmax.f32 %v1136, 0.0
        %v1513 = vmax.f32 %v1141, 0.0
        %v1514 = vmax.f32 %v1144, 0.0
        %v1515 = vmax.f32 %v1149, 0.0
        %v1516 = vmax.f32 %v1152, 0.0
        %v1517 = vmax.f32 %v1157, 0.0
        %v1518 = vmax.f32 %v1160, 0.0
        %v1519 = vmax.f32 %v1165, 0.0
        %v1520 = vmax.f32 %v1168, 0.0
        %v1521 = vmax.f32 %v1173, 0.0
        %v1522 = vmax.f32 %v1176, 0.0
        %v1523 = vmax.f32 %v1181, 0.0
        %v1524 = vmax.f32 %v1184, 0.0
        %v1525 = vmax.f32 %v1189, 0.0
        %v1526 = vmax.f32 %v1192, 0.0
        %v1527 = vmax.f32 %v1197, 0.0
        %v1528 = vmax.f32 %v1200, 0.0
        %v1529 = vmax.f32 %v1205, 0.0
        %v1530 = vmax.f32 %v1208, 0.0
        %v1531 = vmax.f32 %v1213, 0.0
        %v1532 = vmax.f32 %v1216, 0.0
        %v1533 = vmax.f32 %v1221, 0.0
        %v1534 = vmax.f32 %v1224, 0.0
        %v1535 = vmax.f32 %v1229, 0.0
        %v1536 = vmax.f32 %v1232, 0.0
        %v1537 = vmax.f32 %v1237, 0.0
        %v1538 = vmax.f32 %v1240, 0.0
        %v1539 = vmax.f32 %v1245, 0.0
        %v1540 = vmax.f32 %v1248, 0.0
        %v1541 = vmax.f32 %v1253, 0.0
        %v1542 = vmax.f32 %v1256, 0.0
        %v1543 = vmax.f32 %v1261, 0.0
        %v1544 = vmax.f32 %v1264, 0.0
        %v1545 = vmax.f32 %v1269, 0.0
        %v1546 = vmax.f32 %v1272, 0.0
        %v1547 = vmax.f32 %v1277, 0.0
        %v1548 = vmax.f32 %v1280, 0.0
        %v1549 = vmax.f32 %v1285, 0.0
        %v1550 = vmax.f32 %v1288, 0.0
        %v1551 = vmax.f32 %v1293, 0.0
        %v1552 = vmax.f32 %v1296, 0.0
        %v1553 = vmax.f32 %v1301, 0.0
        %v1554 = vmax.f32 %v1304, 0.0
        %v1555 = vmax.f32 %v1309, 0.0
        %v1556 = vmax.f32 %v1312, 0.0
        %v1557 = vmax.f32 %v1317, 0.0
        %v1558 = vmax.f32 %v1320, 0.0
        %v1559 = vmax.f32 %v1325, 0.0
        %v1560 = vmax.f32 %v1328, 0.0
        %v1561 = vmax.f32 %v1333, 0.0
        %v1562 = vmax.f32 %v1336, 0.0
        %v1563 = vmax.f32 %v1341, 0.0
        %v1564 = vmax.f32 %v1344, 0.0
        %v1565 = vmax.f32 %v1349, 0.0
        %v1566 = vmax.f32 %v1352, 0.0
        %v1567 = vmax.f32 %v1357, 0.0
        %v1568 = vmax.f32 %v1360, 0.0
        %v1569 = vmax.f32 %v1365, 0.0
        %v1570 = vmax.f32 %v1368, 0.0
        %v1571 = vmax.f32 %v1373, 0.0
        %v1572 = vmax.f32 %v1376, 0.0
        %v1573 = vmax.f32 %v1381, 0.0
        %v1574 = vmax.f32 %v1384, 0.0
        %v1575 = vmax.f32 %v1389, 0.0
        %v1576 = vmax.f32 %v1392, 0.0
        %v1577 = vmax.f32 %v1397, 0.0
        %v1578 = vmax.f32 %v1400, 0.0
        %v1579 = vmax.f32 %v1405, 0.0
        %v1580 = vmax.f32 %v1408, 0.0
        %v1581 = vmax.f32 %v1413, 0.0
        %v1582 = vmax.f32 %v1416, 0.0
        %v1583 = vmax.f32 %v1421, 0.0
        %v1584 = vmax.f32 %v1424, 0.0
        %v1585 = vmax.f32 %v1429, 0.0
        %v1586 = vmax.f32 %v1432, 0.0
        %v1587 = vmax.f32 %v1437, 0.0
        %v1588 = vmax.f32 %v1440, 0.0
        %v1589 = vmax.f32 %v1445, 0.0
        %v1590 = vmax.f32 %v1448, 0.0
        %v1591 = vmax.f32 %v1453, 0.0
        %v1592 = vmax.f32 %v1456, 0.0
        %v1593 = vmax.f32 %v1461, 0.0
        %v1594 = vmax.f32 %v1464, 0.0
        %s1595 = smul.u32 %s20, 1024
        %v1596 = vlaneseq
        %v1597 = vshrl.u32 %v1596, 7
        %v1598 = vadd.s32 %v1597, 8
        %v1599 = vadd.s32 %v1597, 16
        %v1600 = vadd.s32 %v1597, 24
        %v1601 = vadd.s32 %v1597, 32
        %v1602 = vadd.s32 %v1597, 40
        %v1603 = vadd.s32 %v1597, 48
        %v1604 = vadd.s32 %v1597, 56
        %v1605 = vadd.s32 %v1597, 64
        %v1606 = vadd.s32 %v1597, 72
        %v1607 = vadd.s32 %v1597, 80
        %v1608 = vadd.s32 %v1597, 88
        %v1609 = vadd.s32 %v1597, 96
        %v1610 = vadd.s32 %v1597, 104
        %v1611 = vadd.s32 %v1597, 112
        %v1612 = vadd.s32 %v1597, 120
        %v1613 = vadd.s32 %v1597, 128
        %v1614 = vadd.s32 %v1597, 136
        %v1615 = vadd.s32 %v1597, 144
        %v1616 = vadd.s32 %v1597, 152
        %v1617 = vadd.s32 %v1597, 160
        %v1618 = vadd.s32 %v1597, 168
        %v1619 = vadd.s32 %v1597, 176
        %v1620 = vadd.s32 %v1597, 184
        %v1621 = vadd.s32 %v1597, 192
        %v1622 = vadd.s32 %v1597, 200
        %v1623 = vadd.s32 %v1597, 208
        %v1624 = vadd.s32 %v1597, 216
        %v1625 = vadd.s32 %v1597, 224
        %v1626 = vadd.s32 %v1597, 232
        %v1627 = vadd.s32 %v1597, 240
        %v1628 = vadd.s32 %v1597, 248
        %v1629 = vadd.s32 %v1597, 256
        %v1630 = vadd.s32 %v1597, 264
        %v1631 = vadd.s32 %v1597, 272
        %v1632 = vadd.s32 %v1597, 280
        %v1633 = vadd.s32 %v1597, 288
        %v1634 = vadd.s32 %v1597, 296
        %v1635 = vadd.s32 %v1597, 304
        %v1636 = vadd.s32 %v1597, 312
        %v1637 = vadd.s32 %v1597, 320
        %v1638 = vadd.s32 %v1597, 328
        %v1639 = vadd.s32 %v1597, 336
        %v1640 = vadd.s32 %v1597, 344
        %v1641 = vadd.s32 %v1597, 352
        %v1642 = vadd.s32 %v1597, 360
        %v1643 = vadd.s32 %v1597, 368
        %v1644 = vadd.s32 %v1597, 376
        %v1645 = vadd.s32 %v1597, 384
        %v1646 = vadd.s32 %v1597, 392
        %v1647 = vadd.s32 %v1597, 400
        %v1648 = vadd.s32 %v1597, 408
        %v1649 = vadd.s32 %v1597, 416
        %v1650 = vadd.s32 %v1597, 424
        %v1651 = vadd.s32 %v1597, 432
        %v1652 = vadd.s32 %v1597, 440
        %v1653 = vadd.s32 %v1597, 448
        %v1654 = vadd.s32 %v1597, 456
        %v1655 = vadd.s32 %v1597, 464
        %v1656 = vadd.s32 %v1597, 472
        %v1657 = vadd.s32 %v1597, 480
        %v1658 = vadd.s32 %v1597, 488
        %v1659 = vadd.s32 %v1597, 496
        %v1660 = vadd.s32 %v1597, 504
        %v1661 = vadd.s32 %v1597, 512
        %v1662 = vadd.s32 %v1597, 520
        %v1663 = vadd.s32 %v1597, 528
        %v1664 = vadd.s32 %v1597, 536
        %v1665 = vadd.s32 %v1597, 544
        %v1666 = vadd.s32 %v1597, 552
        %v1667 = vadd.s32 %v1597, 560
        %v1668 = vadd.s32 %v1597, 568
        %v1669 = vadd.s32 %v1597, 576
        %v1670 = vadd.s32 %v1597, 584
        %v1671 = vadd.s32 %v1597, 592
        %v1672 = vadd.s32 %v1597, 600
        %v1673 = vadd.s32 %v1597, 608
        %v1674 = vadd.s32 %v1597, 616
        %v1675 = vadd.s32 %v1597, 624
        %v1676 = vadd.s32 %v1597, 632
        %v1677 = vadd.s32 %v1597, 640
        %v1678 = vadd.s32 %v1597, 648
        %v1679 = vadd.s32 %v1597, 656
        %v1680 = vadd.s32 %v1597, 664
        %v1681 = vadd.s32 %v1597, 672
        %v1682 = vadd.s32 %v1597, 680
        %v1683 = vadd.s32 %v1597, 688
        %v1684 = vadd.s32 %v1597, 696
        %v1685 = vadd.s32 %v1597, 704
        %v1686 = vadd.s32 %v1597, 712
        %v1687 = vadd.s32 %v1597, 720
        %v1688 = vadd.s32 %v1597, 728
        %v1689 = vadd.s32 %v1597, 736
        %v1690 = vadd.s32 %v1597, 744
        %v1691 = vadd.s32 %v1597, 752
        %v1692 = vadd.s32 %v1597, 760
        %v1693 = vadd.s32 %v1597, 768
        %v1694 = vadd.s32 %v1597, 776
        %v1695 = vadd.s32 %v1597, 784
        %v1696 = vadd.s32 %v1597, 792
        %v1697 = vadd.s32 %v1597, 800
        %v1698 = vadd.s32 %v1597, 808
        %v1699 = vadd.s32 %v1597, 816
        %v1700 = vadd.s32 %v1597, 824
        %v1701 = vadd.s32 %v1597, 832
        %v1702 = vadd.s32 %v1597, 840
        %v1703 = vadd.s32 %v1597, 848
        %v1704 = vadd.s32 %v1597, 856
        %v1705 = vadd.s32 %v1597, 864
        %v1706 = vadd.s32 %v1597, 872
        %v1707 = vadd.s32 %v1597, 880
        %v1708 = vadd.s32 %v1597, 888
        %v1709 = vadd.s32 %v1597, 896
        %v1710 = vadd.s32 %v1597, 904
        %v1711 = vadd.s32 %v1597, 912
        %v1712 = vadd.s32 %v1597, 920
        %v1713 = vadd.s32 %v1597, 928
        %v1714 = vadd.s32 %v1597, 936
        %v1715 = vadd.s32 %v1597, 944
        %v1716 = vadd.s32 %v1597, 952
        %v1717 = vadd.s32 %v1597, 960
        %v1718 = vadd.s32 %v1597, 968
        %v1719 = vadd.s32 %v1597, 976
        %v1720 = vadd.s32 %v1597, 984
        %v1721 = vadd.s32 %v1597, 992
        %v1722 = vadd.s32 %v1597, 1000
        %v1723 = vadd.s32 %v1597, 1008
        %v1724 = vadd.s32 %v1597, 1016
        %v1725 = vstv %s1595
        %v1726 = vadd.s32 %v1725, %v1597
        %v1727 = vadd.s32 %v1725, %v1598
        %v1728 = vadd.s32 %v1725, %v1599
        %v1729 = vadd.s32 %v1725, %v1600
        %v1730 = vadd.s32 %v1725, %v1601
        %v1731 = vadd.s32 %v1725, %v1602
        %v1732 = vadd.s32 %v1725, %v1603
        %v1733 = vadd.s32 %v1725, %v1604
        %v1734 = vadd.s32 %v1725, %v1605
        %v1735 = vadd.s32 %v1725, %v1606
        %v1736 = vadd.s32 %v1725, %v1607
        %v1737 = vadd.s32 %v1725, %v1608
        %v1738 = vadd.s32 %v1725, %v1609
        %v1739 = vadd.s32 %v1725, %v1610
        %v1740 = vadd.s32 %v1725, %v1611
        %v1741 = vadd.s32 %v1725, %v1612
        %v1742 = vadd.s32 %v1725, %v1613
        %v1743 = vadd.s32 %v1725, %v1614
        %v1744 = vadd.s32 %v1725, %v1615
        %v1745 = vadd.s32 %v1725, %v1616
        %v1746 = vadd.s32 %v1725, %v1617
        %v1747 = vadd.s32 %v1725, %v1618
        %v1748 = vadd.s32 %v1725, %v1619
        %v1749 = vadd.s32 %v1725, %v1620
        %v1750 = vadd.s32 %v1725, %v1621
        %v1751 = vadd.s32 %v1725, %v1622
        %v1752 = vadd.s32 %v1725, %v1623
        %v1753 = vadd.s32 %v1725, %v1624
        %v1754 = vadd.s32 %v1725, %v1625
        %v1755 = vadd.s32 %v1725, %v1626
        %v1756 = vadd.s32 %v1725, %v1627
        %v1757 = vadd.s32 %v1725, %v1628
        %v1758 = vadd.s32 %v1725, %v1629
        %v1759 = vadd.s32 %v1725, %v1630
        %v1760 = vadd.s32 %v1725, %v1631
        %v1761 = vadd.s32 %v1725, %v1632
        %v1762 = vadd.s32 %v1725, %v1633
        %v1763 = vadd.s32 %v1725, %v1634
        %v1764 = vadd.s32 %v1725, %v1635
        %v1765 = vadd.s32 %v1725, %v1636
        %v1766 = vadd.s32 %v1725, %v1637
        %v1767 = vadd.s32 %v1725, %v1638
        %v1768 = vadd.s32 %v1725, %v1639
        %v1769 = vadd.s32 %v1725, %v1640
        %v1770 = vadd.s32 %v1725, %v1641
        %v1771 = vadd.s32 %v1725, %v1642
        %v1772 = vadd.s32 %v1725, %v1643
        %v1773 = vadd.s32 %v1725, %v1644
        %v1774 = vadd.s32 %v1725, %v1645
        %v1775 = vadd.s32 %v1725, %v1646
        %v1776 = vadd.s32 %v1725, %v1647
        %v1777 = vadd.s32 %v1725, %v1648
        %v1778 = vadd.s32 %v1725, %v1649
        %v1779 = vadd.s32 %v1725, %v1650
        %v1780 = vadd.s32 %v1725, %v1651
        %v1781 = vadd.s32 %v1725, %v1652
        %v1782 = vadd.s32 %v1725, %v1653
        %v1783 = vadd.s32 %v1725, %v1654
        %v1784 = vadd.s32 %v1725, %v1655
        %v1785 = vadd.s32 %v1725, %v1656
        %v1786 = vadd.s32 %v1725, %v1657
        %v1787 = vadd.s32 %v1725, %v1658
        %v1788 = vadd.s32 %v1725, %v1659
        %v1789 = vadd.s32 %v1725, %v1660
        %v1790 = vadd.s32 %v1725, %v1661
        %v1791 = vadd.s32 %v1725, %v1662
        %v1792 = vadd.s32 %v1725, %v1663
        %v1793 = vadd.s32 %v1725, %v1664
        %v1794 = vadd.s32 %v1725, %v1665
        %v1795 = vadd.s32 %v1725, %v1666
        %v1796 = vadd.s32 %v1725, %v1667
        %v1797 = vadd.s32 %v1725, %v1668
        %v1798 = vadd.s32 %v1725, %v1669
        %v1799 = vadd.s32 %v1725, %v1670
        %v1800 = vadd.s32 %v1725, %v1671
        %v1801 = vadd.s32 %v1725, %v1672
        %v1802 = vadd.s32 %v1725, %v1673
        %v1803 = vadd.s32 %v1725, %v1674
        %v1804 = vadd.s32 %v1725, %v1675
        %v1805 = vadd.s32 %v1725, %v1676
        %v1806 = vadd.s32 %v1725, %v1677
        %v1807 = vadd.s32 %v1725, %v1678
        %v1808 = vadd.s32 %v1725, %v1679
        %v1809 = vadd.s32 %v1725, %v1680
        %v1810 = vadd.s32 %v1725, %v1681
        %v1811 = vadd.s32 %v1725, %v1682
        %v1812 = vadd.s32 %v1725, %v1683
        %v1813 = vadd.s32 %v1725, %v1684
        %v1814 = vadd.s32 %v1725, %v1685
        %v1815 = vadd.s32 %v1725, %v1686
        %v1816 = vadd.s32 %v1725, %v1687
        %v1817 = vadd.s32 %v1725, %v1688
        %v1818 = vadd.s32 %v1725, %v1689
        %v1819 = vadd.s32 %v1725, %v1690
        %v1820 = vadd.s32 %v1725, %v1691
        %v1821 = vadd.s32 %v1725, %v1692
        %v1822 = vadd.s32 %v1725, %v1693
        %v1823 = vadd.s32 %v1725, %v1694
        %v1824 = vadd.s32 %v1725, %v1695
        %v1825 = vadd.s32 %v1725, %v1696
        %v1826 = vadd.s32 %v1725, %v1697
        %v1827 = vadd.s32 %v1725, %v1698
        %v1828 = vadd.s32 %v1725, %v1699
        %v1829 = vadd.s32 %v1725, %v1700
        %v1830 = vadd.s32 %v1725, %v1701
        %v1831 = vadd.s32 %v1725, %v1702
        %v1832 = vadd.s32 %v1725, %v1703
        %v1833 = vadd.s32 %v1725, %v1704
        %v1834 = vadd.s32 %v1725, %v1705
        %v1835 = vadd.s32 %v1725, %v1706
        %v1836 = vadd.s32 %v1725, %v1707
        %v1837 = vadd.s32 %v1725, %v1708
        %v1838 = vadd.s32 %v1725, %v1709
        %v1839 = vadd.s32 %v1725, %v1710
        %v1840 = vadd.s32 %v1725, %v1711
        %v1841 = vadd.s32 %v1725, %v1712
        %v1842 = vadd.s32 %v1725, %v1713
        %v1843 = vadd.s32 %v1725, %v1714
        %v1844 = vadd.s32 %v1725, %v1715
        %v1845 = vadd.s32 %v1725, %v1716
        %v1846 = vadd.s32 %v1725, %v1717
        %v1847 = vadd.s32 %v1725, %v1718
        %v1848 = vadd.s32 %v1725, %v1719
        %v1849 = vadd.s32 %v1725, %v1720
        %v1850 = vadd.s32 %v1725, %v1721
        %v1851 = vadd.s32 %v1725, %v1722
        %v1852 = vadd.s32 %v1725, %v1723
        %v1853 = vadd.s32 %v1725, %v1724
        %v1854 = vstv %s265
        %vm1855 = vcmp.lt.s32.totalorder %v1726, %v1854
        %vm1856 = vcmp.lt.s32.totalorder %v1727, %v1854
        %vm1857 = vcmp.lt.s32.totalorder %v1728, %v1854
        %vm1858 = vcmp.lt.s32.totalorder %v1729, %v1854
        %vm1859 = vcmp.lt.s32.totalorder %v1730, %v1854
        %vm1860 = vcmp.lt.s32.totalorder %v1731, %v1854
        %vm1861 = vcmp.lt.s32.totalorder %v1732, %v1854
        %vm1862 = vcmp.lt.s32.totalorder %v1733, %v1854
        %vm1863 = vcmp.lt.s32.totalorder %v1734, %v1854
        %vm1864 = vcmp.lt.s32.totalorder %v1735, %v1854
        %vm1865 = vcmp.lt.s32.totalorder %v1736, %v1854
        %vm1866 = vcmp.lt.s32.totalorder %v1737, %v1854
        %vm1867 = vcmp.lt.s32.totalorder %v1738, %v1854
        %vm1868 = vcmp.lt.s32.totalorder %v1739, %v1854
        %vm1869 = vcmp.lt.s32.totalorder %v1740, %v1854
        %vm1870 = vcmp.lt.s32.totalorder %v1741, %v1854
        %vm1871 = vcmp.lt.s32.totalorder %v1742, %v1854
        %vm1872 = vcmp.lt.s32.totalorder %v1743, %v1854
        %vm1873 = vcmp.lt.s32.totalorder %v1744, %v1854
        %vm1874 = vcmp.lt.s32.totalorder %v1745, %v1854
        %vm1875 = vcmp.lt.s32.totalorder %v1746, %v1854
        %vm1876 = vcmp.lt.s32.totalorder %v1747, %v1854
        %vm1877 = vcmp.lt.s32.totalorder %v1748, %v1854
        %vm1878 = vcmp.lt.s32.totalorder %v1749, %v1854
        %vm1879 = vcmp.lt.s32.totalorder %v1750, %v1854
        %vm1880 = vcmp.lt.s32.totalorder %v1751, %v1854
        %vm1881 = vcmp.lt.s32.totalorder %v1752, %v1854
        %vm1882 = vcmp.lt.s32.totalorder %v1753, %v1854
        %vm1883 = vcmp.lt.s32.totalorder %v1754, %v1854
        %vm1884 = vcmp.lt.s32.totalorder %v1755, %v1854
        %vm1885 = vcmp.lt.s32.totalorder %v1756, %v1854
        %vm1886 = vcmp.lt.s32.totalorder %v1757, %v1854
        %vm1887 = vcmp.lt.s32.totalorder %v1758, %v1854
        %vm1888 = vcmp.lt.s32.totalorder %v1759, %v1854
        %vm1889 = vcmp.lt.s32.totalorder %v1760, %v1854
        %vm1890 = vcmp.lt.s32.totalorder %v1761, %v1854
        %vm1891 = vcmp.lt.s32.totalorder %v1762, %v1854
        %vm1892 = vcmp.lt.s32.totalorder %v1763, %v1854
        %vm1893 = vcmp.lt.s32.totalorder %v1764, %v1854
        %vm1894 = vcmp.lt.s32.totalorder %v1765, %v1854
        %vm1895 = vcmp.lt.s32.totalorder %v1766, %v1854
        %vm1896 = vcmp.lt.s32.totalorder %v1767, %v1854
        %vm1897 = vcmp.lt.s32.totalorder %v1768, %v1854
        %vm1898 = vcmp.lt.s32.totalorder %v1769, %v1854
        %vm1899 = vcmp.lt.s32.totalorder %v1770, %v1854
        %vm1900 = vcmp.lt.s32.totalorder %v1771, %v1854
        %vm1901 = vcmp.lt.s32.totalorder %v1772, %v1854
        %vm1902 = vcmp.lt.s32.totalorder %v1773, %v1854
        %vm1903 = vcmp.lt.s32.totalorder %v1774, %v1854
        %vm1904 = vcmp.lt.s32.totalorder %v1775, %v1854
        %vm1905 = vcmp.lt.s32.totalorder %v1776, %v1854
        %vm1906 = vcmp.lt.s32.totalorder %v1777, %v1854
        %vm1907 = vcmp.lt.s32.totalorder %v1778, %v1854
        %vm1908 = vcmp.lt.s32.totalorder %v1779, %v1854
        %vm1909 = vcmp.lt.s32.totalorder %v1780, %v1854
        %vm1910 = vcmp.lt.s32.totalorder %v1781, %v1854
        %vm1911 = vcmp.lt.s32.totalorder %v1782, %v1854
        %vm1912 = vcmp.lt.s32.totalorder %v1783, %v1854
        %vm1913 = vcmp.lt.s32.totalorder %v1784, %v1854
        %vm1914 = vcmp.lt.s32.totalorder %v1785, %v1854
        %vm1915 = vcmp.lt.s32.totalorder %v1786, %v1854
        %vm1916 = vcmp.lt.s32.totalorder %v1787, %v1854
        %vm1917 = vcmp.lt.s32.totalorder %v1788, %v1854
        %vm1918 = vcmp.lt.s32.totalorder %v1789, %v1854
        %vm1919 = vcmp.lt.s32.totalorder %v1790, %v1854
        %vm1920 = vcmp.lt.s32.totalorder %v1791, %v1854
        %vm1921 = vcmp.lt.s32.totalorder %v1792, %v1854
        %vm1922 = vcmp.lt.s32.totalorder %v1793, %v1854
        %vm1923 = vcmp.lt.s32.totalorder %v1794, %v1854
        %vm1924 = vcmp.lt.s32.totalorder %v1795, %v1854
        %vm1925 = vcmp.lt.s32.totalorder %v1796, %v1854
        %vm1926 = vcmp.lt.s32.totalorder %v1797, %v1854
        %vm1927 = vcmp.lt.s32.totalorder %v1798, %v1854
        %vm1928 = vcmp.lt.s32.totalorder %v1799, %v1854
        %vm1929 = vcmp.lt.s32.totalorder %v1800, %v1854
        %vm1930 = vcmp.lt.s32.totalorder %v1801, %v1854
        %vm1931 = vcmp.lt.s32.totalorder %v1802, %v1854
        %vm1932 = vcmp.lt.s32.totalorder %v1803, %v1854
        %vm1933 = vcmp.lt.s32.totalorder %v1804, %v1854
        %vm1934 = vcmp.lt.s32.totalorder %v1805, %v1854
        %vm1935 = vcmp.lt.s32.totalorder %v1806, %v1854
        %vm1936 = vcmp.lt.s32.totalorder %v1807, %v1854
        %vm1937 = vcmp.lt.s32.totalorder %v1808, %v1854
        %vm1938 = vcmp.lt.s32.totalorder %v1809, %v1854
        %vm1939 = vcmp.lt.s32.totalorder %v1810, %v1854
        %vm1940 = vcmp.lt.s32.totalorder %v1811, %v1854
        %vm1941 = vcmp.lt.s32.totalorder %v1812, %v1854
        %vm1942 = vcmp.lt.s32.totalorder %v1813, %v1854
        %vm1943 = vcmp.lt.s32.totalorder %v1814, %v1854
        %vm1944 = vcmp.lt.s32.totalorder %v1815, %v1854
        %vm1945 = vcmp.lt.s32.totalorder %v1816, %v1854
        %vm1946 = vcmp.lt.s32.totalorder %v1817, %v1854
        %vm1947 = vcmp.lt.s32.totalorder %v1818, %v1854
        %vm1948 = vcmp.lt.s32.totalorder %v1819, %v1854
        %vm1949 = vcmp.lt.s32.totalorder %v1820, %v1854
        %vm1950 = vcmp.lt.s32.totalorder %v1821, %v1854
        %vm1951 = vcmp.lt.s32.totalorder %v1822, %v1854
        %vm1952 = vcmp.lt.s32.totalorder %v1823, %v1854
        %vm1953 = vcmp.lt.s32.totalorder %v1824, %v1854
        %vm1954 = vcmp.lt.s32.totalorder %v1825, %v1854
        %vm1955 = vcmp.lt.s32.totalorder %v1826, %v1854
        %vm1956 = vcmp.lt.s32.totalorder %v1827, %v1854
        %vm1957 = vcmp.lt.s32.totalorder %v1828, %v1854
        %vm1958 = vcmp.lt.s32.totalorder %v1829, %v1854
        %vm1959 = vcmp.lt.s32.totalorder %v1830, %v1854
        %vm1960 = vcmp.lt.s32.totalorder %v1831, %v1854
        %vm1961 = vcmp.lt.s32.totalorder %v1832, %v1854
        %vm1962 = vcmp.lt.s32.totalorder %v1833, %v1854
        %vm1963 = vcmp.lt.s32.totalorder %v1834, %v1854
        %vm1964 = vcmp.lt.s32.totalorder %v1835, %v1854
        %vm1965 = vcmp.lt.s32.totalorder %v1836, %v1854
        %vm1966 = vcmp.lt.s32.totalorder %v1837, %v1854
        %vm1967 = vcmp.lt.s32.totalorder %v1838, %v1854
        %vm1968 = vcmp.lt.s32.totalorder %v1839, %v1854
        %vm1969 = vcmp.lt.s32.totalorder %v1840, %v1854
        %vm1970 = vcmp.lt.s32.totalorder %v1841, %v1854
        %vm1971 = vcmp.lt.s32.totalorder %v1842, %v1854
        %vm1972 = vcmp.lt.s32.totalorder %v1843, %v1854
        %vm1973 = vcmp.lt.s32.totalorder %v1844, %v1854
        %vm1974 = vcmp.lt.s32.totalorder %v1845, %v1854
        %vm1975 = vcmp.lt.s32.totalorder %v1846, %v1854
        %vm1976 = vcmp.lt.s32.totalorder %v1847, %v1854
        %vm1977 = vcmp.lt.s32.totalorder %v1848, %v1854
        %vm1978 = vcmp.lt.s32.totalorder %v1849, %v1854
        %vm1979 = vcmp.lt.s32.totalorder %v1850, %v1854
        %vm1980 = vcmp.lt.s32.totalorder %v1851, %v1854
        %vm1981 = vcmp.lt.s32.totalorder %v1852, %v1854
        %vm1982 = vcmp.lt.s32.totalorder %v1853, %v1854
        %v1983 = vmul.f32 %v1467, %v1467
        %v1984 = vmul.f32 %v1468, %v1468
        %v1985 = vmul.f32 %v1469, %v1469
        %v1986 = vmul.f32 %v1470, %v1470
        %v1987 = vmul.f32 %v1471, %v1471
        %v1988 = vmul.f32 %v1472, %v1472
        %v1989 = vmul.f32 %v1473, %v1473
        %v1990 = vmul.f32 %v1474, %v1474
        %v1991 = vmul.f32 %v1475, %v1475
        %v1992 = vmul.f32 %v1476, %v1476
        %v1993 = vmul.f32 %v1477, %v1477
        %v1994 = vmul.f32 %v1478, %v1478
        %v1995 = vmul.f32 %v1479, %v1479
        %v1996 = vmul.f32 %v1480, %v1480
        %v1997 = vmul.f32 %v1481, %v1481
        %v1998 = vmul.f32 %v1482, %v1482
        %v1999 = vmul.f32 %v1483, %v1483
        %v2000 = vmul.f32 %v1484, %v1484
        %v2001 = vmul.f32 %v1485, %v1485
        %v2002 = vmul.f32 %v1486, %v1486
        %v2003 = vmul.f32 %v1487, %v1487
        %v2004 = vmul.f32 %v1488, %v1488
        %v2005 = vmul.f32 %v1489, %v1489
        %v2006 = vmul.f32 %v1490, %v1490
        %v2007 = vmul.f32 %v1491, %v1491
        %v2008 = vmul.f32 %v1492, %v1492
        %v2009 = vmul.f32 %v1493, %v1493
        %v2010 = vmul.f32 %v1494, %v1494
        %v2011 = vmul.f32 %v1495, %v1495
        %v2012 = vmul.f32 %v1496, %v1496
        %v2013 = vmul.f32 %v1497, %v1497
        %v2014 = vmul.f32 %v1498, %v1498
        %v2015 = vmul.f32 %v1499, %v1499
        %v2016 = vmul.f32 %v1500, %v1500
        %v2017 = vmul.f32 %v1501, %v1501
        %v2018 = vmul.f32 %v1502, %v1502
        %v2019 = vmul.f32 %v1503, %v1503
        %v2020 = vmul.f32 %v1504, %v1504
        %v2021 = vmul.f32 %v1505, %v1505
        %v2022 = vmul.f32 %v1506, %v1506
        %v2023 = vmul.f32 %v1507, %v1507
        %v2024 = vmul.f32 %v1508, %v1508
        %v2025 = vmul.f32 %v1509, %v1509
        %v2026 = vmul.f32 %v1510, %v1510
        %v2027 = vmul.f32 %v1511, %v1511
        %v2028 = vmul.f32 %v1512, %v1512
        %v2029 = vmul.f32 %v1513, %v1513
        %v2030 = vmul.f32 %v1514, %v1514
        %v2031 = vmul.f32 %v1515, %v1515
        %v2032 = vmul.f32 %v1516, %v1516
        %v2033 = vmul.f32 %v1517, %v1517
        %v2034 = vmul.f32 %v1518, %v1518
        %v2035 = vmul.f32 %v1519, %v1519
        %v2036 = vmul.f32 %v1520, %v1520
        %v2037 = vmul.f32 %v1521, %v1521
        %v2038 = vmul.f32 %v1522, %v1522
        %v2039 = vmul.f32 %v1523, %v1523
        %v2040 = vmul.f32 %v1524, %v1524
        %v2041 = vmul.f32 %v1525, %v1525
        %v2042 = vmul.f32 %v1526, %v1526
        %v2043 = vmul.f32 %v1527, %v1527
        %v2044 = vmul.f32 %v1528, %v1528
        %v2045 = vmul.f32 %v1529, %v1529
        %v2046 = vmul.f32 %v1530, %v1530
        %v2047 = vmul.f32 %v1531, %v1531
        %v2048 = vmul.f32 %v1532, %v1532
        %v2049 = vmul.f32 %v1533, %v1533
        %v2050 = vmul.f32 %v1534, %v1534
        %v2051 = vmul.f32 %v1535, %v1535
        %v2052 = vmul.f32 %v1536, %v1536
        %v2053 = vmul.f32 %v1537, %v1537
        %v2054 = vmul.f32 %v1538, %v1538
        %v2055 = vmul.f32 %v1539, %v1539
        %v2056 = vmul.f32 %v1540, %v1540
        %v2057 = vmul.f32 %v1541, %v1541
        %v2058 = vmul.f32 %v1542, %v1542
        %v2059 = vmul.f32 %v1543, %v1543
        %v2060 = vmul.f32 %v1544, %v1544
        %v2061 = vmul.f32 %v1545, %v1545
        %v2062 = vmul.f32 %v1546, %v1546
        %v2063 = vmul.f32 %v1547, %v1547
        %v2064 = vmul.f32 %v1548, %v1548
        %v2065 = vmul.f32 %v1549, %v1549
        %v2066 = vmul.f32 %v1550, %v1550
        %v2067 = vmul.f32 %v1551, %v1551
        %v2068 = vmul.f32 %v1552, %v1552
        %v2069 = vmul.f32 %v1553, %v1553
        %v2070 = vmul.f32 %v1554, %v1554
        %v2071 = vmul.f32 %v1555, %v1555
        %v2072 = vmul.f32 %v1556, %v1556
        %v2073 = vmul.f32 %v1557, %v1557
        %v2074 = vmul.f32 %v1558, %v1558
        %v2075 = vmul.f32 %v1559, %v1559
        %v2076 = vmul.f32 %v1560, %v1560
        %v2077 = vmul.f32 %v1561, %v1561
        %v2078 = vmul.f32 %v1562, %v1562
        %v2079 = vmul.f32 %v1563, %v1563
        %v2080 = vmul.f32 %v1564, %v1564
        %v2081 = vmul.f32 %v1565, %v1565
        %v2082 = vmul.f32 %v1566, %v1566
        %v2083 = vmul.f32 %v1567, %v1567
        %v2084 = vmul.f32 %v1568, %v1568
        %v2085 = vmul.f32 %v1569, %v1569
        %v2086 = vmul.f32 %v1570, %v1570
        %v2087 = vmul.f32 %v1571, %v1571
        %v2088 = vmul.f32 %v1572, %v1572
        %v2089 = vmul.f32 %v1573, %v1573
        %v2090 = vmul.f32 %v1574, %v1574
        %v2091 = vmul.f32 %v1575, %v1575
        %v2092 = vmul.f32 %v1576, %v1576
        %v2093 = vmul.f32 %v1577, %v1577
        %v2094 = vmul.f32 %v1578, %v1578
        %v2095 = vmul.f32 %v1579, %v1579
        %v2096 = vmul.f32 %v1580, %v1580
        %v2097 = vmul.f32 %v1581, %v1581
        %v2098 = vmul.f32 %v1582, %v1582
        %v2099 = vmul.f32 %v1583, %v1583
        %v2100 = vmul.f32 %v1584, %v1584
        %v2101 = vmul.f32 %v1585, %v1585
        %v2102 = vmul.f32 %v1586, %v1586
        %v2103 = vmul.f32 %v1587, %v1587
        %v2104 = vmul.f32 %v1588, %v1588
        %v2105 = vmul.f32 %v1589, %v1589
        %v2106 = vmul.f32 %v1590, %v1590
        %v2107 = vmul.f32 %v1591, %v1591
        %v2108 = vmul.f32 %v1592, %v1592
        %v2109 = vmul.f32 %v1593, %v1593
        %v2110 = vmul.f32 %v1594, %v1594
        %2111 = vadd.xlane.f32.xlu0 %v1983
        %v2112 = vpop.xlane.xlu0 %2111
        %2113 = vadd.xlane.f32.xlu0 %v1984
        %v2114 = vpop.xlane.xlu0 %2113
        %2115 = vadd.xlane.f32.xlu0 %v1985
        %v2116 = vpop.xlane.xlu0 %2115
        %2117 = vadd.xlane.f32.xlu0 %v1986
        %v2118 = vpop.xlane.xlu0 %2117
        %2119 = vadd.xlane.f32.xlu0 %v1987
        %v2120 = vpop.xlane.xlu0 %2119
        %2121 = vadd.xlane.f32.xlu0 %v1988
        %v2122 = vpop.xlane.xlu0 %2121
        %2123 = vadd.xlane.f32.xlu0 %v1989
        %v2124 = vpop.xlane.xlu0 %2123
        %2125 = vadd.xlane.f32.xlu0 %v1990
        %v2126 = vpop.xlane.xlu0 %2125
        %2127 = vadd.xlane.f32.xlu0 %v1991
        %v2128 = vpop.xlane.xlu0 %2127
        %2129 = vadd.xlane.f32.xlu0 %v1992
        %v2130 = vpop.xlane.xlu0 %2129
        %2131 = vadd.xlane.f32.xlu0 %v1993
        %v2132 = vpop.xlane.xlu0 %2131
        %2133 = vadd.xlane.f32.xlu0 %v1994
        %v2134 = vpop.xlane.xlu0 %2133
        %2135 = vadd.xlane.f32.xlu0 %v1995
        %v2136 = vpop.xlane.xlu0 %2135
        %2137 = vadd.xlane.f32.xlu0 %v1996
        %v2138 = vpop.xlane.xlu0 %2137
        %2139 = vadd.xlane.f32.xlu0 %v1997
        %v2140 = vpop.xlane.xlu0 %2139
        %2141 = vadd.xlane.f32.xlu0 %v1998
        %v2142 = vpop.xlane.xlu0 %2141
        %2143 = vadd.xlane.f32.xlu0 %v1999
        %v2144 = vpop.xlane.xlu0 %2143
        %2145 = vadd.xlane.f32.xlu0 %v2000
        %v2146 = vpop.xlane.xlu0 %2145
        %2147 = vadd.xlane.f32.xlu0 %v2001
        %v2148 = vpop.xlane.xlu0 %2147
        %2149 = vadd.xlane.f32.xlu0 %v2002
        %v2150 = vpop.xlane.xlu0 %2149
        %2151 = vadd.xlane.f32.xlu0 %v2003
        %v2152 = vpop.xlane.xlu0 %2151
        %2153 = vadd.xlane.f32.xlu0 %v2004
        %v2154 = vpop.xlane.xlu0 %2153
        %2155 = vadd.xlane.f32.xlu0 %v2005
        %v2156 = vpop.xlane.xlu0 %2155
        %2157 = vadd.xlane.f32.xlu0 %v2006
        %v2158 = vpop.xlane.xlu0 %2157
        %2159 = vadd.xlane.f32.xlu0 %v2007
        %v2160 = vpop.xlane.xlu0 %2159
        %2161 = vadd.xlane.f32.xlu0 %v2008
        %v2162 = vpop.xlane.xlu0 %2161
        %2163 = vadd.xlane.f32.xlu0 %v2009
        %v2164 = vpop.xlane.xlu0 %2163
        %2165 = vadd.xlane.f32.xlu0 %v2010
        %v2166 = vpop.xlane.xlu0 %2165
        %2167 = vadd.xlane.f32.xlu0 %v2011
        %v2168 = vpop.xlane.xlu0 %2167
        %2169 = vadd.xlane.f32.xlu0 %v2012
        %v2170 = vpop.xlane.xlu0 %2169
        %2171 = vadd.xlane.f32.xlu0 %v2013
        %v2172 = vpop.xlane.xlu0 %2171
        %2173 = vadd.xlane.f32.xlu0 %v2014
        %v2174 = vpop.xlane.xlu0 %2173
        %2175 = vadd.xlane.f32.xlu0 %v2015
        %v2176 = vpop.xlane.xlu0 %2175
        %2177 = vadd.xlane.f32.xlu0 %v2016
        %v2178 = vpop.xlane.xlu0 %2177
        %2179 = vadd.xlane.f32.xlu0 %v2017
        %v2180 = vpop.xlane.xlu0 %2179
        %2181 = vadd.xlane.f32.xlu0 %v2018
        %v2182 = vpop.xlane.xlu0 %2181
        %2183 = vadd.xlane.f32.xlu0 %v2019
        %v2184 = vpop.xlane.xlu0 %2183
        %2185 = vadd.xlane.f32.xlu0 %v2020
        %v2186 = vpop.xlane.xlu0 %2185
        %2187 = vadd.xlane.f32.xlu0 %v2021
        %v2188 = vpop.xlane.xlu0 %2187
        %2189 = vadd.xlane.f32.xlu0 %v2022
        %v2190 = vpop.xlane.xlu0 %2189
        %2191 = vadd.xlane.f32.xlu0 %v2023
        %v2192 = vpop.xlane.xlu0 %2191
        %2193 = vadd.xlane.f32.xlu0 %v2024
        %v2194 = vpop.xlane.xlu0 %2193
        %2195 = vadd.xlane.f32.xlu0 %v2025
        %v2196 = vpop.xlane.xlu0 %2195
        %2197 = vadd.xlane.f32.xlu0 %v2026
        %v2198 = vpop.xlane.xlu0 %2197
        %2199 = vadd.xlane.f32.xlu0 %v2027
        %v2200 = vpop.xlane.xlu0 %2199
        %2201 = vadd.xlane.f32.xlu0 %v2028
        %v2202 = vpop.xlane.xlu0 %2201
        %2203 = vadd.xlane.f32.xlu0 %v2029
        %v2204 = vpop.xlane.xlu0 %2203
        %2205 = vadd.xlane.f32.xlu0 %v2030
        %v2206 = vpop.xlane.xlu0 %2205
        %2207 = vadd.xlane.f32.xlu0 %v2031
        %v2208 = vpop.xlane.xlu0 %2207
        %2209 = vadd.xlane.f32.xlu0 %v2032
        %v2210 = vpop.xlane.xlu0 %2209
        %2211 = vadd.xlane.f32.xlu0 %v2033
        %v2212 = vpop.xlane.xlu0 %2211
        %2213 = vadd.xlane.f32.xlu0 %v2034
        %v2214 = vpop.xlane.xlu0 %2213
        %2215 = vadd.xlane.f32.xlu0 %v2035
        %v2216 = vpop.xlane.xlu0 %2215
        %2217 = vadd.xlane.f32.xlu0 %v2036
        %v2218 = vpop.xlane.xlu0 %2217
        %2219 = vadd.xlane.f32.xlu0 %v2037
        %v2220 = vpop.xlane.xlu0 %2219
        %2221 = vadd.xlane.f32.xlu0 %v2038
        %v2222 = vpop.xlane.xlu0 %2221
        %2223 = vadd.xlane.f32.xlu0 %v2039
        %v2224 = vpop.xlane.xlu0 %2223
        %2225 = vadd.xlane.f32.xlu0 %v2040
        %v2226 = vpop.xlane.xlu0 %2225
        %2227 = vadd.xlane.f32.xlu0 %v2041
        %v2228 = vpop.xlane.xlu0 %2227
        %2229 = vadd.xlane.f32.xlu0 %v2042
        %v2230 = vpop.xlane.xlu0 %2229
        %2231 = vadd.xlane.f32.xlu0 %v2043
        %v2232 = vpop.xlane.xlu0 %2231
        %2233 = vadd.xlane.f32.xlu0 %v2044
        %v2234 = vpop.xlane.xlu0 %2233
        %2235 = vadd.xlane.f32.xlu0 %v2045
        %v2236 = vpop.xlane.xlu0 %2235
        %2237 = vadd.xlane.f32.xlu0 %v2046
        %v2238 = vpop.xlane.xlu0 %2237
        %2239 = vadd.xlane.f32.xlu0 %v2047
        %v2240 = vpop.xlane.xlu0 %2239
        %2241 = vadd.xlane.f32.xlu0 %v2048
        %v2242 = vpop.xlane.xlu0 %2241
        %2243 = vadd.xlane.f32.xlu0 %v2049
        %v2244 = vpop.xlane.xlu0 %2243
        %2245 = vadd.xlane.f32.xlu0 %v2050
        %v2246 = vpop.xlane.xlu0 %2245
        %2247 = vadd.xlane.f32.xlu0 %v2051
        %v2248 = vpop.xlane.xlu0 %2247
        %2249 = vadd.xlane.f32.xlu0 %v2052
        %v2250 = vpop.xlane.xlu0 %2249
        %2251 = vadd.xlane.f32.xlu0 %v2053
        %v2252 = vpop.xlane.xlu0 %2251
        %2253 = vadd.xlane.f32.xlu0 %v2054
        %v2254 = vpop.xlane.xlu0 %2253
        %2255 = vadd.xlane.f32.xlu0 %v2055
        %v2256 = vpop.xlane.xlu0 %2255
        %2257 = vadd.xlane.f32.xlu0 %v2056
        %v2258 = vpop.xlane.xlu0 %2257
        %2259 = vadd.xlane.f32.xlu0 %v2057
        %v2260 = vpop.xlane.xlu0 %2259
        %2261 = vadd.xlane.f32.xlu0 %v2058
        %v2262 = vpop.xlane.xlu0 %2261
        %2263 = vadd.xlane.f32.xlu0 %v2059
        %v2264 = vpop.xlane.xlu0 %2263
        %2265 = vadd.xlane.f32.xlu0 %v2060
        %v2266 = vpop.xlane.xlu0 %2265
        %2267 = vadd.xlane.f32.xlu0 %v2061
        %v2268 = vpop.xlane.xlu0 %2267
        %2269 = vadd.xlane.f32.xlu0 %v2062
        %v2270 = vpop.xlane.xlu0 %2269
        %2271 = vadd.xlane.f32.xlu0 %v2063
        %v2272 = vpop.xlane.xlu0 %2271
        %2273 = vadd.xlane.f32.xlu0 %v2064
        %v2274 = vpop.xlane.xlu0 %2273
        %2275 = vadd.xlane.f32.xlu0 %v2065
        %v2276 = vpop.xlane.xlu0 %2275
        %2277 = vadd.xlane.f32.xlu0 %v2066
        %v2278 = vpop.xlane.xlu0 %2277
        %2279 = vadd.xlane.f32.xlu0 %v2067
        %v2280 = vpop.xlane.xlu0 %2279
        %2281 = vadd.xlane.f32.xlu0 %v2068
        %v2282 = vpop.xlane.xlu0 %2281
        %2283 = vadd.xlane.f32.xlu0 %v2069
        %v2284 = vpop.xlane.xlu0 %2283
        %2285 = vadd.xlane.f32.xlu0 %v2070
        %v2286 = vpop.xlane.xlu0 %2285
        %2287 = vadd.xlane.f32.xlu0 %v2071
        %v2288 = vpop.xlane.xlu0 %2287
        %2289 = vadd.xlane.f32.xlu0 %v2072
        %v2290 = vpop.xlane.xlu0 %2289
        %2291 = vadd.xlane.f32.xlu0 %v2073
        %v2292 = vpop.xlane.xlu0 %2291
        %2293 = vadd.xlane.f32.xlu0 %v2074
        %v2294 = vpop.xlane.xlu0 %2293
        %2295 = vadd.xlane.f32.xlu0 %v2075
        %v2296 = vpop.xlane.xlu0 %2295
        %2297 = vadd.xlane.f32.xlu0 %v2076
        %v2298 = vpop.xlane.xlu0 %2297
        %2299 = vadd.xlane.f32.xlu0 %v2077
        %v2300 = vpop.xlane.xlu0 %2299
        %2301 = vadd.xlane.f32.xlu0 %v2078
        %v2302 = vpop.xlane.xlu0 %2301
        %2303 = vadd.xlane.f32.xlu0 %v2079
        %v2304 = vpop.xlane.xlu0 %2303
        %2305 = vadd.xlane.f32.xlu0 %v2080
        %v2306 = vpop.xlane.xlu0 %2305
        %2307 = vadd.xlane.f32.xlu0 %v2081
        %v2308 = vpop.xlane.xlu0 %2307
        %2309 = vadd.xlane.f32.xlu0 %v2082
        %v2310 = vpop.xlane.xlu0 %2309
        %2311 = vadd.xlane.f32.xlu0 %v2083
        %v2312 = vpop.xlane.xlu0 %2311
        %2313 = vadd.xlane.f32.xlu0 %v2084
        %v2314 = vpop.xlane.xlu0 %2313
        %2315 = vadd.xlane.f32.xlu0 %v2085
        %v2316 = vpop.xlane.xlu0 %2315
        %2317 = vadd.xlane.f32.xlu0 %v2086
        %v2318 = vpop.xlane.xlu0 %2317
        %2319 = vadd.xlane.f32.xlu0 %v2087
        %v2320 = vpop.xlane.xlu0 %2319
        %2321 = vadd.xlane.f32.xlu0 %v2088
        %v2322 = vpop.xlane.xlu0 %2321
        %2323 = vadd.xlane.f32.xlu0 %v2089
        %v2324 = vpop.xlane.xlu0 %2323
        %2325 = vadd.xlane.f32.xlu0 %v2090
        %v2326 = vpop.xlane.xlu0 %2325
        %2327 = vadd.xlane.f32.xlu0 %v2091
        %v2328 = vpop.xlane.xlu0 %2327
        %2329 = vadd.xlane.f32.xlu0 %v2092
        %v2330 = vpop.xlane.xlu0 %2329
        %2331 = vadd.xlane.f32.xlu0 %v2093
        %v2332 = vpop.xlane.xlu0 %2331
        %2333 = vadd.xlane.f32.xlu0 %v2094
        %v2334 = vpop.xlane.xlu0 %2333
        %2335 = vadd.xlane.f32.xlu0 %v2095
        %v2336 = vpop.xlane.xlu0 %2335
        %2337 = vadd.xlane.f32.xlu0 %v2096
        %v2338 = vpop.xlane.xlu0 %2337
        %2339 = vadd.xlane.f32.xlu0 %v2097
        %v2340 = vpop.xlane.xlu0 %2339
        %2341 = vadd.xlane.f32.xlu0 %v2098
        %v2342 = vpop.xlane.xlu0 %2341
        %2343 = vadd.xlane.f32.xlu0 %v2099
        %v2344 = vpop.xlane.xlu0 %2343
        %2345 = vadd.xlane.f32.xlu0 %v2100
        %v2346 = vpop.xlane.xlu0 %2345
        %2347 = vadd.xlane.f32.xlu0 %v2101
        %v2348 = vpop.xlane.xlu0 %2347
        %2349 = vadd.xlane.f32.xlu0 %v2102
        %v2350 = vpop.xlane.xlu0 %2349
        %2351 = vadd.xlane.f32.xlu0 %v2103
        %v2352 = vpop.xlane.xlu0 %2351
        %2353 = vadd.xlane.f32.xlu0 %v2104
        %v2354 = vpop.xlane.xlu0 %2353
        %2355 = vadd.xlane.f32.xlu0 %v2105
        %v2356 = vpop.xlane.xlu0 %2355
        %2357 = vadd.xlane.f32.xlu0 %v2106
        %v2358 = vpop.xlane.xlu0 %2357
        %2359 = vadd.xlane.f32.xlu0 %v2107
        %v2360 = vpop.xlane.xlu0 %2359
        %2361 = vadd.xlane.f32.xlu0 %v2108
        %v2362 = vpop.xlane.xlu0 %2361
        %2363 = vadd.xlane.f32.xlu0 %v2109
        %v2364 = vpop.xlane.xlu0 %2363
        %2365 = vadd.xlane.f32.xlu0 %v2110
        %v2366 = vpop.xlane.xlu0 %2365
        %v2367 = vsel %vm1855, %v2112, 0.0
        %v2368 = vsel %vm1856, %v2114, 0.0
        %v2369 = vsel %vm1857, %v2116, 0.0
        %v2370 = vsel %vm1858, %v2118, 0.0
        %v2371 = vsel %vm1859, %v2120, 0.0
        %v2372 = vsel %vm1860, %v2122, 0.0
        %v2373 = vsel %vm1861, %v2124, 0.0
        %v2374 = vsel %vm1862, %v2126, 0.0
        %v2375 = vsel %vm1863, %v2128, 0.0
        %v2376 = vsel %vm1864, %v2130, 0.0
        %v2377 = vsel %vm1865, %v2132, 0.0
        %v2378 = vsel %vm1866, %v2134, 0.0
        %v2379 = vsel %vm1867, %v2136, 0.0
        %v2380 = vsel %vm1868, %v2138, 0.0
        %v2381 = vsel %vm1869, %v2140, 0.0
        %v2382 = vsel %vm1870, %v2142, 0.0
        %v2383 = vsel %vm1871, %v2144, 0.0
        %v2384 = vsel %vm1872, %v2146, 0.0
        %v2385 = vsel %vm1873, %v2148, 0.0
        %v2386 = vsel %vm1874, %v2150, 0.0
        %v2387 = vsel %vm1875, %v2152, 0.0
        %v2388 = vsel %vm1876, %v2154, 0.0
        %v2389 = vsel %vm1877, %v2156, 0.0
        %v2390 = vsel %vm1878, %v2158, 0.0
        %v2391 = vsel %vm1879, %v2160, 0.0
        %v2392 = vsel %vm1880, %v2162, 0.0
        %v2393 = vsel %vm1881, %v2164, 0.0
        %v2394 = vsel %vm1882, %v2166, 0.0
        %v2395 = vsel %vm1883, %v2168, 0.0
        %v2396 = vsel %vm1884, %v2170, 0.0
        %v2397 = vsel %vm1885, %v2172, 0.0
        %v2398 = vsel %vm1886, %v2174, 0.0
        %v2399 = vsel %vm1887, %v2176, 0.0
        %v2400 = vsel %vm1888, %v2178, 0.0
        %v2401 = vsel %vm1889, %v2180, 0.0
        %v2402 = vsel %vm1890, %v2182, 0.0
        %v2403 = vsel %vm1891, %v2184, 0.0
        %v2404 = vsel %vm1892, %v2186, 0.0
        %v2405 = vsel %vm1893, %v2188, 0.0
        %v2406 = vsel %vm1894, %v2190, 0.0
        %v2407 = vsel %vm1895, %v2192, 0.0
        %v2408 = vsel %vm1896, %v2194, 0.0
        %v2409 = vsel %vm1897, %v2196, 0.0
        %v2410 = vsel %vm1898, %v2198, 0.0
        %v2411 = vsel %vm1899, %v2200, 0.0
        %v2412 = vsel %vm1900, %v2202, 0.0
        %v2413 = vsel %vm1901, %v2204, 0.0
        %v2414 = vsel %vm1902, %v2206, 0.0
        %v2415 = vsel %vm1903, %v2208, 0.0
        %v2416 = vsel %vm1904, %v2210, 0.0
        %v2417 = vsel %vm1905, %v2212, 0.0
        %v2418 = vsel %vm1906, %v2214, 0.0
        %v2419 = vsel %vm1907, %v2216, 0.0
        %v2420 = vsel %vm1908, %v2218, 0.0
        %v2421 = vsel %vm1909, %v2220, 0.0
        %v2422 = vsel %vm1910, %v2222, 0.0
        %v2423 = vsel %vm1911, %v2224, 0.0
        %v2424 = vsel %vm1912, %v2226, 0.0
        %v2425 = vsel %vm1913, %v2228, 0.0
        %v2426 = vsel %vm1914, %v2230, 0.0
        %v2427 = vsel %vm1915, %v2232, 0.0
        %v2428 = vsel %vm1916, %v2234, 0.0
        %v2429 = vsel %vm1917, %v2236, 0.0
        %v2430 = vsel %vm1918, %v2238, 0.0
        %v2431 = vsel %vm1919, %v2240, 0.0
        %v2432 = vsel %vm1920, %v2242, 0.0
        %v2433 = vsel %vm1921, %v2244, 0.0
        %v2434 = vsel %vm1922, %v2246, 0.0
        %v2435 = vsel %vm1923, %v2248, 0.0
        %v2436 = vsel %vm1924, %v2250, 0.0
        %v2437 = vsel %vm1925, %v2252, 0.0
        %v2438 = vsel %vm1926, %v2254, 0.0
        %v2439 = vsel %vm1927, %v2256, 0.0
        %v2440 = vsel %vm1928, %v2258, 0.0
        %v2441 = vsel %vm1929, %v2260, 0.0
        %v2442 = vsel %vm1930, %v2262, 0.0
        %v2443 = vsel %vm1931, %v2264, 0.0
        %v2444 = vsel %vm1932, %v2266, 0.0
        %v2445 = vsel %vm1933, %v2268, 0.0
        %v2446 = vsel %vm1934, %v2270, 0.0
        %v2447 = vsel %vm1935, %v2272, 0.0
        %v2448 = vsel %vm1936, %v2274, 0.0
        %v2449 = vsel %vm1937, %v2276, 0.0
        %v2450 = vsel %vm1938, %v2278, 0.0
        %v2451 = vsel %vm1939, %v2280, 0.0
        %v2452 = vsel %vm1940, %v2282, 0.0
        %v2453 = vsel %vm1941, %v2284, 0.0
        %v2454 = vsel %vm1942, %v2286, 0.0
        %v2455 = vsel %vm1943, %v2288, 0.0
        %v2456 = vsel %vm1944, %v2290, 0.0
        %v2457 = vsel %vm1945, %v2292, 0.0
        %v2458 = vsel %vm1946, %v2294, 0.0
        %v2459 = vsel %vm1947, %v2296, 0.0
        %v2460 = vsel %vm1948, %v2298, 0.0
        %v2461 = vsel %vm1949, %v2300, 0.0
        %v2462 = vsel %vm1950, %v2302, 0.0
        %v2463 = vsel %vm1951, %v2304, 0.0
        %v2464 = vsel %vm1952, %v2306, 0.0
        %v2465 = vsel %vm1953, %v2308, 0.0
        %v2466 = vsel %vm1954, %v2310, 0.0
        %v2467 = vsel %vm1955, %v2312, 0.0
        %v2468 = vsel %vm1956, %v2314, 0.0
        %v2469 = vsel %vm1957, %v2316, 0.0
        %v2470 = vsel %vm1958, %v2318, 0.0
        %v2471 = vsel %vm1959, %v2320, 0.0
        %v2472 = vsel %vm1960, %v2322, 0.0
        %v2473 = vsel %vm1961, %v2324, 0.0
        %v2474 = vsel %vm1962, %v2326, 0.0
        %v2475 = vsel %vm1963, %v2328, 0.0
        %v2476 = vsel %vm1964, %v2330, 0.0
        %v2477 = vsel %vm1965, %v2332, 0.0
        %v2478 = vsel %vm1966, %v2334, 0.0
        %v2479 = vsel %vm1967, %v2336, 0.0
        %v2480 = vsel %vm1968, %v2338, 0.0
        %v2481 = vsel %vm1969, %v2340, 0.0
        %v2482 = vsel %vm1970, %v2342, 0.0
        %v2483 = vsel %vm1971, %v2344, 0.0
        %v2484 = vsel %vm1972, %v2346, 0.0
        %v2485 = vsel %vm1973, %v2348, 0.0
        %v2486 = vsel %vm1974, %v2350, 0.0
        %v2487 = vsel %vm1975, %v2352, 0.0
        %v2488 = vsel %vm1976, %v2354, 0.0
        %v2489 = vsel %vm1977, %v2356, 0.0
        %v2490 = vsel %vm1978, %v2358, 0.0
        %v2491 = vsel %vm1979, %v2360, 0.0
        %v2492 = vsel %vm1980, %v2362, 0.0
        %v2493 = vsel %vm1981, %v2364, 0.0
        %v2494 = vsel %vm1982, %v2366, 0.0
        %vm2495 = vcmask 7168
        %v2496 = vsel %vm2495, %v2367, 0.0
        %v2497 = vsel %vm2495, %v2368, 0.0
        %v2498 = vadd.f32 %v2496, %v2497
        %v2499 = vsel %vm2495, %v2369, 0.0
        %v2500 = vadd.f32 %v2498, %v2499
        %v2501 = vsel %vm2495, %v2370, 0.0
        %v2502 = vadd.f32 %v2500, %v2501
        %v2503 = vsel %vm2495, %v2371, 0.0
        %v2504 = vadd.f32 %v2502, %v2503
        %v2505 = vsel %vm2495, %v2372, 0.0
        %v2506 = vadd.f32 %v2504, %v2505
        %v2507 = vsel %vm2495, %v2373, 0.0
        %v2508 = vadd.f32 %v2506, %v2507
        %v2509 = vsel %vm2495, %v2374, 0.0
        %v2510 = vadd.f32 %v2508, %v2509
        %v2511 = vsel %vm2495, %v2375, 0.0
        %v2512 = vadd.f32 %v2510, %v2511
        %v2513 = vsel %vm2495, %v2376, 0.0
        %v2514 = vadd.f32 %v2512, %v2513
        %v2515 = vsel %vm2495, %v2377, 0.0
        %v2516 = vadd.f32 %v2514, %v2515
        %v2517 = vsel %vm2495, %v2378, 0.0
        %v2518 = vadd.f32 %v2516, %v2517
        %v2519 = vsel %vm2495, %v2379, 0.0
        %v2520 = vadd.f32 %v2518, %v2519
        %v2521 = vsel %vm2495, %v2380, 0.0
        %v2522 = vadd.f32 %v2520, %v2521
        %v2523 = vsel %vm2495, %v2381, 0.0
        %v2524 = vadd.f32 %v2522, %v2523
        %v2525 = vsel %vm2495, %v2382, 0.0
        %v2526 = vadd.f32 %v2524, %v2525
        %v2527 = vsel %vm2495, %v2383, 0.0
        %v2528 = vadd.f32 %v2526, %v2527
        %v2529 = vsel %vm2495, %v2384, 0.0
        %v2530 = vadd.f32 %v2528, %v2529
        %v2531 = vsel %vm2495, %v2385, 0.0
        %v2532 = vadd.f32 %v2530, %v2531
        %v2533 = vsel %vm2495, %v2386, 0.0
        %v2534 = vadd.f32 %v2532, %v2533
        %v2535 = vsel %vm2495, %v2387, 0.0
        %v2536 = vadd.f32 %v2534, %v2535
        %v2537 = vsel %vm2495, %v2388, 0.0
        %v2538 = vadd.f32 %v2536, %v2537
        %v2539 = vsel %vm2495, %v2389, 0.0
        %v2540 = vadd.f32 %v2538, %v2539
        %v2541 = vsel %vm2495, %v2390, 0.0
        %v2542 = vadd.f32 %v2540, %v2541
        %v2543 = vsel %vm2495, %v2391, 0.0
        %v2544 = vadd.f32 %v2542, %v2543
        %v2545 = vsel %vm2495, %v2392, 0.0
        %v2546 = vadd.f32 %v2544, %v2545
        %v2547 = vsel %vm2495, %v2393, 0.0
        %v2548 = vadd.f32 %v2546, %v2547
        %v2549 = vsel %vm2495, %v2394, 0.0
        %v2550 = vadd.f32 %v2548, %v2549
        %v2551 = vsel %vm2495, %v2395, 0.0
        %v2552 = vadd.f32 %v2550, %v2551
        %v2553 = vsel %vm2495, %v2396, 0.0
        %v2554 = vadd.f32 %v2552, %v2553
        %v2555 = vsel %vm2495, %v2397, 0.0
        %v2556 = vadd.f32 %v2554, %v2555
        %v2557 = vsel %vm2495, %v2398, 0.0
        %v2558 = vadd.f32 %v2556, %v2557
        %v2559 = vsel %vm2495, %v2399, 0.0
        %v2560 = vadd.f32 %v2558, %v2559
        %v2561 = vsel %vm2495, %v2400, 0.0
        %v2562 = vadd.f32 %v2560, %v2561
        %v2563 = vsel %vm2495, %v2401, 0.0
        %v2564 = vadd.f32 %v2562, %v2563
        %v2565 = vsel %vm2495, %v2402, 0.0
        %v2566 = vadd.f32 %v2564, %v2565
        %v2567 = vsel %vm2495, %v2403, 0.0
        %v2568 = vadd.f32 %v2566, %v2567
        %v2569 = vsel %vm2495, %v2404, 0.0
        %v2570 = vadd.f32 %v2568, %v2569
        %v2571 = vsel %vm2495, %v2405, 0.0
        %v2572 = vadd.f32 %v2570, %v2571
        %v2573 = vsel %vm2495, %v2406, 0.0
        %v2574 = vadd.f32 %v2572, %v2573
        %v2575 = vsel %vm2495, %v2407, 0.0
        %v2576 = vadd.f32 %v2574, %v2575
        %v2577 = vsel %vm2495, %v2408, 0.0
        %v2578 = vadd.f32 %v2576, %v2577
        %v2579 = vsel %vm2495, %v2409, 0.0
        %v2580 = vadd.f32 %v2578, %v2579
        %v2581 = vsel %vm2495, %v2410, 0.0
        %v2582 = vadd.f32 %v2580, %v2581
        %v2583 = vsel %vm2495, %v2411, 0.0
        %v2584 = vadd.f32 %v2582, %v2583
        %v2585 = vsel %vm2495, %v2412, 0.0
        %v2586 = vadd.f32 %v2584, %v2585
        %v2587 = vsel %vm2495, %v2413, 0.0
        %v2588 = vadd.f32 %v2586, %v2587
        %v2589 = vsel %vm2495, %v2414, 0.0
        %v2590 = vadd.f32 %v2588, %v2589
        %v2591 = vsel %vm2495, %v2415, 0.0
        %v2592 = vadd.f32 %v2590, %v2591
        %v2593 = vsel %vm2495, %v2416, 0.0
        %v2594 = vadd.f32 %v2592, %v2593
        %v2595 = vsel %vm2495, %v2417, 0.0
        %v2596 = vadd.f32 %v2594, %v2595
        %v2597 = vsel %vm2495, %v2418, 0.0
        %v2598 = vadd.f32 %v2596, %v2597
        %v2599 = vsel %vm2495, %v2419, 0.0
        %v2600 = vadd.f32 %v2598, %v2599
        %v2601 = vsel %vm2495, %v2420, 0.0
        %v2602 = vadd.f32 %v2600, %v2601
        %v2603 = vsel %vm2495, %v2421, 0.0
        %v2604 = vadd.f32 %v2602, %v2603
        %v2605 = vsel %vm2495, %v2422, 0.0
        %v2606 = vadd.f32 %v2604, %v2605
        %v2607 = vsel %vm2495, %v2423, 0.0
        %v2608 = vadd.f32 %v2606, %v2607
        %v2609 = vsel %vm2495, %v2424, 0.0
        %v2610 = vadd.f32 %v2608, %v2609
        %v2611 = vsel %vm2495, %v2425, 0.0
        %v2612 = vadd.f32 %v2610, %v2611
        %v2613 = vsel %vm2495, %v2426, 0.0
        %v2614 = vadd.f32 %v2612, %v2613
        %v2615 = vsel %vm2495, %v2427, 0.0
        %v2616 = vadd.f32 %v2614, %v2615
        %v2617 = vsel %vm2495, %v2428, 0.0
        %v2618 = vadd.f32 %v2616, %v2617
        %v2619 = vsel %vm2495, %v2429, 0.0
        %v2620 = vadd.f32 %v2618, %v2619
        %v2621 = vsel %vm2495, %v2430, 0.0
        %v2622 = vadd.f32 %v2620, %v2621
        %v2623 = vsel %vm2495, %v2431, 0.0
        %v2624 = vadd.f32 %v2622, %v2623
        %v2625 = vsel %vm2495, %v2432, 0.0
        %v2626 = vadd.f32 %v2624, %v2625
        %v2627 = vsel %vm2495, %v2433, 0.0
        %v2628 = vadd.f32 %v2626, %v2627
        %v2629 = vsel %vm2495, %v2434, 0.0
        %v2630 = vadd.f32 %v2628, %v2629
        %v2631 = vsel %vm2495, %v2435, 0.0
        %v2632 = vadd.f32 %v2630, %v2631
        %v2633 = vsel %vm2495, %v2436, 0.0
        %v2634 = vadd.f32 %v2632, %v2633
        %v2635 = vsel %vm2495, %v2437, 0.0
        %v2636 = vadd.f32 %v2634, %v2635
        %v2637 = vsel %vm2495, %v2438, 0.0
        %v2638 = vadd.f32 %v2636, %v2637
        %v2639 = vsel %vm2495, %v2439, 0.0
        %v2640 = vadd.f32 %v2638, %v2639
        %v2641 = vsel %vm2495, %v2440, 0.0
        %v2642 = vadd.f32 %v2640, %v2641
        %v2643 = vsel %vm2495, %v2441, 0.0
        %v2644 = vadd.f32 %v2642, %v2643
        %v2645 = vsel %vm2495, %v2442, 0.0
        %v2646 = vadd.f32 %v2644, %v2645
        %v2647 = vsel %vm2495, %v2443, 0.0
        %v2648 = vadd.f32 %v2646, %v2647
        %v2649 = vsel %vm2495, %v2444, 0.0
        %v2650 = vadd.f32 %v2648, %v2649
        %v2651 = vsel %vm2495, %v2445, 0.0
        %v2652 = vadd.f32 %v2650, %v2651
        %v2653 = vsel %vm2495, %v2446, 0.0
        %v2654 = vadd.f32 %v2652, %v2653
        %v2655 = vsel %vm2495, %v2447, 0.0
        %v2656 = vadd.f32 %v2654, %v2655
        %v2657 = vsel %vm2495, %v2448, 0.0
        %v2658 = vadd.f32 %v2656, %v2657
        %v2659 = vsel %vm2495, %v2449, 0.0
        %v2660 = vadd.f32 %v2658, %v2659
        %v2661 = vsel %vm2495, %v2450, 0.0
        %v2662 = vadd.f32 %v2660, %v2661
        %v2663 = vsel %vm2495, %v2451, 0.0
        %v2664 = vadd.f32 %v2662, %v2663
        %v2665 = vsel %vm2495, %v2452, 0.0
        %v2666 = vadd.f32 %v2664, %v2665
        %v2667 = vsel %vm2495, %v2453, 0.0
        %v2668 = vadd.f32 %v2666, %v2667
        %v2669 = vsel %vm2495, %v2454, 0.0
        %v2670 = vadd.f32 %v2668, %v2669
        %v2671 = vsel %vm2495, %v2455, 0.0
        %v2672 = vadd.f32 %v2670, %v2671
        %v2673 = vsel %vm2495, %v2456, 0.0
        %v2674 = vadd.f32 %v2672, %v2673
        %v2675 = vsel %vm2495, %v2457, 0.0
        %v2676 = vadd.f32 %v2674, %v2675
        %v2677 = vsel %vm2495, %v2458, 0.0
        %v2678 = vadd.f32 %v2676, %v2677
        %v2679 = vsel %vm2495, %v2459, 0.0
        %v2680 = vadd.f32 %v2678, %v2679
        %v2681 = vsel %vm2495, %v2460, 0.0
        %v2682 = vadd.f32 %v2680, %v2681
        %v2683 = vsel %vm2495, %v2461, 0.0
        %v2684 = vadd.f32 %v2682, %v2683
        %v2685 = vsel %vm2495, %v2462, 0.0
        %v2686 = vadd.f32 %v2684, %v2685
        %v2687 = vsel %vm2495, %v2463, 0.0
        %v2688 = vadd.f32 %v2686, %v2687
        %v2689 = vsel %vm2495, %v2464, 0.0
        %v2690 = vadd.f32 %v2688, %v2689
        %v2691 = vsel %vm2495, %v2465, 0.0
        %v2692 = vadd.f32 %v2690, %v2691
        %v2693 = vsel %vm2495, %v2466, 0.0
        %v2694 = vadd.f32 %v2692, %v2693
        %v2695 = vsel %vm2495, %v2467, 0.0
        %v2696 = vadd.f32 %v2694, %v2695
        %v2697 = vsel %vm2495, %v2468, 0.0
        %v2698 = vadd.f32 %v2696, %v2697
        %v2699 = vsel %vm2495, %v2469, 0.0
        %v2700 = vadd.f32 %v2698, %v2699
        %v2701 = vsel %vm2495, %v2470, 0.0
        %v2702 = vadd.f32 %v2700, %v2701
        %v2703 = vsel %vm2495, %v2471, 0.0
        %v2704 = vadd.f32 %v2702, %v2703
        %v2705 = vsel %vm2495, %v2472, 0.0
        %v2706 = vadd.f32 %v2704, %v2705
        %v2707 = vsel %vm2495, %v2473, 0.0
        %v2708 = vadd.f32 %v2706, %v2707
        %v2709 = vsel %vm2495, %v2474, 0.0
        %v2710 = vadd.f32 %v2708, %v2709
        %v2711 = vsel %vm2495, %v2475, 0.0
        %v2712 = vadd.f32 %v2710, %v2711
        %v2713 = vsel %vm2495, %v2476, 0.0
        %v2714 = vadd.f32 %v2712, %v2713
        %v2715 = vsel %vm2495, %v2477, 0.0
        %v2716 = vadd.f32 %v2714, %v2715
        %v2717 = vsel %vm2495, %v2478, 0.0
        %v2718 = vadd.f32 %v2716, %v2717
        %v2719 = vsel %vm2495, %v2479, 0.0
        %v2720 = vadd.f32 %v2718, %v2719
        %v2721 = vsel %vm2495, %v2480, 0.0
        %v2722 = vadd.f32 %v2720, %v2721
        %v2723 = vsel %vm2495, %v2481, 0.0
        %v2724 = vadd.f32 %v2722, %v2723
        %v2725 = vsel %vm2495, %v2482, 0.0
        %v2726 = vadd.f32 %v2724, %v2725
        %v2727 = vsel %vm2495, %v2483, 0.0
        %v2728 = vadd.f32 %v2726, %v2727
        %v2729 = vsel %vm2495, %v2484, 0.0
        %v2730 = vadd.f32 %v2728, %v2729
        %v2731 = vsel %vm2495, %v2485, 0.0
        %v2732 = vadd.f32 %v2730, %v2731
        %v2733 = vsel %vm2495, %v2486, 0.0
        %v2734 = vadd.f32 %v2732, %v2733
        %v2735 = vsel %vm2495, %v2487, 0.0
        %v2736 = vadd.f32 %v2734, %v2735
        %v2737 = vsel %vm2495, %v2488, 0.0
        %v2738 = vadd.f32 %v2736, %v2737
        %v2739 = vsel %vm2495, %v2489, 0.0
        %v2740 = vadd.f32 %v2738, %v2739
        %v2741 = vsel %vm2495, %v2490, 0.0
        %v2742 = vadd.f32 %v2740, %v2741
        %v2743 = vsel %vm2495, %v2491, 0.0
        %v2744 = vadd.f32 %v2742, %v2743
        %v2745 = vsel %vm2495, %v2492, 0.0
        %v2746 = vadd.f32 %v2744, %v2745
        %v2747 = vsel %vm2495, %v2493, 0.0
        %v2748 = vadd.f32 %v2746, %v2747
        %v2749 = vsel %vm2495, %v2494, 0.0
        %v2750 = vadd.f32 %v2748, %v2749
        %2751 = vadd.xlane.f32.xlu0 %v2750
        %v2752 = vpop.xlane.xlu0 %2751
        %v2753 = vrot.slane %v2752, 4
        %v2754 = vadd.f32 %v2752, %v2753
        %v2755 = vrot.slane %v2754, 2
        %v2756 = vadd.f32 %v2754, %v2755
        %v2757 = vrot.slane %v2756, 1
        %v2758 = vadd.f32 %v2756, %v2757
        %s2759 = vtos %v2758
        %v2760 = vpack.c.bf16 %v1468, %v1467
        %v2761 = vpack.c.bf16 %v1470, %v1469
        %v2762 = vpack.c.bf16 %v1472, %v1471
        %v2763 = vpack.c.bf16 %v1474, %v1473
        %v2764 = vpack.c.bf16 %v1476, %v1475
        %v2765 = vpack.c.bf16 %v1478, %v1477
        %v2766 = vpack.c.bf16 %v1480, %v1479
        %v2767 = vpack.c.bf16 %v1482, %v1481
        %v2768 = vpack.c.bf16 %v1484, %v1483
        %v2769 = vpack.c.bf16 %v1486, %v1485
        %v2770 = vpack.c.bf16 %v1488, %v1487
        %v2771 = vpack.c.bf16 %v1490, %v1489
        %v2772 = vpack.c.bf16 %v1492, %v1491
        %v2773 = vpack.c.bf16 %v1494, %v1493
        %v2774 = vpack.c.bf16 %v1496, %v1495
        %v2775 = vpack.c.bf16 %v1498, %v1497
        %v2776 = vpack.c.bf16 %v1500, %v1499
        %v2777 = vpack.c.bf16 %v1502, %v1501
        %v2778 = vpack.c.bf16 %v1504, %v1503
        %v2779 = vpack.c.bf16 %v1506, %v1505
        %v2780 = vpack.c.bf16 %v1508, %v1507
        %v2781 = vpack.c.bf16 %v1510, %v1509
        %v2782 = vpack.c.bf16 %v1512, %v1511
        %v2783 = vpack.c.bf16 %v1514, %v1513
        %v2784 = vpack.c.bf16 %v1516, %v1515
        %v2785 = vpack.c.bf16 %v1518, %v1517
        %v2786 = vpack.c.bf16 %v1520, %v1519
        %v2787 = vpack.c.bf16 %v1522, %v1521
        %v2788 = vpack.c.bf16 %v1524, %v1523
        %v2789 = vpack.c.bf16 %v1526, %v1525
        %v2790 = vpack.c.bf16 %v1528, %v1527
        %v2791 = vpack.c.bf16 %v1530, %v1529
        %v2792 = vpack.c.bf16 %v1532, %v1531
        %v2793 = vpack.c.bf16 %v1534, %v1533
        %v2794 = vpack.c.bf16 %v1536, %v1535
        %v2795 = vpack.c.bf16 %v1538, %v1537
        %v2796 = vpack.c.bf16 %v1540, %v1539
        %v2797 = vpack.c.bf16 %v1542, %v1541
        %v2798 = vpack.c.bf16 %v1544, %v1543
        %v2799 = vpack.c.bf16 %v1546, %v1545
        %v2800 = vpack.c.bf16 %v1548, %v1547
        %v2801 = vpack.c.bf16 %v1550, %v1549
        %v2802 = vpack.c.bf16 %v1552, %v1551
        %v2803 = vpack.c.bf16 %v1554, %v1553
        %v2804 = vpack.c.bf16 %v1556, %v1555
        %v2805 = vpack.c.bf16 %v1558, %v1557
        %v2806 = vpack.c.bf16 %v1560, %v1559
        %v2807 = vpack.c.bf16 %v1562, %v1561
        %v2808 = vpack.c.bf16 %v1564, %v1563
        %v2809 = vpack.c.bf16 %v1566, %v1565
        %v2810 = vpack.c.bf16 %v1568, %v1567
        %v2811 = vpack.c.bf16 %v1570, %v1569
        %v2812 = vpack.c.bf16 %v1572, %v1571
        %v2813 = vpack.c.bf16 %v1574, %v1573
        %v2814 = vpack.c.bf16 %v1576, %v1575
        %v2815 = vpack.c.bf16 %v1578, %v1577
        %v2816 = vpack.c.bf16 %v1580, %v1579
        %v2817 = vpack.c.bf16 %v1582, %v1581
        %v2818 = vpack.c.bf16 %v1584, %v1583
        %v2819 = vpack.c.bf16 %v1586, %v1585
        %v2820 = vpack.c.bf16 %v1588, %v1587
        %v2821 = vpack.c.bf16 %v1590, %v1589
        %v2822 = vpack.c.bf16 %v1592, %v1591
        %v2823 = vpack.c.bf16 %v1594, %v1593
        %v2824 = vld [vmem:[%s5] sm:$0xf]
        %v2825 = vld [vmem:[%s5 + $0x4] sm:$0xf]
        %v2826 = vld [vmem:[%s5 + $0x8] sm:$0xf]
        %v2827 = vld [vmem:[%s5 + $0xc] sm:$0xf]
        %v2828 = vld [vmem:[%s5 + $0x10] sm:$0xf]
        %v2829 = vld [vmem:[%s5 + $0x14] sm:$0xf]
        %v2830 = vld [vmem:[%s5 + $0x18] sm:$0xf]
        %v2831 = vld [vmem:[%s5 + $0x1c] sm:$0xf]
        %v2832 = vld [vmem:[%s5 + $0x20] sm:$0xf]
        %v2833 = vld [vmem:[%s5 + $0x24] sm:$0xf]
        %v2834 = vld [vmem:[%s5 + $0x28] sm:$0xf]
        %v2835 = vld [vmem:[%s5 + $0x2c] sm:$0xf]
        %v2836 = vld [vmem:[%s5 + $0x30] sm:$0xf]
        %v2837 = vld [vmem:[%s5 + $0x34] sm:$0xf]
        %v2838 = vld [vmem:[%s5 + $0x38] sm:$0xf]
        %v2839 = vld [vmem:[%s5 + $0x3c] sm:$0xf]
        %v2840 = vld [vmem:[%s6] sm:$0x1]
        %v2842 = vlaneseq
        %v2843 = vshrl.u32 %v2842, 7
        %v2844 = vsub.s32 0, %v2843
        %v2845 = vrot.slane %v2840, %v2844
        %v2863 = vunpack.c.l.b16 %v2824
        %v2864 = vunpack.c.l.b16 %v2825
        %v2865 = vunpack.c.l.b16 %v2826
        %v2866 = vunpack.c.l.b16 %v2827
        %v2867 = vunpack.c.l.b16 %v2828
        %v2868 = vunpack.c.l.b16 %v2829
        %v2869 = vunpack.c.l.b16 %v2830
        %v2870 = vunpack.c.l.b16 %v2831
        %v2871 = vunpack.c.l.b16 %v2832
        %v2872 = vunpack.c.l.b16 %v2833
        %v2873 = vunpack.c.l.b16 %v2834
        %v2874 = vunpack.c.l.b16 %v2835
        %v2875 = vunpack.c.l.b16 %v2836
        %v2876 = vunpack.c.l.b16 %v2837
        %v2877 = vunpack.c.l.b16 %v2838
        %v2878 = vunpack.c.l.b16 %v2839
        %v2879 = vpack.c.b16 %v2864, %v2863
        %v2880 = vpack.c.b16 %v2866, %v2865
        %v2881 = vpack.c.b16 %v2868, %v2867
        %v2882 = vpack.c.b16 %v2870, %v2869
        %v2883 = vpack.c.b16 %v2872, %v2871
        %v2884 = vpack.c.b16 %v2874, %v2873
        %v2885 = vpack.c.b16 %v2876, %v2875
        %v2886 = vpack.c.b16 %v2878, %v2877
        %2895 = vmatprep.subr.bf16.mxu0 0
        %2896 = vmatpush1.bf16.msra.mxu0 %v2879
        %2897 = vmatprep.subr.bf16.mxu0 0
        %2898 = vmatpush1.bf16.msra.mxu0 %v2880
        %2899 = vmatprep.subr.bf16.mxu0 0
        %2900 = vmatpush1.bf16.msra.mxu0 %v2881
        %2901 = vmatprep.subr.bf16.mxu0 0
        %2902 = vmatpush1.bf16.msra.mxu0 %v2882
        %2903 = vmatprep.subr.bf16.mxu0 0
        %2904 = vmatpush1.bf16.msra.mxu0 %v2883
        %2905 = vmatprep.subr.bf16.mxu0 0
        %2906 = vmatpush1.bf16.msra.mxu0 %v2884
        %2907 = vmatprep.subr.bf16.mxu0 0
        %2908 = vmatpush1.bf16.msra.mxu0 %v2885
        %2909 = vmatprep.subr.bf16.mxu0 0
        %2910 = vmatpush1.bf16.msra.mxu0 %v2886
        %2911 = vmatprep.subr.bf16.mxu0 0
        %2912 = vmatpush1.bf16.msra.mxu0 0
        %2913 = vmatprep.subr.bf16.mxu0 0
        %2914 = vmatpush1.bf16.msra.mxu0 0
        %2915 = vmatprep.subr.bf16.mxu0 0
        %2916 = vmatpush1.bf16.msra.mxu0 0
        %2917 = vmatprep.subr.bf16.mxu0 0
        %2918 = vmatpush1.bf16.msra.mxu0 0
        %2919 = vmatprep.subr.bf16.mxu0 0
        %2920 = vmatpush1.bf16.msra.mxu0 0
        %2921 = vmatprep.subr.bf16.mxu0 0
        %2922 = vmatpush1.bf16.msra.mxu0 0
        %2923 = vmatprep.subr.bf16.mxu0 0
        %2924 = vmatpush1.bf16.msra.mxu0 0
        %2925 = vmatprep.subr.bf16.mxu0 0
        %2926 = vmatpush1.bf16.msra.mxu0 0
        %2927 = vmatprep.mubr.bf16.mxu0 0
        %2928 = vmatmul.mubr.bf16.gmra.mrb[0].mxu0 %v2760
        %v2929 = vpop.f32.mrb[0].mxu0
        %v2930 = vadd.f32 %v2845, %v2929
        %v2931 = vpop.f32.mrb[0].mxu0
        %v2932 = vpop.f32.mrb[0].mxu0
        %v2933 = vadd.f32 %v2845, %v2932
        %v2934 = vpop.f32.mrb[0].mxu0
        %2935 = vmatprep.mubr.bf16.mxu0 0
        %2936 = vmatmul.mubr.bf16.gmra.mrb[0].mxu0 %v2761
        %v2937 = vpop.f32.mrb[0].mxu0
        %v2938 = vadd.f32 %v2845, %v2937
        %v2939 = vpop.f32.mrb[0].mxu0
        %v2940 = vpop.f32.mrb[0].mxu0
        %v2941 = vadd.f32 %v2845, %v2940
        %v2942 = vpop.f32.mrb[0].mxu0
        %2943 = vmatprep.mubr.bf16.mxu0 0
        %2944 = vmatmul.mubr.bf16.gmra.mrb[0].mxu0 %v2762
        %v2945 = vpop.f32.mrb[0].mxu0
        %v2946 = vadd.f32 %v2845, %v2945
        %v2947 = vpop.f32.mrb[0].mxu0
        %v2948 = vpop.f32.mrb[0].mxu0
        %v2949 = vadd.f32 %v2845, %v2948
        %v2950 = vpop.f32.mrb[0].mxu0
        %2951 = vmatprep.mubr.bf16.mxu0 0
        %2952 = vmatmul.mubr.bf16.gmra.mrb[0].mxu0 %v2763
        %v2953 = vpop.f32.mrb[0].mxu0
        %v2954 = vadd.f32 %v2845, %v2953
        %v2955 = vpop.f32.mrb[0].mxu0
        %v2956 = vpop.f32.mrb[0].mxu0
        %v2957 = vadd.f32 %v2845, %v2956
        %v2958 = vpop.f32.mrb[0].mxu0
        %2959 = vmatprep.mubr.bf16.mxu0 0
        %2960 = vmatmul.mubr.bf16.gmra.mrb[0].mxu0 %v2764
        %v2961 = vpop.f32.mrb[0].mxu0
        %v2962 = vadd.f32 %v2845, %v2961
        %v2963 = vpop.f32.mrb[0].mxu0
        %v2964 = vpop.f32.mrb[0].mxu0
        %v2965 = vadd.f32 %v2845, %v2964
        %v2966 = vpop.f32.mrb[0].mxu0
        %2967 = vmatprep.mubr.bf16.mxu0 0
        %2968 = vmatmul.mubr.bf16.gmra.mrb[0].mxu0 %v2765
        %v2969 = vpop.f32.mrb[0].mxu0
        %v2970 = vadd.f32 %v2845, %v2969
        %v2971 = vpop.f32.mrb[0].mxu0
        %v2972 = vpop.f32.mrb[0].mxu0
        %v2973 = vadd.f32 %v2845, %v2972
        %v2974 = vpop.f32.mrb[0].mxu0
        %2975 = vmatprep.mubr.bf16.mxu0 0
        %2976 = vmatmul.mubr.bf16.gmra.mrb[0].mxu0 %v2766
        %v2977 = vpop.f32.mrb[0].mxu0
        %v2978 = vadd.f32 %v2845, %v2977
        %v2979 = vpop.f32.mrb[0].mxu0
        %v2980 = vpop.f32.mrb[0].mxu0
        %v2981 = vadd.f32 %v2845, %v2980
        %v2982 = vpop.f32.mrb[0].mxu0
        %2983 = vmatprep.mubr.bf16.mxu0 0
        %2984 = vmatmul.mubr.bf16.gmra.mrb[0].mxu0 %v2767
        %v2985 = vpop.f32.mrb[0].mxu0
        %v2986 = vadd.f32 %v2845, %v2985
        %v2987 = vpop.f32.mrb[0].mxu0
        %v2988 = vpop.f32.mrb[0].mxu0
        %v2989 = vadd.f32 %v2845, %v2988
        %v2990 = vpop.f32.mrb[0].mxu0
        %2991 = vmatprep.mubr.bf16.mxu0 0
        %2992 = vmatmul.mubr.bf16.gmra.mrb[0].mxu0 %v2768
        %v2993 = vpop.f32.mrb[0].mxu0
        %v2994 = vadd.f32 %v2845, %v2993
        %v2995 = vpop.f32.mrb[0].mxu0
        %v2996 = vpop.f32.mrb[0].mxu0
        %v2997 = vadd.f32 %v2845, %v2996
        %v2998 = vpop.f32.mrb[0].mxu0
        %2999 = vmatprep.mubr.bf16.mxu0 0
        %3000 = vmatmul.mubr.bf16.gmra.mrb[0].mxu0 %v2769
        %v3001 = vpop.f32.mrb[0].mxu0
        %v3002 = vadd.f32 %v2845, %v3001
        %v3003 = vpop.f32.mrb[0].mxu0
        %v3004 = vpop.f32.mrb[0].mxu0
        %v3005 = vadd.f32 %v2845, %v3004
        %v3006 = vpop.f32.mrb[0].mxu0
        %3007 = vmatprep.mubr.bf16.mxu0 0
        %3008 = vmatmul.mubr.bf16.gmra.mrb[0].mxu0 %v2770
        %v3009 = vpop.f32.mrb[0].mxu0
        %v3010 = vadd.f32 %v2845, %v3009
        %v3011 = vpop.f32.mrb[0].mxu0
        %v3012 = vpop.f32.mrb[0].mxu0
        %v3013 = vadd.f32 %v2845, %v3012
        %v3014 = vpop.f32.mrb[0].mxu0
        %3015 = vmatprep.mubr.bf16.mxu0 0
        %3016 = vmatmul.mubr.bf16.gmra.mrb[0].mxu0 %v2771
        %v3017 = vpop.f32.mrb[0].mxu0
        %v3018 = vadd.f32 %v2845, %v3017
        %v3019 = vpop.f32.mrb[0].mxu0
        %v3020 = vpop.f32.mrb[0].mxu0
        %v3021 = vadd.f32 %v2845, %v3020
        %v3022 = vpop.f32.mrb[0].mxu0
        %3023 = vmatprep.mubr.bf16.mxu0 0
        %3024 = vmatmul.mubr.bf16.gmra.mrb[0].mxu0 %v2772
        %v3025 = vpop.f32.mrb[0].mxu0
        %v3026 = vadd.f32 %v2845, %v3025
        %v3027 = vpop.f32.mrb[0].mxu0
        %v3028 = vpop.f32.mrb[0].mxu0
        %v3029 = vadd.f32 %v2845, %v3028
        %v3030 = vpop.f32.mrb[0].mxu0
        %3031 = vmatprep.mubr.bf16.mxu0 0
        %3032 = vmatmul.mubr.bf16.gmra.mrb[0].mxu0 %v2773
        %v3033 = vpop.f32.mrb[0].mxu0
        %v3034 = vadd.f32 %v2845, %v3033
        %v3035 = vpop.f32.mrb[0].mxu0
        %v3036 = vpop.f32.mrb[0].mxu0
        %v3037 = vadd.f32 %v2845, %v3036
        %v3038 = vpop.f32.mrb[0].mxu0
        %3039 = vmatprep.mubr.bf16.mxu0 0
        %3040 = vmatmul.mubr.bf16.gmra.mrb[0].mxu0 %v2774
        %v3041 = vpop.f32.mrb[0].mxu0
        %v3042 = vadd.f32 %v2845, %v3041
        %v3043 = vpop.f32.mrb[0].mxu0
        %v3044 = vpop.f32.mrb[0].mxu0
        %v3045 = vadd.f32 %v2845, %v3044
        %v3046 = vpop.f32.mrb[0].mxu0
        %3047 = vmatprep.mubr.bf16.mxu0 0
        %3048 = vmatmul.mubr.bf16.gmra.mrb[0].mxu0 %v2775
        %v3049 = vpop.f32.mrb[0].mxu0
        %v3050 = vadd.f32 %v2845, %v3049
        %v3051 = vpop.f32.mrb[0].mxu0
        %v3052 = vpop.f32.mrb[0].mxu0
        %v3053 = vadd.f32 %v2845, %v3052
        %v3054 = vpop.f32.mrb[0].mxu0
        %3055 = vmatprep.mubr.bf16.mxu0 0
        %3056 = vmatmul.mubr.bf16.gmra.mrb[0].mxu0 %v2776
        %v3057 = vpop.f32.mrb[0].mxu0
        %v3058 = vadd.f32 %v2845, %v3057
        %v3059 = vpop.f32.mrb[0].mxu0
        %v3060 = vpop.f32.mrb[0].mxu0
        %v3061 = vadd.f32 %v2845, %v3060
        %v3062 = vpop.f32.mrb[0].mxu0
        %3063 = vmatprep.mubr.bf16.mxu0 0
        %3064 = vmatmul.mubr.bf16.gmra.mrb[0].mxu0 %v2777
        %v3065 = vpop.f32.mrb[0].mxu0
        %v3066 = vadd.f32 %v2845, %v3065
        %v3067 = vpop.f32.mrb[0].mxu0
        %v3068 = vpop.f32.mrb[0].mxu0
        %v3069 = vadd.f32 %v2845, %v3068
        %v3070 = vpop.f32.mrb[0].mxu0
        %3071 = vmatprep.mubr.bf16.mxu0 0
        %3072 = vmatmul.mubr.bf16.gmra.mrb[0].mxu0 %v2778
        %v3073 = vpop.f32.mrb[0].mxu0
        %v3074 = vadd.f32 %v2845, %v3073
        %v3075 = vpop.f32.mrb[0].mxu0
        %v3076 = vpop.f32.mrb[0].mxu0
        %v3077 = vadd.f32 %v2845, %v3076
        %v3078 = vpop.f32.mrb[0].mxu0
        %3079 = vmatprep.mubr.bf16.mxu0 0
        %3080 = vmatmul.mubr.bf16.gmra.mrb[0].mxu0 %v2779
        %v3081 = vpop.f32.mrb[0].mxu0
        %v3082 = vadd.f32 %v2845, %v3081
        %v3083 = vpop.f32.mrb[0].mxu0
        %v3084 = vpop.f32.mrb[0].mxu0
        %v3085 = vadd.f32 %v2845, %v3084
        %v3086 = vpop.f32.mrb[0].mxu0
        %3087 = vmatprep.mubr.bf16.mxu0 0
        %3088 = vmatmul.mubr.bf16.gmra.mrb[0].mxu0 %v2780
        %v3089 = vpop.f32.mrb[0].mxu0
        %v3090 = vadd.f32 %v2845, %v3089
        %v3091 = vpop.f32.mrb[0].mxu0
        %v3092 = vpop.f32.mrb[0].mxu0
        %v3093 = vadd.f32 %v2845, %v3092
        %v3094 = vpop.f32.mrb[0].mxu0
        %3095 = vmatprep.mubr.bf16.mxu0 0
        %3096 = vmatmul.mubr.bf16.gmra.mrb[0].mxu0 %v2781
        %v3097 = vpop.f32.mrb[0].mxu0
        %v3098 = vadd.f32 %v2845, %v3097
        %v3099 = vpop.f32.mrb[0].mxu0
        %v3100 = vpop.f32.mrb[0].mxu0
        %v3101 = vadd.f32 %v2845, %v3100
        %v3102 = vpop.f32.mrb[0].mxu0
        %3103 = vmatprep.mubr.bf16.mxu0 0
        %3104 = vmatmul.mubr.bf16.gmra.mrb[0].mxu0 %v2782
        %v3105 = vpop.f32.mrb[0].mxu0
        %v3106 = vadd.f32 %v2845, %v3105
        %v3107 = vpop.f32.mrb[0].mxu0
        %v3108 = vpop.f32.mrb[0].mxu0
        %v3109 = vadd.f32 %v2845, %v3108
        %v3110 = vpop.f32.mrb[0].mxu0
        %3111 = vmatprep.mubr.bf16.mxu0 0
        %3112 = vmatmul.mubr.bf16.gmra.mrb[0].mxu0 %v2783
        %v3113 = vpop.f32.mrb[0].mxu0
        %v3114 = vadd.f32 %v2845, %v3113
        %v3115 = vpop.f32.mrb[0].mxu0
        %v3116 = vpop.f32.mrb[0].mxu0
        %v3117 = vadd.f32 %v2845, %v3116
        %v3118 = vpop.f32.mrb[0].mxu0
        %3119 = vmatprep.mubr.bf16.mxu0 0
        %3120 = vmatmul.mubr.bf16.gmra.mrb[0].mxu0 %v2784
        %v3121 = vpop.f32.mrb[0].mxu0
        %v3122 = vadd.f32 %v2845, %v3121
        %v3123 = vpop.f32.mrb[0].mxu0
        %v3124 = vpop.f32.mrb[0].mxu0
        %v3125 = vadd.f32 %v2845, %v3124
        %v3126 = vpop.f32.mrb[0].mxu0
        %3127 = vmatprep.mubr.bf16.mxu0 0
        %3128 = vmatmul.mubr.bf16.gmra.mrb[0].mxu0 %v2785
        %v3129 = vpop.f32.mrb[0].mxu0
        %v3130 = vadd.f32 %v2845, %v3129
        %v3131 = vpop.f32.mrb[0].mxu0
        %v3132 = vpop.f32.mrb[0].mxu0
        %v3133 = vadd.f32 %v2845, %v3132
        %v3134 = vpop.f32.mrb[0].mxu0
        %3135 = vmatprep.mubr.bf16.mxu0 0
        %3136 = vmatmul.mubr.bf16.gmra.mrb[0].mxu0 %v2786
        %v3137 = vpop.f32.mrb[0].mxu0
        %v3138 = vadd.f32 %v2845, %v3137
        %v3139 = vpop.f32.mrb[0].mxu0
        %v3140 = vpop.f32.mrb[0].mxu0
        %v3141 = vadd.f32 %v2845, %v3140
        %v3142 = vpop.f32.mrb[0].mxu0
        %3143 = vmatprep.mubr.bf16.mxu0 0
        %3144 = vmatmul.mubr.bf16.gmra.mrb[0].mxu0 %v2787
        %v3145 = vpop.f32.mrb[0].mxu0
        %v3146 = vadd.f32 %v2845, %v3145
        %v3147 = vpop.f32.mrb[0].mxu0
        %v3148 = vpop.f32.mrb[0].mxu0
        %v3149 = vadd.f32 %v2845, %v3148
        %v3150 = vpop.f32.mrb[0].mxu0
        %3151 = vmatprep.mubr.bf16.mxu0 0
        %3152 = vmatmul.mubr.bf16.gmra.mrb[0].mxu0 %v2788
        %v3153 = vpop.f32.mrb[0].mxu0
        %v3154 = vadd.f32 %v2845, %v3153
        %v3155 = vpop.f32.mrb[0].mxu0
        %v3156 = vpop.f32.mrb[0].mxu0
        %v3157 = vadd.f32 %v2845, %v3156
        %v3158 = vpop.f32.mrb[0].mxu0
        %3159 = vmatprep.mubr.bf16.mxu0 0
        %3160 = vmatmul.mubr.bf16.gmra.mrb[0].mxu0 %v2789
        %v3161 = vpop.f32.mrb[0].mxu0
        %v3162 = vadd.f32 %v2845, %v3161
        %v3163 = vpop.f32.mrb[0].mxu0
        %v3164 = vpop.f32.mrb[0].mxu0
        %v3165 = vadd.f32 %v2845, %v3164
        %v3166 = vpop.f32.mrb[0].mxu0
        %3167 = vmatprep.mubr.bf16.mxu0 0
        %3168 = vmatmul.mubr.bf16.gmra.mrb[0].mxu0 %v2790
        %v3169 = vpop.f32.mrb[0].mxu0
        %v3170 = vadd.f32 %v2845, %v3169
        %v3171 = vpop.f32.mrb[0].mxu0
        %v3172 = vpop.f32.mrb[0].mxu0
        %v3173 = vadd.f32 %v2845, %v3172
        %v3174 = vpop.f32.mrb[0].mxu0
        %3175 = vmatprep.mubr.bf16.mxu0 0
        %3176 = vmatmul.mubr.bf16.gmra.mrb[0].mxu0 %v2791
        %v3177 = vpop.f32.mrb[0].mxu0
        %v3178 = vadd.f32 %v2845, %v3177
        %v3179 = vpop.f32.mrb[0].mxu0
        %v3180 = vpop.f32.mrb[0].mxu0
        %v3181 = vadd.f32 %v2845, %v3180
        %v3182 = vpop.f32.mrb[0].mxu0
        %3183 = vmatprep.mubr.bf16.mxu0 0
        %3184 = vmatmul.mubr.bf16.gmra.mrb[0].mxu0 %v2792
        %v3185 = vpop.f32.mrb[0].mxu0
        %v3186 = vadd.f32 %v2845, %v3185
        %v3187 = vpop.f32.mrb[0].mxu0
        %v3188 = vpop.f32.mrb[0].mxu0
        %v3189 = vadd.f32 %v2845, %v3188
        %v3190 = vpop.f32.mrb[0].mxu0
        %3191 = vmatprep.mubr.bf16.mxu0 0
        %3192 = vmatmul.mubr.bf16.gmra.mrb[0].mxu0 %v2793
        %v3193 = vpop.f32.mrb[0].mxu0
        %v3194 = vadd.f32 %v2845, %v3193
        %v3195 = vpop.f32.mrb[0].mxu0
        %v3196 = vpop.f32.mrb[0].mxu0
        %v3197 = vadd.f32 %v2845, %v3196
        %v3198 = vpop.f32.mrb[0].mxu0
        %3199 = vmatprep.mubr.bf16.mxu0 0
        %3200 = vmatmul.mubr.bf16.gmra.mrb[0].mxu0 %v2794
        %v3201 = vpop.f32.mrb[0].mxu0
        %v3202 = vadd.f32 %v2845, %v3201
        %v3203 = vpop.f32.mrb[0].mxu0
        %v3204 = vpop.f32.mrb[0].mxu0
        %v3205 = vadd.f32 %v2845, %v3204
        %v3206 = vpop.f32.mrb[0].mxu0
        %3207 = vmatprep.mubr.bf16.mxu0 0
        %3208 = vmatmul.mubr.bf16.gmra.mrb[0].mxu0 %v2795
        %v3209 = vpop.f32.mrb[0].mxu0
        %v3210 = vadd.f32 %v2845, %v3209
        %v3211 = vpop.f32.mrb[0].mxu0
        %v3212 = vpop.f32.mrb[0].mxu0
        %v3213 = vadd.f32 %v2845, %v3212
        %v3214 = vpop.f32.mrb[0].mxu0
        %3215 = vmatprep.mubr.bf16.mxu0 0
        %3216 = vmatmul.mubr.bf16.gmra.mrb[0].mxu0 %v2796
        %v3217 = vpop.f32.mrb[0].mxu0
        %v3218 = vadd.f32 %v2845, %v3217
        %v3219 = vpop.f32.mrb[0].mxu0
        %v3220 = vpop.f32.mrb[0].mxu0
        %v3221 = vadd.f32 %v2845, %v3220
        %v3222 = vpop.f32.mrb[0].mxu0
        %3223 = vmatprep.mubr.bf16.mxu0 0
        %3224 = vmatmul.mubr.bf16.gmra.mrb[0].mxu0 %v2797
        %v3225 = vpop.f32.mrb[0].mxu0
        %v3226 = vadd.f32 %v2845, %v3225
        %v3227 = vpop.f32.mrb[0].mxu0
        %v3228 = vpop.f32.mrb[0].mxu0
        %v3229 = vadd.f32 %v2845, %v3228
        %v3230 = vpop.f32.mrb[0].mxu0
        %3231 = vmatprep.mubr.bf16.mxu0 0
        %3232 = vmatmul.mubr.bf16.gmra.mrb[0].mxu0 %v2798
        %v3233 = vpop.f32.mrb[0].mxu0
        %v3234 = vadd.f32 %v2845, %v3233
        %v3235 = vpop.f32.mrb[0].mxu0
        %v3236 = vpop.f32.mrb[0].mxu0
        %v3237 = vadd.f32 %v2845, %v3236
        %v3238 = vpop.f32.mrb[0].mxu0
        %3239 = vmatprep.mubr.bf16.mxu0 0
        %3240 = vmatmul.mubr.bf16.gmra.mrb[0].mxu0 %v2799
        %v3241 = vpop.f32.mrb[0].mxu0
        %v3242 = vadd.f32 %v2845, %v3241
        %v3243 = vpop.f32.mrb[0].mxu0
        %v3244 = vpop.f32.mrb[0].mxu0
        %v3245 = vadd.f32 %v2845, %v3244
        %v3246 = vpop.f32.mrb[0].mxu0
        %3247 = vmatprep.mubr.bf16.mxu0 0
        %3248 = vmatmul.mubr.bf16.gmra.mrb[0].mxu0 %v2800
        %v3249 = vpop.f32.mrb[0].mxu0
        %v3250 = vadd.f32 %v2845, %v3249
        %v3251 = vpop.f32.mrb[0].mxu0
        %v3252 = vpop.f32.mrb[0].mxu0
        %v3253 = vadd.f32 %v2845, %v3252
        %v3254 = vpop.f32.mrb[0].mxu0
        %3255 = vmatprep.mubr.bf16.mxu0 0
        %3256 = vmatmul.mubr.bf16.gmra.mrb[0].mxu0 %v2801
        %v3257 = vpop.f32.mrb[0].mxu0
        %v3258 = vadd.f32 %v2845, %v3257
        %v3259 = vpop.f32.mrb[0].mxu0
        %v3260 = vpop.f32.mrb[0].mxu0
        %v3261 = vadd.f32 %v2845, %v3260
        %v3262 = vpop.f32.mrb[0].mxu0
        %3263 = vmatprep.mubr.bf16.mxu0 0
        %3264 = vmatmul.mubr.bf16.gmra.mrb[0].mxu0 %v2802
        %v3265 = vpop.f32.mrb[0].mxu0
        %v3266 = vadd.f32 %v2845, %v3265
        %v3267 = vpop.f32.mrb[0].mxu0
        %v3268 = vpop.f32.mrb[0].mxu0
        %v3269 = vadd.f32 %v2845, %v3268
        %v3270 = vpop.f32.mrb[0].mxu0
        %3271 = vmatprep.mubr.bf16.mxu0 0
        %3272 = vmatmul.mubr.bf16.gmra.mrb[0].mxu0 %v2803
        %v3273 = vpop.f32.mrb[0].mxu0
        %v3274 = vadd.f32 %v2845, %v3273
        %v3275 = vpop.f32.mrb[0].mxu0
        %v3276 = vpop.f32.mrb[0].mxu0
        %v3277 = vadd.f32 %v2845, %v3276
        %v3278 = vpop.f32.mrb[0].mxu0
        %3279 = vmatprep.mubr.bf16.mxu0 0
        %3280 = vmatmul.mubr.bf16.gmra.mrb[0].mxu0 %v2804
        %v3281 = vpop.f32.mrb[0].mxu0
        %v3282 = vadd.f32 %v2845, %v3281
        %v3283 = vpop.f32.mrb[0].mxu0
        %v3284 = vpop.f32.mrb[0].mxu0
        %v3285 = vadd.f32 %v2845, %v3284
        %v3286 = vpop.f32.mrb[0].mxu0
        %3287 = vmatprep.mubr.bf16.mxu0 0
        %3288 = vmatmul.mubr.bf16.gmra.mrb[0].mxu0 %v2805
        %v3289 = vpop.f32.mrb[0].mxu0
        %v3290 = vadd.f32 %v2845, %v3289
        %v3291 = vpop.f32.mrb[0].mxu0
        %v3292 = vpop.f32.mrb[0].mxu0
        %v3293 = vadd.f32 %v2845, %v3292
        %v3294 = vpop.f32.mrb[0].mxu0
        %3295 = vmatprep.mubr.bf16.mxu0 0
        %3296 = vmatmul.mubr.bf16.gmra.mrb[0].mxu0 %v2806
        %v3297 = vpop.f32.mrb[0].mxu0
        %v3298 = vadd.f32 %v2845, %v3297
        %v3299 = vpop.f32.mrb[0].mxu0
        %v3300 = vpop.f32.mrb[0].mxu0
        %v3301 = vadd.f32 %v2845, %v3300
        %v3302 = vpop.f32.mrb[0].mxu0
        %3303 = vmatprep.mubr.bf16.mxu0 0
        %3304 = vmatmul.mubr.bf16.gmra.mrb[0].mxu0 %v2807
        %v3305 = vpop.f32.mrb[0].mxu0
        %v3306 = vadd.f32 %v2845, %v3305
        %v3307 = vpop.f32.mrb[0].mxu0
        %v3308 = vpop.f32.mrb[0].mxu0
        %v3309 = vadd.f32 %v2845, %v3308
        %v3310 = vpop.f32.mrb[0].mxu0
        %3311 = vmatprep.mubr.bf16.mxu0 0
        %3312 = vmatmul.mubr.bf16.gmra.mrb[0].mxu0 %v2808
        %v3313 = vpop.f32.mrb[0].mxu0
        %v3314 = vadd.f32 %v2845, %v3313
        %v3315 = vpop.f32.mrb[0].mxu0
        %v3316 = vpop.f32.mrb[0].mxu0
        %v3317 = vadd.f32 %v2845, %v3316
        %v3318 = vpop.f32.mrb[0].mxu0
        %3319 = vmatprep.mubr.bf16.mxu0 0
        %3320 = vmatmul.mubr.bf16.gmra.mrb[0].mxu0 %v2809
        %v3321 = vpop.f32.mrb[0].mxu0
        %v3322 = vadd.f32 %v2845, %v3321
        %v3323 = vpop.f32.mrb[0].mxu0
        %v3324 = vpop.f32.mrb[0].mxu0
        %v3325 = vadd.f32 %v2845, %v3324
        %v3326 = vpop.f32.mrb[0].mxu0
        %3327 = vmatprep.mubr.bf16.mxu0 0
        %3328 = vmatmul.mubr.bf16.gmra.mrb[0].mxu0 %v2810
        %v3329 = vpop.f32.mrb[0].mxu0
        %v3330 = vadd.f32 %v2845, %v3329
        %v3331 = vpop.f32.mrb[0].mxu0
        %v3332 = vpop.f32.mrb[0].mxu0
        %v3333 = vadd.f32 %v2845, %v3332
        %v3334 = vpop.f32.mrb[0].mxu0
        %3335 = vmatprep.mubr.bf16.mxu0 0
        %3336 = vmatmul.mubr.bf16.gmra.mrb[0].mxu0 %v2811
        %v3337 = vpop.f32.mrb[0].mxu0
        %v3338 = vadd.f32 %v2845, %v3337
        %v3339 = vpop.f32.mrb[0].mxu0
        %v3340 = vpop.f32.mrb[0].mxu0
        %v3341 = vadd.f32 %v2845, %v3340
        %v3342 = vpop.f32.mrb[0].mxu0
        %3343 = vmatprep.mubr.bf16.mxu0 0
        %3344 = vmatmul.mubr.bf16.gmra.mrb[0].mxu0 %v2812
        %v3345 = vpop.f32.mrb[0].mxu0
        %v3346 = vadd.f32 %v2845, %v3345
        %v3347 = vpop.f32.mrb[0].mxu0
        %v3348 = vpop.f32.mrb[0].mxu0
        %v3349 = vadd.f32 %v2845, %v3348
        %v3350 = vpop.f32.mrb[0].mxu0
        %3351 = vmatprep.mubr.bf16.mxu0 0
        %3352 = vmatmul.mubr.bf16.gmra.mrb[0].mxu0 %v2813
        %v3353 = vpop.f32.mrb[0].mxu0
        %v3354 = vadd.f32 %v2845, %v3353
        %v3355 = vpop.f32.mrb[0].mxu0
        %v3356 = vpop.f32.mrb[0].mxu0
        %v3357 = vadd.f32 %v2845, %v3356
        %v3358 = vpop.f32.mrb[0].mxu0
        %3359 = vmatprep.mubr.bf16.mxu0 0
        %3360 = vmatmul.mubr.bf16.gmra.mrb[0].mxu0 %v2814
        %v3361 = vpop.f32.mrb[0].mxu0
        %v3362 = vadd.f32 %v2845, %v3361
        %v3363 = vpop.f32.mrb[0].mxu0
        %v3364 = vpop.f32.mrb[0].mxu0
        %v3365 = vadd.f32 %v2845, %v3364
        %v3366 = vpop.f32.mrb[0].mxu0
        %3367 = vmatprep.mubr.bf16.mxu0 0
        %3368 = vmatmul.mubr.bf16.gmra.mrb[0].mxu0 %v2815
        %v3369 = vpop.f32.mrb[0].mxu0
        %v3370 = vadd.f32 %v2845, %v3369
        %v3371 = vpop.f32.mrb[0].mxu0
        %v3372 = vpop.f32.mrb[0].mxu0
        %v3373 = vadd.f32 %v2845, %v3372
        %v3374 = vpop.f32.mrb[0].mxu0
        %3375 = vmatprep.mubr.bf16.mxu0 0
        %3376 = vmatmul.mubr.bf16.gmra.mrb[0].mxu0 %v2816
        %v3377 = vpop.f32.mrb[0].mxu0
        %v3378 = vadd.f32 %v2845, %v3377
        %v3379 = vpop.f32.mrb[0].mxu0
        %v3380 = vpop.f32.mrb[0].mxu0
        %v3381 = vadd.f32 %v2845, %v3380
        %v3382 = vpop.f32.mrb[0].mxu0
        %3383 = vmatprep.mubr.bf16.mxu0 0
        %3384 = vmatmul.mubr.bf16.gmra.mrb[0].mxu0 %v2817
        %v3385 = vpop.f32.mrb[0].mxu0
        %v3386 = vadd.f32 %v2845, %v3385
        %v3387 = vpop.f32.mrb[0].mxu0
        %v3388 = vpop.f32.mrb[0].mxu0
        %v3389 = vadd.f32 %v2845, %v3388
        %v3390 = vpop.f32.mrb[0].mxu0
        %3391 = vmatprep.mubr.bf16.mxu0 0
        %3392 = vmatmul.mubr.bf16.gmra.mrb[0].mxu0 %v2818
        %v3393 = vpop.f32.mrb[0].mxu0
        %v3394 = vadd.f32 %v2845, %v3393
        %v3395 = vpop.f32.mrb[0].mxu0
        %v3396 = vpop.f32.mrb[0].mxu0
        %v3397 = vadd.f32 %v2845, %v3396
        %v3398 = vpop.f32.mrb[0].mxu0
        %3399 = vmatprep.mubr.bf16.mxu0 0
        %3400 = vmatmul.mubr.bf16.gmra.mrb[0].mxu0 %v2819
        %v3401 = vpop.f32.mrb[0].mxu0
        %v3402 = vadd.f32 %v2845, %v3401
        %v3403 = vpop.f32.mrb[0].mxu0
        %v3404 = vpop.f32.mrb[0].mxu0
        %v3405 = vadd.f32 %v2845, %v3404
        %v3406 = vpop.f32.mrb[0].mxu0
        %3407 = vmatprep.mubr.bf16.mxu0 0
        %3408 = vmatmul.mubr.bf16.gmra.mrb[0].mxu0 %v2820
        %v3409 = vpop.f32.mrb[0].mxu0
        %v3410 = vadd.f32 %v2845, %v3409
        %v3411 = vpop.f32.mrb[0].mxu0
        %v3412 = vpop.f32.mrb[0].mxu0
        %v3413 = vadd.f32 %v2845, %v3412
        %v3414 = vpop.f32.mrb[0].mxu0
        %3415 = vmatprep.mubr.bf16.mxu0 0
        %3416 = vmatmul.mubr.bf16.gmra.mrb[0].mxu0 %v2821
        %v3417 = vpop.f32.mrb[0].mxu0
        %v3418 = vadd.f32 %v2845, %v3417
        %v3419 = vpop.f32.mrb[0].mxu0
        %v3420 = vpop.f32.mrb[0].mxu0
        %v3421 = vadd.f32 %v2845, %v3420
        %v3422 = vpop.f32.mrb[0].mxu0
        %3423 = vmatprep.mubr.bf16.mxu0 0
        %3424 = vmatmul.mubr.bf16.gmra.mrb[0].mxu0 %v2822
        %v3425 = vpop.f32.mrb[0].mxu0
        %v3426 = vadd.f32 %v2845, %v3425
        %v3427 = vpop.f32.mrb[0].mxu0
        %v3428 = vpop.f32.mrb[0].mxu0
        %v3429 = vadd.f32 %v2845, %v3428
        %v3430 = vpop.f32.mrb[0].mxu0
        %3431 = vmatprep.mubr.bf16.mxu0 0
        %3432 = vmatmul.mubr.bf16.gmra.mrb[0].mxu0 %v2823
        %v3433 = vpop.f32.mrb[0].mxu0
        %v3434 = vadd.f32 %v2845, %v3433
        %v3435 = vpop.f32.mrb[0].mxu0
        %v3436 = vpop.f32.mrb[0].mxu0
        %v3437 = vadd.f32 %v2845, %v3436
        %v3438 = vpop.f32.mrb[0].mxu0
        %3439 = vdwg.mxu0
        %v3440 = vlaneseq
        %v3441 = vand.u32 %v3440, 127
        %vm3442 = vcmp.lt.s32.totalorder %v3441, 13
        %v3443 = vsel %vm3442, 1, 0
        %vm3444 = vcmp.eq.s32.totalorder %v3443, 1
        %v3445 = vsel %vm3444, %v2930, -1e+30
        %v3446 = vsel %vm3444, %v2933, -1e+30
        %v3447 = vsel %vm3444, %v2938, -1e+30
        %v3448 = vsel %vm3444, %v2941, -1e+30
        %v3449 = vsel %vm3444, %v2946, -1e+30
        %v3450 = vsel %vm3444, %v2949, -1e+30
        %v3451 = vsel %vm3444, %v2954, -1e+30
        %v3452 = vsel %vm3444, %v2957, -1e+30
        %v3453 = vsel %vm3444, %v2962, -1e+30
        %v3454 = vsel %vm3444, %v2965, -1e+30
        %v3455 = vsel %vm3444, %v2970, -1e+30
        %v3456 = vsel %vm3444, %v2973, -1e+30
        %v3457 = vsel %vm3444, %v2978, -1e+30
        %v3458 = vsel %vm3444, %v2981, -1e+30
        %v3459 = vsel %vm3444, %v2986, -1e+30
        %v3460 = vsel %vm3444, %v2989, -1e+30
        %v3461 = vsel %vm3444, %v2994, -1e+30
        %v3462 = vsel %vm3444, %v2997, -1e+30
        %v3463 = vsel %vm3444, %v3002, -1e+30
        %v3464 = vsel %vm3444, %v3005, -1e+30
        %v3465 = vsel %vm3444, %v3010, -1e+30
        %v3466 = vsel %vm3444, %v3013, -1e+30
        %v3467 = vsel %vm3444, %v3018, -1e+30
        %v3468 = vsel %vm3444, %v3021, -1e+30
        %v3469 = vsel %vm3444, %v3026, -1e+30
        %v3470 = vsel %vm3444, %v3029, -1e+30
        %v3471 = vsel %vm3444, %v3034, -1e+30
        %v3472 = vsel %vm3444, %v3037, -1e+30
        %v3473 = vsel %vm3444, %v3042, -1e+30
        %v3474 = vsel %vm3444, %v3045, -1e+30
        %v3475 = vsel %vm3444, %v3050, -1e+30
        %v3476 = vsel %vm3444, %v3053, -1e+30
        %v3477 = vsel %vm3444, %v3058, -1e+30
        %v3478 = vsel %vm3444, %v3061, -1e+30
        %v3479 = vsel %vm3444, %v3066, -1e+30
        %v3480 = vsel %vm3444, %v3069, -1e+30
        %v3481 = vsel %vm3444, %v3074, -1e+30
        %v3482 = vsel %vm3444, %v3077, -1e+30
        %v3483 = vsel %vm3444, %v3082, -1e+30
        %v3484 = vsel %vm3444, %v3085, -1e+30
        %v3485 = vsel %vm3444, %v3090, -1e+30
        %v3486 = vsel %vm3444, %v3093, -1e+30
        %v3487 = vsel %vm3444, %v3098, -1e+30
        %v3488 = vsel %vm3444, %v3101, -1e+30
        %v3489 = vsel %vm3444, %v3106, -1e+30
        %v3490 = vsel %vm3444, %v3109, -1e+30
        %v3491 = vsel %vm3444, %v3114, -1e+30
        %v3492 = vsel %vm3444, %v3117, -1e+30
        %v3493 = vsel %vm3444, %v3122, -1e+30
        %v3494 = vsel %vm3444, %v3125, -1e+30
        %v3495 = vsel %vm3444, %v3130, -1e+30
        %v3496 = vsel %vm3444, %v3133, -1e+30
        %v3497 = vsel %vm3444, %v3138, -1e+30
        %v3498 = vsel %vm3444, %v3141, -1e+30
        %v3499 = vsel %vm3444, %v3146, -1e+30
        %v3500 = vsel %vm3444, %v3149, -1e+30
        %v3501 = vsel %vm3444, %v3154, -1e+30
        %v3502 = vsel %vm3444, %v3157, -1e+30
        %v3503 = vsel %vm3444, %v3162, -1e+30
        %v3504 = vsel %vm3444, %v3165, -1e+30
        %v3505 = vsel %vm3444, %v3170, -1e+30
        %v3506 = vsel %vm3444, %v3173, -1e+30
        %v3507 = vsel %vm3444, %v3178, -1e+30
        %v3508 = vsel %vm3444, %v3181, -1e+30
        %v3509 = vsel %vm3444, %v3186, -1e+30
        %v3510 = vsel %vm3444, %v3189, -1e+30
        %v3511 = vsel %vm3444, %v3194, -1e+30
        %v3512 = vsel %vm3444, %v3197, -1e+30
        %v3513 = vsel %vm3444, %v3202, -1e+30
        %v3514 = vsel %vm3444, %v3205, -1e+30
        %v3515 = vsel %vm3444, %v3210, -1e+30
        %v3516 = vsel %vm3444, %v3213, -1e+30
        %v3517 = vsel %vm3444, %v3218, -1e+30
        %v3518 = vsel %vm3444, %v3221, -1e+30
        %v3519 = vsel %vm3444, %v3226, -1e+30
        %v3520 = vsel %vm3444, %v3229, -1e+30
        %v3521 = vsel %vm3444, %v3234, -1e+30
        %v3522 = vsel %vm3444, %v3237, -1e+30
        %v3523 = vsel %vm3444, %v3242, -1e+30
        %v3524 = vsel %vm3444, %v3245, -1e+30
        %v3525 = vsel %vm3444, %v3250, -1e+30
        %v3526 = vsel %vm3444, %v3253, -1e+30
        %v3527 = vsel %vm3444, %v3258, -1e+30
        %v3528 = vsel %vm3444, %v3261, -1e+30
        %v3529 = vsel %vm3444, %v3266, -1e+30
        %v3530 = vsel %vm3444, %v3269, -1e+30
        %v3531 = vsel %vm3444, %v3274, -1e+30
        %v3532 = vsel %vm3444, %v3277, -1e+30
        %v3533 = vsel %vm3444, %v3282, -1e+30
        %v3534 = vsel %vm3444, %v3285, -1e+30
        %v3535 = vsel %vm3444, %v3290, -1e+30
        %v3536 = vsel %vm3444, %v3293, -1e+30
        %v3537 = vsel %vm3444, %v3298, -1e+30
        %v3538 = vsel %vm3444, %v3301, -1e+30
        %v3539 = vsel %vm3444, %v3306, -1e+30
        %v3540 = vsel %vm3444, %v3309, -1e+30
        %v3541 = vsel %vm3444, %v3314, -1e+30
        %v3542 = vsel %vm3444, %v3317, -1e+30
        %v3543 = vsel %vm3444, %v3322, -1e+30
        %v3544 = vsel %vm3444, %v3325, -1e+30
        %v3545 = vsel %vm3444, %v3330, -1e+30
        %v3546 = vsel %vm3444, %v3333, -1e+30
        %v3547 = vsel %vm3444, %v3338, -1e+30
        %v3548 = vsel %vm3444, %v3341, -1e+30
        %v3549 = vsel %vm3444, %v3346, -1e+30
        %v3550 = vsel %vm3444, %v3349, -1e+30
        %v3551 = vsel %vm3444, %v3354, -1e+30
        %v3552 = vsel %vm3444, %v3357, -1e+30
        %v3553 = vsel %vm3444, %v3362, -1e+30
        %v3554 = vsel %vm3444, %v3365, -1e+30
        %v3555 = vsel %vm3444, %v3370, -1e+30
        %v3556 = vsel %vm3444, %v3373, -1e+30
        %v3557 = vsel %vm3444, %v3378, -1e+30
        %v3558 = vsel %vm3444, %v3381, -1e+30
        %v3559 = vsel %vm3444, %v3386, -1e+30
        %v3560 = vsel %vm3444, %v3389, -1e+30
        %v3561 = vsel %vm3444, %v3394, -1e+30
        %v3562 = vsel %vm3444, %v3397, -1e+30
        %v3563 = vsel %vm3444, %v3402, -1e+30
        %v3564 = vsel %vm3444, %v3405, -1e+30
        %v3565 = vsel %vm3444, %v3410, -1e+30
        %v3566 = vsel %vm3444, %v3413, -1e+30
        %v3567 = vsel %vm3444, %v3418, -1e+30
        %v3568 = vsel %vm3444, %v3421, -1e+30
        %v3569 = vsel %vm3444, %v3426, -1e+30
        %v3570 = vsel %vm3444, %v3429, -1e+30
        %v3571 = vsel %vm3444, %v3434, -1e+30
        %v3572 = vsel %vm3444, %v3437, -1e+30
        %3573 = vmax.xlane.f32.xlu0 %v3445
        %v3574 = vpop.xlane.xlu0 %3573
        %3575 = vmax.xlane.f32.xlu0 %v3446
        %v3576 = vpop.xlane.xlu0 %3575
        %3577 = vmax.xlane.f32.xlu0 %v3447
        %v3578 = vpop.xlane.xlu0 %3577
        %3579 = vmax.xlane.f32.xlu0 %v3448
        %v3580 = vpop.xlane.xlu0 %3579
        %3581 = vmax.xlane.f32.xlu0 %v3449
        %v3582 = vpop.xlane.xlu0 %3581
        %3583 = vmax.xlane.f32.xlu0 %v3450
        %v3584 = vpop.xlane.xlu0 %3583
        %3585 = vmax.xlane.f32.xlu0 %v3451
        %v3586 = vpop.xlane.xlu0 %3585
        %3587 = vmax.xlane.f32.xlu0 %v3452
        %v3588 = vpop.xlane.xlu0 %3587
        %3589 = vmax.xlane.f32.xlu0 %v3453
        %v3590 = vpop.xlane.xlu0 %3589
        %3591 = vmax.xlane.f32.xlu0 %v3454
        %v3592 = vpop.xlane.xlu0 %3591
        %3593 = vmax.xlane.f32.xlu0 %v3455
        %v3594 = vpop.xlane.xlu0 %3593
        %3595 = vmax.xlane.f32.xlu0 %v3456
        %v3596 = vpop.xlane.xlu0 %3595
        %3597 = vmax.xlane.f32.xlu0 %v3457
        %v3598 = vpop.xlane.xlu0 %3597
        %3599 = vmax.xlane.f32.xlu0 %v3458
        %v3600 = vpop.xlane.xlu0 %3599
        %3601 = vmax.xlane.f32.xlu0 %v3459
        %v3602 = vpop.xlane.xlu0 %3601
        %3603 = vmax.xlane.f32.xlu0 %v3460
        %v3604 = vpop.xlane.xlu0 %3603
        %3605 = vmax.xlane.f32.xlu0 %v3461
        %v3606 = vpop.xlane.xlu0 %3605
        %3607 = vmax.xlane.f32.xlu0 %v3462
        %v3608 = vpop.xlane.xlu0 %3607
        %3609 = vmax.xlane.f32.xlu0 %v3463
        %v3610 = vpop.xlane.xlu0 %3609
        %3611 = vmax.xlane.f32.xlu0 %v3464
        %v3612 = vpop.xlane.xlu0 %3611
        %3613 = vmax.xlane.f32.xlu0 %v3465
        %v3614 = vpop.xlane.xlu0 %3613
        %3615 = vmax.xlane.f32.xlu0 %v3466
        %v3616 = vpop.xlane.xlu0 %3615
        %3617 = vmax.xlane.f32.xlu0 %v3467
        %v3618 = vpop.xlane.xlu0 %3617
        %3619 = vmax.xlane.f32.xlu0 %v3468
        %v3620 = vpop.xlane.xlu0 %3619
        %3621 = vmax.xlane.f32.xlu0 %v3469
        %v3622 = vpop.xlane.xlu0 %3621
        %3623 = vmax.xlane.f32.xlu0 %v3470
        %v3624 = vpop.xlane.xlu0 %3623
        %3625 = vmax.xlane.f32.xlu0 %v3471
        %v3626 = vpop.xlane.xlu0 %3625
        %3627 = vmax.xlane.f32.xlu0 %v3472
        %v3628 = vpop.xlane.xlu0 %3627
        %3629 = vmax.xlane.f32.xlu0 %v3473
        %v3630 = vpop.xlane.xlu0 %3629
        %3631 = vmax.xlane.f32.xlu0 %v3474
        %v3632 = vpop.xlane.xlu0 %3631
        %3633 = vmax.xlane.f32.xlu0 %v3475
        %v3634 = vpop.xlane.xlu0 %3633
        %3635 = vmax.xlane.f32.xlu0 %v3476
        %v3636 = vpop.xlane.xlu0 %3635
        %3637 = vmax.xlane.f32.xlu0 %v3477
        %v3638 = vpop.xlane.xlu0 %3637
        %3639 = vmax.xlane.f32.xlu0 %v3478
        %v3640 = vpop.xlane.xlu0 %3639
        %3641 = vmax.xlane.f32.xlu0 %v3479
        %v3642 = vpop.xlane.xlu0 %3641
        %3643 = vmax.xlane.f32.xlu0 %v3480
        %v3644 = vpop.xlane.xlu0 %3643
        %3645 = vmax.xlane.f32.xlu0 %v3481
        %v3646 = vpop.xlane.xlu0 %3645
        %3647 = vmax.xlane.f32.xlu0 %v3482
        %v3648 = vpop.xlane.xlu0 %3647
        %3649 = vmax.xlane.f32.xlu0 %v3483
        %v3650 = vpop.xlane.xlu0 %3649
        %3651 = vmax.xlane.f32.xlu0 %v3484
        %v3652 = vpop.xlane.xlu0 %3651
        %3653 = vmax.xlane.f32.xlu0 %v3485
        %v3654 = vpop.xlane.xlu0 %3653
        %3655 = vmax.xlane.f32.xlu0 %v3486
        %v3656 = vpop.xlane.xlu0 %3655
        %3657 = vmax.xlane.f32.xlu0 %v3487
        %v3658 = vpop.xlane.xlu0 %3657
        %3659 = vmax.xlane.f32.xlu0 %v3488
        %v3660 = vpop.xlane.xlu0 %3659
        %3661 = vmax.xlane.f32.xlu0 %v3489
        %v3662 = vpop.xlane.xlu0 %3661
        %3663 = vmax.xlane.f32.xlu0 %v3490
        %v3664 = vpop.xlane.xlu0 %3663
        %3665 = vmax.xlane.f32.xlu0 %v3491
        %v3666 = vpop.xlane.xlu0 %3665
        %3667 = vmax.xlane.f32.xlu0 %v3492
        %v3668 = vpop.xlane.xlu0 %3667
        %3669 = vmax.xlane.f32.xlu0 %v3493
        %v3670 = vpop.xlane.xlu0 %3669
        %3671 = vmax.xlane.f32.xlu0 %v3494
        %v3672 = vpop.xlane.xlu0 %3671
        %3673 = vmax.xlane.f32.xlu0 %v3495
        %v3674 = vpop.xlane.xlu0 %3673
        %3675 = vmax.xlane.f32.xlu0 %v3496
        %v3676 = vpop.xlane.xlu0 %3675
        %3677 = vmax.xlane.f32.xlu0 %v3497
        %v3678 = vpop.xlane.xlu0 %3677
        %3679 = vmax.xlane.f32.xlu0 %v3498
        %v3680 = vpop.xlane.xlu0 %3679
        %3681 = vmax.xlane.f32.xlu0 %v3499
        %v3682 = vpop.xlane.xlu0 %3681
        %3683 = vmax.xlane.f32.xlu0 %v3500
        %v3684 = vpop.xlane.xlu0 %3683
        %3685 = vmax.xlane.f32.xlu0 %v3501
        %v3686 = vpop.xlane.xlu0 %3685
        %3687 = vmax.xlane.f32.xlu0 %v3502
        %v3688 = vpop.xlane.xlu0 %3687
        %3689 = vmax.xlane.f32.xlu0 %v3503
        %v3690 = vpop.xlane.xlu0 %3689
        %3691 = vmax.xlane.f32.xlu0 %v3504
        %v3692 = vpop.xlane.xlu0 %3691
        %3693 = vmax.xlane.f32.xlu0 %v3505
        %v3694 = vpop.xlane.xlu0 %3693
        %3695 = vmax.xlane.f32.xlu0 %v3506
        %v3696 = vpop.xlane.xlu0 %3695
        %3697 = vmax.xlane.f32.xlu0 %v3507
        %v3698 = vpop.xlane.xlu0 %3697
        %3699 = vmax.xlane.f32.xlu0 %v3508
        %v3700 = vpop.xlane.xlu0 %3699
        %3701 = vmax.xlane.f32.xlu0 %v3509
        %v3702 = vpop.xlane.xlu0 %3701
        %3703 = vmax.xlane.f32.xlu0 %v3510
        %v3704 = vpop.xlane.xlu0 %3703
        %3705 = vmax.xlane.f32.xlu0 %v3511
        %v3706 = vpop.xlane.xlu0 %3705
        %3707 = vmax.xlane.f32.xlu0 %v3512
        %v3708 = vpop.xlane.xlu0 %3707
        %3709 = vmax.xlane.f32.xlu0 %v3513
        %v3710 = vpop.xlane.xlu0 %3709
        %3711 = vmax.xlane.f32.xlu0 %v3514
        %v3712 = vpop.xlane.xlu0 %3711
        %3713 = vmax.xlane.f32.xlu0 %v3515
        %v3714 = vpop.xlane.xlu0 %3713
        %3715 = vmax.xlane.f32.xlu0 %v3516
        %v3716 = vpop.xlane.xlu0 %3715
        %3717 = vmax.xlane.f32.xlu0 %v3517
        %v3718 = vpop.xlane.xlu0 %3717
        %3719 = vmax.xlane.f32.xlu0 %v3518
        %v3720 = vpop.xlane.xlu0 %3719
        %3721 = vmax.xlane.f32.xlu0 %v3519
        %v3722 = vpop.xlane.xlu0 %3721
        %3723 = vmax.xlane.f32.xlu0 %v3520
        %v3724 = vpop.xlane.xlu0 %3723
        %3725 = vmax.xlane.f32.xlu0 %v3521
        %v3726 = vpop.xlane.xlu0 %3725
        %3727 = vmax.xlane.f32.xlu0 %v3522
        %v3728 = vpop.xlane.xlu0 %3727
        %3729 = vmax.xlane.f32.xlu0 %v3523
        %v3730 = vpop.xlane.xlu0 %3729
        %3731 = vmax.xlane.f32.xlu0 %v3524
        %v3732 = vpop.xlane.xlu0 %3731
        %3733 = vmax.xlane.f32.xlu0 %v3525
        %v3734 = vpop.xlane.xlu0 %3733
        %3735 = vmax.xlane.f32.xlu0 %v3526
        %v3736 = vpop.xlane.xlu0 %3735
        %3737 = vmax.xlane.f32.xlu0 %v3527
        %v3738 = vpop.xlane.xlu0 %3737
        %3739 = vmax.xlane.f32.xlu0 %v3528
        %v3740 = vpop.xlane.xlu0 %3739
        %3741 = vmax.xlane.f32.xlu0 %v3529
        %v3742 = vpop.xlane.xlu0 %3741
        %3743 = vmax.xlane.f32.xlu0 %v3530
        %v3744 = vpop.xlane.xlu0 %3743
        %3745 = vmax.xlane.f32.xlu0 %v3531
        %v3746 = vpop.xlane.xlu0 %3745
        %3747 = vmax.xlane.f32.xlu0 %v3532
        %v3748 = vpop.xlane.xlu0 %3747
        %3749 = vmax.xlane.f32.xlu0 %v3533
        %v3750 = vpop.xlane.xlu0 %3749
        %3751 = vmax.xlane.f32.xlu0 %v3534
        %v3752 = vpop.xlane.xlu0 %3751
        %3753 = vmax.xlane.f32.xlu0 %v3535
        %v3754 = vpop.xlane.xlu0 %3753
        %3755 = vmax.xlane.f32.xlu0 %v3536
        %v3756 = vpop.xlane.xlu0 %3755
        %3757 = vmax.xlane.f32.xlu0 %v3537
        %v3758 = vpop.xlane.xlu0 %3757
        %3759 = vmax.xlane.f32.xlu0 %v3538
        %v3760 = vpop.xlane.xlu0 %3759
        %3761 = vmax.xlane.f32.xlu0 %v3539
        %v3762 = vpop.xlane.xlu0 %3761
        %3763 = vmax.xlane.f32.xlu0 %v3540
        %v3764 = vpop.xlane.xlu0 %3763
        %3765 = vmax.xlane.f32.xlu0 %v3541
        %v3766 = vpop.xlane.xlu0 %3765
        %3767 = vmax.xlane.f32.xlu0 %v3542
        %v3768 = vpop.xlane.xlu0 %3767
        %3769 = vmax.xlane.f32.xlu0 %v3543
        %v3770 = vpop.xlane.xlu0 %3769
        %3771 = vmax.xlane.f32.xlu0 %v3544
        %v3772 = vpop.xlane.xlu0 %3771
        %3773 = vmax.xlane.f32.xlu0 %v3545
        %v3774 = vpop.xlane.xlu0 %3773
        %3775 = vmax.xlane.f32.xlu0 %v3546
        %v3776 = vpop.xlane.xlu0 %3775
        %3777 = vmax.xlane.f32.xlu0 %v3547
        %v3778 = vpop.xlane.xlu0 %3777
        %3779 = vmax.xlane.f32.xlu0 %v3548
        %v3780 = vpop.xlane.xlu0 %3779
        %3781 = vmax.xlane.f32.xlu0 %v3549
        %v3782 = vpop.xlane.xlu0 %3781
        %3783 = vmax.xlane.f32.xlu0 %v3550
        %v3784 = vpop.xlane.xlu0 %3783
        %3785 = vmax.xlane.f32.xlu0 %v3551
        %v3786 = vpop.xlane.xlu0 %3785
        %3787 = vmax.xlane.f32.xlu0 %v3552
        %v3788 = vpop.xlane.xlu0 %3787
        %3789 = vmax.xlane.f32.xlu0 %v3553
        %v3790 = vpop.xlane.xlu0 %3789
        %3791 = vmax.xlane.f32.xlu0 %v3554
        %v3792 = vpop.xlane.xlu0 %3791
        %3793 = vmax.xlane.f32.xlu0 %v3555
        %v3794 = vpop.xlane.xlu0 %3793
        %3795 = vmax.xlane.f32.xlu0 %v3556
        %v3796 = vpop.xlane.xlu0 %3795
        %3797 = vmax.xlane.f32.xlu0 %v3557
        %v3798 = vpop.xlane.xlu0 %3797
        %3799 = vmax.xlane.f32.xlu0 %v3558
        %v3800 = vpop.xlane.xlu0 %3799
        %3801 = vmax.xlane.f32.xlu0 %v3559
        %v3802 = vpop.xlane.xlu0 %3801
        %3803 = vmax.xlane.f32.xlu0 %v3560
        %v3804 = vpop.xlane.xlu0 %3803
        %3805 = vmax.xlane.f32.xlu0 %v3561
        %v3806 = vpop.xlane.xlu0 %3805
        %3807 = vmax.xlane.f32.xlu0 %v3562
        %v3808 = vpop.xlane.xlu0 %3807
        %3809 = vmax.xlane.f32.xlu0 %v3563
        %v3810 = vpop.xlane.xlu0 %3809
        %3811 = vmax.xlane.f32.xlu0 %v3564
        %v3812 = vpop.xlane.xlu0 %3811
        %3813 = vmax.xlane.f32.xlu0 %v3565
        %v3814 = vpop.xlane.xlu0 %3813
        %3815 = vmax.xlane.f32.xlu0 %v3566
        %v3816 = vpop.xlane.xlu0 %3815
        %3817 = vmax.xlane.f32.xlu0 %v3567
        %v3818 = vpop.xlane.xlu0 %3817
        %3819 = vmax.xlane.f32.xlu0 %v3568
        %v3820 = vpop.xlane.xlu0 %3819
        %3821 = vmax.xlane.f32.xlu0 %v3569
        %v3822 = vpop.xlane.xlu0 %3821
        %3823 = vmax.xlane.f32.xlu0 %v3570
        %v3824 = vpop.xlane.xlu0 %3823
        %3825 = vmax.xlane.f32.xlu0 %v3571
        %v3826 = vpop.xlane.xlu0 %3825
        %3827 = vmax.xlane.f32.xlu0 %v3572
        %v3828 = vpop.xlane.xlu0 %3827
        %v3829 = vsub.f32 %v3445, %v3574
        %v3830 = vsub.f32 %v3446, %v3576
        %v3831 = vsub.f32 %v3447, %v3578
        %v3832 = vsub.f32 %v3448, %v3580
        %v3833 = vsub.f32 %v3449, %v3582
        %v3834 = vsub.f32 %v3450, %v3584
        %v3835 = vsub.f32 %v3451, %v3586
        %v3836 = vsub.f32 %v3452, %v3588
        %v3837 = vsub.f32 %v3453, %v3590
        %v3838 = vsub.f32 %v3454, %v3592
        %v3839 = vsub.f32 %v3455, %v3594
        %v3840 = vsub.f32 %v3456, %v3596
        %v3841 = vsub.f32 %v3457, %v3598
        %v3842 = vsub.f32 %v3458, %v3600
        %v3843 = vsub.f32 %v3459, %v3602
        %v3844 = vsub.f32 %v3460, %v3604
        %v3845 = vsub.f32 %v3461, %v3606
        %v3846 = vsub.f32 %v3462, %v3608
        %v3847 = vsub.f32 %v3463, %v3610
        %v3848 = vsub.f32 %v3464, %v3612
        %v3849 = vsub.f32 %v3465, %v3614
        %v3850 = vsub.f32 %v3466, %v3616
        %v3851 = vsub.f32 %v3467, %v3618
        %v3852 = vsub.f32 %v3468, %v3620
        %v3853 = vsub.f32 %v3469, %v3622
        %v3854 = vsub.f32 %v3470, %v3624
        %v3855 = vsub.f32 %v3471, %v3626
        %v3856 = vsub.f32 %v3472, %v3628
        %v3857 = vsub.f32 %v3473, %v3630
        %v3858 = vsub.f32 %v3474, %v3632
        %v3859 = vsub.f32 %v3475, %v3634
        %v3860 = vsub.f32 %v3476, %v3636
        %v3861 = vsub.f32 %v3477, %v3638
        %v3862 = vsub.f32 %v3478, %v3640
        %v3863 = vsub.f32 %v3479, %v3642
        %v3864 = vsub.f32 %v3480, %v3644
        %v3865 = vsub.f32 %v3481, %v3646
        %v3866 = vsub.f32 %v3482, %v3648
        %v3867 = vsub.f32 %v3483, %v3650
        %v3868 = vsub.f32 %v3484, %v3652
        %v3869 = vsub.f32 %v3485, %v3654
        %v3870 = vsub.f32 %v3486, %v3656
        %v3871 = vsub.f32 %v3487, %v3658
        %v3872 = vsub.f32 %v3488, %v3660
        %v3873 = vsub.f32 %v3489, %v3662
        %v3874 = vsub.f32 %v3490, %v3664
        %v3875 = vsub.f32 %v3491, %v3666
        %v3876 = vsub.f32 %v3492, %v3668
        %v3877 = vsub.f32 %v3493, %v3670
        %v3878 = vsub.f32 %v3494, %v3672
        %v3879 = vsub.f32 %v3495, %v3674
        %v3880 = vsub.f32 %v3496, %v3676
        %v3881 = vsub.f32 %v3497, %v3678
        %v3882 = vsub.f32 %v3498, %v3680
        %v3883 = vsub.f32 %v3499, %v3682
        %v3884 = vsub.f32 %v3500, %v3684
        %v3885 = vsub.f32 %v3501, %v3686
        %v3886 = vsub.f32 %v3502, %v3688
        %v3887 = vsub.f32 %v3503, %v3690
        %v3888 = vsub.f32 %v3504, %v3692
        %v3889 = vsub.f32 %v3505, %v3694
        %v3890 = vsub.f32 %v3506, %v3696
        %v3891 = vsub.f32 %v3507, %v3698
        %v3892 = vsub.f32 %v3508, %v3700
        %v3893 = vsub.f32 %v3509, %v3702
        %v3894 = vsub.f32 %v3510, %v3704
        %v3895 = vsub.f32 %v3511, %v3706
        %v3896 = vsub.f32 %v3512, %v3708
        %v3897 = vsub.f32 %v3513, %v3710
        %v3898 = vsub.f32 %v3514, %v3712
        %v3899 = vsub.f32 %v3515, %v3714
        %v3900 = vsub.f32 %v3516, %v3716
        %v3901 = vsub.f32 %v3517, %v3718
        %v3902 = vsub.f32 %v3518, %v3720
        %v3903 = vsub.f32 %v3519, %v3722
        %v3904 = vsub.f32 %v3520, %v3724
        %v3905 = vsub.f32 %v3521, %v3726
        %v3906 = vsub.f32 %v3522, %v3728
        %v3907 = vsub.f32 %v3523, %v3730
        %v3908 = vsub.f32 %v3524, %v3732
        %v3909 = vsub.f32 %v3525, %v3734
        %v3910 = vsub.f32 %v3526, %v3736
        %v3911 = vsub.f32 %v3527, %v3738
        %v3912 = vsub.f32 %v3528, %v3740
        %v3913 = vsub.f32 %v3529, %v3742
        %v3914 = vsub.f32 %v3530, %v3744
        %v3915 = vsub.f32 %v3531, %v3746
        %v3916 = vsub.f32 %v3532, %v3748
        %v3917 = vsub.f32 %v3533, %v3750
        %v3918 = vsub.f32 %v3534, %v3752
        %v3919 = vsub.f32 %v3535, %v3754
        %v3920 = vsub.f32 %v3536, %v3756
        %v3921 = vsub.f32 %v3537, %v3758
        %v3922 = vsub.f32 %v3538, %v3760
        %v3923 = vsub.f32 %v3539, %v3762
        %v3924 = vsub.f32 %v3540, %v3764
        %v3925 = vsub.f32 %v3541, %v3766
        %v3926 = vsub.f32 %v3542, %v3768
        %v3927 = vsub.f32 %v3543, %v3770
        %v3928 = vsub.f32 %v3544, %v3772
        %v3929 = vsub.f32 %v3545, %v3774
        %v3930 = vsub.f32 %v3546, %v3776
        %v3931 = vsub.f32 %v3547, %v3778
        %v3932 = vsub.f32 %v3548, %v3780
        %v3933 = vsub.f32 %v3549, %v3782
        %v3934 = vsub.f32 %v3550, %v3784
        %v3935 = vsub.f32 %v3551, %v3786
        %v3936 = vsub.f32 %v3552, %v3788
        %v3937 = vsub.f32 %v3553, %v3790
        %v3938 = vsub.f32 %v3554, %v3792
        %v3939 = vsub.f32 %v3555, %v3794
        %v3940 = vsub.f32 %v3556, %v3796
        %v3941 = vsub.f32 %v3557, %v3798
        %v3942 = vsub.f32 %v3558, %v3800
        %v3943 = vsub.f32 %v3559, %v3802
        %v3944 = vsub.f32 %v3560, %v3804
        %v3945 = vsub.f32 %v3561, %v3806
        %v3946 = vsub.f32 %v3562, %v3808
        %v3947 = vsub.f32 %v3563, %v3810
        %v3948 = vsub.f32 %v3564, %v3812
        %v3949 = vsub.f32 %v3565, %v3814
        %v3950 = vsub.f32 %v3566, %v3816
        %v3951 = vsub.f32 %v3567, %v3818
        %v3952 = vsub.f32 %v3568, %v3820
        %v3953 = vsub.f32 %v3569, %v3822
        %v3954 = vsub.f32 %v3570, %v3824
        %v3955 = vsub.f32 %v3571, %v3826
        %v3956 = vsub.f32 %v3572, %v3828
        %v3957 = vmul.f32 %v3829, 1.442695
        %v3958 = vpow.pop %v3957
        %v3959 = vmul.f32 %v3830, 1.442695
        %v3960 = vpow.pop %v3959
        %v3961 = vmul.f32 %v3831, 1.442695
        %v3962 = vpow.pop %v3961
        %v3963 = vmul.f32 %v3832, 1.442695
        %v3964 = vpow.pop %v3963
        %v3965 = vmul.f32 %v3833, 1.442695
        %v3966 = vpow.pop %v3965
        %v3967 = vmul.f32 %v3834, 1.442695
        %v3968 = vpow.pop %v3967
        %v3969 = vmul.f32 %v3835, 1.442695
        %v3970 = vpow.pop %v3969
        %v3971 = vmul.f32 %v3836, 1.442695
        %v3972 = vpow.pop %v3971
        %v3973 = vmul.f32 %v3837, 1.442695
        %v3974 = vpow.pop %v3973
        %v3975 = vmul.f32 %v3838, 1.442695
        %v3976 = vpow.pop %v3975
        %v3977 = vmul.f32 %v3839, 1.442695
        %v3978 = vpow.pop %v3977
        %v3979 = vmul.f32 %v3840, 1.442695
        %v3980 = vpow.pop %v3979
        %v3981 = vmul.f32 %v3841, 1.442695
        %v3982 = vpow.pop %v3981
        %v3983 = vmul.f32 %v3842, 1.442695
        %v3984 = vpow.pop %v3983
        %v3985 = vmul.f32 %v3843, 1.442695
        %v3986 = vpow.pop %v3985
        %v3987 = vmul.f32 %v3844, 1.442695
        %v3988 = vpow.pop %v3987
        %v3989 = vmul.f32 %v3845, 1.442695
        %v3990 = vpow.pop %v3989
        %v3991 = vmul.f32 %v3846, 1.442695
        %v3992 = vpow.pop %v3991
        %v3993 = vmul.f32 %v3847, 1.442695
        %v3994 = vpow.pop %v3993
        %v3995 = vmul.f32 %v3848, 1.442695
        %v3996 = vpow.pop %v3995
        %v3997 = vmul.f32 %v3849, 1.442695
        %v3998 = vpow.pop %v3997
        %v3999 = vmul.f32 %v3850, 1.442695
        %v4000 = vpow.pop %v3999
        %v4001 = vmul.f32 %v3851, 1.442695
        %v4002 = vpow.pop %v4001
        %v4003 = vmul.f32 %v3852, 1.442695
        %v4004 = vpow.pop %v4003
        %v4005 = vmul.f32 %v3853, 1.442695
        %v4006 = vpow.pop %v4005
        %v4007 = vmul.f32 %v3854, 1.442695
        %v4008 = vpow.pop %v4007
        %v4009 = vmul.f32 %v3855, 1.442695
        %v4010 = vpow.pop %v4009
        %v4011 = vmul.f32 %v3856, 1.442695
        %v4012 = vpow.pop %v4011
        %v4013 = vmul.f32 %v3857, 1.442695
        %v4014 = vpow.pop %v4013
        %v4015 = vmul.f32 %v3858, 1.442695
        %v4016 = vpow.pop %v4015
        %v4017 = vmul.f32 %v3859, 1.442695
        %v4018 = vpow.pop %v4017
        %v4019 = vmul.f32 %v3860, 1.442695
        %v4020 = vpow.pop %v4019
        %v4021 = vmul.f32 %v3861, 1.442695
        %v4022 = vpow.pop %v4021
        %v4023 = vmul.f32 %v3862, 1.442695
        %v4024 = vpow.pop %v4023
        %v4025 = vmul.f32 %v3863, 1.442695
        %v4026 = vpow.pop %v4025
        %v4027 = vmul.f32 %v3864, 1.442695
        %v4028 = vpow.pop %v4027
        %v4029 = vmul.f32 %v3865, 1.442695
        %v4030 = vpow.pop %v4029
        %v4031 = vmul.f32 %v3866, 1.442695
        %v4032 = vpow.pop %v4031
        %v4033 = vmul.f32 %v3867, 1.442695
        %v4034 = vpow.pop %v4033
        %v4035 = vmul.f32 %v3868, 1.442695
        %v4036 = vpow.pop %v4035
        %v4037 = vmul.f32 %v3869, 1.442695
        %v4038 = vpow.pop %v4037
        %v4039 = vmul.f32 %v3870, 1.442695
        %v4040 = vpow.pop %v4039
        %v4041 = vmul.f32 %v3871, 1.442695
        %v4042 = vpow.pop %v4041
        %v4043 = vmul.f32 %v3872, 1.442695
        %v4044 = vpow.pop %v4043
        %v4045 = vmul.f32 %v3873, 1.442695
        %v4046 = vpow.pop %v4045
        %v4047 = vmul.f32 %v3874, 1.442695
        %v4048 = vpow.pop %v4047
        %v4049 = vmul.f32 %v3875, 1.442695
        %v4050 = vpow.pop %v4049
        %v4051 = vmul.f32 %v3876, 1.442695
        %v4052 = vpow.pop %v4051
        %v4053 = vmul.f32 %v3877, 1.442695
        %v4054 = vpow.pop %v4053
        %v4055 = vmul.f32 %v3878, 1.442695
        %v4056 = vpow.pop %v4055
        %v4057 = vmul.f32 %v3879, 1.442695
        %v4058 = vpow.pop %v4057
        %v4059 = vmul.f32 %v3880, 1.442695
        %v4060 = vpow.pop %v4059
        %v4061 = vmul.f32 %v3881, 1.442695
        %v4062 = vpow.pop %v4061
        %v4063 = vmul.f32 %v3882, 1.442695
        %v4064 = vpow.pop %v4063
        %v4065 = vmul.f32 %v3883, 1.442695
        %v4066 = vpow.pop %v4065
        %v4067 = vmul.f32 %v3884, 1.442695
        %v4068 = vpow.pop %v4067
        %v4069 = vmul.f32 %v3885, 1.442695
        %v4070 = vpow.pop %v4069
        %v4071 = vmul.f32 %v3886, 1.442695
        %v4072 = vpow.pop %v4071
        %v4073 = vmul.f32 %v3887, 1.442695
        %v4074 = vpow.pop %v4073
        %v4075 = vmul.f32 %v3888, 1.442695
        %v4076 = vpow.pop %v4075
        %v4077 = vmul.f32 %v3889, 1.442695
        %v4078 = vpow.pop %v4077
        %v4079 = vmul.f32 %v3890, 1.442695
        %v4080 = vpow.pop %v4079
        %v4081 = vmul.f32 %v3891, 1.442695
        %v4082 = vpow.pop %v4081
        %v4083 = vmul.f32 %v3892, 1.442695
        %v4084 = vpow.pop %v4083
        %v4085 = vmul.f32 %v3893, 1.442695
        %v4086 = vpow.pop %v4085
        %v4087 = vmul.f32 %v3894, 1.442695
        %v4088 = vpow.pop %v4087
        %v4089 = vmul.f32 %v3895, 1.442695
        %v4090 = vpow.pop %v4089
        %v4091 = vmul.f32 %v3896, 1.442695
        %v4092 = vpow.pop %v4091
        %v4093 = vmul.f32 %v3897, 1.442695
        %v4094 = vpow.pop %v4093
        %v4095 = vmul.f32 %v3898, 1.442695
        %v4096 = vpow.pop %v4095
        %v4097 = vmul.f32 %v3899, 1.442695
        %v4098 = vpow.pop %v4097
        %v4099 = vmul.f32 %v3900, 1.442695
        %v4100 = vpow.pop %v4099
        %v4101 = vmul.f32 %v3901, 1.442695
        %v4102 = vpow.pop %v4101
        %v4103 = vmul.f32 %v3902, 1.442695
        %v4104 = vpow.pop %v4103
        %v4105 = vmul.f32 %v3903, 1.442695
        %v4106 = vpow.pop %v4105
        %v4107 = vmul.f32 %v3904, 1.442695
        %v4108 = vpow.pop %v4107
        %v4109 = vmul.f32 %v3905, 1.442695
        %v4110 = vpow.pop %v4109
        %v4111 = vmul.f32 %v3906, 1.442695
        %v4112 = vpow.pop %v4111
        %v4113 = vmul.f32 %v3907, 1.442695
        %v4114 = vpow.pop %v4113
        %v4115 = vmul.f32 %v3908, 1.442695
        %v4116 = vpow.pop %v4115
        %v4117 = vmul.f32 %v3909, 1.442695
        %v4118 = vpow.pop %v4117
        %v4119 = vmul.f32 %v3910, 1.442695
        %v4120 = vpow.pop %v4119
        %v4121 = vmul.f32 %v3911, 1.442695
        %v4122 = vpow.pop %v4121
        %v4123 = vmul.f32 %v3912, 1.442695
        %v4124 = vpow.pop %v4123
        %v4125 = vmul.f32 %v3913, 1.442695
        %v4126 = vpow.pop %v4125
        %v4127 = vmul.f32 %v3914, 1.442695
        %v4128 = vpow.pop %v4127
        %v4129 = vmul.f32 %v3915, 1.442695
        %v4130 = vpow.pop %v4129
        %v4131 = vmul.f32 %v3916, 1.442695
        %v4132 = vpow.pop %v4131
        %v4133 = vmul.f32 %v3917, 1.442695
        %v4134 = vpow.pop %v4133
        %v4135 = vmul.f32 %v3918, 1.442695
        %v4136 = vpow.pop %v4135
        %v4137 = vmul.f32 %v3919, 1.442695
        %v4138 = vpow.pop %v4137
        %v4139 = vmul.f32 %v3920, 1.442695
        %v4140 = vpow.pop %v4139
        %v4141 = vmul.f32 %v3921, 1.442695
        %v4142 = vpow.pop %v4141
        %v4143 = vmul.f32 %v3922, 1.442695
        %v4144 = vpow.pop %v4143
        %v4145 = vmul.f32 %v3923, 1.442695
        %v4146 = vpow.pop %v4145
        %v4147 = vmul.f32 %v3924, 1.442695
        %v4148 = vpow.pop %v4147
        %v4149 = vmul.f32 %v3925, 1.442695
        %v4150 = vpow.pop %v4149
        %v4151 = vmul.f32 %v3926, 1.442695
        %v4152 = vpow.pop %v4151
        %v4153 = vmul.f32 %v3927, 1.442695
        %v4154 = vpow.pop %v4153
        %v4155 = vmul.f32 %v3928, 1.442695
        %v4156 = vpow.pop %v4155
        %v4157 = vmul.f32 %v3929, 1.442695
        %v4158 = vpow.pop %v4157
        %v4159 = vmul.f32 %v3930, 1.442695
        %v4160 = vpow.pop %v4159
        %v4161 = vmul.f32 %v3931, 1.442695
        %v4162 = vpow.pop %v4161
        %v4163 = vmul.f32 %v3932, 1.442695
        %v4164 = vpow.pop %v4163
        %v4165 = vmul.f32 %v3933, 1.442695
        %v4166 = vpow.pop %v4165
        %v4167 = vmul.f32 %v3934, 1.442695
        %v4168 = vpow.pop %v4167
        %v4169 = vmul.f32 %v3935, 1.442695
        %v4170 = vpow.pop %v4169
        %v4171 = vmul.f32 %v3936, 1.442695
        %v4172 = vpow.pop %v4171
        %v4173 = vmul.f32 %v3937, 1.442695
        %v4174 = vpow.pop %v4173
        %v4175 = vmul.f32 %v3938, 1.442695
        %v4176 = vpow.pop %v4175
        %v4177 = vmul.f32 %v3939, 1.442695
        %v4178 = vpow.pop %v4177
        %v4179 = vmul.f32 %v3940, 1.442695
        %v4180 = vpow.pop %v4179
        %v4181 = vmul.f32 %v3941, 1.442695
        %v4182 = vpow.pop %v4181
        %v4183 = vmul.f32 %v3942, 1.442695
        %v4184 = vpow.pop %v4183
        %v4185 = vmul.f32 %v3943, 1.442695
        %v4186 = vpow.pop %v4185
        %v4187 = vmul.f32 %v3944, 1.442695
        %v4188 = vpow.pop %v4187
        %v4189 = vmul.f32 %v3945, 1.442695
        %v4190 = vpow.pop %v4189
        %v4191 = vmul.f32 %v3946, 1.442695
        %v4192 = vpow.pop %v4191
        %v4193 = vmul.f32 %v3947, 1.442695
        %v4194 = vpow.pop %v4193
        %v4195 = vmul.f32 %v3948, 1.442695
        %v4196 = vpow.pop %v4195
        %v4197 = vmul.f32 %v3949, 1.442695
        %v4198 = vpow.pop %v4197
        %v4199 = vmul.f32 %v3950, 1.442695
        %v4200 = vpow.pop %v4199
        %v4201 = vmul.f32 %v3951, 1.442695
        %v4202 = vpow.pop %v4201
        %v4203 = vmul.f32 %v3952, 1.442695
        %v4204 = vpow.pop %v4203
        %v4205 = vmul.f32 %v3953, 1.442695
        %v4206 = vpow.pop %v4205
        %v4207 = vmul.f32 %v3954, 1.442695
        %v4208 = vpow.pop %v4207
        %v4209 = vmul.f32 %v3955, 1.442695
        %v4210 = vpow.pop %v4209
        %v4211 = vmul.f32 %v3956, 1.442695
        %v4212 = vpow.pop %v4211
        %4213 = vadd.xlane.f32.xlu0 %v3958
        %v4214 = vpop.xlane.xlu0 %4213
        %4215 = vadd.xlane.f32.xlu0 %v3960
        %v4216 = vpop.xlane.xlu0 %4215
        %4217 = vadd.xlane.f32.xlu0 %v3962
        %v4218 = vpop.xlane.xlu0 %4217
        %4219 = vadd.xlane.f32.xlu0 %v3964
        %v4220 = vpop.xlane.xlu0 %4219
        %4221 = vadd.xlane.f32.xlu0 %v3966
        %v4222 = vpop.xlane.xlu0 %4221
        %4223 = vadd.xlane.f32.xlu0 %v3968
        %v4224 = vpop.xlane.xlu0 %4223
        %4225 = vadd.xlane.f32.xlu0 %v3970
        %v4226 = vpop.xlane.xlu0 %4225
        %4227 = vadd.xlane.f32.xlu0 %v3972
        %v4228 = vpop.xlane.xlu0 %4227
        %4229 = vadd.xlane.f32.xlu0 %v3974
        %v4230 = vpop.xlane.xlu0 %4229
        %4231 = vadd.xlane.f32.xlu0 %v3976
        %v4232 = vpop.xlane.xlu0 %4231
        %4233 = vadd.xlane.f32.xlu0 %v3978
        %v4234 = vpop.xlane.xlu0 %4233
        %4235 = vadd.xlane.f32.xlu0 %v3980
        %v4236 = vpop.xlane.xlu0 %4235
        %4237 = vadd.xlane.f32.xlu0 %v3982
        %v4238 = vpop.xlane.xlu0 %4237
        %4239 = vadd.xlane.f32.xlu0 %v3984
        %v4240 = vpop.xlane.xlu0 %4239
        %4241 = vadd.xlane.f32.xlu0 %v3986
        %v4242 = vpop.xlane.xlu0 %4241
        %4243 = vadd.xlane.f32.xlu0 %v3988
        %v4244 = vpop.xlane.xlu0 %4243
        %4245 = vadd.xlane.f32.xlu0 %v3990
        %v4246 = vpop.xlane.xlu0 %4245
        %4247 = vadd.xlane.f32.xlu0 %v3992
        %v4248 = vpop.xlane.xlu0 %4247
        %4249 = vadd.xlane.f32.xlu0 %v3994
        %v4250 = vpop.xlane.xlu0 %4249
        %4251 = vadd.xlane.f32.xlu0 %v3996
        %v4252 = vpop.xlane.xlu0 %4251
        %4253 = vadd.xlane.f32.xlu0 %v3998
        %v4254 = vpop.xlane.xlu0 %4253
        %4255 = vadd.xlane.f32.xlu0 %v4000
        %v4256 = vpop.xlane.xlu0 %4255
        %4257 = vadd.xlane.f32.xlu0 %v4002
        %v4258 = vpop.xlane.xlu0 %4257
        %4259 = vadd.xlane.f32.xlu0 %v4004
        %v4260 = vpop.xlane.xlu0 %4259
        %4261 = vadd.xlane.f32.xlu0 %v4006
        %v4262 = vpop.xlane.xlu0 %4261
        %4263 = vadd.xlane.f32.xlu0 %v4008
        %v4264 = vpop.xlane.xlu0 %4263
        %4265 = vadd.xlane.f32.xlu0 %v4010
        %v4266 = vpop.xlane.xlu0 %4265
        %4267 = vadd.xlane.f32.xlu0 %v4012
        %v4268 = vpop.xlane.xlu0 %4267
        %4269 = vadd.xlane.f32.xlu0 %v4014
        %v4270 = vpop.xlane.xlu0 %4269
        %4271 = vadd.xlane.f32.xlu0 %v4016
        %v4272 = vpop.xlane.xlu0 %4271
        %4273 = vadd.xlane.f32.xlu0 %v4018
        %v4274 = vpop.xlane.xlu0 %4273
        %4275 = vadd.xlane.f32.xlu0 %v4020
        %v4276 = vpop.xlane.xlu0 %4275
        %4277 = vadd.xlane.f32.xlu0 %v4022
        %v4278 = vpop.xlane.xlu0 %4277
        %4279 = vadd.xlane.f32.xlu0 %v4024
        %v4280 = vpop.xlane.xlu0 %4279
        %4281 = vadd.xlane.f32.xlu0 %v4026
        %v4282 = vpop.xlane.xlu0 %4281
        %4283 = vadd.xlane.f32.xlu0 %v4028
        %v4284 = vpop.xlane.xlu0 %4283
        %4285 = vadd.xlane.f32.xlu0 %v4030
        %v4286 = vpop.xlane.xlu0 %4285
        %4287 = vadd.xlane.f32.xlu0 %v4032
        %v4288 = vpop.xlane.xlu0 %4287
        %4289 = vadd.xlane.f32.xlu0 %v4034
        %v4290 = vpop.xlane.xlu0 %4289
        %4291 = vadd.xlane.f32.xlu0 %v4036
        %v4292 = vpop.xlane.xlu0 %4291
        %4293 = vadd.xlane.f32.xlu0 %v4038
        %v4294 = vpop.xlane.xlu0 %4293
        %4295 = vadd.xlane.f32.xlu0 %v4040
        %v4296 = vpop.xlane.xlu0 %4295
        %4297 = vadd.xlane.f32.xlu0 %v4042
        %v4298 = vpop.xlane.xlu0 %4297
        %4299 = vadd.xlane.f32.xlu0 %v4044
        %v4300 = vpop.xlane.xlu0 %4299
        %4301 = vadd.xlane.f32.xlu0 %v4046
        %v4302 = vpop.xlane.xlu0 %4301
        %4303 = vadd.xlane.f32.xlu0 %v4048
        %v4304 = vpop.xlane.xlu0 %4303
        %4305 = vadd.xlane.f32.xlu0 %v4050
        %v4306 = vpop.xlane.xlu0 %4305
        %4307 = vadd.xlane.f32.xlu0 %v4052
        %v4308 = vpop.xlane.xlu0 %4307
        %4309 = vadd.xlane.f32.xlu0 %v4054
        %v4310 = vpop.xlane.xlu0 %4309
        %4311 = vadd.xlane.f32.xlu0 %v4056
        %v4312 = vpop.xlane.xlu0 %4311
        %4313 = vadd.xlane.f32.xlu0 %v4058
        %v4314 = vpop.xlane.xlu0 %4313
        %4315 = vadd.xlane.f32.xlu0 %v4060
        %v4316 = vpop.xlane.xlu0 %4315
        %4317 = vadd.xlane.f32.xlu0 %v4062
        %v4318 = vpop.xlane.xlu0 %4317
        %4319 = vadd.xlane.f32.xlu0 %v4064
        %v4320 = vpop.xlane.xlu0 %4319
        %4321 = vadd.xlane.f32.xlu0 %v4066
        %v4322 = vpop.xlane.xlu0 %4321
        %4323 = vadd.xlane.f32.xlu0 %v4068
        %v4324 = vpop.xlane.xlu0 %4323
        %4325 = vadd.xlane.f32.xlu0 %v4070
        %v4326 = vpop.xlane.xlu0 %4325
        %4327 = vadd.xlane.f32.xlu0 %v4072
        %v4328 = vpop.xlane.xlu0 %4327
        %4329 = vadd.xlane.f32.xlu0 %v4074
        %v4330 = vpop.xlane.xlu0 %4329
        %4331 = vadd.xlane.f32.xlu0 %v4076
        %v4332 = vpop.xlane.xlu0 %4331
        %4333 = vadd.xlane.f32.xlu0 %v4078
        %v4334 = vpop.xlane.xlu0 %4333
        %4335 = vadd.xlane.f32.xlu0 %v4080
        %v4336 = vpop.xlane.xlu0 %4335
        %4337 = vadd.xlane.f32.xlu0 %v4082
        %v4338 = vpop.xlane.xlu0 %4337
        %4339 = vadd.xlane.f32.xlu0 %v4084
        %v4340 = vpop.xlane.xlu0 %4339
        %4341 = vadd.xlane.f32.xlu0 %v4086
        %v4342 = vpop.xlane.xlu0 %4341
        %4343 = vadd.xlane.f32.xlu0 %v4088
        %v4344 = vpop.xlane.xlu0 %4343
        %4345 = vadd.xlane.f32.xlu0 %v4090
        %v4346 = vpop.xlane.xlu0 %4345
        %4347 = vadd.xlane.f32.xlu0 %v4092
        %v4348 = vpop.xlane.xlu0 %4347
        %4349 = vadd.xlane.f32.xlu0 %v4094
        %v4350 = vpop.xlane.xlu0 %4349
        %4351 = vadd.xlane.f32.xlu0 %v4096
        %v4352 = vpop.xlane.xlu0 %4351
        %4353 = vadd.xlane.f32.xlu0 %v4098
        %v4354 = vpop.xlane.xlu0 %4353
        %4355 = vadd.xlane.f32.xlu0 %v4100
        %v4356 = vpop.xlane.xlu0 %4355
        %4357 = vadd.xlane.f32.xlu0 %v4102
        %v4358 = vpop.xlane.xlu0 %4357
        %4359 = vadd.xlane.f32.xlu0 %v4104
        %v4360 = vpop.xlane.xlu0 %4359
        %4361 = vadd.xlane.f32.xlu0 %v4106
        %v4362 = vpop.xlane.xlu0 %4361
        %4363 = vadd.xlane.f32.xlu0 %v4108
        %v4364 = vpop.xlane.xlu0 %4363
        %4365 = vadd.xlane.f32.xlu0 %v4110
        %v4366 = vpop.xlane.xlu0 %4365
        %4367 = vadd.xlane.f32.xlu0 %v4112
        %v4368 = vpop.xlane.xlu0 %4367
        %4369 = vadd.xlane.f32.xlu0 %v4114
        %v4370 = vpop.xlane.xlu0 %4369
        %4371 = vadd.xlane.f32.xlu0 %v4116
        %v4372 = vpop.xlane.xlu0 %4371
        %4373 = vadd.xlane.f32.xlu0 %v4118
        %v4374 = vpop.xlane.xlu0 %4373
        %4375 = vadd.xlane.f32.xlu0 %v4120
        %v4376 = vpop.xlane.xlu0 %4375
        %4377 = vadd.xlane.f32.xlu0 %v4122
        %v4378 = vpop.xlane.xlu0 %4377
        %4379 = vadd.xlane.f32.xlu0 %v4124
        %v4380 = vpop.xlane.xlu0 %4379
        %4381 = vadd.xlane.f32.xlu0 %v4126
        %v4382 = vpop.xlane.xlu0 %4381
        %4383 = vadd.xlane.f32.xlu0 %v4128
        %v4384 = vpop.xlane.xlu0 %4383
        %4385 = vadd.xlane.f32.xlu0 %v4130
        %v4386 = vpop.xlane.xlu0 %4385
        %4387 = vadd.xlane.f32.xlu0 %v4132
        %v4388 = vpop.xlane.xlu0 %4387
        %4389 = vadd.xlane.f32.xlu0 %v4134
        %v4390 = vpop.xlane.xlu0 %4389
        %4391 = vadd.xlane.f32.xlu0 %v4136
        %v4392 = vpop.xlane.xlu0 %4391
        %4393 = vadd.xlane.f32.xlu0 %v4138
        %v4394 = vpop.xlane.xlu0 %4393
        %4395 = vadd.xlane.f32.xlu0 %v4140
        %v4396 = vpop.xlane.xlu0 %4395
        %4397 = vadd.xlane.f32.xlu0 %v4142
        %v4398 = vpop.xlane.xlu0 %4397
        %4399 = vadd.xlane.f32.xlu0 %v4144
        %v4400 = vpop.xlane.xlu0 %4399
        %4401 = vadd.xlane.f32.xlu0 %v4146
        %v4402 = vpop.xlane.xlu0 %4401
        %4403 = vadd.xlane.f32.xlu0 %v4148
        %v4404 = vpop.xlane.xlu0 %4403
        %4405 = vadd.xlane.f32.xlu0 %v4150
        %v4406 = vpop.xlane.xlu0 %4405
        %4407 = vadd.xlane.f32.xlu0 %v4152
        %v4408 = vpop.xlane.xlu0 %4407
        %4409 = vadd.xlane.f32.xlu0 %v4154
        %v4410 = vpop.xlane.xlu0 %4409
        %4411 = vadd.xlane.f32.xlu0 %v4156
        %v4412 = vpop.xlane.xlu0 %4411
        %4413 = vadd.xlane.f32.xlu0 %v4158
        %v4414 = vpop.xlane.xlu0 %4413
        %4415 = vadd.xlane.f32.xlu0 %v4160
        %v4416 = vpop.xlane.xlu0 %4415
        %4417 = vadd.xlane.f32.xlu0 %v4162
        %v4418 = vpop.xlane.xlu0 %4417
        %4419 = vadd.xlane.f32.xlu0 %v4164
        %v4420 = vpop.xlane.xlu0 %4419
        %4421 = vadd.xlane.f32.xlu0 %v4166
        %v4422 = vpop.xlane.xlu0 %4421
        %4423 = vadd.xlane.f32.xlu0 %v4168
        %v4424 = vpop.xlane.xlu0 %4423
        %4425 = vadd.xlane.f32.xlu0 %v4170
        %v4426 = vpop.xlane.xlu0 %4425
        %4427 = vadd.xlane.f32.xlu0 %v4172
        %v4428 = vpop.xlane.xlu0 %4427
        %4429 = vadd.xlane.f32.xlu0 %v4174
        %v4430 = vpop.xlane.xlu0 %4429
        %4431 = vadd.xlane.f32.xlu0 %v4176
        %v4432 = vpop.xlane.xlu0 %4431
        %4433 = vadd.xlane.f32.xlu0 %v4178
        %v4434 = vpop.xlane.xlu0 %4433
        %4435 = vadd.xlane.f32.xlu0 %v4180
        %v4436 = vpop.xlane.xlu0 %4435
        %4437 = vadd.xlane.f32.xlu0 %v4182
        %v4438 = vpop.xlane.xlu0 %4437
        %4439 = vadd.xlane.f32.xlu0 %v4184
        %v4440 = vpop.xlane.xlu0 %4439
        %4441 = vadd.xlane.f32.xlu0 %v4186
        %v4442 = vpop.xlane.xlu0 %4441
        %4443 = vadd.xlane.f32.xlu0 %v4188
        %v4444 = vpop.xlane.xlu0 %4443
        %4445 = vadd.xlane.f32.xlu0 %v4190
        %v4446 = vpop.xlane.xlu0 %4445
        %4447 = vadd.xlane.f32.xlu0 %v4192
        %v4448 = vpop.xlane.xlu0 %4447
        %4449 = vadd.xlane.f32.xlu0 %v4194
        %v4450 = vpop.xlane.xlu0 %4449
        %4451 = vadd.xlane.f32.xlu0 %v4196
        %v4452 = vpop.xlane.xlu0 %4451
        %4453 = vadd.xlane.f32.xlu0 %v4198
        %v4454 = vpop.xlane.xlu0 %4453
        %4455 = vadd.xlane.f32.xlu0 %v4200
        %v4456 = vpop.xlane.xlu0 %4455
        %4457 = vadd.xlane.f32.xlu0 %v4202
        %v4458 = vpop.xlane.xlu0 %4457
        %4459 = vadd.xlane.f32.xlu0 %v4204
        %v4460 = vpop.xlane.xlu0 %4459
        %4461 = vadd.xlane.f32.xlu0 %v4206
        %v4462 = vpop.xlane.xlu0 %4461
        %4463 = vadd.xlane.f32.xlu0 %v4208
        %v4464 = vpop.xlane.xlu0 %4463
        %4465 = vadd.xlane.f32.xlu0 %v4210
        %v4466 = vpop.xlane.xlu0 %4465
        %4467 = vadd.xlane.f32.xlu0 %v4212
        %v4468 = vpop.xlane.xlu0 %4467
        %v4469 = vld [vmem:[%s262] sm:$0xff]
        %v4470 = vld [vmem:[%s262 + $0x8] sm:$0xff]
        %v4471 = vld [vmem:[%s262 + $0x10] sm:$0xff]
        %v4472 = vld [vmem:[%s262 + $0x18] sm:$0xff]
        %v4473 = vld [vmem:[%s262 + $0x20] sm:$0xff]
        %v4474 = vld [vmem:[%s262 + $0x28] sm:$0xff]
        %v4475 = vld [vmem:[%s262 + $0x30] sm:$0xff]
        %v4476 = vld [vmem:[%s262 + $0x38] sm:$0xff]
        %v4477 = vld [vmem:[%s262 + $0x40] sm:$0xff]
        %v4478 = vld [vmem:[%s262 + $0x48] sm:$0xff]
        %v4479 = vld [vmem:[%s262 + $0x50] sm:$0xff]
        %v4480 = vld [vmem:[%s262 + $0x58] sm:$0xff]
        %v4481 = vld [vmem:[%s262 + $0x60] sm:$0xff]
        %v4482 = vld [vmem:[%s262 + $0x68] sm:$0xff]
        %v4483 = vld [vmem:[%s262 + $0x70] sm:$0xff]
        %v4484 = vld [vmem:[%s262 + $0x78] sm:$0xff]
        %v4485 = vld [vmem:[%s262 + $0x80] sm:$0xff]
        %v4486 = vld [vmem:[%s262 + $0x88] sm:$0xff]
        %v4487 = vld [vmem:[%s262 + $0x90] sm:$0xff]
        %v4488 = vld [vmem:[%s262 + $0x98] sm:$0xff]
        %v4489 = vld [vmem:[%s262 + $0xa0] sm:$0xff]
        %v4490 = vld [vmem:[%s262 + $0xa8] sm:$0xff]
        %v4491 = vld [vmem:[%s262 + $0xb0] sm:$0xff]
        %v4492 = vld [vmem:[%s262 + $0xb8] sm:$0xff]
        %v4493 = vld [vmem:[%s262 + $0xc0] sm:$0xff]
        %v4494 = vld [vmem:[%s262 + $0xc8] sm:$0xff]
        %v4495 = vld [vmem:[%s262 + $0xd0] sm:$0xff]
        %v4496 = vld [vmem:[%s262 + $0xd8] sm:$0xff]
        %v4497 = vld [vmem:[%s262 + $0xe0] sm:$0xff]
        %v4498 = vld [vmem:[%s262 + $0xe8] sm:$0xff]
        %v4499 = vld [vmem:[%s262 + $0xf0] sm:$0xff]
        %v4500 = vld [vmem:[%s262 + $0xf8] sm:$0xff]
        %v4501 = vld [vmem:[%s262 + $0x100] sm:$0xff]
        %v4502 = vld [vmem:[%s262 + $0x108] sm:$0xff]
        %v4503 = vld [vmem:[%s262 + $0x110] sm:$0xff]
        %v4504 = vld [vmem:[%s262 + $0x118] sm:$0xff]
        %v4505 = vld [vmem:[%s262 + $0x120] sm:$0xff]
        %v4506 = vld [vmem:[%s262 + $0x128] sm:$0xff]
        %v4507 = vld [vmem:[%s262 + $0x130] sm:$0xff]
        %v4508 = vld [vmem:[%s262 + $0x138] sm:$0xff]
        %v4509 = vld [vmem:[%s262 + $0x140] sm:$0xff]
        %v4510 = vld [vmem:[%s262 + $0x148] sm:$0xff]
        %v4511 = vld [vmem:[%s262 + $0x150] sm:$0xff]
        %v4512 = vld [vmem:[%s262 + $0x158] sm:$0xff]
        %v4513 = vld [vmem:[%s262 + $0x160] sm:$0xff]
        %v4514 = vld [vmem:[%s262 + $0x168] sm:$0xff]
        %v4515 = vld [vmem:[%s262 + $0x170] sm:$0xff]
        %v4516 = vld [vmem:[%s262 + $0x178] sm:$0xff]
        %v4517 = vld [vmem:[%s262 + $0x180] sm:$0xff]
        %v4518 = vld [vmem:[%s262 + $0x188] sm:$0xff]
        %v4519 = vld [vmem:[%s262 + $0x190] sm:$0xff]
        %v4520 = vld [vmem:[%s262 + $0x198] sm:$0xff]
        %v4521 = vld [vmem:[%s262 + $0x1a0] sm:$0xff]
        %v4522 = vld [vmem:[%s262 + $0x1a8] sm:$0xff]
        %v4523 = vld [vmem:[%s262 + $0x1b0] sm:$0xff]
        %v4524 = vld [vmem:[%s262 + $0x1b8] sm:$0xff]
        %v4525 = vld [vmem:[%s262 + $0x1c0] sm:$0xff]
        %v4526 = vld [vmem:[%s262 + $0x1c8] sm:$0xff]
        %v4527 = vld [vmem:[%s262 + $0x1d0] sm:$0xff]
        %v4528 = vld [vmem:[%s262 + $0x1d8] sm:$0xff]
        %v4529 = vld [vmem:[%s262 + $0x1e0] sm:$0xff]
        %v4530 = vld [vmem:[%s262 + $0x1e8] sm:$0xff]
        %v4531 = vld [vmem:[%s262 + $0x1f0] sm:$0xff]
        %v4532 = vld [vmem:[%s262 + $0x1f8] sm:$0xff]
        %v4533 = vld [vmem:[%s262 + $0x200] sm:$0xff]
        %v4534 = vld [vmem:[%s262 + $0x208] sm:$0xff]
        %v4535 = vld [vmem:[%s262 + $0x210] sm:$0xff]
        %v4536 = vld [vmem:[%s262 + $0x218] sm:$0xff]
        %v4537 = vld [vmem:[%s262 + $0x220] sm:$0xff]
        %v4538 = vld [vmem:[%s262 + $0x228] sm:$0xff]
        %v4539 = vld [vmem:[%s262 + $0x230] sm:$0xff]
        %v4540 = vld [vmem:[%s262 + $0x238] sm:$0xff]
        %v4541 = vld [vmem:[%s262 + $0x240] sm:$0xff]
        %v4542 = vld [vmem:[%s262 + $0x248] sm:$0xff]
        %v4543 = vld [vmem:[%s262 + $0x250] sm:$0xff]
        %v4544 = vld [vmem:[%s262 + $0x258] sm:$0xff]
        %v4545 = vld [vmem:[%s262 + $0x260] sm:$0xff]
        %v4546 = vld [vmem:[%s262 + $0x268] sm:$0xff]
        %v4547 = vld [vmem:[%s262 + $0x270] sm:$0xff]
        %v4548 = vld [vmem:[%s262 + $0x278] sm:$0xff]
        %v4549 = vld [vmem:[%s262 + $0x280] sm:$0xff]
        %v4550 = vld [vmem:[%s262 + $0x288] sm:$0xff]
        %v4551 = vld [vmem:[%s262 + $0x290] sm:$0xff]
        %v4552 = vld [vmem:[%s262 + $0x298] sm:$0xff]
        %v4553 = vld [vmem:[%s262 + $0x2a0] sm:$0xff]
        %v4554 = vld [vmem:[%s262 + $0x2a8] sm:$0xff]
        %v4555 = vld [vmem:[%s262 + $0x2b0] sm:$0xff]
        %v4556 = vld [vmem:[%s262 + $0x2b8] sm:$0xff]
        %v4557 = vld [vmem:[%s262 + $0x2c0] sm:$0xff]
        %v4558 = vld [vmem:[%s262 + $0x2c8] sm:$0xff]
        %v4559 = vld [vmem:[%s262 + $0x2d0] sm:$0xff]
        %v4560 = vld [vmem:[%s262 + $0x2d8] sm:$0xff]
        %v4561 = vld [vmem:[%s262 + $0x2e0] sm:$0xff]
        %v4562 = vld [vmem:[%s262 + $0x2e8] sm:$0xff]
        %v4563 = vld [vmem:[%s262 + $0x2f0] sm:$0xff]
        %v4564 = vld [vmem:[%s262 + $0x2f8] sm:$0xff]
        %v4565 = vld [vmem:[%s262 + $0x300] sm:$0xff]
        %v4566 = vld [vmem:[%s262 + $0x308] sm:$0xff]
        %v4567 = vld [vmem:[%s262 + $0x310] sm:$0xff]
        %v4568 = vld [vmem:[%s262 + $0x318] sm:$0xff]
        %v4569 = vld [vmem:[%s262 + $0x320] sm:$0xff]
        %v4570 = vld [vmem:[%s262 + $0x328] sm:$0xff]
        %v4571 = vld [vmem:[%s262 + $0x330] sm:$0xff]
        %v4572 = vld [vmem:[%s262 + $0x338] sm:$0xff]
        %v4573 = vld [vmem:[%s262 + $0x340] sm:$0xff]
        %v4574 = vld [vmem:[%s262 + $0x348] sm:$0xff]
        %v4575 = vld [vmem:[%s262 + $0x350] sm:$0xff]
        %v4576 = vld [vmem:[%s262 + $0x358] sm:$0xff]
        %v4577 = vld [vmem:[%s262 + $0x360] sm:$0xff]
        %v4578 = vld [vmem:[%s262 + $0x368] sm:$0xff]
        %v4579 = vld [vmem:[%s262 + $0x370] sm:$0xff]
        %v4580 = vld [vmem:[%s262 + $0x378] sm:$0xff]
        %v4581 = vld [vmem:[%s262 + $0x380] sm:$0xff]
        %v4582 = vld [vmem:[%s262 + $0x388] sm:$0xff]
        %v4583 = vld [vmem:[%s262 + $0x390] sm:$0xff]
        %v4584 = vld [vmem:[%s262 + $0x398] sm:$0xff]
        %v4585 = vld [vmem:[%s262 + $0x3a0] sm:$0xff]
        %v4586 = vld [vmem:[%s262 + $0x3a8] sm:$0xff]
        %v4587 = vld [vmem:[%s262 + $0x3b0] sm:$0xff]
        %v4588 = vld [vmem:[%s262 + $0x3b8] sm:$0xff]
        %v4589 = vld [vmem:[%s262 + $0x3c0] sm:$0xff]
        %v4590 = vld [vmem:[%s262 + $0x3c8] sm:$0xff]
        %v4591 = vld [vmem:[%s262 + $0x3d0] sm:$0xff]
        %v4592 = vld [vmem:[%s262 + $0x3d8] sm:$0xff]
        %v4593 = vld [vmem:[%s262 + $0x3e0] sm:$0xff]
        %v4594 = vld [vmem:[%s262 + $0x3e8] sm:$0xff]
        %v4595 = vld [vmem:[%s262 + $0x3f0] sm:$0xff]
        %v4596 = vld [vmem:[%s262 + $0x3f8] sm:$0xff]
        %vm4597 = vcmp.ge.s32.totalorder %v4469, 0
        %vm4598 = vcmp.ge.s32.totalorder %v4470, 0
        %vm4599 = vcmp.ge.s32.totalorder %v4471, 0
        %vm4600 = vcmp.ge.s32.totalorder %v4472, 0
        %vm4601 = vcmp.ge.s32.totalorder %v4473, 0
        %vm4602 = vcmp.ge.s32.totalorder %v4474, 0
        %vm4603 = vcmp.ge.s32.totalorder %v4475, 0
        %vm4604 = vcmp.ge.s32.totalorder %v4476, 0
        %vm4605 = vcmp.ge.s32.totalorder %v4477, 0
        %vm4606 = vcmp.ge.s32.totalorder %v4478, 0
        %vm4607 = vcmp.ge.s32.totalorder %v4479, 0
        %vm4608 = vcmp.ge.s32.totalorder %v4480, 0
        %vm4609 = vcmp.ge.s32.totalorder %v4481, 0
        %vm4610 = vcmp.ge.s32.totalorder %v4482, 0
        %vm4611 = vcmp.ge.s32.totalorder %v4483, 0
        %vm4612 = vcmp.ge.s32.totalorder %v4484, 0
        %vm4613 = vcmp.ge.s32.totalorder %v4485, 0
        %vm4614 = vcmp.ge.s32.totalorder %v4486, 0
        %vm4615 = vcmp.ge.s32.totalorder %v4487, 0
        %vm4616 = vcmp.ge.s32.totalorder %v4488, 0
        %vm4617 = vcmp.ge.s32.totalorder %v4489, 0
        %vm4618 = vcmp.ge.s32.totalorder %v4490, 0
        %vm4619 = vcmp.ge.s32.totalorder %v4491, 0
        %vm4620 = vcmp.ge.s32.totalorder %v4492, 0
        %vm4621 = vcmp.ge.s32.totalorder %v4493, 0
        %vm4622 = vcmp.ge.s32.totalorder %v4494, 0
        %vm4623 = vcmp.ge.s32.totalorder %v4495, 0
        %vm4624 = vcmp.ge.s32.totalorder %v4496, 0
        %vm4625 = vcmp.ge.s32.totalorder %v4497, 0
        %vm4626 = vcmp.ge.s32.totalorder %v4498, 0
        %vm4627 = vcmp.ge.s32.totalorder %v4499, 0
        %vm4628 = vcmp.ge.s32.totalorder %v4500, 0
        %vm4629 = vcmp.ge.s32.totalorder %v4501, 0
        %vm4630 = vcmp.ge.s32.totalorder %v4502, 0
        %vm4631 = vcmp.ge.s32.totalorder %v4503, 0
        %vm4632 = vcmp.ge.s32.totalorder %v4504, 0
        %vm4633 = vcmp.ge.s32.totalorder %v4505, 0
        %vm4634 = vcmp.ge.s32.totalorder %v4506, 0
        %vm4635 = vcmp.ge.s32.totalorder %v4507, 0
        %vm4636 = vcmp.ge.s32.totalorder %v4508, 0
        %vm4637 = vcmp.ge.s32.totalorder %v4509, 0
        %vm4638 = vcmp.ge.s32.totalorder %v4510, 0
        %vm4639 = vcmp.ge.s32.totalorder %v4511, 0
        %vm4640 = vcmp.ge.s32.totalorder %v4512, 0
        %vm4641 = vcmp.ge.s32.totalorder %v4513, 0
        %vm4642 = vcmp.ge.s32.totalorder %v4514, 0
        %vm4643 = vcmp.ge.s32.totalorder %v4515, 0
        %vm4644 = vcmp.ge.s32.totalorder %v4516, 0
        %vm4645 = vcmp.ge.s32.totalorder %v4517, 0
        %vm4646 = vcmp.ge.s32.totalorder %v4518, 0
        %vm4647 = vcmp.ge.s32.totalorder %v4519, 0
        %vm4648 = vcmp.ge.s32.totalorder %v4520, 0
        %vm4649 = vcmp.ge.s32.totalorder %v4521, 0
        %vm4650 = vcmp.ge.s32.totalorder %v4522, 0
        %vm4651 = vcmp.ge.s32.totalorder %v4523, 0
        %vm4652 = vcmp.ge.s32.totalorder %v4524, 0
        %vm4653 = vcmp.ge.s32.totalorder %v4525, 0
        %vm4654 = vcmp.ge.s32.totalorder %v4526, 0
        %vm4655 = vcmp.ge.s32.totalorder %v4527, 0
        %vm4656 = vcmp.ge.s32.totalorder %v4528, 0
        %vm4657 = vcmp.ge.s32.totalorder %v4529, 0
        %vm4658 = vcmp.ge.s32.totalorder %v4530, 0
        %vm4659 = vcmp.ge.s32.totalorder %v4531, 0
        %vm4660 = vcmp.ge.s32.totalorder %v4532, 0
        %vm4661 = vcmp.ge.s32.totalorder %v4533, 0
        %vm4662 = vcmp.ge.s32.totalorder %v4534, 0
        %vm4663 = vcmp.ge.s32.totalorder %v4535, 0
        %vm4664 = vcmp.ge.s32.totalorder %v4536, 0
        %vm4665 = vcmp.ge.s32.totalorder %v4537, 0
        %vm4666 = vcmp.ge.s32.totalorder %v4538, 0
        %vm4667 = vcmp.ge.s32.totalorder %v4539, 0
        %vm4668 = vcmp.ge.s32.totalorder %v4540, 0
        %vm4669 = vcmp.ge.s32.totalorder %v4541, 0
        %vm4670 = vcmp.ge.s32.totalorder %v4542, 0
        %vm4671 = vcmp.ge.s32.totalorder %v4543, 0
        %vm4672 = vcmp.ge.s32.totalorder %v4544, 0
        %vm4673 = vcmp.ge.s32.totalorder %v4545, 0
        %vm4674 = vcmp.ge.s32.totalorder %v4546, 0
        %vm4675 = vcmp.ge.s32.totalorder %v4547, 0
        %vm4676 = vcmp.ge.s32.totalorder %v4548, 0
        %vm4677 = vcmp.ge.s32.totalorder %v4549, 0
        %vm4678 = vcmp.ge.s32.totalorder %v4550, 0
        %vm4679 = vcmp.ge.s32.totalorder %v4551, 0
        %vm4680 = vcmp.ge.s32.totalorder %v4552, 0
        %vm4681 = vcmp.ge.s32.totalorder %v4553, 0
        %vm4682 = vcmp.ge.s32.totalorder %v4554, 0
        %vm4683 = vcmp.ge.s32.totalorder %v4555, 0
        %vm4684 = vcmp.ge.s32.totalorder %v4556, 0
        %vm4685 = vcmp.ge.s32.totalorder %v4557, 0
        %vm4686 = vcmp.ge.s32.totalorder %v4558, 0
        %vm4687 = vcmp.ge.s32.totalorder %v4559, 0
        %vm4688 = vcmp.ge.s32.totalorder %v4560, 0
        %vm4689 = vcmp.ge.s32.totalorder %v4561, 0
        %vm4690 = vcmp.ge.s32.totalorder %v4562, 0
        %vm4691 = vcmp.ge.s32.totalorder %v4563, 0
        %vm4692 = vcmp.ge.s32.totalorder %v4564, 0
        %vm4693 = vcmp.ge.s32.totalorder %v4565, 0
        %vm4694 = vcmp.ge.s32.totalorder %v4566, 0
        %vm4695 = vcmp.ge.s32.totalorder %v4567, 0
        %vm4696 = vcmp.ge.s32.totalorder %v4568, 0
        %vm4697 = vcmp.ge.s32.totalorder %v4569, 0
        %vm4698 = vcmp.ge.s32.totalorder %v4570, 0
        %vm4699 = vcmp.ge.s32.totalorder %v4571, 0
        %vm4700 = vcmp.ge.s32.totalorder %v4572, 0
        %vm4701 = vcmp.ge.s32.totalorder %v4573, 0
        %vm4702 = vcmp.ge.s32.totalorder %v4574, 0
        %vm4703 = vcmp.ge.s32.totalorder %v4575, 0
        %vm4704 = vcmp.ge.s32.totalorder %v4576, 0
        %vm4705 = vcmp.ge.s32.totalorder %v4577, 0
        %vm4706 = vcmp.ge.s32.totalorder %v4578, 0
        %vm4707 = vcmp.ge.s32.totalorder %v4579, 0
        %vm4708 = vcmp.ge.s32.totalorder %v4580, 0
        %vm4709 = vcmp.ge.s32.totalorder %v4581, 0
        %vm4710 = vcmp.ge.s32.totalorder %v4582, 0
        %vm4711 = vcmp.ge.s32.totalorder %v4583, 0
        %vm4712 = vcmp.ge.s32.totalorder %v4584, 0
        %vm4713 = vcmp.ge.s32.totalorder %v4585, 0
        %vm4714 = vcmp.ge.s32.totalorder %v4586, 0
        %vm4715 = vcmp.ge.s32.totalorder %v4587, 0
        %vm4716 = vcmp.ge.s32.totalorder %v4588, 0
        %vm4717 = vcmp.ge.s32.totalorder %v4589, 0
        %vm4718 = vcmp.ge.s32.totalorder %v4590, 0
        %vm4719 = vcmp.ge.s32.totalorder %v4591, 0
        %vm4720 = vcmp.ge.s32.totalorder %v4592, 0
        %vm4721 = vcmp.ge.s32.totalorder %v4593, 0
        %vm4722 = vcmp.ge.s32.totalorder %v4594, 0
        %vm4723 = vcmp.ge.s32.totalorder %v4595, 0
        %vm4724 = vcmp.ge.s32.totalorder %v4596, 0
        %vm4725 = vmand %vm4597, %vm1855
        %vm4726 = vmand %vm4598, %vm1856
        %vm4727 = vmand %vm4599, %vm1857
        %vm4728 = vmand %vm4600, %vm1858
        %vm4729 = vmand %vm4601, %vm1859
        %vm4730 = vmand %vm4602, %vm1860
        %vm4731 = vmand %vm4603, %vm1861
        %vm4732 = vmand %vm4604, %vm1862
        %vm4733 = vmand %vm4605, %vm1863
        %vm4734 = vmand %vm4606, %vm1864
        %vm4735 = vmand %vm4607, %vm1865
        %vm4736 = vmand %vm4608, %vm1866
        %vm4737 = vmand %vm4609, %vm1867
        %vm4738 = vmand %vm4610, %vm1868
        %vm4739 = vmand %vm4611, %vm1869
        %vm4740 = vmand %vm4612, %vm1870
        %vm4741 = vmand %vm4613, %vm1871
        %vm4742 = vmand %vm4614, %vm1872
        %vm4743 = vmand %vm4615, %vm1873
        %vm4744 = vmand %vm4616, %vm1874
        %vm4745 = vmand %vm4617, %vm1875
        %vm4746 = vmand %vm4618, %vm1876
        %vm4747 = vmand %vm4619, %vm1877
        %vm4748 = vmand %vm4620, %vm1878
        %vm4749 = vmand %vm4621, %vm1879
        %vm4750 = vmand %vm4622, %vm1880
        %vm4751 = vmand %vm4623, %vm1881
        %vm4752 = vmand %vm4624, %vm1882
        %vm4753 = vmand %vm4625, %vm1883
        %vm4754 = vmand %vm4626, %vm1884
        %vm4755 = vmand %vm4627, %vm1885
        %vm4756 = vmand %vm4628, %vm1886
        %vm4757 = vmand %vm4629, %vm1887
        %vm4758 = vmand %vm4630, %vm1888
        %vm4759 = vmand %vm4631, %vm1889
        %vm4760 = vmand %vm4632, %vm1890
        %vm4761 = vmand %vm4633, %vm1891
        %vm4762 = vmand %vm4634, %vm1892
        %vm4763 = vmand %vm4635, %vm1893
        %vm4764 = vmand %vm4636, %vm1894
        %vm4765 = vmand %vm4637, %vm1895
        %vm4766 = vmand %vm4638, %vm1896
        %vm4767 = vmand %vm4639, %vm1897
        %vm4768 = vmand %vm4640, %vm1898
        %vm4769 = vmand %vm4641, %vm1899
        %vm4770 = vmand %vm4642, %vm1900
        %vm4771 = vmand %vm4643, %vm1901
        %vm4772 = vmand %vm4644, %vm1902
        %vm4773 = vmand %vm4645, %vm1903
        %vm4774 = vmand %vm4646, %vm1904
        %vm4775 = vmand %vm4647, %vm1905
        %vm4776 = vmand %vm4648, %vm1906
        %vm4777 = vmand %vm4649, %vm1907
        %vm4778 = vmand %vm4650, %vm1908
        %vm4779 = vmand %vm4651, %vm1909
        %vm4780 = vmand %vm4652, %vm1910
        %vm4781 = vmand %vm4653, %vm1911
        %vm4782 = vmand %vm4654, %vm1912
        %vm4783 = vmand %vm4655, %vm1913
        %vm4784 = vmand %vm4656, %vm1914
        %vm4785 = vmand %vm4657, %vm1915
        %vm4786 = vmand %vm4658, %vm1916
        %vm4787 = vmand %vm4659, %vm1917
        %vm4788 = vmand %vm4660, %vm1918
        %vm4789 = vmand %vm4661, %vm1919
        %vm4790 = vmand %vm4662, %vm1920
        %vm4791 = vmand %vm4663, %vm1921
        %vm4792 = vmand %vm4664, %vm1922
        %vm4793 = vmand %vm4665, %vm1923
        %vm4794 = vmand %vm4666, %vm1924
        %vm4795 = vmand %vm4667, %vm1925
        %vm4796 = vmand %vm4668, %vm1926
        %vm4797 = vmand %vm4669, %vm1927
        %vm4798 = vmand %vm4670, %vm1928
        %vm4799 = vmand %vm4671, %vm1929
        %vm4800 = vmand %vm4672, %vm1930
        %vm4801 = vmand %vm4673, %vm1931
        %vm4802 = vmand %vm4674, %vm1932
        %vm4803 = vmand %vm4675, %vm1933
        %vm4804 = vmand %vm4676, %vm1934
        %vm4805 = vmand %vm4677, %vm1935
        %vm4806 = vmand %vm4678, %vm1936
        %vm4807 = vmand %vm4679, %vm1937
        %vm4808 = vmand %vm4680, %vm1938
        %vm4809 = vmand %vm4681, %vm1939
        %vm4810 = vmand %vm4682, %vm1940
        %vm4811 = vmand %vm4683, %vm1941
        %vm4812 = vmand %vm4684, %vm1942
        %vm4813 = vmand %vm4685, %vm1943
        %vm4814 = vmand %vm4686, %vm1944
        %vm4815 = vmand %vm4687, %vm1945
        %vm4816 = vmand %vm4688, %vm1946
        %vm4817 = vmand %vm4689, %vm1947
        %vm4818 = vmand %vm4690, %vm1948
        %vm4819 = vmand %vm4691, %vm1949
        %vm4820 = vmand %vm4692, %vm1950
        %vm4821 = vmand %vm4693, %vm1951
        %vm4822 = vmand %vm4694, %vm1952
        %vm4823 = vmand %vm4695, %vm1953
        %vm4824 = vmand %vm4696, %vm1954
        %vm4825 = vmand %vm4697, %vm1955
        %vm4826 = vmand %vm4698, %vm1956
        %vm4827 = vmand %vm4699, %vm1957
        %vm4828 = vmand %vm4700, %vm1958
        %vm4829 = vmand %vm4701, %vm1959
        %vm4830 = vmand %vm4702, %vm1960
        %vm4831 = vmand %vm4703, %vm1961
        %vm4832 = vmand %vm4704, %vm1962
        %vm4833 = vmand %vm4705, %vm1963
        %vm4834 = vmand %vm4706, %vm1964
        %vm4835 = vmand %vm4707, %vm1965
        %vm4836 = vmand %vm4708, %vm1966
        %vm4837 = vmand %vm4709, %vm1967
        %vm4838 = vmand %vm4710, %vm1968
        %vm4839 = vmand %vm4711, %vm1969
        %vm4840 = vmand %vm4712, %vm1970
        %vm4841 = vmand %vm4713, %vm1971
        %vm4842 = vmand %vm4714, %vm1972
        %vm4843 = vmand %vm4715, %vm1973
        %vm4844 = vmand %vm4716, %vm1974
        %vm4845 = vmand %vm4717, %vm1975
        %vm4846 = vmand %vm4718, %vm1976
        %vm4847 = vmand %vm4719, %vm1977
        %vm4848 = vmand %vm4720, %vm1978
        %vm4849 = vmand %vm4721, %vm1979
        %vm4850 = vmand %vm4722, %vm1980
        %vm4851 = vmand %vm4723, %vm1981
        %vm4852 = vmand %vm4724, %vm1982
        %v4853 = vsel %vm4725, %v4469, 0
        %v4854 = vsel %vm4726, %v4470, 0
        %v4855 = vsel %vm4727, %v4471, 0
        %v4856 = vsel %vm4728, %v4472, 0
        %v4857 = vsel %vm4729, %v4473, 0
        %v4858 = vsel %vm4730, %v4474, 0
        %v4859 = vsel %vm4731, %v4475, 0
        %v4860 = vsel %vm4732, %v4476, 0
        %v4861 = vsel %vm4733, %v4477, 0
        %v4862 = vsel %vm4734, %v4478, 0
        %v4863 = vsel %vm4735, %v4479, 0
        %v4864 = vsel %vm4736, %v4480, 0
        %v4865 = vsel %vm4737, %v4481, 0
        %v4866 = vsel %vm4738, %v4482, 0
        %v4867 = vsel %vm4739, %v4483, 0
        %v4868 = vsel %vm4740, %v4484, 0
        %v4869 = vsel %vm4741, %v4485, 0
        %v4870 = vsel %vm4742, %v4486, 0
        %v4871 = vsel %vm4743, %v4487, 0
        %v4872 = vsel %vm4744, %v4488, 0
        %v4873 = vsel %vm4745, %v4489, 0
        %v4874 = vsel %vm4746, %v4490, 0
        %v4875 = vsel %vm4747, %v4491, 0
        %v4876 = vsel %vm4748, %v4492, 0
        %v4877 = vsel %vm4749, %v4493, 0
        %v4878 = vsel %vm4750, %v4494, 0
        %v4879 = vsel %vm4751, %v4495, 0
        %v4880 = vsel %vm4752, %v4496, 0
        %v4881 = vsel %vm4753, %v4497, 0
        %v4882 = vsel %vm4754, %v4498, 0
        %v4883 = vsel %vm4755, %v4499, 0
        %v4884 = vsel %vm4756, %v4500, 0
        %v4885 = vsel %vm4757, %v4501, 0
        %v4886 = vsel %vm4758, %v4502, 0
        %v4887 = vsel %vm4759, %v4503, 0
        %v4888 = vsel %vm4760, %v4504, 0
        %v4889 = vsel %vm4761, %v4505, 0
        %v4890 = vsel %vm4762, %v4506, 0
        %v4891 = vsel %vm4763, %v4507, 0
        %v4892 = vsel %vm4764, %v4508, 0
        %v4893 = vsel %vm4765, %v4509, 0
        %v4894 = vsel %vm4766, %v4510, 0
        %v4895 = vsel %vm4767, %v4511, 0
        %v4896 = vsel %vm4768, %v4512, 0
        %v4897 = vsel %vm4769, %v4513, 0
        %v4898 = vsel %vm4770, %v4514, 0
        %v4899 = vsel %vm4771, %v4515, 0
        %v4900 = vsel %vm4772, %v4516, 0
        %v4901 = vsel %vm4773, %v4517, 0
        %v4902 = vsel %vm4774, %v4518, 0
        %v4903 = vsel %vm4775, %v4519, 0
        %v4904 = vsel %vm4776, %v4520, 0
        %v4905 = vsel %vm4777, %v4521, 0
        %v4906 = vsel %vm4778, %v4522, 0
        %v4907 = vsel %vm4779, %v4523, 0
        %v4908 = vsel %vm4780, %v4524, 0
        %v4909 = vsel %vm4781, %v4525, 0
        %v4910 = vsel %vm4782, %v4526, 0
        %v4911 = vsel %vm4783, %v4527, 0
        %v4912 = vsel %vm4784, %v4528, 0
        %v4913 = vsel %vm4785, %v4529, 0
        %v4914 = vsel %vm4786, %v4530, 0
        %v4915 = vsel %vm4787, %v4531, 0
        %v4916 = vsel %vm4788, %v4532, 0
        %v4917 = vsel %vm4789, %v4533, 0
        %v4918 = vsel %vm4790, %v4534, 0
        %v4919 = vsel %vm4791, %v4535, 0
        %v4920 = vsel %vm4792, %v4536, 0
        %v4921 = vsel %vm4793, %v4537, 0
        %v4922 = vsel %vm4794, %v4538, 0
        %v4923 = vsel %vm4795, %v4539, 0
        %v4924 = vsel %vm4796, %v4540, 0
        %v4925 = vsel %vm4797, %v4541, 0
        %v4926 = vsel %vm4798, %v4542, 0
        %v4927 = vsel %vm4799, %v4543, 0
        %v4928 = vsel %vm4800, %v4544, 0
        %v4929 = vsel %vm4801, %v4545, 0
        %v4930 = vsel %vm4802, %v4546, 0
        %v4931 = vsel %vm4803, %v4547, 0
        %v4932 = vsel %vm4804, %v4548, 0
        %v4933 = vsel %vm4805, %v4549, 0
        %v4934 = vsel %vm4806, %v4550, 0
        %v4935 = vsel %vm4807, %v4551, 0
        %v4936 = vsel %vm4808, %v4552, 0
        %v4937 = vsel %vm4809, %v4553, 0
        %v4938 = vsel %vm4810, %v4554, 0
        %v4939 = vsel %vm4811, %v4555, 0
        %v4940 = vsel %vm4812, %v4556, 0
        %v4941 = vsel %vm4813, %v4557, 0
        %v4942 = vsel %vm4814, %v4558, 0
        %v4943 = vsel %vm4815, %v4559, 0
        %v4944 = vsel %vm4816, %v4560, 0
        %v4945 = vsel %vm4817, %v4561, 0
        %v4946 = vsel %vm4818, %v4562, 0
        %v4947 = vsel %vm4819, %v4563, 0
        %v4948 = vsel %vm4820, %v4564, 0
        %v4949 = vsel %vm4821, %v4565, 0
        %v4950 = vsel %vm4822, %v4566, 0
        %v4951 = vsel %vm4823, %v4567, 0
        %v4952 = vsel %vm4824, %v4568, 0
        %v4953 = vsel %vm4825, %v4569, 0
        %v4954 = vsel %vm4826, %v4570, 0
        %v4955 = vsel %vm4827, %v4571, 0
        %v4956 = vsel %vm4828, %v4572, 0
        %v4957 = vsel %vm4829, %v4573, 0
        %v4958 = vsel %vm4830, %v4574, 0
        %v4959 = vsel %vm4831, %v4575, 0
        %v4960 = vsel %vm4832, %v4576, 0
        %v4961 = vsel %vm4833, %v4577, 0
        %v4962 = vsel %vm4834, %v4578, 0
        %v4963 = vsel %vm4835, %v4579, 0
        %v4964 = vsel %vm4836, %v4580, 0
        %v4965 = vsel %vm4837, %v4581, 0
        %v4966 = vsel %vm4838, %v4582, 0
        %v4967 = vsel %vm4839, %v4583, 0
        %v4968 = vsel %vm4840, %v4584, 0
        %v4969 = vsel %vm4841, %v4585, 0
        %v4970 = vsel %vm4842, %v4586, 0
        %v4971 = vsel %vm4843, %v4587, 0
        %v4972 = vsel %vm4844, %v4588, 0
        %v4973 = vsel %vm4845, %v4589, 0
        %v4974 = vsel %vm4846, %v4590, 0
        %v4975 = vsel %vm4847, %v4591, 0
        %v4976 = vsel %vm4848, %v4592, 0
        %v4977 = vsel %vm4849, %v4593, 0
        %v4978 = vsel %vm4850, %v4594, 0
        %v4979 = vsel %vm4851, %v4595, 0
        %v4980 = vsel %vm4852, %v4596, 0
        %4981 = vset.pattern.permute.xlu0 0
        %4982 = vperm.xlu0 %4981, %v4853
        %v4983 = vpop.permute.xlu0 %4982
        %4984 = vset.pattern.permute.xlu0 0
        %4985 = vperm.xlu0 %4984, %v4854
        %v4986 = vpop.permute.xlu0 %4985
        %4987 = vset.pattern.permute.xlu0 0
        %4988 = vperm.xlu0 %4987, %v4855
        %v4989 = vpop.permute.xlu0 %4988
        %4990 = vset.pattern.permute.xlu0 0
        %4991 = vperm.xlu0 %4990, %v4856
        %v4992 = vpop.permute.xlu0 %4991
        %4993 = vset.pattern.permute.xlu0 0
        %4994 = vperm.xlu0 %4993, %v4857
        %v4995 = vpop.permute.xlu0 %4994
        %4996 = vset.pattern.permute.xlu0 0
        %4997 = vperm.xlu0 %4996, %v4858
        %v4998 = vpop.permute.xlu0 %4997
        %4999 = vset.pattern.permute.xlu0 0
        %5000 = vperm.xlu0 %4999, %v4859
        %v5001 = vpop.permute.xlu0 %5000
        %5002 = vset.pattern.permute.xlu0 0
        %5003 = vperm.xlu0 %5002, %v4860
        %v5004 = vpop.permute.xlu0 %5003
        %5005 = vset.pattern.permute.xlu0 0
        %5006 = vperm.xlu0 %5005, %v4861
        %v5007 = vpop.permute.xlu0 %5006
        %5008 = vset.pattern.permute.xlu0 0
        %5009 = vperm.xlu0 %5008, %v4862
        %v5010 = vpop.permute.xlu0 %5009
        %5011 = vset.pattern.permute.xlu0 0
        %5012 = vperm.xlu0 %5011, %v4863
        %v5013 = vpop.permute.xlu0 %5012
        %5014 = vset.pattern.permute.xlu0 0
        %5015 = vperm.xlu0 %5014, %v4864
        %v5016 = vpop.permute.xlu0 %5015
        %5017 = vset.pattern.permute.xlu0 0
        %5018 = vperm.xlu0 %5017, %v4865
        %v5019 = vpop.permute.xlu0 %5018
        %5020 = vset.pattern.permute.xlu0 0
        %5021 = vperm.xlu0 %5020, %v4866
        %v5022 = vpop.permute.xlu0 %5021
        %5023 = vset.pattern.permute.xlu0 0
        %5024 = vperm.xlu0 %5023, %v4867
        %v5025 = vpop.permute.xlu0 %5024
        %5026 = vset.pattern.permute.xlu0 0
        %5027 = vperm.xlu0 %5026, %v4868
        %v5028 = vpop.permute.xlu0 %5027
        %5029 = vset.pattern.permute.xlu0 0
        %5030 = vperm.xlu0 %5029, %v4869
        %v5031 = vpop.permute.xlu0 %5030
        %5032 = vset.pattern.permute.xlu0 0
        %5033 = vperm.xlu0 %5032, %v4870
        %v5034 = vpop.permute.xlu0 %5033
        %5035 = vset.pattern.permute.xlu0 0
        %5036 = vperm.xlu0 %5035, %v4871
        %v5037 = vpop.permute.xlu0 %5036
        %5038 = vset.pattern.permute.xlu0 0
        %5039 = vperm.xlu0 %5038, %v4872
        %v5040 = vpop.permute.xlu0 %5039
        %5041 = vset.pattern.permute.xlu0 0
        %5042 = vperm.xlu0 %5041, %v4873
        %v5043 = vpop.permute.xlu0 %5042
        %5044 = vset.pattern.permute.xlu0 0
        %5045 = vperm.xlu0 %5044, %v4874
        %v5046 = vpop.permute.xlu0 %5045
        %5047 = vset.pattern.permute.xlu0 0
        %5048 = vperm.xlu0 %5047, %v4875
        %v5049 = vpop.permute.xlu0 %5048
        %5050 = vset.pattern.permute.xlu0 0
        %5051 = vperm.xlu0 %5050, %v4876
        %v5052 = vpop.permute.xlu0 %5051
        %5053 = vset.pattern.permute.xlu0 0
        %5054 = vperm.xlu0 %5053, %v4877
        %v5055 = vpop.permute.xlu0 %5054
        %5056 = vset.pattern.permute.xlu0 0
        %5057 = vperm.xlu0 %5056, %v4878
        %v5058 = vpop.permute.xlu0 %5057
        %5059 = vset.pattern.permute.xlu0 0
        %5060 = vperm.xlu0 %5059, %v4879
        %v5061 = vpop.permute.xlu0 %5060
        %5062 = vset.pattern.permute.xlu0 0
        %5063 = vperm.xlu0 %5062, %v4880
        %v5064 = vpop.permute.xlu0 %5063
        %5065 = vset.pattern.permute.xlu0 0
        %5066 = vperm.xlu0 %5065, %v4881
        %v5067 = vpop.permute.xlu0 %5066
        %5068 = vset.pattern.permute.xlu0 0
        %5069 = vperm.xlu0 %5068, %v4882
        %v5070 = vpop.permute.xlu0 %5069
        %5071 = vset.pattern.permute.xlu0 0
        %5072 = vperm.xlu0 %5071, %v4883
        %v5073 = vpop.permute.xlu0 %5072
        %5074 = vset.pattern.permute.xlu0 0
        %5075 = vperm.xlu0 %5074, %v4884
        %v5076 = vpop.permute.xlu0 %5075
        %5077 = vset.pattern.permute.xlu0 0
        %5078 = vperm.xlu0 %5077, %v4885
        %v5079 = vpop.permute.xlu0 %5078
        %5080 = vset.pattern.permute.xlu0 0
        %5081 = vperm.xlu0 %5080, %v4886
        %v5082 = vpop.permute.xlu0 %5081
        %5083 = vset.pattern.permute.xlu0 0
        %5084 = vperm.xlu0 %5083, %v4887
        %v5085 = vpop.permute.xlu0 %5084
        %5086 = vset.pattern.permute.xlu0 0
        %5087 = vperm.xlu0 %5086, %v4888
        %v5088 = vpop.permute.xlu0 %5087
        %5089 = vset.pattern.permute.xlu0 0
        %5090 = vperm.xlu0 %5089, %v4889
        %v5091 = vpop.permute.xlu0 %5090
        %5092 = vset.pattern.permute.xlu0 0
        %5093 = vperm.xlu0 %5092, %v4890
        %v5094 = vpop.permute.xlu0 %5093
        %5095 = vset.pattern.permute.xlu0 0
        %5096 = vperm.xlu0 %5095, %v4891
        %v5097 = vpop.permute.xlu0 %5096
        %5098 = vset.pattern.permute.xlu0 0
        %5099 = vperm.xlu0 %5098, %v4892
        %v5100 = vpop.permute.xlu0 %5099
        %5101 = vset.pattern.permute.xlu0 0
        %5102 = vperm.xlu0 %5101, %v4893
        %v5103 = vpop.permute.xlu0 %5102
        %5104 = vset.pattern.permute.xlu0 0
        %5105 = vperm.xlu0 %5104, %v4894
        %v5106 = vpop.permute.xlu0 %5105
        %5107 = vset.pattern.permute.xlu0 0
        %5108 = vperm.xlu0 %5107, %v4895
        %v5109 = vpop.permute.xlu0 %5108
        %5110 = vset.pattern.permute.xlu0 0
        %5111 = vperm.xlu0 %5110, %v4896
        %v5112 = vpop.permute.xlu0 %5111
        %5113 = vset.pattern.permute.xlu0 0
        %5114 = vperm.xlu0 %5113, %v4897
        %v5115 = vpop.permute.xlu0 %5114
        %5116 = vset.pattern.permute.xlu0 0
        %5117 = vperm.xlu0 %5116, %v4898
        %v5118 = vpop.permute.xlu0 %5117
        %5119 = vset.pattern.permute.xlu0 0
        %5120 = vperm.xlu0 %5119, %v4899
        %v5121 = vpop.permute.xlu0 %5120
        %5122 = vset.pattern.permute.xlu0 0
        %5123 = vperm.xlu0 %5122, %v4900
        %v5124 = vpop.permute.xlu0 %5123
        %5125 = vset.pattern.permute.xlu0 0
        %5126 = vperm.xlu0 %5125, %v4901
        %v5127 = vpop.permute.xlu0 %5126
        %5128 = vset.pattern.permute.xlu0 0
        %5129 = vperm.xlu0 %5128, %v4902
        %v5130 = vpop.permute.xlu0 %5129
        %5131 = vset.pattern.permute.xlu0 0
        %5132 = vperm.xlu0 %5131, %v4903
        %v5133 = vpop.permute.xlu0 %5132
        %5134 = vset.pattern.permute.xlu0 0
        %5135 = vperm.xlu0 %5134, %v4904
        %v5136 = vpop.permute.xlu0 %5135
        %5137 = vset.pattern.permute.xlu0 0
        %5138 = vperm.xlu0 %5137, %v4905
        %v5139 = vpop.permute.xlu0 %5138
        %5140 = vset.pattern.permute.xlu0 0
        %5141 = vperm.xlu0 %5140, %v4906
        %v5142 = vpop.permute.xlu0 %5141
        %5143 = vset.pattern.permute.xlu0 0
        %5144 = vperm.xlu0 %5143, %v4907
        %v5145 = vpop.permute.xlu0 %5144
        %5146 = vset.pattern.permute.xlu0 0
        %5147 = vperm.xlu0 %5146, %v4908
        %v5148 = vpop.permute.xlu0 %5147
        %5149 = vset.pattern.permute.xlu0 0
        %5150 = vperm.xlu0 %5149, %v4909
        %v5151 = vpop.permute.xlu0 %5150
        %5152 = vset.pattern.permute.xlu0 0
        %5153 = vperm.xlu0 %5152, %v4910
        %v5154 = vpop.permute.xlu0 %5153
        %5155 = vset.pattern.permute.xlu0 0
        %5156 = vperm.xlu0 %5155, %v4911
        %v5157 = vpop.permute.xlu0 %5156
        %5158 = vset.pattern.permute.xlu0 0
        %5159 = vperm.xlu0 %5158, %v4912
        %v5160 = vpop.permute.xlu0 %5159
        %5161 = vset.pattern.permute.xlu0 0
        %5162 = vperm.xlu0 %5161, %v4913
        %v5163 = vpop.permute.xlu0 %5162
        %5164 = vset.pattern.permute.xlu0 0
        %5165 = vperm.xlu0 %5164, %v4914
        %v5166 = vpop.permute.xlu0 %5165
        %5167 = vset.pattern.permute.xlu0 0
        %5168 = vperm.xlu0 %5167, %v4915
        %v5169 = vpop.permute.xlu0 %5168
        %5170 = vset.pattern.permute.xlu0 0
        %5171 = vperm.xlu0 %5170, %v4916
        %v5172 = vpop.permute.xlu0 %5171
        %5173 = vset.pattern.permute.xlu0 0
        %5174 = vperm.xlu0 %5173, %v4917
        %v5175 = vpop.permute.xlu0 %5174
        %5176 = vset.pattern.permute.xlu0 0
        %5177 = vperm.xlu0 %5176, %v4918
        %v5178 = vpop.permute.xlu0 %5177
        %5179 = vset.pattern.permute.xlu0 0
        %5180 = vperm.xlu0 %5179, %v4919
        %v5181 = vpop.permute.xlu0 %5180
        %5182 = vset.pattern.permute.xlu0 0
        %5183 = vperm.xlu0 %5182, %v4920
        %v5184 = vpop.permute.xlu0 %5183
        %5185 = vset.pattern.permute.xlu0 0
        %5186 = vperm.xlu0 %5185, %v4921
        %v5187 = vpop.permute.xlu0 %5186
        %5188 = vset.pattern.permute.xlu0 0
        %5189 = vperm.xlu0 %5188, %v4922
        %v5190 = vpop.permute.xlu0 %5189
        %5191 = vset.pattern.permute.xlu0 0
        %5192 = vperm.xlu0 %5191, %v4923
        %v5193 = vpop.permute.xlu0 %5192
        %5194 = vset.pattern.permute.xlu0 0
        %5195 = vperm.xlu0 %5194, %v4924
        %v5196 = vpop.permute.xlu0 %5195
        %5197 = vset.pattern.permute.xlu0 0
        %5198 = vperm.xlu0 %5197, %v4925
        %v5199 = vpop.permute.xlu0 %5198
        %5200 = vset.pattern.permute.xlu0 0
        %5201 = vperm.xlu0 %5200, %v4926
        %v5202 = vpop.permute.xlu0 %5201
        %5203 = vset.pattern.permute.xlu0 0
        %5204 = vperm.xlu0 %5203, %v4927
        %v5205 = vpop.permute.xlu0 %5204
        %5206 = vset.pattern.permute.xlu0 0
        %5207 = vperm.xlu0 %5206, %v4928
        %v5208 = vpop.permute.xlu0 %5207
        %5209 = vset.pattern.permute.xlu0 0
        %5210 = vperm.xlu0 %5209, %v4929
        %v5211 = vpop.permute.xlu0 %5210
        %5212 = vset.pattern.permute.xlu0 0
        %5213 = vperm.xlu0 %5212, %v4930
        %v5214 = vpop.permute.xlu0 %5213
        %5215 = vset.pattern.permute.xlu0 0
        %5216 = vperm.xlu0 %5215, %v4931
        %v5217 = vpop.permute.xlu0 %5216
        %5218 = vset.pattern.permute.xlu0 0
        %5219 = vperm.xlu0 %5218, %v4932
        %v5220 = vpop.permute.xlu0 %5219
        %5221 = vset.pattern.permute.xlu0 0
        %5222 = vperm.xlu0 %5221, %v4933
        %v5223 = vpop.permute.xlu0 %5222
        %5224 = vset.pattern.permute.xlu0 0
        %5225 = vperm.xlu0 %5224, %v4934
        %v5226 = vpop.permute.xlu0 %5225
        %5227 = vset.pattern.permute.xlu0 0
        %5228 = vperm.xlu0 %5227, %v4935
        %v5229 = vpop.permute.xlu0 %5228
        %5230 = vset.pattern.permute.xlu0 0
        %5231 = vperm.xlu0 %5230, %v4936
        %v5232 = vpop.permute.xlu0 %5231
        %5233 = vset.pattern.permute.xlu0 0
        %5234 = vperm.xlu0 %5233, %v4937
        %v5235 = vpop.permute.xlu0 %5234
        %5236 = vset.pattern.permute.xlu0 0
        %5237 = vperm.xlu0 %5236, %v4938
        %v5238 = vpop.permute.xlu0 %5237
        %5239 = vset.pattern.permute.xlu0 0
        %5240 = vperm.xlu0 %5239, %v4939
        %v5241 = vpop.permute.xlu0 %5240
        %5242 = vset.pattern.permute.xlu0 0
        %5243 = vperm.xlu0 %5242, %v4940
        %v5244 = vpop.permute.xlu0 %5243
        %5245 = vset.pattern.permute.xlu0 0
        %5246 = vperm.xlu0 %5245, %v4941
        %v5247 = vpop.permute.xlu0 %5246
        %5248 = vset.pattern.permute.xlu0 0
        %5249 = vperm.xlu0 %5248, %v4942
        %v5250 = vpop.permute.xlu0 %5249
        %5251 = vset.pattern.permute.xlu0 0
        %5252 = vperm.xlu0 %5251, %v4943
        %v5253 = vpop.permute.xlu0 %5252
        %5254 = vset.pattern.permute.xlu0 0
        %5255 = vperm.xlu0 %5254, %v4944
        %v5256 = vpop.permute.xlu0 %5255
        %5257 = vset.pattern.permute.xlu0 0
        %5258 = vperm.xlu0 %5257, %v4945
        %v5259 = vpop.permute.xlu0 %5258
        %5260 = vset.pattern.permute.xlu0 0
        %5261 = vperm.xlu0 %5260, %v4946
        %v5262 = vpop.permute.xlu0 %5261
        %5263 = vset.pattern.permute.xlu0 0
        %5264 = vperm.xlu0 %5263, %v4947
        %v5265 = vpop.permute.xlu0 %5264
        %5266 = vset.pattern.permute.xlu0 0
        %5267 = vperm.xlu0 %5266, %v4948
        %v5268 = vpop.permute.xlu0 %5267
        %5269 = vset.pattern.permute.xlu0 0
        %5270 = vperm.xlu0 %5269, %v4949
        %v5271 = vpop.permute.xlu0 %5270
        %5272 = vset.pattern.permute.xlu0 0
        %5273 = vperm.xlu0 %5272, %v4950
        %v5274 = vpop.permute.xlu0 %5273
        %5275 = vset.pattern.permute.xlu0 0
        %5276 = vperm.xlu0 %5275, %v4951
        %v5277 = vpop.permute.xlu0 %5276
        %5278 = vset.pattern.permute.xlu0 0
        %5279 = vperm.xlu0 %5278, %v4952
        %v5280 = vpop.permute.xlu0 %5279
        %5281 = vset.pattern.permute.xlu0 0
        %5282 = vperm.xlu0 %5281, %v4953
        %v5283 = vpop.permute.xlu0 %5282
        %5284 = vset.pattern.permute.xlu0 0
        %5285 = vperm.xlu0 %5284, %v4954
        %v5286 = vpop.permute.xlu0 %5285
        %5287 = vset.pattern.permute.xlu0 0
        %5288 = vperm.xlu0 %5287, %v4955
        %v5289 = vpop.permute.xlu0 %5288
        %5290 = vset.pattern.permute.xlu0 0
        %5291 = vperm.xlu0 %5290, %v4956
        %v5292 = vpop.permute.xlu0 %5291
        %5293 = vset.pattern.permute.xlu0 0
        %5294 = vperm.xlu0 %5293, %v4957
        %v5295 = vpop.permute.xlu0 %5294
        %5296 = vset.pattern.permute.xlu0 0
        %5297 = vperm.xlu0 %5296, %v4958
        %v5298 = vpop.permute.xlu0 %5297
        %5299 = vset.pattern.permute.xlu0 0
        %5300 = vperm.xlu0 %5299, %v4959
        %v5301 = vpop.permute.xlu0 %5300
        %5302 = vset.pattern.permute.xlu0 0
        %5303 = vperm.xlu0 %5302, %v4960
        %v5304 = vpop.permute.xlu0 %5303
        %5305 = vset.pattern.permute.xlu0 0
        %5306 = vperm.xlu0 %5305, %v4961
        %v5307 = vpop.permute.xlu0 %5306
        %5308 = vset.pattern.permute.xlu0 0
        %5309 = vperm.xlu0 %5308, %v4962
        %v5310 = vpop.permute.xlu0 %5309
        %5311 = vset.pattern.permute.xlu0 0
        %5312 = vperm.xlu0 %5311, %v4963
        %v5313 = vpop.permute.xlu0 %5312
        %5314 = vset.pattern.permute.xlu0 0
        %5315 = vperm.xlu0 %5314, %v4964
        %v5316 = vpop.permute.xlu0 %5315
        %5317 = vset.pattern.permute.xlu0 0
        %5318 = vperm.xlu0 %5317, %v4965
        %v5319 = vpop.permute.xlu0 %5318
        %5320 = vset.pattern.permute.xlu0 0
        %5321 = vperm.xlu0 %5320, %v4966
        %v5322 = vpop.permute.xlu0 %5321
        %5323 = vset.pattern.permute.xlu0 0
        %5324 = vperm.xlu0 %5323, %v4967
        %v5325 = vpop.permute.xlu0 %5324
        %5326 = vset.pattern.permute.xlu0 0
        %5327 = vperm.xlu0 %5326, %v4968
        %v5328 = vpop.permute.xlu0 %5327
        %5329 = vset.pattern.permute.xlu0 0
        %5330 = vperm.xlu0 %5329, %v4969
        %v5331 = vpop.permute.xlu0 %5330
        %5332 = vset.pattern.permute.xlu0 0
        %5333 = vperm.xlu0 %5332, %v4970
        %v5334 = vpop.permute.xlu0 %5333
        %5335 = vset.pattern.permute.xlu0 0
        %5336 = vperm.xlu0 %5335, %v4971
        %v5337 = vpop.permute.xlu0 %5336
        %5338 = vset.pattern.permute.xlu0 0
        %5339 = vperm.xlu0 %5338, %v4972
        %v5340 = vpop.permute.xlu0 %5339
        %5341 = vset.pattern.permute.xlu0 0
        %5342 = vperm.xlu0 %5341, %v4973
        %v5343 = vpop.permute.xlu0 %5342
        %5344 = vset.pattern.permute.xlu0 0
        %5345 = vperm.xlu0 %5344, %v4974
        %v5346 = vpop.permute.xlu0 %5345
        %5347 = vset.pattern.permute.xlu0 0
        %5348 = vperm.xlu0 %5347, %v4975
        %v5349 = vpop.permute.xlu0 %5348
        %5350 = vset.pattern.permute.xlu0 0
        %5351 = vperm.xlu0 %5350, %v4976
        %v5352 = vpop.permute.xlu0 %5351
        %5353 = vset.pattern.permute.xlu0 0
        %5354 = vperm.xlu0 %5353, %v4977
        %v5355 = vpop.permute.xlu0 %5354
        %5356 = vset.pattern.permute.xlu0 0
        %5357 = vperm.xlu0 %5356, %v4978
        %v5358 = vpop.permute.xlu0 %5357
        %5359 = vset.pattern.permute.xlu0 0
        %5360 = vperm.xlu0 %5359, %v4979
        %v5361 = vpop.permute.xlu0 %5360
        %5362 = vset.pattern.permute.xlu0 0
        %5363 = vperm.xlu0 %5362, %v4980
        %v5364 = vpop.permute.xlu0 %5363
        %vm5365 = vcmp.eq.s32.totalorder %v3441, %v4983
        %vm5366 = vcmp.eq.s32.totalorder %v3441, %v4986
        %vm5367 = vcmp.eq.s32.totalorder %v3441, %v4989
        %vm5368 = vcmp.eq.s32.totalorder %v3441, %v4992
        %vm5369 = vcmp.eq.s32.totalorder %v3441, %v4995
        %vm5370 = vcmp.eq.s32.totalorder %v3441, %v4998
        %vm5371 = vcmp.eq.s32.totalorder %v3441, %v5001
        %vm5372 = vcmp.eq.s32.totalorder %v3441, %v5004
        %vm5373 = vcmp.eq.s32.totalorder %v3441, %v5007
        %vm5374 = vcmp.eq.s32.totalorder %v3441, %v5010
        %vm5375 = vcmp.eq.s32.totalorder %v3441, %v5013
        %vm5376 = vcmp.eq.s32.totalorder %v3441, %v5016
        %vm5377 = vcmp.eq.s32.totalorder %v3441, %v5019
        %vm5378 = vcmp.eq.s32.totalorder %v3441, %v5022
        %vm5379 = vcmp.eq.s32.totalorder %v3441, %v5025
        %vm5380 = vcmp.eq.s32.totalorder %v3441, %v5028
        %vm5381 = vcmp.eq.s32.totalorder %v3441, %v5031
        %vm5382 = vcmp.eq.s32.totalorder %v3441, %v5034
        %vm5383 = vcmp.eq.s32.totalorder %v3441, %v5037
        %vm5384 = vcmp.eq.s32.totalorder %v3441, %v5040
        %vm5385 = vcmp.eq.s32.totalorder %v3441, %v5043
        %vm5386 = vcmp.eq.s32.totalorder %v3441, %v5046
        %vm5387 = vcmp.eq.s32.totalorder %v3441, %v5049
        %vm5388 = vcmp.eq.s32.totalorder %v3441, %v5052
        %vm5389 = vcmp.eq.s32.totalorder %v3441, %v5055
        %vm5390 = vcmp.eq.s32.totalorder %v3441, %v5058
        %vm5391 = vcmp.eq.s32.totalorder %v3441, %v5061
        %vm5392 = vcmp.eq.s32.totalorder %v3441, %v5064
        %vm5393 = vcmp.eq.s32.totalorder %v3441, %v5067
        %vm5394 = vcmp.eq.s32.totalorder %v3441, %v5070
        %vm5395 = vcmp.eq.s32.totalorder %v3441, %v5073
        %vm5396 = vcmp.eq.s32.totalorder %v3441, %v5076
        %vm5397 = vcmp.eq.s32.totalorder %v3441, %v5079
        %vm5398 = vcmp.eq.s32.totalorder %v3441, %v5082
        %vm5399 = vcmp.eq.s32.totalorder %v3441, %v5085
        %vm5400 = vcmp.eq.s32.totalorder %v3441, %v5088
        %vm5401 = vcmp.eq.s32.totalorder %v3441, %v5091
        %vm5402 = vcmp.eq.s32.totalorder %v3441, %v5094
        %vm5403 = vcmp.eq.s32.totalorder %v3441, %v5097
        %vm5404 = vcmp.eq.s32.totalorder %v3441, %v5100
        %vm5405 = vcmp.eq.s32.totalorder %v3441, %v5103
        %vm5406 = vcmp.eq.s32.totalorder %v3441, %v5106
        %vm5407 = vcmp.eq.s32.totalorder %v3441, %v5109
        %vm5408 = vcmp.eq.s32.totalorder %v3441, %v5112
        %vm5409 = vcmp.eq.s32.totalorder %v3441, %v5115
        %vm5410 = vcmp.eq.s32.totalorder %v3441, %v5118
        %vm5411 = vcmp.eq.s32.totalorder %v3441, %v5121
        %vm5412 = vcmp.eq.s32.totalorder %v3441, %v5124
        %vm5413 = vcmp.eq.s32.totalorder %v3441, %v5127
        %vm5414 = vcmp.eq.s32.totalorder %v3441, %v5130
        %vm5415 = vcmp.eq.s32.totalorder %v3441, %v5133
        %vm5416 = vcmp.eq.s32.totalorder %v3441, %v5136
        %vm5417 = vcmp.eq.s32.totalorder %v3441, %v5139
        %vm5418 = vcmp.eq.s32.totalorder %v3441, %v5142
        %vm5419 = vcmp.eq.s32.totalorder %v3441, %v5145
        %vm5420 = vcmp.eq.s32.totalorder %v3441, %v5148
        %vm5421 = vcmp.eq.s32.totalorder %v3441, %v5151
        %vm5422 = vcmp.eq.s32.totalorder %v3441, %v5154
        %vm5423 = vcmp.eq.s32.totalorder %v3441, %v5157
        %vm5424 = vcmp.eq.s32.totalorder %v3441, %v5160
        %vm5425 = vcmp.eq.s32.totalorder %v3441, %v5163
        %vm5426 = vcmp.eq.s32.totalorder %v3441, %v5166
        %vm5427 = vcmp.eq.s32.totalorder %v3441, %v5169
        %vm5428 = vcmp.eq.s32.totalorder %v3441, %v5172
        %vm5429 = vcmp.eq.s32.totalorder %v3441, %v5175
        %vm5430 = vcmp.eq.s32.totalorder %v3441, %v5178
        %vm5431 = vcmp.eq.s32.totalorder %v3441, %v5181
        %vm5432 = vcmp.eq.s32.totalorder %v3441, %v5184
        %vm5433 = vcmp.eq.s32.totalorder %v3441, %v5187
        %vm5434 = vcmp.eq.s32.totalorder %v3441, %v5190
        %vm5435 = vcmp.eq.s32.totalorder %v3441, %v5193
        %vm5436 = vcmp.eq.s32.totalorder %v3441, %v5196
        %vm5437 = vcmp.eq.s32.totalorder %v3441, %v5199
        %vm5438 = vcmp.eq.s32.totalorder %v3441, %v5202
        %vm5439 = vcmp.eq.s32.totalorder %v3441, %v5205
        %vm5440 = vcmp.eq.s32.totalorder %v3441, %v5208
        %vm5441 = vcmp.eq.s32.totalorder %v3441, %v5211
        %vm5442 = vcmp.eq.s32.totalorder %v3441, %v5214
        %vm5443 = vcmp.eq.s32.totalorder %v3441, %v5217
        %vm5444 = vcmp.eq.s32.totalorder %v3441, %v5220
        %vm5445 = vcmp.eq.s32.totalorder %v3441, %v5223
        %vm5446 = vcmp.eq.s32.totalorder %v3441, %v5226
        %vm5447 = vcmp.eq.s32.totalorder %v3441, %v5229
        %vm5448 = vcmp.eq.s32.totalorder %v3441, %v5232
        %vm5449 = vcmp.eq.s32.totalorder %v3441, %v5235
        %vm5450 = vcmp.eq.s32.totalorder %v3441, %v5238
        %vm5451 = vcmp.eq.s32.totalorder %v3441, %v5241
        %vm5452 = vcmp.eq.s32.totalorder %v3441, %v5244
        %vm5453 = vcmp.eq.s32.totalorder %v3441, %v5247
        %vm5454 = vcmp.eq.s32.totalorder %v3441, %v5250
        %vm5455 = vcmp.eq.s32.totalorder %v3441, %v5253
        %vm5456 = vcmp.eq.s32.totalorder %v3441, %v5256
        %vm5457 = vcmp.eq.s32.totalorder %v3441, %v5259
        %vm5458 = vcmp.eq.s32.totalorder %v3441, %v5262
        %vm5459 = vcmp.eq.s32.totalorder %v3441, %v5265
        %vm5460 = vcmp.eq.s32.totalorder %v3441, %v5268
        %vm5461 = vcmp.eq.s32.totalorder %v3441, %v5271
        %vm5462 = vcmp.eq.s32.totalorder %v3441, %v5274
        %vm5463 = vcmp.eq.s32.totalorder %v3441, %v5277
        %vm5464 = vcmp.eq.s32.totalorder %v3441, %v5280
        %vm5465 = vcmp.eq.s32.totalorder %v3441, %v5283
        %vm5466 = vcmp.eq.s32.totalorder %v3441, %v5286
        %vm5467 = vcmp.eq.s32.totalorder %v3441, %v5289
        %vm5468 = vcmp.eq.s32.totalorder %v3441, %v5292
        %vm5469 = vcmp.eq.s32.totalorder %v3441, %v5295
        %vm5470 = vcmp.eq.s32.totalorder %v3441, %v5298
        %vm5471 = vcmp.eq.s32.totalorder %v3441, %v5301
        %vm5472 = vcmp.eq.s32.totalorder %v3441, %v5304
        %vm5473 = vcmp.eq.s32.totalorder %v3441, %v5307
        %vm5474 = vcmp.eq.s32.totalorder %v3441, %v5310
        %vm5475 = vcmp.eq.s32.totalorder %v3441, %v5313
        %vm5476 = vcmp.eq.s32.totalorder %v3441, %v5316
        %vm5477 = vcmp.eq.s32.totalorder %v3441, %v5319
        %vm5478 = vcmp.eq.s32.totalorder %v3441, %v5322
        %vm5479 = vcmp.eq.s32.totalorder %v3441, %v5325
        %vm5480 = vcmp.eq.s32.totalorder %v3441, %v5328
        %vm5481 = vcmp.eq.s32.totalorder %v3441, %v5331
        %vm5482 = vcmp.eq.s32.totalorder %v3441, %v5334
        %vm5483 = vcmp.eq.s32.totalorder %v3441, %v5337
        %vm5484 = vcmp.eq.s32.totalorder %v3441, %v5340
        %vm5485 = vcmp.eq.s32.totalorder %v3441, %v5343
        %vm5486 = vcmp.eq.s32.totalorder %v3441, %v5346
        %vm5487 = vcmp.eq.s32.totalorder %v3441, %v5349
        %vm5488 = vcmp.eq.s32.totalorder %v3441, %v5352
        %vm5489 = vcmp.eq.s32.totalorder %v3441, %v5355
        %vm5490 = vcmp.eq.s32.totalorder %v3441, %v5358
        %vm5491 = vcmp.eq.s32.totalorder %v3441, %v5361
        %vm5492 = vcmp.eq.s32.totalorder %v3441, %v5364
        %v5493 = vsel %vm5365, %v3829, 0.0
        %v5494 = vsel %vm5366, %v3830, 0.0
        %v5495 = vsel %vm5367, %v3831, 0.0
        %v5496 = vsel %vm5368, %v3832, 0.0
        %v5497 = vsel %vm5369, %v3833, 0.0
        %v5498 = vsel %vm5370, %v3834, 0.0
        %v5499 = vsel %vm5371, %v3835, 0.0
        %v5500 = vsel %vm5372, %v3836, 0.0
        %v5501 = vsel %vm5373, %v3837, 0.0
        %v5502 = vsel %vm5374, %v3838, 0.0
        %v5503 = vsel %vm5375, %v3839, 0.0
        %v5504 = vsel %vm5376, %v3840, 0.0
        %v5505 = vsel %vm5377, %v3841, 0.0
        %v5506 = vsel %vm5378, %v3842, 0.0
        %v5507 = vsel %vm5379, %v3843, 0.0
        %v5508 = vsel %vm5380, %v3844, 0.0
        %v5509 = vsel %vm5381, %v3845, 0.0
        %v5510 = vsel %vm5382, %v3846, 0.0
        %v5511 = vsel %vm5383, %v3847, 0.0
        %v5512 = vsel %vm5384, %v3848, 0.0
        %v5513 = vsel %vm5385, %v3849, 0.0
        %v5514 = vsel %vm5386, %v3850, 0.0
        %v5515 = vsel %vm5387, %v3851, 0.0
        %v5516 = vsel %vm5388, %v3852, 0.0
        %v5517 = vsel %vm5389, %v3853, 0.0
        %v5518 = vsel %vm5390, %v3854, 0.0
        %v5519 = vsel %vm5391, %v3855, 0.0
        %v5520 = vsel %vm5392, %v3856, 0.0
        %v5521 = vsel %vm5393, %v3857, 0.0
        %v5522 = vsel %vm5394, %v3858, 0.0
        %v5523 = vsel %vm5395, %v3859, 0.0
        %v5524 = vsel %vm5396, %v3860, 0.0
        %v5525 = vsel %vm5397, %v3861, 0.0
        %v5526 = vsel %vm5398, %v3862, 0.0
        %v5527 = vsel %vm5399, %v3863, 0.0
        %v5528 = vsel %vm5400, %v3864, 0.0
        %v5529 = vsel %vm5401, %v3865, 0.0
        %v5530 = vsel %vm5402, %v3866, 0.0
        %v5531 = vsel %vm5403, %v3867, 0.0
        %v5532 = vsel %vm5404, %v3868, 0.0
        %v5533 = vsel %vm5405, %v3869, 0.0
        %v5534 = vsel %vm5406, %v3870, 0.0
        %v5535 = vsel %vm5407, %v3871, 0.0
        %v5536 = vsel %vm5408, %v3872, 0.0
        %v5537 = vsel %vm5409, %v3873, 0.0
        %v5538 = vsel %vm5410, %v3874, 0.0
        %v5539 = vsel %vm5411, %v3875, 0.0
        %v5540 = vsel %vm5412, %v3876, 0.0
        %v5541 = vsel %vm5413, %v3877, 0.0
        %v5542 = vsel %vm5414, %v3878, 0.0
        %v5543 = vsel %vm5415, %v3879, 0.0
        %v5544 = vsel %vm5416, %v3880, 0.0
        %v5545 = vsel %vm5417, %v3881, 0.0
        %v5546 = vsel %vm5418, %v3882, 0.0
        %v5547 = vsel %vm5419, %v3883, 0.0
        %v5548 = vsel %vm5420, %v3884, 0.0
        %v5549 = vsel %vm5421, %v3885, 0.0
        %v5550 = vsel %vm5422, %v3886, 0.0
        %v5551 = vsel %vm5423, %v3887, 0.0
        %v5552 = vsel %vm5424, %v3888, 0.0
        %v5553 = vsel %vm5425, %v3889, 0.0
        %v5554 = vsel %vm5426, %v3890, 0.0
        %v5555 = vsel %vm5427, %v3891, 0.0
        %v5556 = vsel %vm5428, %v3892, 0.0
        %v5557 = vsel %vm5429, %v3893, 0.0
        %v5558 = vsel %vm5430, %v3894, 0.0
        %v5559 = vsel %vm5431, %v3895, 0.0
        %v5560 = vsel %vm5432, %v3896, 0.0
        %v5561 = vsel %vm5433, %v3897, 0.0
        %v5562 = vsel %vm5434, %v3898, 0.0
        %v5563 = vsel %vm5435, %v3899, 0.0
        %v5564 = vsel %vm5436, %v3900, 0.0
        %v5565 = vsel %vm5437, %v3901, 0.0
        %v5566 = vsel %vm5438, %v3902, 0.0
        %v5567 = vsel %vm5439, %v3903, 0.0
        %v5568 = vsel %vm5440, %v3904, 0.0
        %v5569 = vsel %vm5441, %v3905, 0.0
        %v5570 = vsel %vm5442, %v3906, 0.0
        %v5571 = vsel %vm5443, %v3907, 0.0
        %v5572 = vsel %vm5444, %v3908, 0.0
        %v5573 = vsel %vm5445, %v3909, 0.0
        %v5574 = vsel %vm5446, %v3910, 0.0
        %v5575 = vsel %vm5447, %v3911, 0.0
        %v5576 = vsel %vm5448, %v3912, 0.0
        %v5577 = vsel %vm5449, %v3913, 0.0
        %v5578 = vsel %vm5450, %v3914, 0.0
        %v5579 = vsel %vm5451, %v3915, 0.0
        %v5580 = vsel %vm5452, %v3916, 0.0
        %v5581 = vsel %vm5453, %v3917, 0.0
        %v5582 = vsel %vm5454, %v3918, 0.0
        %v5583 = vsel %vm5455, %v3919, 0.0
        %v5584 = vsel %vm5456, %v3920, 0.0
        %v5585 = vsel %vm5457, %v3921, 0.0
        %v5586 = vsel %vm5458, %v3922, 0.0
        %v5587 = vsel %vm5459, %v3923, 0.0
        %v5588 = vsel %vm5460, %v3924, 0.0
        %v5589 = vsel %vm5461, %v3925, 0.0
        %v5590 = vsel %vm5462, %v3926, 0.0
        %v5591 = vsel %vm5463, %v3927, 0.0
        %v5592 = vsel %vm5464, %v3928, 0.0
        %v5593 = vsel %vm5465, %v3929, 0.0
        %v5594 = vsel %vm5466, %v3930, 0.0
        %v5595 = vsel %vm5467, %v3931, 0.0
        %v5596 = vsel %vm5468, %v3932, 0.0
        %v5597 = vsel %vm5469, %v3933, 0.0
        %v5598 = vsel %vm5470, %v3934, 0.0
        %v5599 = vsel %vm5471, %v3935, 0.0
        %v5600 = vsel %vm5472, %v3936, 0.0
        %v5601 = vsel %vm5473, %v3937, 0.0
        %v5602 = vsel %vm5474, %v3938, 0.0
        %v5603 = vsel %vm5475, %v3939, 0.0
        %v5604 = vsel %vm5476, %v3940, 0.0
        %v5605 = vsel %vm5477, %v3941, 0.0
        %v5606 = vsel %vm5478, %v3942, 0.0
        %v5607 = vsel %vm5479, %v3943, 0.0
        %v5608 = vsel %vm5480, %v3944, 0.0
        %v5609 = vsel %vm5481, %v3945, 0.0
        %v5610 = vsel %vm5482, %v3946, 0.0
        %v5611 = vsel %vm5483, %v3947, 0.0
        %v5612 = vsel %vm5484, %v3948, 0.0
        %v5613 = vsel %vm5485, %v3949, 0.0
        %v5614 = vsel %vm5486, %v3950, 0.0
        %v5615 = vsel %vm5487, %v3951, 0.0
        %v5616 = vsel %vm5488, %v3952, 0.0
        %v5617 = vsel %vm5489, %v3953, 0.0
        %v5618 = vsel %vm5490, %v3954, 0.0
        %v5619 = vsel %vm5491, %v3955, 0.0
        %v5620 = vsel %vm5492, %v3956, 0.0
        %5621 = vadd.xlane.f32.xlu0 %v5493
        %v5622 = vpop.xlane.xlu0 %5621
        %5623 = vadd.xlane.f32.xlu0 %v5494
        %v5624 = vpop.xlane.xlu0 %5623
        %5625 = vadd.xlane.f32.xlu0 %v5495
        %v5626 = vpop.xlane.xlu0 %5625
        %5627 = vadd.xlane.f32.xlu0 %v5496
        %v5628 = vpop.xlane.xlu0 %5627
        %5629 = vadd.xlane.f32.xlu0 %v5497
        %v5630 = vpop.xlane.xlu0 %5629
        %5631 = vadd.xlane.f32.xlu0 %v5498
        %v5632 = vpop.xlane.xlu0 %5631
        %5633 = vadd.xlane.f32.xlu0 %v5499
        %v5634 = vpop.xlane.xlu0 %5633
        %5635 = vadd.xlane.f32.xlu0 %v5500
        %v5636 = vpop.xlane.xlu0 %5635
        %5637 = vadd.xlane.f32.xlu0 %v5501
        %v5638 = vpop.xlane.xlu0 %5637
        %5639 = vadd.xlane.f32.xlu0 %v5502
        %v5640 = vpop.xlane.xlu0 %5639
        %5641 = vadd.xlane.f32.xlu0 %v5503
        %v5642 = vpop.xlane.xlu0 %5641
        %5643 = vadd.xlane.f32.xlu0 %v5504
        %v5644 = vpop.xlane.xlu0 %5643
        %5645 = vadd.xlane.f32.xlu0 %v5505
        %v5646 = vpop.xlane.xlu0 %5645
        %5647 = vadd.xlane.f32.xlu0 %v5506
        %v5648 = vpop.xlane.xlu0 %5647
        %5649 = vadd.xlane.f32.xlu0 %v5507
        %v5650 = vpop.xlane.xlu0 %5649
        %5651 = vadd.xlane.f32.xlu0 %v5508
        %v5652 = vpop.xlane.xlu0 %5651
        %5653 = vadd.xlane.f32.xlu0 %v5509
        %v5654 = vpop.xlane.xlu0 %5653
        %5655 = vadd.xlane.f32.xlu0 %v5510
        %v5656 = vpop.xlane.xlu0 %5655
        %5657 = vadd.xlane.f32.xlu0 %v5511
        %v5658 = vpop.xlane.xlu0 %5657
        %5659 = vadd.xlane.f32.xlu0 %v5512
        %v5660 = vpop.xlane.xlu0 %5659
        %5661 = vadd.xlane.f32.xlu0 %v5513
        %v5662 = vpop.xlane.xlu0 %5661
        %5663 = vadd.xlane.f32.xlu0 %v5514
        %v5664 = vpop.xlane.xlu0 %5663
        %5665 = vadd.xlane.f32.xlu0 %v5515
        %v5666 = vpop.xlane.xlu0 %5665
        %5667 = vadd.xlane.f32.xlu0 %v5516
        %v5668 = vpop.xlane.xlu0 %5667
        %5669 = vadd.xlane.f32.xlu0 %v5517
        %v5670 = vpop.xlane.xlu0 %5669
        %5671 = vadd.xlane.f32.xlu0 %v5518
        %v5672 = vpop.xlane.xlu0 %5671
        %5673 = vadd.xlane.f32.xlu0 %v5519
        %v5674 = vpop.xlane.xlu0 %5673
        %5675 = vadd.xlane.f32.xlu0 %v5520
        %v5676 = vpop.xlane.xlu0 %5675
        %5677 = vadd.xlane.f32.xlu0 %v5521
        %v5678 = vpop.xlane.xlu0 %5677
        %5679 = vadd.xlane.f32.xlu0 %v5522
        %v5680 = vpop.xlane.xlu0 %5679
        %5681 = vadd.xlane.f32.xlu0 %v5523
        %v5682 = vpop.xlane.xlu0 %5681
        %5683 = vadd.xlane.f32.xlu0 %v5524
        %v5684 = vpop.xlane.xlu0 %5683
        %5685 = vadd.xlane.f32.xlu0 %v5525
        %v5686 = vpop.xlane.xlu0 %5685
        %5687 = vadd.xlane.f32.xlu0 %v5526
        %v5688 = vpop.xlane.xlu0 %5687
        %5689 = vadd.xlane.f32.xlu0 %v5527
        %v5690 = vpop.xlane.xlu0 %5689
        %5691 = vadd.xlane.f32.xlu0 %v5528
        %v5692 = vpop.xlane.xlu0 %5691
        %5693 = vadd.xlane.f32.xlu0 %v5529
        %v5694 = vpop.xlane.xlu0 %5693
        %5695 = vadd.xlane.f32.xlu0 %v5530
        %v5696 = vpop.xlane.xlu0 %5695
        %5697 = vadd.xlane.f32.xlu0 %v5531
        %v5698 = vpop.xlane.xlu0 %5697
        %5699 = vadd.xlane.f32.xlu0 %v5532
        %v5700 = vpop.xlane.xlu0 %5699
        %5701 = vadd.xlane.f32.xlu0 %v5533
        %v5702 = vpop.xlane.xlu0 %5701
        %5703 = vadd.xlane.f32.xlu0 %v5534
        %v5704 = vpop.xlane.xlu0 %5703
        %5705 = vadd.xlane.f32.xlu0 %v5535
        %v5706 = vpop.xlane.xlu0 %5705
        %5707 = vadd.xlane.f32.xlu0 %v5536
        %v5708 = vpop.xlane.xlu0 %5707
        %5709 = vadd.xlane.f32.xlu0 %v5537
        %v5710 = vpop.xlane.xlu0 %5709
        %5711 = vadd.xlane.f32.xlu0 %v5538
        %v5712 = vpop.xlane.xlu0 %5711
        %5713 = vadd.xlane.f32.xlu0 %v5539
        %v5714 = vpop.xlane.xlu0 %5713
        %5715 = vadd.xlane.f32.xlu0 %v5540
        %v5716 = vpop.xlane.xlu0 %5715
        %5717 = vadd.xlane.f32.xlu0 %v5541
        %v5718 = vpop.xlane.xlu0 %5717
        %5719 = vadd.xlane.f32.xlu0 %v5542
        %v5720 = vpop.xlane.xlu0 %5719
        %5721 = vadd.xlane.f32.xlu0 %v5543
        %v5722 = vpop.xlane.xlu0 %5721
        %5723 = vadd.xlane.f32.xlu0 %v5544
        %v5724 = vpop.xlane.xlu0 %5723
        %5725 = vadd.xlane.f32.xlu0 %v5545
        %v5726 = vpop.xlane.xlu0 %5725
        %5727 = vadd.xlane.f32.xlu0 %v5546
        %v5728 = vpop.xlane.xlu0 %5727
        %5729 = vadd.xlane.f32.xlu0 %v5547
        %v5730 = vpop.xlane.xlu0 %5729
        %5731 = vadd.xlane.f32.xlu0 %v5548
        %v5732 = vpop.xlane.xlu0 %5731
        %5733 = vadd.xlane.f32.xlu0 %v5549
        %v5734 = vpop.xlane.xlu0 %5733
        %5735 = vadd.xlane.f32.xlu0 %v5550
        %v5736 = vpop.xlane.xlu0 %5735
        %5737 = vadd.xlane.f32.xlu0 %v5551
        %v5738 = vpop.xlane.xlu0 %5737
        %5739 = vadd.xlane.f32.xlu0 %v5552
        %v5740 = vpop.xlane.xlu0 %5739
        %5741 = vadd.xlane.f32.xlu0 %v5553
        %v5742 = vpop.xlane.xlu0 %5741
        %5743 = vadd.xlane.f32.xlu0 %v5554
        %v5744 = vpop.xlane.xlu0 %5743
        %5745 = vadd.xlane.f32.xlu0 %v5555
        %v5746 = vpop.xlane.xlu0 %5745
        %5747 = vadd.xlane.f32.xlu0 %v5556
        %v5748 = vpop.xlane.xlu0 %5747
        %5749 = vadd.xlane.f32.xlu0 %v5557
        %v5750 = vpop.xlane.xlu0 %5749
        %5751 = vadd.xlane.f32.xlu0 %v5558
        %v5752 = vpop.xlane.xlu0 %5751
        %5753 = vadd.xlane.f32.xlu0 %v5559
        %v5754 = vpop.xlane.xlu0 %5753
        %5755 = vadd.xlane.f32.xlu0 %v5560
        %v5756 = vpop.xlane.xlu0 %5755
        %5757 = vadd.xlane.f32.xlu0 %v5561
        %v5758 = vpop.xlane.xlu0 %5757
        %5759 = vadd.xlane.f32.xlu0 %v5562
        %v5760 = vpop.xlane.xlu0 %5759
        %5761 = vadd.xlane.f32.xlu0 %v5563
        %v5762 = vpop.xlane.xlu0 %5761
        %5763 = vadd.xlane.f32.xlu0 %v5564
        %v5764 = vpop.xlane.xlu0 %5763
        %5765 = vadd.xlane.f32.xlu0 %v5565
        %v5766 = vpop.xlane.xlu0 %5765
        %5767 = vadd.xlane.f32.xlu0 %v5566
        %v5768 = vpop.xlane.xlu0 %5767
        %5769 = vadd.xlane.f32.xlu0 %v5567
        %v5770 = vpop.xlane.xlu0 %5769
        %5771 = vadd.xlane.f32.xlu0 %v5568
        %v5772 = vpop.xlane.xlu0 %5771
        %5773 = vadd.xlane.f32.xlu0 %v5569
        %v5774 = vpop.xlane.xlu0 %5773
        %5775 = vadd.xlane.f32.xlu0 %v5570
        %v5776 = vpop.xlane.xlu0 %5775
        %5777 = vadd.xlane.f32.xlu0 %v5571
        %v5778 = vpop.xlane.xlu0 %5777
        %5779 = vadd.xlane.f32.xlu0 %v5572
        %v5780 = vpop.xlane.xlu0 %5779
        %5781 = vadd.xlane.f32.xlu0 %v5573
        %v5782 = vpop.xlane.xlu0 %5781
        %5783 = vadd.xlane.f32.xlu0 %v5574
        %v5784 = vpop.xlane.xlu0 %5783
        %5785 = vadd.xlane.f32.xlu0 %v5575
        %v5786 = vpop.xlane.xlu0 %5785
        %5787 = vadd.xlane.f32.xlu0 %v5576
        %v5788 = vpop.xlane.xlu0 %5787
        %5789 = vadd.xlane.f32.xlu0 %v5577
        %v5790 = vpop.xlane.xlu0 %5789
        %5791 = vadd.xlane.f32.xlu0 %v5578
        %v5792 = vpop.xlane.xlu0 %5791
        %5793 = vadd.xlane.f32.xlu0 %v5579
        %v5794 = vpop.xlane.xlu0 %5793
        %5795 = vadd.xlane.f32.xlu0 %v5580
        %v5796 = vpop.xlane.xlu0 %5795
        %5797 = vadd.xlane.f32.xlu0 %v5581
        %v5798 = vpop.xlane.xlu0 %5797
        %5799 = vadd.xlane.f32.xlu0 %v5582
        %v5800 = vpop.xlane.xlu0 %5799
        %5801 = vadd.xlane.f32.xlu0 %v5583
        %v5802 = vpop.xlane.xlu0 %5801
        %5803 = vadd.xlane.f32.xlu0 %v5584
        %v5804 = vpop.xlane.xlu0 %5803
        %5805 = vadd.xlane.f32.xlu0 %v5585
        %v5806 = vpop.xlane.xlu0 %5805
        %5807 = vadd.xlane.f32.xlu0 %v5586
        %v5808 = vpop.xlane.xlu0 %5807
        %5809 = vadd.xlane.f32.xlu0 %v5587
        %v5810 = vpop.xlane.xlu0 %5809
        %5811 = vadd.xlane.f32.xlu0 %v5588
        %v5812 = vpop.xlane.xlu0 %5811
        %5813 = vadd.xlane.f32.xlu0 %v5589
        %v5814 = vpop.xlane.xlu0 %5813
        %5815 = vadd.xlane.f32.xlu0 %v5590
        %v5816 = vpop.xlane.xlu0 %5815
        %5817 = vadd.xlane.f32.xlu0 %v5591
        %v5818 = vpop.xlane.xlu0 %5817
        %5819 = vadd.xlane.f32.xlu0 %v5592
        %v5820 = vpop.xlane.xlu0 %5819
        %5821 = vadd.xlane.f32.xlu0 %v5593
        %v5822 = vpop.xlane.xlu0 %5821
        %5823 = vadd.xlane.f32.xlu0 %v5594
        %v5824 = vpop.xlane.xlu0 %5823
        %5825 = vadd.xlane.f32.xlu0 %v5595
        %v5826 = vpop.xlane.xlu0 %5825
        %5827 = vadd.xlane.f32.xlu0 %v5596
        %v5828 = vpop.xlane.xlu0 %5827
        %5829 = vadd.xlane.f32.xlu0 %v5597
        %v5830 = vpop.xlane.xlu0 %5829
        %5831 = vadd.xlane.f32.xlu0 %v5598
        %v5832 = vpop.xlane.xlu0 %5831
        %5833 = vadd.xlane.f32.xlu0 %v5599
        %v5834 = vpop.xlane.xlu0 %5833
        %5835 = vadd.xlane.f32.xlu0 %v5600
        %v5836 = vpop.xlane.xlu0 %5835
        %5837 = vadd.xlane.f32.xlu0 %v5601
        %v5838 = vpop.xlane.xlu0 %5837
        %5839 = vadd.xlane.f32.xlu0 %v5602
        %v5840 = vpop.xlane.xlu0 %5839
        %5841 = vadd.xlane.f32.xlu0 %v5603
        %v5842 = vpop.xlane.xlu0 %5841
        %5843 = vadd.xlane.f32.xlu0 %v5604
        %v5844 = vpop.xlane.xlu0 %5843
        %5845 = vadd.xlane.f32.xlu0 %v5605
        %v5846 = vpop.xlane.xlu0 %5845
        %5847 = vadd.xlane.f32.xlu0 %v5606
        %v5848 = vpop.xlane.xlu0 %5847
        %5849 = vadd.xlane.f32.xlu0 %v5607
        %v5850 = vpop.xlane.xlu0 %5849
        %5851 = vadd.xlane.f32.xlu0 %v5608
        %v5852 = vpop.xlane.xlu0 %5851
        %5853 = vadd.xlane.f32.xlu0 %v5609
        %v5854 = vpop.xlane.xlu0 %5853
        %5855 = vadd.xlane.f32.xlu0 %v5610
        %v5856 = vpop.xlane.xlu0 %5855
        %5857 = vadd.xlane.f32.xlu0 %v5611
        %v5858 = vpop.xlane.xlu0 %5857
        %5859 = vadd.xlane.f32.xlu0 %v5612
        %v5860 = vpop.xlane.xlu0 %5859
        %5861 = vadd.xlane.f32.xlu0 %v5613
        %v5862 = vpop.xlane.xlu0 %5861
        %5863 = vadd.xlane.f32.xlu0 %v5614
        %v5864 = vpop.xlane.xlu0 %5863
        %5865 = vadd.xlane.f32.xlu0 %v5615
        %v5866 = vpop.xlane.xlu0 %5865
        %5867 = vadd.xlane.f32.xlu0 %v5616
        %v5868 = vpop.xlane.xlu0 %5867
        %5869 = vadd.xlane.f32.xlu0 %v5617
        %v5870 = vpop.xlane.xlu0 %5869
        %5871 = vadd.xlane.f32.xlu0 %v5618
        %v5872 = vpop.xlane.xlu0 %5871
        %5873 = vadd.xlane.f32.xlu0 %v5619
        %v5874 = vpop.xlane.xlu0 %5873
        %5875 = vadd.xlane.f32.xlu0 %v5620
        %v5876 = vpop.xlane.xlu0 %5875
        %v5877 = vlog2.pop %v4214
        %v5878 = vmul.f32 %v5877, 0.6931472
        %v5879 = vlog2.pop %v4216
        %v5880 = vmul.f32 %v5879, 0.6931472
        %v5881 = vlog2.pop %v4218
        %v5882 = vmul.f32 %v5881, 0.6931472
        %v5883 = vlog2.pop %v4220
        %v5884 = vmul.f32 %v5883, 0.6931472
        %v5885 = vlog2.pop %v4222
        %v5886 = vmul.f32 %v5885, 0.6931472
        %v5887 = vlog2.pop %v4224
        %v5888 = vmul.f32 %v5887, 0.6931472
        %v5889 = vlog2.pop %v4226
        %v5890 = vmul.f32 %v5889, 0.6931472
        %v5891 = vlog2.pop %v4228
        %v5892 = vmul.f32 %v5891, 0.6931472
        %v5893 = vlog2.pop %v4230
        %v5894 = vmul.f32 %v5893, 0.6931472
        %v5895 = vlog2.pop %v4232
        %v5896 = vmul.f32 %v5895, 0.6931472
        %v5897 = vlog2.pop %v4234
        %v5898 = vmul.f32 %v5897, 0.6931472
        %v5899 = vlog2.pop %v4236
        %v5900 = vmul.f32 %v5899, 0.6931472
        %v5901 = vlog2.pop %v4238
        %v5902 = vmul.f32 %v5901, 0.6931472
        %v5903 = vlog2.pop %v4240
        %v5904 = vmul.f32 %v5903, 0.6931472
        %v5905 = vlog2.pop %v4242
        %v5906 = vmul.f32 %v5905, 0.6931472
        %v5907 = vlog2.pop %v4244
        %v5908 = vmul.f32 %v5907, 0.6931472
        %v5909 = vlog2.pop %v4246
        %v5910 = vmul.f32 %v5909, 0.6931472
        %v5911 = vlog2.pop %v4248
        %v5912 = vmul.f32 %v5911, 0.6931472
        %v5913 = vlog2.pop %v4250
        %v5914 = vmul.f32 %v5913, 0.6931472
        %v5915 = vlog2.pop %v4252
        %v5916 = vmul.f32 %v5915, 0.6931472
        %v5917 = vlog2.pop %v4254
        %v5918 = vmul.f32 %v5917, 0.6931472
        %v5919 = vlog2.pop %v4256
        %v5920 = vmul.f32 %v5919, 0.6931472
        %v5921 = vlog2.pop %v4258
        %v5922 = vmul.f32 %v5921, 0.6931472
        %v5923 = vlog2.pop %v4260
        %v5924 = vmul.f32 %v5923, 0.6931472
        %v5925 = vlog2.pop %v4262
        %v5926 = vmul.f32 %v5925, 0.6931472
        %v5927 = vlog2.pop %v4264
        %v5928 = vmul.f32 %v5927, 0.6931472
        %v5929 = vlog2.pop %v4266
        %v5930 = vmul.f32 %v5929, 0.6931472
        %v5931 = vlog2.pop %v4268
        %v5932 = vmul.f32 %v5931, 0.6931472
        %v5933 = vlog2.pop %v4270
        %v5934 = vmul.f32 %v5933, 0.6931472
        %v5935 = vlog2.pop %v4272
        %v5936 = vmul.f32 %v5935, 0.6931472
        %v5937 = vlog2.pop %v4274
        %v5938 = vmul.f32 %v5937, 0.6931472
        %v5939 = vlog2.pop %v4276
        %v5940 = vmul.f32 %v5939, 0.6931472
        %v5941 = vlog2.pop %v4278
        %v5942 = vmul.f32 %v5941, 0.6931472
        %v5943 = vlog2.pop %v4280
        %v5944 = vmul.f32 %v5943, 0.6931472
        %v5945 = vlog2.pop %v4282
        %v5946 = vmul.f32 %v5945, 0.6931472
        %v5947 = vlog2.pop %v4284
        %v5948 = vmul.f32 %v5947, 0.6931472
        %v5949 = vlog2.pop %v4286
        %v5950 = vmul.f32 %v5949, 0.6931472
        %v5951 = vlog2.pop %v4288
        %v5952 = vmul.f32 %v5951, 0.6931472
        %v5953 = vlog2.pop %v4290
        %v5954 = vmul.f32 %v5953, 0.6931472
        %v5955 = vlog2.pop %v4292
        %v5956 = vmul.f32 %v5955, 0.6931472
        %v5957 = vlog2.pop %v4294
        %v5958 = vmul.f32 %v5957, 0.6931472
        %v5959 = vlog2.pop %v4296
        %v5960 = vmul.f32 %v5959, 0.6931472
        %v5961 = vlog2.pop %v4298
        %v5962 = vmul.f32 %v5961, 0.6931472
        %v5963 = vlog2.pop %v4300
        %v5964 = vmul.f32 %v5963, 0.6931472
        %v5965 = vlog2.pop %v4302
        %v5966 = vmul.f32 %v5965, 0.6931472
        %v5967 = vlog2.pop %v4304
        %v5968 = vmul.f32 %v5967, 0.6931472
        %v5969 = vlog2.pop %v4306
        %v5970 = vmul.f32 %v5969, 0.6931472
        %v5971 = vlog2.pop %v4308
        %v5972 = vmul.f32 %v5971, 0.6931472
        %v5973 = vlog2.pop %v4310
        %v5974 = vmul.f32 %v5973, 0.6931472
        %v5975 = vlog2.pop %v4312
        %v5976 = vmul.f32 %v5975, 0.6931472
        %v5977 = vlog2.pop %v4314
        %v5978 = vmul.f32 %v5977, 0.6931472
        %v5979 = vlog2.pop %v4316
        %v5980 = vmul.f32 %v5979, 0.6931472
        %v5981 = vlog2.pop %v4318
        %v5982 = vmul.f32 %v5981, 0.6931472
        %v5983 = vlog2.pop %v4320
        %v5984 = vmul.f32 %v5983, 0.6931472
        %v5985 = vlog2.pop %v4322
        %v5986 = vmul.f32 %v5985, 0.6931472
        %v5987 = vlog2.pop %v4324
        %v5988 = vmul.f32 %v5987, 0.6931472
        %v5989 = vlog2.pop %v4326
        %v5990 = vmul.f32 %v5989, 0.6931472
        %v5991 = vlog2.pop %v4328
        %v5992 = vmul.f32 %v5991, 0.6931472
        %v5993 = vlog2.pop %v4330
        %v5994 = vmul.f32 %v5993, 0.6931472
        %v5995 = vlog2.pop %v4332
        %v5996 = vmul.f32 %v5995, 0.6931472
        %v5997 = vlog2.pop %v4334
        %v5998 = vmul.f32 %v5997, 0.6931472
        %v5999 = vlog2.pop %v4336
        %v6000 = vmul.f32 %v5999, 0.6931472
        %v6001 = vlog2.pop %v4338
        %v6002 = vmul.f32 %v6001, 0.6931472
        %v6003 = vlog2.pop %v4340
        %v6004 = vmul.f32 %v6003, 0.6931472
        %v6005 = vlog2.pop %v4342
        %v6006 = vmul.f32 %v6005, 0.6931472
        %v6007 = vlog2.pop %v4344
        %v6008 = vmul.f32 %v6007, 0.6931472
        %v6009 = vlog2.pop %v4346
        %v6010 = vmul.f32 %v6009, 0.6931472
        %v6011 = vlog2.pop %v4348
        %v6012 = vmul.f32 %v6011, 0.6931472
        %v6013 = vlog2.pop %v4350
        %v6014 = vmul.f32 %v6013, 0.6931472
        %v6015 = vlog2.pop %v4352
        %v6016 = vmul.f32 %v6015, 0.6931472
        %v6017 = vlog2.pop %v4354
        %v6018 = vmul.f32 %v6017, 0.6931472
        %v6019 = vlog2.pop %v4356
        %v6020 = vmul.f32 %v6019, 0.6931472
        %v6021 = vlog2.pop %v4358
        %v6022 = vmul.f32 %v6021, 0.6931472
        %v6023 = vlog2.pop %v4360
        %v6024 = vmul.f32 %v6023, 0.6931472
        %v6025 = vlog2.pop %v4362
        %v6026 = vmul.f32 %v6025, 0.6931472
        %v6027 = vlog2.pop %v4364
        %v6028 = vmul.f32 %v6027, 0.6931472
        %v6029 = vlog2.pop %v4366
        %v6030 = vmul.f32 %v6029, 0.6931472
        %v6031 = vlog2.pop %v4368
        %v6032 = vmul.f32 %v6031, 0.6931472
        %v6033 = vlog2.pop %v4370
        %v6034 = vmul.f32 %v6033, 0.6931472
        %v6035 = vlog2.pop %v4372
        %v6036 = vmul.f32 %v6035, 0.6931472
        %v6037 = vlog2.pop %v4374
        %v6038 = vmul.f32 %v6037, 0.6931472
        %v6039 = vlog2.pop %v4376
        %v6040 = vmul.f32 %v6039, 0.6931472
        %v6041 = vlog2.pop %v4378
        %v6042 = vmul.f32 %v6041, 0.6931472
        %v6043 = vlog2.pop %v4380
        %v6044 = vmul.f32 %v6043, 0.6931472
        %v6045 = vlog2.pop %v4382
        %v6046 = vmul.f32 %v6045, 0.6931472
        %v6047 = vlog2.pop %v4384
        %v6048 = vmul.f32 %v6047, 0.6931472
        %v6049 = vlog2.pop %v4386
        %v6050 = vmul.f32 %v6049, 0.6931472
        %v6051 = vlog2.pop %v4388
        %v6052 = vmul.f32 %v6051, 0.6931472
        %v6053 = vlog2.pop %v4390
        %v6054 = vmul.f32 %v6053, 0.6931472
        %v6055 = vlog2.pop %v4392
        %v6056 = vmul.f32 %v6055, 0.6931472
        %v6057 = vlog2.pop %v4394
        %v6058 = vmul.f32 %v6057, 0.6931472
        %v6059 = vlog2.pop %v4396
        %v6060 = vmul.f32 %v6059, 0.6931472
        %v6061 = vlog2.pop %v4398
        %v6062 = vmul.f32 %v6061, 0.6931472
        %v6063 = vlog2.pop %v4400
        %v6064 = vmul.f32 %v6063, 0.6931472
        %v6065 = vlog2.pop %v4402
        %v6066 = vmul.f32 %v6065, 0.6931472
        %v6067 = vlog2.pop %v4404
        %v6068 = vmul.f32 %v6067, 0.6931472
        %v6069 = vlog2.pop %v4406
        %v6070 = vmul.f32 %v6069, 0.6931472
        %v6071 = vlog2.pop %v4408
        %v6072 = vmul.f32 %v6071, 0.6931472
        %v6073 = vlog2.pop %v4410
        %v6074 = vmul.f32 %v6073, 0.6931472
        %v6075 = vlog2.pop %v4412
        %v6076 = vmul.f32 %v6075, 0.6931472
        %v6077 = vlog2.pop %v4414
        %v6078 = vmul.f32 %v6077, 0.6931472
        %v6079 = vlog2.pop %v4416
        %v6080 = vmul.f32 %v6079, 0.6931472
        %v6081 = vlog2.pop %v4418
        %v6082 = vmul.f32 %v6081, 0.6931472
        %v6083 = vlog2.pop %v4420
        %v6084 = vmul.f32 %v6083, 0.6931472
        %v6085 = vlog2.pop %v4422
        %v6086 = vmul.f32 %v6085, 0.6931472
        %v6087 = vlog2.pop %v4424
        %v6088 = vmul.f32 %v6087, 0.6931472
        %v6089 = vlog2.pop %v4426
        %v6090 = vmul.f32 %v6089, 0.6931472
        %v6091 = vlog2.pop %v4428
        %v6092 = vmul.f32 %v6091, 0.6931472
        %v6093 = vlog2.pop %v4430
        %v6094 = vmul.f32 %v6093, 0.6931472
        %v6095 = vlog2.pop %v4432
        %v6096 = vmul.f32 %v6095, 0.6931472
        %v6097 = vlog2.pop %v4434
        %v6098 = vmul.f32 %v6097, 0.6931472
        %v6099 = vlog2.pop %v4436
        %v6100 = vmul.f32 %v6099, 0.6931472
        %v6101 = vlog2.pop %v4438
        %v6102 = vmul.f32 %v6101, 0.6931472
        %v6103 = vlog2.pop %v4440
        %v6104 = vmul.f32 %v6103, 0.6931472
        %v6105 = vlog2.pop %v4442
        %v6106 = vmul.f32 %v6105, 0.6931472
        %v6107 = vlog2.pop %v4444
        %v6108 = vmul.f32 %v6107, 0.6931472
        %v6109 = vlog2.pop %v4446
        %v6110 = vmul.f32 %v6109, 0.6931472
        %v6111 = vlog2.pop %v4448
        %v6112 = vmul.f32 %v6111, 0.6931472
        %v6113 = vlog2.pop %v4450
        %v6114 = vmul.f32 %v6113, 0.6931472
        %v6115 = vlog2.pop %v4452
        %v6116 = vmul.f32 %v6115, 0.6931472
        %v6117 = vlog2.pop %v4454
        %v6118 = vmul.f32 %v6117, 0.6931472
        %v6119 = vlog2.pop %v4456
        %v6120 = vmul.f32 %v6119, 0.6931472
        %v6121 = vlog2.pop %v4458
        %v6122 = vmul.f32 %v6121, 0.6931472
        %v6123 = vlog2.pop %v4460
        %v6124 = vmul.f32 %v6123, 0.6931472
        %v6125 = vlog2.pop %v4462
        %v6126 = vmul.f32 %v6125, 0.6931472
        %v6127 = vlog2.pop %v4464
        %v6128 = vmul.f32 %v6127, 0.6931472
        %v6129 = vlog2.pop %v4466
        %v6130 = vmul.f32 %v6129, 0.6931472
        %v6131 = vlog2.pop %v4468
        %v6132 = vmul.f32 %v6131, 0.6931472
        %v6133 = vsub.f32 %v5878, %v5622
        %v6134 = vsub.f32 %v5880, %v5624
        %v6135 = vsub.f32 %v5882, %v5626
        %v6136 = vsub.f32 %v5884, %v5628
        %v6137 = vsub.f32 %v5886, %v5630
        %v6138 = vsub.f32 %v5888, %v5632
        %v6139 = vsub.f32 %v5890, %v5634
        %v6140 = vsub.f32 %v5892, %v5636
        %v6141 = vsub.f32 %v5894, %v5638
        %v6142 = vsub.f32 %v5896, %v5640
        %v6143 = vsub.f32 %v5898, %v5642
        %v6144 = vsub.f32 %v5900, %v5644
        %v6145 = vsub.f32 %v5902, %v5646
        %v6146 = vsub.f32 %v5904, %v5648
        %v6147 = vsub.f32 %v5906, %v5650
        %v6148 = vsub.f32 %v5908, %v5652
        %v6149 = vsub.f32 %v5910, %v5654
        %v6150 = vsub.f32 %v5912, %v5656
        %v6151 = vsub.f32 %v5914, %v5658
        %v6152 = vsub.f32 %v5916, %v5660
        %v6153 = vsub.f32 %v5918, %v5662
        %v6154 = vsub.f32 %v5920, %v5664
        %v6155 = vsub.f32 %v5922, %v5666
        %v6156 = vsub.f32 %v5924, %v5668
        %v6157 = vsub.f32 %v5926, %v5670
        %v6158 = vsub.f32 %v5928, %v5672
        %v6159 = vsub.f32 %v5930, %v5674
        %v6160 = vsub.f32 %v5932, %v5676
        %v6161 = vsub.f32 %v5934, %v5678
        %v6162 = vsub.f32 %v5936, %v5680
        %v6163 = vsub.f32 %v5938, %v5682
        %v6164 = vsub.f32 %v5940, %v5684
        %v6165 = vsub.f32 %v5942, %v5686
        %v6166 = vsub.f32 %v5944, %v5688
        %v6167 = vsub.f32 %v5946, %v5690
        %v6168 = vsub.f32 %v5948, %v5692
        %v6169 = vsub.f32 %v5950, %v5694
        %v6170 = vsub.f32 %v5952, %v5696
        %v6171 = vsub.f32 %v5954, %v5698
        %v6172 = vsub.f32 %v5956, %v5700
        %v6173 = vsub.f32 %v5958, %v5702
        %v6174 = vsub.f32 %v5960, %v5704
        %v6175 = vsub.f32 %v5962, %v5706
        %v6176 = vsub.f32 %v5964, %v5708
        %v6177 = vsub.f32 %v5966, %v5710
        %v6178 = vsub.f32 %v5968, %v5712
        %v6179 = vsub.f32 %v5970, %v5714
        %v6180 = vsub.f32 %v5972, %v5716
        %v6181 = vsub.f32 %v5974, %v5718
        %v6182 = vsub.f32 %v5976, %v5720
        %v6183 = vsub.f32 %v5978, %v5722
        %v6184 = vsub.f32 %v5980, %v5724
        %v6185 = vsub.f32 %v5982, %v5726
        %v6186 = vsub.f32 %v5984, %v5728
        %v6187 = vsub.f32 %v5986, %v5730
        %v6188 = vsub.f32 %v5988, %v5732
        %v6189 = vsub.f32 %v5990, %v5734
        %v6190 = vsub.f32 %v5992, %v5736
        %v6191 = vsub.f32 %v5994, %v5738
        %v6192 = vsub.f32 %v5996, %v5740
        %v6193 = vsub.f32 %v5998, %v5742
        %v6194 = vsub.f32 %v6000, %v5744
        %v6195 = vsub.f32 %v6002, %v5746
        %v6196 = vsub.f32 %v6004, %v5748
        %v6197 = vsub.f32 %v6006, %v5750
        %v6198 = vsub.f32 %v6008, %v5752
        %v6199 = vsub.f32 %v6010, %v5754
        %v6200 = vsub.f32 %v6012, %v5756
        %v6201 = vsub.f32 %v6014, %v5758
        %v6202 = vsub.f32 %v6016, %v5760
        %v6203 = vsub.f32 %v6018, %v5762
        %v6204 = vsub.f32 %v6020, %v5764
        %v6205 = vsub.f32 %v6022, %v5766
        %v6206 = vsub.f32 %v6024, %v5768
        %v6207 = vsub.f32 %v6026, %v5770
        %v6208 = vsub.f32 %v6028, %v5772
        %v6209 = vsub.f32 %v6030, %v5774
        %v6210 = vsub.f32 %v6032, %v5776
        %v6211 = vsub.f32 %v6034, %v5778
        %v6212 = vsub.f32 %v6036, %v5780
        %v6213 = vsub.f32 %v6038, %v5782
        %v6214 = vsub.f32 %v6040, %v5784
        %v6215 = vsub.f32 %v6042, %v5786
        %v6216 = vsub.f32 %v6044, %v5788
        %v6217 = vsub.f32 %v6046, %v5790
        %v6218 = vsub.f32 %v6048, %v5792
        %v6219 = vsub.f32 %v6050, %v5794
        %v6220 = vsub.f32 %v6052, %v5796
        %v6221 = vsub.f32 %v6054, %v5798
        %v6222 = vsub.f32 %v6056, %v5800
        %v6223 = vsub.f32 %v6058, %v5802
        %v6224 = vsub.f32 %v6060, %v5804
        %v6225 = vsub.f32 %v6062, %v5806
        %v6226 = vsub.f32 %v6064, %v5808
        %v6227 = vsub.f32 %v6066, %v5810
        %v6228 = vsub.f32 %v6068, %v5812
        %v6229 = vsub.f32 %v6070, %v5814
        %v6230 = vsub.f32 %v6072, %v5816
        %v6231 = vsub.f32 %v6074, %v5818
        %v6232 = vsub.f32 %v6076, %v5820
        %v6233 = vsub.f32 %v6078, %v5822
        %v6234 = vsub.f32 %v6080, %v5824
        %v6235 = vsub.f32 %v6082, %v5826
        %v6236 = vsub.f32 %v6084, %v5828
        %v6237 = vsub.f32 %v6086, %v5830
        %v6238 = vsub.f32 %v6088, %v5832
        %v6239 = vsub.f32 %v6090, %v5834
        %v6240 = vsub.f32 %v6092, %v5836
        %v6241 = vsub.f32 %v6094, %v5838
        %v6242 = vsub.f32 %v6096, %v5840
        %v6243 = vsub.f32 %v6098, %v5842
        %v6244 = vsub.f32 %v6100, %v5844
        %v6245 = vsub.f32 %v6102, %v5846
        %v6246 = vsub.f32 %v6104, %v5848
        %v6247 = vsub.f32 %v6106, %v5850
        %v6248 = vsub.f32 %v6108, %v5852
        %v6249 = vsub.f32 %v6110, %v5854
        %v6250 = vsub.f32 %v6112, %v5856
        %v6251 = vsub.f32 %v6114, %v5858
        %v6252 = vsub.f32 %v6116, %v5860
        %v6253 = vsub.f32 %v6118, %v5862
        %v6254 = vsub.f32 %v6120, %v5864
        %v6255 = vsub.f32 %v6122, %v5866
        %v6256 = vsub.f32 %v6124, %v5868
        %v6257 = vsub.f32 %v6126, %v5870
        %v6258 = vsub.f32 %v6128, %v5872
        %v6259 = vsub.f32 %v6130, %v5874
        %v6260 = vsub.f32 %v6132, %v5876
        %v6261 = vsel %vm4725, %v6133, 0.0
        %v6262 = vsel %vm4726, %v6134, 0.0
        %v6263 = vsel %vm4727, %v6135, 0.0
        %v6264 = vsel %vm4728, %v6136, 0.0
        %v6265 = vsel %vm4729, %v6137, 0.0
        %v6266 = vsel %vm4730, %v6138, 0.0
        %v6267 = vsel %vm4731, %v6139, 0.0
        %v6268 = vsel %vm4732, %v6140, 0.0
        %v6269 = vsel %vm4733, %v6141, 0.0
        %v6270 = vsel %vm4734, %v6142, 0.0
        %v6271 = vsel %vm4735, %v6143, 0.0
        %v6272 = vsel %vm4736, %v6144, 0.0
        %v6273 = vsel %vm4737, %v6145, 0.0
        %v6274 = vsel %vm4738, %v6146, 0.0
        %v6275 = vsel %vm4739, %v6147, 0.0
        %v6276 = vsel %vm4740, %v6148, 0.0
        %v6277 = vsel %vm4741, %v6149, 0.0
        %v6278 = vsel %vm4742, %v6150, 0.0
        %v6279 = vsel %vm4743, %v6151, 0.0
        %v6280 = vsel %vm4744, %v6152, 0.0
        %v6281 = vsel %vm4745, %v6153, 0.0
        %v6282 = vsel %vm4746, %v6154, 0.0
        %v6283 = vsel %vm4747, %v6155, 0.0
        %v6284 = vsel %vm4748, %v6156, 0.0
        %v6285 = vsel %vm4749, %v6157, 0.0
        %v6286 = vsel %vm4750, %v6158, 0.0
        %v6287 = vsel %vm4751, %v6159, 0.0
        %v6288 = vsel %vm4752, %v6160, 0.0
        %v6289 = vsel %vm4753, %v6161, 0.0
        %v6290 = vsel %vm4754, %v6162, 0.0
        %v6291 = vsel %vm4755, %v6163, 0.0
        %v6292 = vsel %vm4756, %v6164, 0.0
        %v6293 = vsel %vm4757, %v6165, 0.0
        %v6294 = vsel %vm4758, %v6166, 0.0
        %v6295 = vsel %vm4759, %v6167, 0.0
        %v6296 = vsel %vm4760, %v6168, 0.0
        %v6297 = vsel %vm4761, %v6169, 0.0
        %v6298 = vsel %vm4762, %v6170, 0.0
        %v6299 = vsel %vm4763, %v6171, 0.0
        %v6300 = vsel %vm4764, %v6172, 0.0
        %v6301 = vsel %vm4765, %v6173, 0.0
        %v6302 = vsel %vm4766, %v6174, 0.0
        %v6303 = vsel %vm4767, %v6175, 0.0
        %v6304 = vsel %vm4768, %v6176, 0.0
        %v6305 = vsel %vm4769, %v6177, 0.0
        %v6306 = vsel %vm4770, %v6178, 0.0
        %v6307 = vsel %vm4771, %v6179, 0.0
        %v6308 = vsel %vm4772, %v6180, 0.0
        %v6309 = vsel %vm4773, %v6181, 0.0
        %v6310 = vsel %vm4774, %v6182, 0.0
        %v6311 = vsel %vm4775, %v6183, 0.0
        %v6312 = vsel %vm4776, %v6184, 0.0
        %v6313 = vsel %vm4777, %v6185, 0.0
        %v6314 = vsel %vm4778, %v6186, 0.0
        %v6315 = vsel %vm4779, %v6187, 0.0
        %v6316 = vsel %vm4780, %v6188, 0.0
        %v6317 = vsel %vm4781, %v6189, 0.0
        %v6318 = vsel %vm4782, %v6190, 0.0
        %v6319 = vsel %vm4783, %v6191, 0.0
        %v6320 = vsel %vm4784, %v6192, 0.0
        %v6321 = vsel %vm4785, %v6193, 0.0
        %v6322 = vsel %vm4786, %v6194, 0.0
        %v6323 = vsel %vm4787, %v6195, 0.0
        %v6324 = vsel %vm4788, %v6196, 0.0
        %v6325 = vsel %vm4789, %v6197, 0.0
        %v6326 = vsel %vm4790, %v6198, 0.0
        %v6327 = vsel %vm4791, %v6199, 0.0
        %v6328 = vsel %vm4792, %v6200, 0.0
        %v6329 = vsel %vm4793, %v6201, 0.0
        %v6330 = vsel %vm4794, %v6202, 0.0
        %v6331 = vsel %vm4795, %v6203, 0.0
        %v6332 = vsel %vm4796, %v6204, 0.0
        %v6333 = vsel %vm4797, %v6205, 0.0
        %v6334 = vsel %vm4798, %v6206, 0.0
        %v6335 = vsel %vm4799, %v6207, 0.0
        %v6336 = vsel %vm4800, %v6208, 0.0
        %v6337 = vsel %vm4801, %v6209, 0.0
        %v6338 = vsel %vm4802, %v6210, 0.0
        %v6339 = vsel %vm4803, %v6211, 0.0
        %v6340 = vsel %vm4804, %v6212, 0.0
        %v6341 = vsel %vm4805, %v6213, 0.0
        %v6342 = vsel %vm4806, %v6214, 0.0
        %v6343 = vsel %vm4807, %v6215, 0.0
        %v6344 = vsel %vm4808, %v6216, 0.0
        %v6345 = vsel %vm4809, %v6217, 0.0
        %v6346 = vsel %vm4810, %v6218, 0.0
        %v6347 = vsel %vm4811, %v6219, 0.0
        %v6348 = vsel %vm4812, %v6220, 0.0
        %v6349 = vsel %vm4813, %v6221, 0.0
        %v6350 = vsel %vm4814, %v6222, 0.0
        %v6351 = vsel %vm4815, %v6223, 0.0
        %v6352 = vsel %vm4816, %v6224, 0.0
        %v6353 = vsel %vm4817, %v6225, 0.0
        %v6354 = vsel %vm4818, %v6226, 0.0
        %v6355 = vsel %vm4819, %v6227, 0.0
        %v6356 = vsel %vm4820, %v6228, 0.0
        %v6357 = vsel %vm4821, %v6229, 0.0
        %v6358 = vsel %vm4822, %v6230, 0.0
        %v6359 = vsel %vm4823, %v6231, 0.0
        %v6360 = vsel %vm4824, %v6232, 0.0
        %v6361 = vsel %vm4825, %v6233, 0.0
        %v6362 = vsel %vm4826, %v6234, 0.0
        %v6363 = vsel %vm4827, %v6235, 0.0
        %v6364 = vsel %vm4828, %v6236, 0.0
        %v6365 = vsel %vm4829, %v6237, 0.0
        %v6366 = vsel %vm4830, %v6238, 0.0
        %v6367 = vsel %vm4831, %v6239, 0.0
        %v6368 = vsel %vm4832, %v6240, 0.0
        %v6369 = vsel %vm4833, %v6241, 0.0
        %v6370 = vsel %vm4834, %v6242, 0.0
        %v6371 = vsel %vm4835, %v6243, 0.0
        %v6372 = vsel %vm4836, %v6244, 0.0
        %v6373 = vsel %vm4837, %v6245, 0.0
        %v6374 = vsel %vm4838, %v6246, 0.0
        %v6375 = vsel %vm4839, %v6247, 0.0
        %v6376 = vsel %vm4840, %v6248, 0.0
        %v6377 = vsel %vm4841, %v6249, 0.0
        %v6378 = vsel %vm4842, %v6250, 0.0
        %v6379 = vsel %vm4843, %v6251, 0.0
        %v6380 = vsel %vm4844, %v6252, 0.0
        %v6381 = vsel %vm4845, %v6253, 0.0
        %v6382 = vsel %vm4846, %v6254, 0.0
        %v6383 = vsel %vm4847, %v6255, 0.0
        %v6384 = vsel %vm4848, %v6256, 0.0
        %v6385 = vsel %vm4849, %v6257, 0.0
        %v6386 = vsel %vm4850, %v6258, 0.0
        %v6387 = vsel %vm4851, %v6259, 0.0
        %v6388 = vsel %vm4852, %v6260, 0.0
        %v6389 = vsel %vm2495, %v6261, 0.0
        %v6390 = vsel %vm2495, %v6262, 0.0
        %v6391 = vadd.f32 %v6389, %v6390
        %v6392 = vsel %vm2495, %v6263, 0.0
        %v6393 = vadd.f32 %v6391, %v6392
        %v6394 = vsel %vm2495, %v6264, 0.0
        %v6395 = vadd.f32 %v6393, %v6394
        %v6396 = vsel %vm2495, %v6265, 0.0
        %v6397 = vadd.f32 %v6395, %v6396
        %v6398 = vsel %vm2495, %v6266, 0.0
        %v6399 = vadd.f32 %v6397, %v6398
        %v6400 = vsel %vm2495, %v6267, 0.0
        %v6401 = vadd.f32 %v6399, %v6400
        %v6402 = vsel %vm2495, %v6268, 0.0
        %v6403 = vadd.f32 %v6401, %v6402
        %v6404 = vsel %vm2495, %v6269, 0.0
        %v6405 = vadd.f32 %v6403, %v6404
        %v6406 = vsel %vm2495, %v6270, 0.0
        %v6407 = vadd.f32 %v6405, %v6406
        %v6408 = vsel %vm2495, %v6271, 0.0
        %v6409 = vadd.f32 %v6407, %v6408
        %v6410 = vsel %vm2495, %v6272, 0.0
        %v6411 = vadd.f32 %v6409, %v6410
        %v6412 = vsel %vm2495, %v6273, 0.0
        %v6413 = vadd.f32 %v6411, %v6412
        %v6414 = vsel %vm2495, %v6274, 0.0
        %v6415 = vadd.f32 %v6413, %v6414
        %v6416 = vsel %vm2495, %v6275, 0.0
        %v6417 = vadd.f32 %v6415, %v6416
        %v6418 = vsel %vm2495, %v6276, 0.0
        %v6419 = vadd.f32 %v6417, %v6418
        %v6420 = vsel %vm2495, %v6277, 0.0
        %v6421 = vadd.f32 %v6419, %v6420
        %v6422 = vsel %vm2495, %v6278, 0.0
        %v6423 = vadd.f32 %v6421, %v6422
        %v6424 = vsel %vm2495, %v6279, 0.0
        %v6425 = vadd.f32 %v6423, %v6424
        %v6426 = vsel %vm2495, %v6280, 0.0
        %v6427 = vadd.f32 %v6425, %v6426
        %v6428 = vsel %vm2495, %v6281, 0.0
        %v6429 = vadd.f32 %v6427, %v6428
        %v6430 = vsel %vm2495, %v6282, 0.0
        %v6431 = vadd.f32 %v6429, %v6430
        %v6432 = vsel %vm2495, %v6283, 0.0
        %v6433 = vadd.f32 %v6431, %v6432
        %v6434 = vsel %vm2495, %v6284, 0.0
        %v6435 = vadd.f32 %v6433, %v6434
        %v6436 = vsel %vm2495, %v6285, 0.0
        %v6437 = vadd.f32 %v6435, %v6436
        %v6438 = vsel %vm2495, %v6286, 0.0
        %v6439 = vadd.f32 %v6437, %v6438
        %v6440 = vsel %vm2495, %v6287, 0.0
        %v6441 = vadd.f32 %v6439, %v6440
        %v6442 = vsel %vm2495, %v6288, 0.0
        %v6443 = vadd.f32 %v6441, %v6442
        %v6444 = vsel %vm2495, %v6289, 0.0
        %v6445 = vadd.f32 %v6443, %v6444
        %v6446 = vsel %vm2495, %v6290, 0.0
        %v6447 = vadd.f32 %v6445, %v6446
        %v6448 = vsel %vm2495, %v6291, 0.0
        %v6449 = vadd.f32 %v6447, %v6448
        %v6450 = vsel %vm2495, %v6292, 0.0
        %v6451 = vadd.f32 %v6449, %v6450
        %v6452 = vsel %vm2495, %v6293, 0.0
        %v6453 = vadd.f32 %v6451, %v6452
        %v6454 = vsel %vm2495, %v6294, 0.0
        %v6455 = vadd.f32 %v6453, %v6454
        %v6456 = vsel %vm2495, %v6295, 0.0
        %v6457 = vadd.f32 %v6455, %v6456
        %v6458 = vsel %vm2495, %v6296, 0.0
        %v6459 = vadd.f32 %v6457, %v6458
        %v6460 = vsel %vm2495, %v6297, 0.0
        %v6461 = vadd.f32 %v6459, %v6460
        %v6462 = vsel %vm2495, %v6298, 0.0
        %v6463 = vadd.f32 %v6461, %v6462
        %v6464 = vsel %vm2495, %v6299, 0.0
        %v6465 = vadd.f32 %v6463, %v6464
        %v6466 = vsel %vm2495, %v6300, 0.0
        %v6467 = vadd.f32 %v6465, %v6466
        %v6468 = vsel %vm2495, %v6301, 0.0
        %v6469 = vadd.f32 %v6467, %v6468
        %v6470 = vsel %vm2495, %v6302, 0.0
        %v6471 = vadd.f32 %v6469, %v6470
        %v6472 = vsel %vm2495, %v6303, 0.0
        %v6473 = vadd.f32 %v6471, %v6472
        %v6474 = vsel %vm2495, %v6304, 0.0
        %v6475 = vadd.f32 %v6473, %v6474
        %v6476 = vsel %vm2495, %v6305, 0.0
        %v6477 = vadd.f32 %v6475, %v6476
        %v6478 = vsel %vm2495, %v6306, 0.0
        %v6479 = vadd.f32 %v6477, %v6478
        %v6480 = vsel %vm2495, %v6307, 0.0
        %v6481 = vadd.f32 %v6479, %v6480
        %v6482 = vsel %vm2495, %v6308, 0.0
        %v6483 = vadd.f32 %v6481, %v6482
        %v6484 = vsel %vm2495, %v6309, 0.0
        %v6485 = vadd.f32 %v6483, %v6484
        %v6486 = vsel %vm2495, %v6310, 0.0
        %v6487 = vadd.f32 %v6485, %v6486
        %v6488 = vsel %vm2495, %v6311, 0.0
        %v6489 = vadd.f32 %v6487, %v6488
        %v6490 = vsel %vm2495, %v6312, 0.0
        %v6491 = vadd.f32 %v6489, %v6490
        %v6492 = vsel %vm2495, %v6313, 0.0
        %v6493 = vadd.f32 %v6491, %v6492
        %v6494 = vsel %vm2495, %v6314, 0.0
        %v6495 = vadd.f32 %v6493, %v6494
        %v6496 = vsel %vm2495, %v6315, 0.0
        %v6497 = vadd.f32 %v6495, %v6496
        %v6498 = vsel %vm2495, %v6316, 0.0
        %v6499 = vadd.f32 %v6497, %v6498
        %v6500 = vsel %vm2495, %v6317, 0.0
        %v6501 = vadd.f32 %v6499, %v6500
        %v6502 = vsel %vm2495, %v6318, 0.0
        %v6503 = vadd.f32 %v6501, %v6502
        %v6504 = vsel %vm2495, %v6319, 0.0
        %v6505 = vadd.f32 %v6503, %v6504
        %v6506 = vsel %vm2495, %v6320, 0.0
        %v6507 = vadd.f32 %v6505, %v6506
        %v6508 = vsel %vm2495, %v6321, 0.0
        %v6509 = vadd.f32 %v6507, %v6508
        %v6510 = vsel %vm2495, %v6322, 0.0
        %v6511 = vadd.f32 %v6509, %v6510
        %v6512 = vsel %vm2495, %v6323, 0.0
        %v6513 = vadd.f32 %v6511, %v6512
        %v6514 = vsel %vm2495, %v6324, 0.0
        %v6515 = vadd.f32 %v6513, %v6514
        %v6516 = vsel %vm2495, %v6325, 0.0
        %v6517 = vadd.f32 %v6515, %v6516
        %v6518 = vsel %vm2495, %v6326, 0.0
        %v6519 = vadd.f32 %v6517, %v6518
        %v6520 = vsel %vm2495, %v6327, 0.0
        %v6521 = vadd.f32 %v6519, %v6520
        %v6522 = vsel %vm2495, %v6328, 0.0
        %v6523 = vadd.f32 %v6521, %v6522
        %v6524 = vsel %vm2495, %v6329, 0.0
        %v6525 = vadd.f32 %v6523, %v6524
        %v6526 = vsel %vm2495, %v6330, 0.0
        %v6527 = vadd.f32 %v6525, %v6526
        %v6528 = vsel %vm2495, %v6331, 0.0
        %v6529 = vadd.f32 %v6527, %v6528
        %v6530 = vsel %vm2495, %v6332, 0.0
        %v6531 = vadd.f32 %v6529, %v6530
        %v6532 = vsel %vm2495, %v6333, 0.0
        %v6533 = vadd.f32 %v6531, %v6532
        %v6534 = vsel %vm2495, %v6334, 0.0
        %v6535 = vadd.f32 %v6533, %v6534
        %v6536 = vsel %vm2495, %v6335, 0.0
        %v6537 = vadd.f32 %v6535, %v6536
        %v6538 = vsel %vm2495, %v6336, 0.0
        %v6539 = vadd.f32 %v6537, %v6538
        %v6540 = vsel %vm2495, %v6337, 0.0
        %v6541 = vadd.f32 %v6539, %v6540
        %v6542 = vsel %vm2495, %v6338, 0.0
        %v6543 = vadd.f32 %v6541, %v6542
        %v6544 = vsel %vm2495, %v6339, 0.0
        %v6545 = vadd.f32 %v6543, %v6544
        %v6546 = vsel %vm2495, %v6340, 0.0
        %v6547 = vadd.f32 %v6545, %v6546
        %v6548 = vsel %vm2495, %v6341, 0.0
        %v6549 = vadd.f32 %v6547, %v6548
        %v6550 = vsel %vm2495, %v6342, 0.0
        %v6551 = vadd.f32 %v6549, %v6550
        %v6552 = vsel %vm2495, %v6343, 0.0
        %v6553 = vadd.f32 %v6551, %v6552
        %v6554 = vsel %vm2495, %v6344, 0.0
        %v6555 = vadd.f32 %v6553, %v6554
        %v6556 = vsel %vm2495, %v6345, 0.0
        %v6557 = vadd.f32 %v6555, %v6556
        %v6558 = vsel %vm2495, %v6346, 0.0
        %v6559 = vadd.f32 %v6557, %v6558
        %v6560 = vsel %vm2495, %v6347, 0.0
        %v6561 = vadd.f32 %v6559, %v6560
        %v6562 = vsel %vm2495, %v6348, 0.0
        %v6563 = vadd.f32 %v6561, %v6562
        %v6564 = vsel %vm2495, %v6349, 0.0
        %v6565 = vadd.f32 %v6563, %v6564
        %v6566 = vsel %vm2495, %v6350, 0.0
        %v6567 = vadd.f32 %v6565, %v6566
        %v6568 = vsel %vm2495, %v6351, 0.0
        %v6569 = vadd.f32 %v6567, %v6568
        %v6570 = vsel %vm2495, %v6352, 0.0
        %v6571 = vadd.f32 %v6569, %v6570
        %v6572 = vsel %vm2495, %v6353, 0.0
        %v6573 = vadd.f32 %v6571, %v6572
        %v6574 = vsel %vm2495, %v6354, 0.0
        %v6575 = vadd.f32 %v6573, %v6574
        %v6576 = vsel %vm2495, %v6355, 0.0
        %v6577 = vadd.f32 %v6575, %v6576
        %v6578 = vsel %vm2495, %v6356, 0.0
        %v6579 = vadd.f32 %v6577, %v6578
        %v6580 = vsel %vm2495, %v6357, 0.0
        %v6581 = vadd.f32 %v6579, %v6580
        %v6582 = vsel %vm2495, %v6358, 0.0
        %v6583 = vadd.f32 %v6581, %v6582
        %v6584 = vsel %vm2495, %v6359, 0.0
        %v6585 = vadd.f32 %v6583, %v6584
        %v6586 = vsel %vm2495, %v6360, 0.0
        %v6587 = vadd.f32 %v6585, %v6586
        %v6588 = vsel %vm2495, %v6361, 0.0
        %v6589 = vadd.f32 %v6587, %v6588
        %v6590 = vsel %vm2495, %v6362, 0.0
        %v6591 = vadd.f32 %v6589, %v6590
        %v6592 = vsel %vm2495, %v6363, 0.0
        %v6593 = vadd.f32 %v6591, %v6592
        %v6594 = vsel %vm2495, %v6364, 0.0
        %v6595 = vadd.f32 %v6593, %v6594
        %v6596 = vsel %vm2495, %v6365, 0.0
        %v6597 = vadd.f32 %v6595, %v6596
        %v6598 = vsel %vm2495, %v6366, 0.0
        %v6599 = vadd.f32 %v6597, %v6598
        %v6600 = vsel %vm2495, %v6367, 0.0
        %v6601 = vadd.f32 %v6599, %v6600
        %v6602 = vsel %vm2495, %v6368, 0.0
        %v6603 = vadd.f32 %v6601, %v6602
        %v6604 = vsel %vm2495, %v6369, 0.0
        %v6605 = vadd.f32 %v6603, %v6604
        %v6606 = vsel %vm2495, %v6370, 0.0
        %v6607 = vadd.f32 %v6605, %v6606
        %v6608 = vsel %vm2495, %v6371, 0.0
        %v6609 = vadd.f32 %v6607, %v6608
        %v6610 = vsel %vm2495, %v6372, 0.0
        %v6611 = vadd.f32 %v6609, %v6610
        %v6612 = vsel %vm2495, %v6373, 0.0
        %v6613 = vadd.f32 %v6611, %v6612
        %v6614 = vsel %vm2495, %v6374, 0.0
        %v6615 = vadd.f32 %v6613, %v6614
        %v6616 = vsel %vm2495, %v6375, 0.0
        %v6617 = vadd.f32 %v6615, %v6616
        %v6618 = vsel %vm2495, %v6376, 0.0
        %v6619 = vadd.f32 %v6617, %v6618
        %v6620 = vsel %vm2495, %v6377, 0.0
        %v6621 = vadd.f32 %v6619, %v6620
        %v6622 = vsel %vm2495, %v6378, 0.0
        %v6623 = vadd.f32 %v6621, %v6622
        %v6624 = vsel %vm2495, %v6379, 0.0
        %v6625 = vadd.f32 %v6623, %v6624
        %v6626 = vsel %vm2495, %v6380, 0.0
        %v6627 = vadd.f32 %v6625, %v6626
        %v6628 = vsel %vm2495, %v6381, 0.0
        %v6629 = vadd.f32 %v6627, %v6628
        %v6630 = vsel %vm2495, %v6382, 0.0
        %v6631 = vadd.f32 %v6629, %v6630
        %v6632 = vsel %vm2495, %v6383, 0.0
        %v6633 = vadd.f32 %v6631, %v6632
        %v6634 = vsel %vm2495, %v6384, 0.0
        %v6635 = vadd.f32 %v6633, %v6634
        %v6636 = vsel %vm2495, %v6385, 0.0
        %v6637 = vadd.f32 %v6635, %v6636
        %v6638 = vsel %vm2495, %v6386, 0.0
        %v6639 = vadd.f32 %v6637, %v6638
        %v6640 = vsel %vm2495, %v6387, 0.0
        %v6641 = vadd.f32 %v6639, %v6640
        %v6642 = vsel %vm2495, %v6388, 0.0
        %v6643 = vadd.f32 %v6641, %v6642
        %6644 = vadd.xlane.f32.xlu0 %v6643
        %v6645 = vpop.xlane.xlu0 %6644
        %v6646 = vrot.slane %v6645, 4
        %v6647 = vadd.f32 %v6645, %v6646
        %v6648 = vrot.slane %v6647, 2
        %v6649 = vadd.f32 %v6647, %v6648
        %v6650 = vrot.slane %v6649, 1
        %v6651 = vadd.f32 %v6649, %v6650
        %s6652 = vtos %v6651
        %v6653 = vsel %vm4725, 1, 0
        %v6654 = vsel %vm4726, 1, 0
        %v6655 = vsel %vm4727, 1, 0
        %v6656 = vsel %vm4728, 1, 0
        %v6657 = vsel %vm4729, 1, 0
        %v6658 = vsel %vm4730, 1, 0
        %v6659 = vsel %vm4731, 1, 0
        %v6660 = vsel %vm4732, 1, 0
        %v6661 = vsel %vm4733, 1, 0
        %v6662 = vsel %vm4734, 1, 0
        %v6663 = vsel %vm4735, 1, 0
        %v6664 = vsel %vm4736, 1, 0
        %v6665 = vsel %vm4737, 1, 0
        %v6666 = vsel %vm4738, 1, 0
        %v6667 = vsel %vm4739, 1, 0
        %v6668 = vsel %vm4740, 1, 0
        %v6669 = vsel %vm4741, 1, 0
        %v6670 = vsel %vm4742, 1, 0
        %v6671 = vsel %vm4743, 1, 0
        %v6672 = vsel %vm4744, 1, 0
        %v6673 = vsel %vm4745, 1, 0
        %v6674 = vsel %vm4746, 1, 0
        %v6675 = vsel %vm4747, 1, 0
        %v6676 = vsel %vm4748, 1, 0
        %v6677 = vsel %vm4749, 1, 0
        %v6678 = vsel %vm4750, 1, 0
        %v6679 = vsel %vm4751, 1, 0
        %v6680 = vsel %vm4752, 1, 0
        %v6681 = vsel %vm4753, 1, 0
        %v6682 = vsel %vm4754, 1, 0
        %v6683 = vsel %vm4755, 1, 0
        %v6684 = vsel %vm4756, 1, 0
        %v6685 = vsel %vm4757, 1, 0
        %v6686 = vsel %vm4758, 1, 0
        %v6687 = vsel %vm4759, 1, 0
        %v6688 = vsel %vm4760, 1, 0
        %v6689 = vsel %vm4761, 1, 0
        %v6690 = vsel %vm4762, 1, 0
        %v6691 = vsel %vm4763, 1, 0
        %v6692 = vsel %vm4764, 1, 0
        %v6693 = vsel %vm4765, 1, 0
        %v6694 = vsel %vm4766, 1, 0
        %v6695 = vsel %vm4767, 1, 0
        %v6696 = vsel %vm4768, 1, 0
        %v6697 = vsel %vm4769, 1, 0
        %v6698 = vsel %vm4770, 1, 0
        %v6699 = vsel %vm4771, 1, 0
        %v6700 = vsel %vm4772, 1, 0
        %v6701 = vsel %vm4773, 1, 0
        %v6702 = vsel %vm4774, 1, 0
        %v6703 = vsel %vm4775, 1, 0
        %v6704 = vsel %vm4776, 1, 0
        %v6705 = vsel %vm4777, 1, 0
        %v6706 = vsel %vm4778, 1, 0
        %v6707 = vsel %vm4779, 1, 0
        %v6708 = vsel %vm4780, 1, 0
        %v6709 = vsel %vm4781, 1, 0
        %v6710 = vsel %vm4782, 1, 0
        %v6711 = vsel %vm4783, 1, 0
        %v6712 = vsel %vm4784, 1, 0
        %v6713 = vsel %vm4785, 1, 0
        %v6714 = vsel %vm4786, 1, 0
        %v6715 = vsel %vm4787, 1, 0
        %v6716 = vsel %vm4788, 1, 0
        %v6717 = vsel %vm4789, 1, 0
        %v6718 = vsel %vm4790, 1, 0
        %v6719 = vsel %vm4791, 1, 0
        %v6720 = vsel %vm4792, 1, 0
        %v6721 = vsel %vm4793, 1, 0
        %v6722 = vsel %vm4794, 1, 0
        %v6723 = vsel %vm4795, 1, 0
        %v6724 = vsel %vm4796, 1, 0
        %v6725 = vsel %vm4797, 1, 0
        %v6726 = vsel %vm4798, 1, 0
        %v6727 = vsel %vm4799, 1, 0
        %v6728 = vsel %vm4800, 1, 0
        %v6729 = vsel %vm4801, 1, 0
        %v6730 = vsel %vm4802, 1, 0
        %v6731 = vsel %vm4803, 1, 0
        %v6732 = vsel %vm4804, 1, 0
        %v6733 = vsel %vm4805, 1, 0
        %v6734 = vsel %vm4806, 1, 0
        %v6735 = vsel %vm4807, 1, 0
        %v6736 = vsel %vm4808, 1, 0
        %v6737 = vsel %vm4809, 1, 0
        %v6738 = vsel %vm4810, 1, 0
        %v6739 = vsel %vm4811, 1, 0
        %v6740 = vsel %vm4812, 1, 0
        %v6741 = vsel %vm4813, 1, 0
        %v6742 = vsel %vm4814, 1, 0
        %v6743 = vsel %vm4815, 1, 0
        %v6744 = vsel %vm4816, 1, 0
        %v6745 = vsel %vm4817, 1, 0
        %v6746 = vsel %vm4818, 1, 0
        %v6747 = vsel %vm4819, 1, 0
        %v6748 = vsel %vm4820, 1, 0
        %v6749 = vsel %vm4821, 1, 0
        %v6750 = vsel %vm4822, 1, 0
        %v6751 = vsel %vm4823, 1, 0
        %v6752 = vsel %vm4824, 1, 0
        %v6753 = vsel %vm4825, 1, 0
        %v6754 = vsel %vm4826, 1, 0
        %v6755 = vsel %vm4827, 1, 0
        %v6756 = vsel %vm4828, 1, 0
        %v6757 = vsel %vm4829, 1, 0
        %v6758 = vsel %vm4830, 1, 0
        %v6759 = vsel %vm4831, 1, 0
        %v6760 = vsel %vm4832, 1, 0
        %v6761 = vsel %vm4833, 1, 0
        %v6762 = vsel %vm4834, 1, 0
        %v6763 = vsel %vm4835, 1, 0
        %v6764 = vsel %vm4836, 1, 0
        %v6765 = vsel %vm4837, 1, 0
        %v6766 = vsel %vm4838, 1, 0
        %v6767 = vsel %vm4839, 1, 0
        %v6768 = vsel %vm4840, 1, 0
        %v6769 = vsel %vm4841, 1, 0
        %v6770 = vsel %vm4842, 1, 0
        %v6771 = vsel %vm4843, 1, 0
        %v6772 = vsel %vm4844, 1, 0
        %v6773 = vsel %vm4845, 1, 0
        %v6774 = vsel %vm4846, 1, 0
        %v6775 = vsel %vm4847, 1, 0
        %v6776 = vsel %vm4848, 1, 0
        %v6777 = vsel %vm4849, 1, 0
        %v6778 = vsel %vm4850, 1, 0
        %v6779 = vsel %vm4851, 1, 0
        %v6780 = vsel %vm4852, 1, 0
        %v6781 = vcvt.s32.f32 %v6653
        %v6782 = vcvt.s32.f32 %v6654
        %v6783 = vcvt.s32.f32 %v6655
        %v6784 = vcvt.s32.f32 %v6656
        %v6785 = vcvt.s32.f32 %v6657
        %v6786 = vcvt.s32.f32 %v6658
        %v6787 = vcvt.s32.f32 %v6659
        %v6788 = vcvt.s32.f32 %v6660
        %v6789 = vcvt.s32.f32 %v6661
        %v6790 = vcvt.s32.f32 %v6662
        %v6791 = vcvt.s32.f32 %v6663
        %v6792 = vcvt.s32.f32 %v6664
        %v6793 = vcvt.s32.f32 %v6665
        %v6794 = vcvt.s32.f32 %v6666
        %v6795 = vcvt.s32.f32 %v6667
        %v6796 = vcvt.s32.f32 %v6668
        %v6797 = vcvt.s32.f32 %v6669
        %v6798 = vcvt.s32.f32 %v6670
        %v6799 = vcvt.s32.f32 %v6671
        %v6800 = vcvt.s32.f32 %v6672
        %v6801 = vcvt.s32.f32 %v6673
        %v6802 = vcvt.s32.f32 %v6674
        %v6803 = vcvt.s32.f32 %v6675
        %v6804 = vcvt.s32.f32 %v6676
        %v6805 = vcvt.s32.f32 %v6677
        %v6806 = vcvt.s32.f32 %v6678
        %v6807 = vcvt.s32.f32 %v6679
        %v6808 = vcvt.s32.f32 %v6680
        %v6809 = vcvt.s32.f32 %v6681
        %v6810 = vcvt.s32.f32 %v6682
        %v6811 = vcvt.s32.f32 %v6683
        %v6812 = vcvt.s32.f32 %v6684
        %v6813 = vcvt.s32.f32 %v6685
        %v6814 = vcvt.s32.f32 %v6686
        %v6815 = vcvt.s32.f32 %v6687
        %v6816 = vcvt.s32.f32 %v6688
        %v6817 = vcvt.s32.f32 %v6689
        %v6818 = vcvt.s32.f32 %v6690
        %v6819 = vcvt.s32.f32 %v6691
        %v6820 = vcvt.s32.f32 %v6692
        %v6821 = vcvt.s32.f32 %v6693
        %v6822 = vcvt.s32.f32 %v6694
        %v6823 = vcvt.s32.f32 %v6695
        %v6824 = vcvt.s32.f32 %v6696
        %v6825 = vcvt.s32.f32 %v6697
        %v6826 = vcvt.s32.f32 %v6698
        %v6827 = vcvt.s32.f32 %v6699
        %v6828 = vcvt.s32.f32 %v6700
        %v6829 = vcvt.s32.f32 %v6701
        %v6830 = vcvt.s32.f32 %v6702
        %v6831 = vcvt.s32.f32 %v6703
        %v6832 = vcvt.s32.f32 %v6704
        %v6833 = vcvt.s32.f32 %v6705
        %v6834 = vcvt.s32.f32 %v6706
        %v6835 = vcvt.s32.f32 %v6707
        %v6836 = vcvt.s32.f32 %v6708
        %v6837 = vcvt.s32.f32 %v6709
        %v6838 = vcvt.s32.f32 %v6710
        %v6839 = vcvt.s32.f32 %v6711
        %v6840 = vcvt.s32.f32 %v6712
        %v6841 = vcvt.s32.f32 %v6713
        %v6842 = vcvt.s32.f32 %v6714
        %v6843 = vcvt.s32.f32 %v6715
        %v6844 = vcvt.s32.f32 %v6716
        %v6845 = vcvt.s32.f32 %v6717
        %v6846 = vcvt.s32.f32 %v6718
        %v6847 = vcvt.s32.f32 %v6719
        %v6848 = vcvt.s32.f32 %v6720
        %v6849 = vcvt.s32.f32 %v6721
        %v6850 = vcvt.s32.f32 %v6722
        %v6851 = vcvt.s32.f32 %v6723
        %v6852 = vcvt.s32.f32 %v6724
        %v6853 = vcvt.s32.f32 %v6725
        %v6854 = vcvt.s32.f32 %v6726
        %v6855 = vcvt.s32.f32 %v6727
        %v6856 = vcvt.s32.f32 %v6728
        %v6857 = vcvt.s32.f32 %v6729
        %v6858 = vcvt.s32.f32 %v6730
        %v6859 = vcvt.s32.f32 %v6731
        %v6860 = vcvt.s32.f32 %v6732
        %v6861 = vcvt.s32.f32 %v6733
        %v6862 = vcvt.s32.f32 %v6734
        %v6863 = vcvt.s32.f32 %v6735
        %v6864 = vcvt.s32.f32 %v6736
        %v6865 = vcvt.s32.f32 %v6737
        %v6866 = vcvt.s32.f32 %v6738
        %v6867 = vcvt.s32.f32 %v6739
        %v6868 = vcvt.s32.f32 %v6740
        %v6869 = vcvt.s32.f32 %v6741
        %v6870 = vcvt.s32.f32 %v6742
        %v6871 = vcvt.s32.f32 %v6743
        %v6872 = vcvt.s32.f32 %v6744
        %v6873 = vcvt.s32.f32 %v6745
        %v6874 = vcvt.s32.f32 %v6746
        %v6875 = vcvt.s32.f32 %v6747
        %v6876 = vcvt.s32.f32 %v6748
        %v6877 = vcvt.s32.f32 %v6749
        %v6878 = vcvt.s32.f32 %v6750
        %v6879 = vcvt.s32.f32 %v6751
        %v6880 = vcvt.s32.f32 %v6752
        %v6881 = vcvt.s32.f32 %v6753
        %v6882 = vcvt.s32.f32 %v6754
        %v6883 = vcvt.s32.f32 %v6755
        %v6884 = vcvt.s32.f32 %v6756
        %v6885 = vcvt.s32.f32 %v6757
        %v6886 = vcvt.s32.f32 %v6758
        %v6887 = vcvt.s32.f32 %v6759
        %v6888 = vcvt.s32.f32 %v6760
        %v6889 = vcvt.s32.f32 %v6761
        %v6890 = vcvt.s32.f32 %v6762
        %v6891 = vcvt.s32.f32 %v6763
        %v6892 = vcvt.s32.f32 %v6764
        %v6893 = vcvt.s32.f32 %v6765
        %v6894 = vcvt.s32.f32 %v6766
        %v6895 = vcvt.s32.f32 %v6767
        %v6896 = vcvt.s32.f32 %v6768
        %v6897 = vcvt.s32.f32 %v6769
        %v6898 = vcvt.s32.f32 %v6770
        %v6899 = vcvt.s32.f32 %v6771
        %v6900 = vcvt.s32.f32 %v6772
        %v6901 = vcvt.s32.f32 %v6773
        %v6902 = vcvt.s32.f32 %v6774
        %v6903 = vcvt.s32.f32 %v6775
        %v6904 = vcvt.s32.f32 %v6776
        %v6905 = vcvt.s32.f32 %v6777
        %v6906 = vcvt.s32.f32 %v6778
        %v6907 = vcvt.s32.f32 %v6779
        %v6908 = vcvt.s32.f32 %v6780
        %v6909 = vsel %vm2495, %v6781, 0.0
        %v6910 = vsel %vm2495, %v6782, 0.0
        %v6911 = vadd.f32 %v6909, %v6910
        %v6912 = vsel %vm2495, %v6783, 0.0
        %v6913 = vadd.f32 %v6911, %v6912
        %v6914 = vsel %vm2495, %v6784, 0.0
        %v6915 = vadd.f32 %v6913, %v6914
        %v6916 = vsel %vm2495, %v6785, 0.0
        %v6917 = vadd.f32 %v6915, %v6916
        %v6918 = vsel %vm2495, %v6786, 0.0
        %v6919 = vadd.f32 %v6917, %v6918
        %v6920 = vsel %vm2495, %v6787, 0.0
        %v6921 = vadd.f32 %v6919, %v6920
        %v6922 = vsel %vm2495, %v6788, 0.0
        %v6923 = vadd.f32 %v6921, %v6922
        %v6924 = vsel %vm2495, %v6789, 0.0
        %v6925 = vadd.f32 %v6923, %v6924
        %v6926 = vsel %vm2495, %v6790, 0.0
        %v6927 = vadd.f32 %v6925, %v6926
        %v6928 = vsel %vm2495, %v6791, 0.0
        %v6929 = vadd.f32 %v6927, %v6928
        %v6930 = vsel %vm2495, %v6792, 0.0
        %v6931 = vadd.f32 %v6929, %v6930
        %v6932 = vsel %vm2495, %v6793, 0.0
        %v6933 = vadd.f32 %v6931, %v6932
        %v6934 = vsel %vm2495, %v6794, 0.0
        %v6935 = vadd.f32 %v6933, %v6934
        %v6936 = vsel %vm2495, %v6795, 0.0
        %v6937 = vadd.f32 %v6935, %v6936
        %v6938 = vsel %vm2495, %v6796, 0.0
        %v6939 = vadd.f32 %v6937, %v6938
        %v6940 = vsel %vm2495, %v6797, 0.0
        %v6941 = vadd.f32 %v6939, %v6940
        %v6942 = vsel %vm2495, %v6798, 0.0
        %v6943 = vadd.f32 %v6941, %v6942
        %v6944 = vsel %vm2495, %v6799, 0.0
        %v6945 = vadd.f32 %v6943, %v6944
        %v6946 = vsel %vm2495, %v6800, 0.0
        %v6947 = vadd.f32 %v6945, %v6946
        %v6948 = vsel %vm2495, %v6801, 0.0
        %v6949 = vadd.f32 %v6947, %v6948
        %v6950 = vsel %vm2495, %v6802, 0.0
        %v6951 = vadd.f32 %v6949, %v6950
        %v6952 = vsel %vm2495, %v6803, 0.0
        %v6953 = vadd.f32 %v6951, %v6952
        %v6954 = vsel %vm2495, %v6804, 0.0
        %v6955 = vadd.f32 %v6953, %v6954
        %v6956 = vsel %vm2495, %v6805, 0.0
        %v6957 = vadd.f32 %v6955, %v6956
        %v6958 = vsel %vm2495, %v6806, 0.0
        %v6959 = vadd.f32 %v6957, %v6958
        %v6960 = vsel %vm2495, %v6807, 0.0
        %v6961 = vadd.f32 %v6959, %v6960
        %v6962 = vsel %vm2495, %v6808, 0.0
        %v6963 = vadd.f32 %v6961, %v6962
        %v6964 = vsel %vm2495, %v6809, 0.0
        %v6965 = vadd.f32 %v6963, %v6964
        %v6966 = vsel %vm2495, %v6810, 0.0
        %v6967 = vadd.f32 %v6965, %v6966
        %v6968 = vsel %vm2495, %v6811, 0.0
        %v6969 = vadd.f32 %v6967, %v6968
        %v6970 = vsel %vm2495, %v6812, 0.0
        %v6971 = vadd.f32 %v6969, %v6970
        %v6972 = vsel %vm2495, %v6813, 0.0
        %v6973 = vadd.f32 %v6971, %v6972
        %v6974 = vsel %vm2495, %v6814, 0.0
        %v6975 = vadd.f32 %v6973, %v6974
        %v6976 = vsel %vm2495, %v6815, 0.0
        %v6977 = vadd.f32 %v6975, %v6976
        %v6978 = vsel %vm2495, %v6816, 0.0
        %v6979 = vadd.f32 %v6977, %v6978
        %v6980 = vsel %vm2495, %v6817, 0.0
        %v6981 = vadd.f32 %v6979, %v6980
        %v6982 = vsel %vm2495, %v6818, 0.0
        %v6983 = vadd.f32 %v6981, %v6982
        %v6984 = vsel %vm2495, %v6819, 0.0
        %v6985 = vadd.f32 %v6983, %v6984
        %v6986 = vsel %vm2495, %v6820, 0.0
        %v6987 = vadd.f32 %v6985, %v6986
        %v6988 = vsel %vm2495, %v6821, 0.0
        %v6989 = vadd.f32 %v6987, %v6988
        %v6990 = vsel %vm2495, %v6822, 0.0
        %v6991 = vadd.f32 %v6989, %v6990
        %v6992 = vsel %vm2495, %v6823, 0.0
        %v6993 = vadd.f32 %v6991, %v6992
        %v6994 = vsel %vm2495, %v6824, 0.0
        %v6995 = vadd.f32 %v6993, %v6994
        %v6996 = vsel %vm2495, %v6825, 0.0
        %v6997 = vadd.f32 %v6995, %v6996
        %v6998 = vsel %vm2495, %v6826, 0.0
        %v6999 = vadd.f32 %v6997, %v6998
        %v7000 = vsel %vm2495, %v6827, 0.0
        %v7001 = vadd.f32 %v6999, %v7000
        %v7002 = vsel %vm2495, %v6828, 0.0
        %v7003 = vadd.f32 %v7001, %v7002
        %v7004 = vsel %vm2495, %v6829, 0.0
        %v7005 = vadd.f32 %v7003, %v7004
        %v7006 = vsel %vm2495, %v6830, 0.0
        %v7007 = vadd.f32 %v7005, %v7006
        %v7008 = vsel %vm2495, %v6831, 0.0
        %v7009 = vadd.f32 %v7007, %v7008
        %v7010 = vsel %vm2495, %v6832, 0.0
        %v7011 = vadd.f32 %v7009, %v7010
        %v7012 = vsel %vm2495, %v6833, 0.0
        %v7013 = vadd.f32 %v7011, %v7012
        %v7014 = vsel %vm2495, %v6834, 0.0
        %v7015 = vadd.f32 %v7013, %v7014
        %v7016 = vsel %vm2495, %v6835, 0.0
        %v7017 = vadd.f32 %v7015, %v7016
        %v7018 = vsel %vm2495, %v6836, 0.0
        %v7019 = vadd.f32 %v7017, %v7018
        %v7020 = vsel %vm2495, %v6837, 0.0
        %v7021 = vadd.f32 %v7019, %v7020
        %v7022 = vsel %vm2495, %v6838, 0.0
        %v7023 = vadd.f32 %v7021, %v7022
        %v7024 = vsel %vm2495, %v6839, 0.0
        %v7025 = vadd.f32 %v7023, %v7024
        %v7026 = vsel %vm2495, %v6840, 0.0
        %v7027 = vadd.f32 %v7025, %v7026
        %v7028 = vsel %vm2495, %v6841, 0.0
        %v7029 = vadd.f32 %v7027, %v7028
        %v7030 = vsel %vm2495, %v6842, 0.0
        %v7031 = vadd.f32 %v7029, %v7030
        %v7032 = vsel %vm2495, %v6843, 0.0
        %v7033 = vadd.f32 %v7031, %v7032
        %v7034 = vsel %vm2495, %v6844, 0.0
        %v7035 = vadd.f32 %v7033, %v7034
        %v7036 = vsel %vm2495, %v6845, 0.0
        %v7037 = vadd.f32 %v7035, %v7036
        %v7038 = vsel %vm2495, %v6846, 0.0
        %v7039 = vadd.f32 %v7037, %v7038
        %v7040 = vsel %vm2495, %v6847, 0.0
        %v7041 = vadd.f32 %v7039, %v7040
        %v7042 = vsel %vm2495, %v6848, 0.0
        %v7043 = vadd.f32 %v7041, %v7042
        %v7044 = vsel %vm2495, %v6849, 0.0
        %v7045 = vadd.f32 %v7043, %v7044
        %v7046 = vsel %vm2495, %v6850, 0.0
        %v7047 = vadd.f32 %v7045, %v7046
        %v7048 = vsel %vm2495, %v6851, 0.0
        %v7049 = vadd.f32 %v7047, %v7048
        %v7050 = vsel %vm2495, %v6852, 0.0
        %v7051 = vadd.f32 %v7049, %v7050
        %v7052 = vsel %vm2495, %v6853, 0.0
        %v7053 = vadd.f32 %v7051, %v7052
        %v7054 = vsel %vm2495, %v6854, 0.0
        %v7055 = vadd.f32 %v7053, %v7054
        %v7056 = vsel %vm2495, %v6855, 0.0
        %v7057 = vadd.f32 %v7055, %v7056
        %v7058 = vsel %vm2495, %v6856, 0.0
        %v7059 = vadd.f32 %v7057, %v7058
        %v7060 = vsel %vm2495, %v6857, 0.0
        %v7061 = vadd.f32 %v7059, %v7060
        %v7062 = vsel %vm2495, %v6858, 0.0
        %v7063 = vadd.f32 %v7061, %v7062
        %v7064 = vsel %vm2495, %v6859, 0.0
        %v7065 = vadd.f32 %v7063, %v7064
        %v7066 = vsel %vm2495, %v6860, 0.0
        %v7067 = vadd.f32 %v7065, %v7066
        %v7068 = vsel %vm2495, %v6861, 0.0
        %v7069 = vadd.f32 %v7067, %v7068
        %v7070 = vsel %vm2495, %v6862, 0.0
        %v7071 = vadd.f32 %v7069, %v7070
        %v7072 = vsel %vm2495, %v6863, 0.0
        %v7073 = vadd.f32 %v7071, %v7072
        %v7074 = vsel %vm2495, %v6864, 0.0
        %v7075 = vadd.f32 %v7073, %v7074
        %v7076 = vsel %vm2495, %v6865, 0.0
        %v7077 = vadd.f32 %v7075, %v7076
        %v7078 = vsel %vm2495, %v6866, 0.0
        %v7079 = vadd.f32 %v7077, %v7078
        %v7080 = vsel %vm2495, %v6867, 0.0
        %v7081 = vadd.f32 %v7079, %v7080
        %v7082 = vsel %vm2495, %v6868, 0.0
        %v7083 = vadd.f32 %v7081, %v7082
        %v7084 = vsel %vm2495, %v6869, 0.0
        %v7085 = vadd.f32 %v7083, %v7084
        %v7086 = vsel %vm2495, %v6870, 0.0
        %v7087 = vadd.f32 %v7085, %v7086
        %v7088 = vsel %vm2495, %v6871, 0.0
        %v7089 = vadd.f32 %v7087, %v7088
        %v7090 = vsel %vm2495, %v6872, 0.0
        %v7091 = vadd.f32 %v7089, %v7090
        %v7092 = vsel %vm2495, %v6873, 0.0
        %v7093 = vadd.f32 %v7091, %v7092
        %v7094 = vsel %vm2495, %v6874, 0.0
        %v7095 = vadd.f32 %v7093, %v7094
        %v7096 = vsel %vm2495, %v6875, 0.0
        %v7097 = vadd.f32 %v7095, %v7096
        %v7098 = vsel %vm2495, %v6876, 0.0
        %v7099 = vadd.f32 %v7097, %v7098
        %v7100 = vsel %vm2495, %v6877, 0.0
        %v7101 = vadd.f32 %v7099, %v7100
        %v7102 = vsel %vm2495, %v6878, 0.0
        %v7103 = vadd.f32 %v7101, %v7102
        %v7104 = vsel %vm2495, %v6879, 0.0
        %v7105 = vadd.f32 %v7103, %v7104
        %v7106 = vsel %vm2495, %v6880, 0.0
        %v7107 = vadd.f32 %v7105, %v7106
        %v7108 = vsel %vm2495, %v6881, 0.0
        %v7109 = vadd.f32 %v7107, %v7108
        %v7110 = vsel %vm2495, %v6882, 0.0
        %v7111 = vadd.f32 %v7109, %v7110
        %v7112 = vsel %vm2495, %v6883, 0.0
        %v7113 = vadd.f32 %v7111, %v7112
        %v7114 = vsel %vm2495, %v6884, 0.0
        %v7115 = vadd.f32 %v7113, %v7114
        %v7116 = vsel %vm2495, %v6885, 0.0
        %v7117 = vadd.f32 %v7115, %v7116
        %v7118 = vsel %vm2495, %v6886, 0.0
        %v7119 = vadd.f32 %v7117, %v7118
        %v7120 = vsel %vm2495, %v6887, 0.0
        %v7121 = vadd.f32 %v7119, %v7120
        %v7122 = vsel %vm2495, %v6888, 0.0
        %v7123 = vadd.f32 %v7121, %v7122
        %v7124 = vsel %vm2495, %v6889, 0.0
        %v7125 = vadd.f32 %v7123, %v7124
        %v7126 = vsel %vm2495, %v6890, 0.0
        %v7127 = vadd.f32 %v7125, %v7126
        %v7128 = vsel %vm2495, %v6891, 0.0
        %v7129 = vadd.f32 %v7127, %v7128
        %v7130 = vsel %vm2495, %v6892, 0.0
        %v7131 = vadd.f32 %v7129, %v7130
        %v7132 = vsel %vm2495, %v6893, 0.0
        %v7133 = vadd.f32 %v7131, %v7132
        %v7134 = vsel %vm2495, %v6894, 0.0
        %v7135 = vadd.f32 %v7133, %v7134
        %v7136 = vsel %vm2495, %v6895, 0.0
        %v7137 = vadd.f32 %v7135, %v7136
        %v7138 = vsel %vm2495, %v6896, 0.0
        %v7139 = vadd.f32 %v7137, %v7138
        %v7140 = vsel %vm2495, %v6897, 0.0
        %v7141 = vadd.f32 %v7139, %v7140
        %v7142 = vsel %vm2495, %v6898, 0.0
        %v7143 = vadd.f32 %v7141, %v7142
        %v7144 = vsel %vm2495, %v6899, 0.0
        %v7145 = vadd.f32 %v7143, %v7144
        %v7146 = vsel %vm2495, %v6900, 0.0
        %v7147 = vadd.f32 %v7145, %v7146
        %v7148 = vsel %vm2495, %v6901, 0.0
        %v7149 = vadd.f32 %v7147, %v7148
        %v7150 = vsel %vm2495, %v6902, 0.0
        %v7151 = vadd.f32 %v7149, %v7150
        %v7152 = vsel %vm2495, %v6903, 0.0
        %v7153 = vadd.f32 %v7151, %v7152
        %v7154 = vsel %vm2495, %v6904, 0.0
        %v7155 = vadd.f32 %v7153, %v7154
        %v7156 = vsel %vm2495, %v6905, 0.0
        %v7157 = vadd.f32 %v7155, %v7156
        %v7158 = vsel %vm2495, %v6906, 0.0
        %v7159 = vadd.f32 %v7157, %v7158
        %v7160 = vsel %vm2495, %v6907, 0.0
        %v7161 = vadd.f32 %v7159, %v7160
        %v7162 = vsel %vm2495, %v6908, 0.0
        %v7163 = vadd.f32 %v7161, %v7162
        %7164 = vadd.xlane.f32.xlu0 %v7163
        %v7165 = vpop.xlane.xlu0 %7164
        %v7166 = vrot.slane %v7165, 4
        %v7167 = vadd.f32 %v7165, %v7166
        %v7168 = vrot.slane %v7167, 2
        %v7169 = vadd.f32 %v7167, %v7168
        %v7170 = vrot.slane %v7169, 1
        %v7171 = vadd.f32 %v7169, %v7170
        %s7172 = vtos %v7171
        %vm7173 = vcmp.eq.s32.totalorder %v3441, 0
        %vm7174 = vcmp.eq.s32.totalorder %v3441, 1
        %vm7175 = vcmp.eq.s32.totalorder %v3441, 2
        %v7176 = vstv %s2759
        %v7177 = vsel %vm7175, %v7176, 0.0
        %v7178 = vstv %s7172
        %v7179 = vsel %vm7174, %v7178, %v7177
        %v7180 = vstv %s6652
        %v7181 = vsel %vm7173, %v7180, %v7179
        %vm7182 = vcmp.eq.s32.totalorder %v1597, 0
        %v7183 = vsel %vm7182, %v7181, 0.0
        %p7184 = scmp.eq.s32.totalorder %s20, 0
        // Predicated region
        $region45: #{tpu_custom_call.1} parent=43 // pred_check
          %p7185 = pneg %p7184
        $region46: #{tpu_custom_call.1} parent=43 // pred_check_branch
          %7187 = sbr.rel (%p7185) target = $region48
        $region47: #{tpu_custom_call.1} parent=43 // pred_region
          %7188 = vst [vmem:[#allocation4] sm:$0xff] 0.0
        $region48: #{tpu_custom_call.1} parent=43 // pred_fallthru
          _
        %v7189 = vld [vmem:[#allocation4] sm:$0xff]
        %v7190 = vadd.f32 %v7189, %v7183
        %7191 = vst [vmem:[#allocation4] sm:$0xff] %v7190
        // Predicated region
        $region49: #{tpu_custom_call.1} parent=43 // pred_check
          %p7192 = pneg %p169
        $region50: #{tpu_custom_call.1} parent=43 // pred_check_branch
          %7194 = sbr.rel (%p7192) target = $region52
        $region51: #{tpu_custom_call.1} parent=43 // pred_region
          %s7196 = ssub.s32 128, 128
          %7197 = vsyncadd [#allocation5], %s7196
          %s7199 = sshll.u32 [#allocation4], 4
          %s7200 = int_to_ptr.vmem [resolvable:$true] %s7199
          %7202 = dma.vmem_to_hbm [thread:$0]  %s7200, 128, %s7, [#allocation5]
        $region52: #{tpu_custom_call.1} parent=43 // pred_fallthru
          _
        // Predicated region
        $region53: #{tpu_custom_call.1} parent=43 // pred_check
          %p7203 = pneg %p169
        $region54: #{tpu_custom_call.1} parent=43 // pred_check_branch
          %7205 = sbr.rel (%p7203) target = $region56
        $region55: #{tpu_custom_call.1} parent=43 // pred_region
          %7206 = dma.done [#allocation5], 128
        $region56: #{tpu_custom_call.1} parent=43 // pred_fallthru
          _
      $region44: #{tpu_custom_call.1} parent=5 // pred_fallthru
        _
      %p7207 = scmp.le.s32.totalorder 2, %s15
      // Predicated region
      $region57: #{tpu_custom_call.1} parent=5 // pred_check
        %p7208 = pneg %p7207
      $region58: #{tpu_custom_call.1} parent=5 // pred_check_branch
        %7210 = sbr.rel (%p7208) target = $region60
      $region59: #{tpu_custom_call.1} parent=5 // pred_region
        %s7211 = ssub.s32 %s15, 2
      $region60: #{tpu_custom_call.1} parent=5 // pred_fallthru
        _
    $region6: #{tpu_custom_call.1} parent=1 // loop_footer
      %s19 = sadd.s32 1, %s15
    $region7: #{tpu_custom_call.1} parent=1 // loop_footer_branch
      %14 = sbr.rel target = $region3
    $region8: #{tpu_custom_call.1} parent=1 // loop_exit
      _
    %7212 = vsyncpa [#allocation5], 1
    %s7213 = scalar_lea.sflag [#allocation5], 1
    %7214 = vsyncpa %s7213, 1

</llo_original>
